<compile_context>
chip_gen: v5e
topology: v5e:2x2
jax: 0.10.0
libtpu: 0.0.40
codegen_flags: <defaults>
</compile_context>

<pallas_src>
import functools
import math

import numpy as np
import jax
import jax.numpy as jnp
from jax import lax
from jax.experimental import pallas as pl
from jax.experimental.pallas import tpu as pltpu

NEG_SLOPE = 0.1   # darknet leaky-ReLU slope
LANES = 128       # TPU lane width; all channel dims are padded to this


# ---------------------------------------------------------------------------
# Pallas kernel
# ---------------------------------------------------------------------------
def _yolo_transform(y, meta_ref, pitch):
    """YOLO head epilogue on a (M, 128) tile of raw head-conv outputs.

    meta rows: 0=scaled-anchor value (1 elsewhere), 1=is_wh lane mask,
    2=is_x lane mask, 3=is_y lane mask, 4=box scale (stride on box lanes).
    """
    m = y.shape[0]
    anc = meta_ref[0:1, :]
    is_wh = meta_ref[1:2, :]
    is_x = meta_ref[2:3, :]
    is_y = meta_ref[3:4, :]
    box_scale = meta_ref[4:5, :]

    row = lax.broadcasted_iota(jnp.int32, (m, LANES), 0).astype(jnp.float32)
    gy = jnp.floor((row + 0.5) / float(pitch))     # spatial row index
    gx = row - gy * float(pitch)                   # spatial col index

    sig = jax.nn.sigmoid(y)
    # TODO(synk): exp() on raw tw/th logits is unbounded (same as the torch
    # reference); real darknet weights may want a clamp here.
    box_wh = jnp.exp(y) * anc
    det = jnp.where(is_wh > 0.5, box_wh, sig + gx * is_x + gy * is_y)
    return det * box_scale


def _fused_conv_kernel(*refs, mode, shifts, m_out, apply_act, pitch):
    """conv (+BN+leaky) [+residual add | +YOLO head | +1x1 head conv+YOLO]."""
    if mode == "plain":
        x_ref, w_ref, s_ref, b_ref, o_ref = refs
    elif mode == "residual":
        x_ref, w_ref, s_ref, b_ref, r_ref, o_ref = refs
    elif mode == "head":
        x_ref, w_ref, s_ref, b_ref, meta_ref, o_ref = refs
    else:  # "conv_head"
        (x_ref, w_ref, s_ref, b_ref, wh_ref, bh_ref, meta_ref,
         o_ref, det_ref) = refs

    # Conv as a sum of shifted (M,128)@(128,128) MXU matmuls over the padded,
    # flattened, VMEM-resident input canvas.
    sh0 = shifts[0]
    acc = jnp.dot(x_ref[sh0:sh0 + m_out, :], w_ref[0],
                  preferred_element_type=jnp.float32)
    for t in range(1, len(shifts)):
        sh = shifts[t]
        acc = acc + jnp.dot(x_ref[sh:sh + m_out, :], w_ref[t],
                            preferred_element_type=jnp.float32)

    y = acc * s_ref[...] + b_ref[...]          # folded BatchNorm (or plain bias)
    if apply_act:
        y = jnp.where(y > 0, y, NEG_SLOPE * y)  # LeakyReLU(0.1)

    if mode == "residual":
        y = y + r_ref[...]                      # fused shortcut add

    if mode == "head":
        o_ref[...] = _yolo_transform(y, meta_ref, pitch)
        return

    o_ref[...] = y

    if mode == "conv_head":
        # fused 1x1 detection-head conv + YOLO transform
        h = jnp.dot(y, wh_ref[0], preferred_element_type=jnp.float32) + bh_ref[...]
        det_ref[...] = _yolo_transform(h, meta_ref, pitch)


# ---------------------------------------------------------------------------
# Glue / wrappers
# ---------------------------------------------------------------------------
def _pad_lanes(x):
    c = x.shape[-1]
    if c == LANES:
        return x
    pad = [(0, 0)] * (x.ndim - 1) + [(0, LANES - c)]
    return jnp.pad(x, pad)


def _yolo_meta(anchors, depth, num_anchors, stride):
    meta = np.zeros((8, LANES), np.float32)
    meta[0, :] = 1.0
    meta[4, :] = 1.0
    for a in range(num_anchors):
        base = a * depth
        meta[0, base + 2] = anchors[a][0] / stride
        meta[0, base + 3] = anchors[a][1] / stride
        meta[1, base + 2] = 1.0
        meta[1, base + 3] = 1.0
        meta[2, base + 0] = 1.0
        meta[3, base + 1] = 1.0
        meta[4, base:base + 4] = stride
    return jnp.asarray(meta)


def _canvas_to_detections(det, b, h, w, pitch, num_anchors, depth):
    det = det.reshape(b, h, pitch, LANES)[:, :, :w, :num_anchors * depth]
    return det.reshape(b, h * w * num_anchors, depth)


def fused_conv(x, layer, params, residual=None, head_layer=None, anchors=None):
    """Single pallas_call: conv(+BN+leaky) with optional fused residual / head.

    x: (B, H, W, 128) channels-last, 128-lane padded.
    """
    B, H, W, _ = x.shape
    k = layer['ksize']
    if k == 3:
        P = W + 2
        xf = jnp.pad(x, ((0, 0), (1, 1), (1, 1), (0, 0))).reshape(
            B, (H + 2) * P, LANES)
        xf = jnp.pad(xf, ((0, 0), (0, 2), (0, 0)))   # guard rows for max shift
        shifts = tuple(dy * P + dx for dy in range(3) for dx in range(3))
    else:
        P = W
        xf = x.reshape(B, H * W, LANES)
        shifts = (0,)
    Mp = xf.shape[1]
    m_out = H * P
    kk = len(shifts)
    depth = 5 + params['num_classes']
    A = params['num_anchors']

    inputs = [xf, layer['w'], layer['scale'], layer['bias']]
    in_specs = [
        pl.BlockSpec((None, Mp, LANES), lambda b: (b, 0, 0)),
        pl.BlockSpec((kk, LANES, LANES), lambda b: (0, 0, 0)),
        pl.BlockSpec((1, LANES), lambda b: (0, 0)),
        pl.BlockSpec((1, LANES), lambda b: (0, 0)),
    ]

    if residual is not None:
        mode = 'residual'
        inputs.append(residual.reshape(B, m_out, LANES))
        in_specs.append(pl.BlockSpec((None, m_out, LANES), lambda b: (b, 0, 0)))
    elif head_layer is not None:
        mode = 'conv_head'
        stride = params['height'] // H
        meta = _yolo_meta(anchors, depth, A, float(stride))
        inputs += [head_layer['w'], head_layer['bias'], meta]
        in_specs += [
            pl.BlockSpec((1, LANES, LANES), lambda b: (0, 0, 0)),
            pl.BlockSpec((1, LANES), lambda b: (0, 0)),
            pl.BlockSpec((8, LANES), lambda b: (0, 0)),
        ]
    elif anchors is not None:
        mode = 'head'
        stride = params['height'] // H
        meta = _yolo_meta(anchors, depth, A, float(stride))
        inputs.append(meta)
        in_specs.append(pl.BlockSpec((8, LANES), lambda b: (0, 0)))
    else:
        mode = 'plain'

    out_block = pl.BlockSpec((None, m_out, LANES), lambda b: (b, 0, 0))
    if mode == 'conv_head':
        out_shape = (jax.ShapeDtypeStruct((B, m_out, LANES), jnp.float32),
                     jax.ShapeDtypeStruct((B, m_out, LANES), jnp.float32))
        out_specs = (out_block, out_block)
    else:
        out_shape = jax.ShapeDtypeStruct((B, m_out, LANES), jnp.float32)
        out_specs = out_block

    kernel = functools.partial(
        _fused_conv_kernel, mode=mode, shifts=shifts, m_out=m_out,
        apply_act=layer['act'], pitch=P)

    result = pl.pallas_call(
        kernel,
        out_shape=out_shape,
        grid=(B,),
        in_specs=in_specs,
        out_specs=out_specs,
        compiler_params=pltpu.CompilerParams(
            dimension_semantics=("parallel",),
            vmem_limit_bytes=32 * 1024 * 1024),
    )(*inputs)

    if mode == 'conv_head':
        act_c, det_c = result
        act = act_c.reshape(B, H, P, LANES)[:, :, :W, :]
        det = _canvas_to_detections(det_c, B, H, W, P, A, depth)
        return act, det
    if mode == 'head':
        return _canvas_to_detections(result, B, H, W, P, A, depth)

    act = result.reshape(B, H, P, LANES)[:, :, :W, :]
    if layer['stride'] == 2:
        act = act[:, ::2, ::2, :]   # stride-2 conv = stride-1 conv subsampled
    return act


def upsample2x(x):
    # glue: nn.Upsample(scale_factor=2, mode='nearest') -- pure data movement
    return jnp.repeat(jnp.repeat(x, 2, axis=1), 2, axis=2)


def route_concat(a, ca, b, cb):
    # glue: channel concat of real (unpadded) channels, re-padded to 128 lanes
    return _pad_lanes(jnp.concatenate([a[..., :ca], b[..., :cb]], axis=-1))


# ---------------------------------------------------------------------------
# Deterministic mini-YOLOv3 model definition (128-lane-padded weights)
# ---------------------------------------------------------------------------
def make_conv(key, cin, cout, ksize, stride, bn, act):
    k1, k2, k3 = jax.random.split(key, 3)
    fan_in = cin * ksize * ksize
    w_real = jax.random.normal(k1, (ksize * ksize, cin, cout),
                               jnp.float32) / math.sqrt(fan_in)
    if not bn:
        w_real = w_real * 0.1
    w = jnp.zeros((ksize * ksize, LANES, LANES),
                  jnp.float32).at[:, :cin, :cout].set(w_real)
    if bn:
        # BatchNorm folded for inference: scale=gamma/sqrt(var+eps),
        # bias=beta-mean*scale
        scale_r = 1.0 + 0.1 * jax.random.normal(k2, (cout,), jnp.float32)
        bias_r = 0.1 * jax.random.normal(k3, (cout,), jnp.float32)
    else:
        scale_r = jnp.ones((cout,), jnp.float32)
        bias_r = 0.1 * jax.random.normal(k2, (cout,), jnp.float32)
    scale = jnp.zeros((1, LANES), jnp.float32).at[0, :cout].set(scale_r)
    bias = jnp.zeros((1, LANES), jnp.float32).at[0, :cout].set(bias_r)
    return dict(type='conv', w=w, scale=scale, bias=bias, cin=cin, cout=cout,
                ksize=ksize, stride=stride, pad=ksize // 2, act=act)


def build_model(key, params):
    keys = iter(jax.random.split(key, 32))
    A, C = params['num_anchors'], params['num_classes']
    head_c = (C + 5) * A
    L = []
    L.append(make_conv(next(keys), 3, 8, 3, 1, True, True))            # 0  32x32
    L.append(make_conv(next(keys), 8, 16, 3, 2, True, True))           # 1  16x16
    L.append(make_conv(next(keys), 16, 16, 1, 1, True, True))          # 2
    L.append(dict(type='shortcut', frm=1))                             # 3
    L.append(make_conv(next(keys), 16, 32, 3, 2, True, True))          # 4  8x8
    L.append(make_conv(next(keys), 32, 32, 1, 1, True, True))          # 5
    L.append(dict(type='shortcut', frm=4))                             # 6
    L.append(make_conv(next(keys), 32, 64, 3, 2, True, True))          # 7  4x4
    L.append(make_conv(next(keys), 64, head_c, 1, 1, False, False))    # 8  head1
    L.append(dict(type='yolo', anchors=[(10., 14.), (14., 20.), (20., 26.)]))  # 9
    L.append(dict(type='route1', frm=7))                               # 10
    L.append(make_conv(next(keys), 64, 16, 1, 1, True, True))          # 11
    L.append(dict(type='upsample'))                                    # 12 8x8
    L.append(dict(type='route2', frm=(12, 6)))                         # 13 16+32
    L.append(make_conv(next(keys), 48, 32, 3, 1, True, True))          # 14
    L.append(make_conv(next(keys), 32, head_c, 1, 1, False, False))    # 15 head2
    L.append(dict(type='yolo', anchors=[(5., 7.), (7., 10.), (10., 13.)]))  # 16
    L.append(dict(type='route1', frm=14))                              # 17
    L.append(make_conv(next(keys), 32, 8, 1, 1, True, True))           # 18
    L.append(dict(type='upsample'))                                    # 19 16x16
    L.append(dict(type='route2', frm=(19, 3)))                         # 20 8+16
    L.append(make_conv(next(keys), 24, 16, 3, 1, True, True))          # 21
    L.append(make_conv(next(keys), 16, head_c, 1, 1, False, False))    # 22 head3
    L.append(dict(type='yolo', anchors=[(2., 3.), (3., 5.), (5., 6.)]))  # 23
    return L


# ---------------------------------------------------------------------------
# Forward passes
# ---------------------------------------------------------------------------
def forward(layers, params, x_nchw):
    """Pallas inference forward: returns (B, total_boxes, 5+num_classes)."""
    L = layers
    x = jnp.transpose(x_nchw, (0, 2, 3, 1)).astype(jnp.float32)  # NCHW -> NHWC
    x = _pad_lanes(x)

    a0 = fused_conv(x, L[0], params)
    a1 = fused_conv(a0, L[1], params)
    a3 = fused_conv(a1, L[2], params, residual=a1)                 # conv2 + shortcut3
    a4 = fused_conv(a3, L[4], params)
    a6 = fused_conv(a4, L[5], params, residual=a4)                 # conv5 + shortcut6
    a7 = fused_conv(a6, L[7], params)
    det1 = fused_conv(a7, L[8], params, anchors=L[9]['anchors'])   # head1 + yolo9
    a11 = fused_conv(a7, L[11], params)                            # route10 -> conv11
    a12 = upsample2x(a11)
    a13 = route_concat(a12, L[11]['cout'], a6, L[5]['cout'])       # route13
    a14, det2 = fused_conv(a13, L[14], params,
                           head_layer=L[15], anchors=L[16]['anchors'])  # 14+15+yolo16
    a18 = fused_conv(a14, L[18], params)                           # route17 -> conv18
    a19 = upsample2x(a18)
    a20 = route_concat(a19, L[18]['cout'], a3, L[2]['cout'])       # route20
    _a21, det3 = fused_conv(a20, L[21], params,
                            head_layer=L[22], anchors=L[23]['anchors'])  # 21+22+yolo23
    return jnp.concatenate([det1, det2, det3], axis=1)


# -------------------- pure-JAX reference of the same graph -------------------
def _ref_conv(x, layer):
    k, cin, cout = layer['ksize'], layer['cin'], layer['cout']
    w = layer['w'][:, :cin, :cout].reshape(k, k, cin, cout)
    y = lax.conv_general_dilated(
        x, w, (layer['stride'], layer['stride']),
        padding=[(layer['pad'], layer['pad'])] * 2,
        dimension_numbers=('NHWC', 'HWIO', 'NHWC'),
        precision=lax.Precision.HIGHEST)
    y = y * layer['scale'][:, :cout] + layer['bias'][:, :cout]
    if layer['act']:
        y = jnp.where(y > 0, y, NEG_SLOPE * y)
    return y


def _ref_yolo(x, anchors, params):
    B, H, W, _ = x.shape
    A = params['num_anchors']
    depth = 5 + params['num_classes']
    stride = params['height'] // H
    pred = x.reshape(B, H * W * A, depth)
    d = jnp.arange(depth)[None, None, :]
    gy, gx = jnp.meshgrid(jnp.arange(H, dtype=jnp.float32),
                          jnp.arange(W, dtype=jnp.float32), indexing='ij')
    xy = jnp.stack([gx.reshape(-1), gy.reshape(-1)], axis=-1)
    xy = jnp.repeat(xy, A, axis=0)
    off = jnp.zeros((H * W * A, depth), jnp.float32).at[:, 0:2].set(xy)[None]
    anc = jnp.tile(jnp.asarray(anchors, jnp.float32) / stride, (H * W, 1))
    ancf = jnp.ones((H * W * A, depth), jnp.float32).at[:, 2:4].set(anc)[None]
    sig = jax.nn.sigmoid(pred)
    y = jnp.where((d < 2) | (d >= 4), sig, pred)
    y = y + off
    y = jnp.where((d >= 2) & (d < 4), jnp.exp(pred) * ancf, y)
    y = jnp.where(d < 4, y * float(stride), y)
    return y


def forward_reference(layers, params, x_nchw):
    x = jnp.transpose(x_nchw, (0, 2, 3, 1)).astype(jnp.float32)
    cache = {}
    dets = []
    for idx, layer in enumerate(layers):
        t = layer['type']
        if t == 'conv':
            x = _ref_conv(x, layer)
        elif t == 'shortcut':
            x = x + cache[layer['frm']]
        elif t == 'route1':
            x = cache[layer['frm']]
        elif t == 'route2':
            a, b = layer['frm']
            x = jnp.concatenate([cache[a], cache[b]], axis=-1)
        elif t == 'upsample':
            x = upsample2x(x)
        elif t == 'yolo':
            dets.append(_ref_yolo(x, layer['anchors'], params))
        cache[idx] = x
    return jnp.concatenate(dets, axis=1)


if __name__ == "__main__":
    params = dict(num_classes=2, num_anchors=3, height=32)
    key = jax.random.PRNGKey(0)
    k_x, k_model = jax.random.split(key)

    # PyTorch-style NCHW input image batch
    x = jax.random.normal(k_x, (2, 3, 32, 32), jnp.float32)

    layers = build_model(k_model, params)

    out = forward(layers, params, x)
    out = jax.block_until_ready(out)

    # sanity-check against a pure-JAX reference of the same graph
    ref = forward_reference(layers, params, x)
    n_boxes = (4 * 4 + 8 * 8 + 16 * 16) * params['num_anchors']
    assert out.shape == (2, n_boxes, 5 + params['num_classes']), out.shape
    assert bool(jnp.all(jnp.isfinite(out)))
    max_err = float(jnp.max(jnp.abs(out - ref)))
    assert bool(jnp.allclose(out, ref, atol=2e-3, rtol=2e-3)), max_err

    print("KERNEL_OK")
</pallas_src>

<mosaic_0001>
module attributes {stable_mosaic.version = 11 : i64} {
  func.func @_fused_conv_kernel(%arg0: i32, %arg1: memref<1x1158x128xf32, #tpu.memory_space<vmem>>, %arg2: memref<9x128x128xf32, #tpu.memory_space<vmem>>, %arg3: memref<1x128xf32, #tpu.memory_space<vmem>>, %arg4: memref<1x128xf32, #tpu.memory_space<vmem>>, %arg5: memref<1x1088x128xf32, #tpu.memory_space<vmem>>) attributes {dimension_semantics = [#tpu.dimension_semantics<parallel>], iteration_bounds = array<i64: 2>, scalar_prefetch = 0 : i64, scratch_operands = 0 : i64, tpu.core_type = #tpu.core_type<tc>, window_params = [{transform_indices = @transform_0, window_bounds = array<i64: 1, 1158, 128>}, {pipeline_mode = #tpu.pipeline_mode<synchronous>, transform_indices = @transform_1, window_bounds = array<i64: 9, 128, 128>}, {pipeline_mode = #tpu.pipeline_mode<synchronous>, transform_indices = @transform_2, window_bounds = array<i64: 1, 128>}, {pipeline_mode = #tpu.pipeline_mode<synchronous>, transform_indices = @transform_3, window_bounds = array<i64: 1, 128>}, {transform_indices = @transform_4, window_bounds = array<i64: 1, 1088, 128>}]} {
    %c0 = arith.constant 0 : index
    %c0_0 = arith.constant 0 : index
    %c0_1 = arith.constant 0 : index
    %0 = vector.load %arg1[%c0, %c0_0, %c0_1] : memref<1x1158x128xf32, #tpu.memory_space<vmem>>, vector<1x1088x128xf32>
    %1 = vector.shape_cast %0 : vector<1x1088x128xf32> to vector<1088x128xf32>
    %c0_2 = arith.constant 0 : index
    %c0_3 = arith.constant 0 : index
    %c0_4 = arith.constant 0 : index
    %2 = vector.load %arg2[%c0_2, %c0_3, %c0_4] : memref<9x128x128xf32, #tpu.memory_space<vmem>>, vector<1x128x128xf32>
    %3 = vector.shape_cast %2 : vector<1x128x128xf32> to vector<128x128xf32>
    %cst = arith.constant dense<0.000000e+00> : vector<1088x128xf32>
    %4 = tpu.matmul %1, %3, %cst {dimension_numbers = #tpu.dot_dimension_numbers<[1], [0], [0], [1], [0, 0, 1, 1], [], []>} : vector<1088x128xf32>, vector<128x128xf32>, vector<1088x128xf32> -> vector<1088x128xf32>
    %c0_5 = arith.constant 0 : index
    %c1 = arith.constant 1 : index
    %c0_6 = arith.constant 0 : index
    %5 = vector.load %arg1[%c0_5, %c1, %c0_6] : memref<1x1158x128xf32, #tpu.memory_space<vmem>>, vector<1x1088x128xf32>
    %6 = vector.shape_cast %5 : vector<1x1088x128xf32> to vector<1088x128xf32>
    %c1_7 = arith.constant 1 : index
    %c0_8 = arith.constant 0 : index
    %c0_9 = arith.constant 0 : index
    %7 = vector.load %arg2[%c1_7, %c0_8, %c0_9] : memref<9x128x128xf32, #tpu.memory_space<vmem>>, vector<1x128x128xf32>
    %8 = vector.shape_cast %7 : vector<1x128x128xf32> to vector<128x128xf32>
    %cst_10 = arith.constant dense<0.000000e+00> : vector<1088x128xf32>
    %9 = tpu.matmul %6, %8, %cst_10 {dimension_numbers = #tpu.dot_dimension_numbers<[1], [0], [0], [1], [0, 0, 1, 1], [], []>} : vector<1088x128xf32>, vector<128x128xf32>, vector<1088x128xf32> -> vector<1088x128xf32>
    %10 = arith.addf %4, %9 : vector<1088x128xf32>
    %c0_11 = arith.constant 0 : index
    %c2 = arith.constant 2 : index
    %c0_12 = arith.constant 0 : index
    %11 = vector.load %arg1[%c0_11, %c2, %c0_12] : memref<1x1158x128xf32, #tpu.memory_space<vmem>>, vector<1x1088x128xf32>
    %12 = vector.shape_cast %11 : vector<1x1088x128xf32> to vector<1088x128xf32>
    %c2_13 = arith.constant 2 : index
    %c0_14 = arith.constant 0 : index
    %c0_15 = arith.constant 0 : index
    %13 = vector.load %arg2[%c2_13, %c0_14, %c0_15] : memref<9x128x128xf32, #tpu.memory_space<vmem>>, vector<1x128x128xf32>
    %14 = vector.shape_cast %13 : vector<1x128x128xf32> to vector<128x128xf32>
    %cst_16 = arith.constant dense<0.000000e+00> : vector<1088x128xf32>
    %15 = tpu.matmul %12, %14, %cst_16 {dimension_numbers = #tpu.dot_dimension_numbers<[1], [0], [0], [1], [0, 0, 1, 1], [], []>} : vector<1088x128xf32>, vector<128x128xf32>, vector<1088x128xf32> -> vector<1088x128xf32>
    %16 = arith.addf %10, %15 : vector<1088x128xf32>
    %c0_17 = arith.constant 0 : index
    %c34 = arith.constant 34 : index
    %c0_18 = arith.constant 0 : index
    %17 = vector.load %arg1[%c0_17, %c34, %c0_18] : memref<1x1158x128xf32, #tpu.memory_space<vmem>>, vector<1x1088x128xf32>
    %18 = vector.shape_cast %17 : vector<1x1088x128xf32> to vector<1088x128xf32>
    %c3 = arith.constant 3 : index
    %c0_19 = arith.constant 0 : index
    %c0_20 = arith.constant 0 : index
    %19 = vector.load %arg2[%c3, %c0_19, %c0_20] : memref<9x128x128xf32, #tpu.memory_space<vmem>>, vector<1x128x128xf32>
    %20 = vector.shape_cast %19 : vector<1x128x128xf32> to vector<128x128xf32>
    %cst_21 = arith.constant dense<0.000000e+00> : vector<1088x128xf32>
    %21 = tpu.matmul %18, %20, %cst_21 {dimension_numbers = #tpu.dot_dimension_numbers<[1], [0], [0], [1], [0, 0, 1, 1], [], []>} : vector<1088x128xf32>, vector<128x128xf32>, vector<1088x128xf32> -> vector<1088x128xf32>
    %22 = arith.addf %16, %21 : vector<1088x128xf32>
    %c0_22 = arith.constant 0 : index
    %c35 = arith.constant 35 : index
    %c0_23 = arith.constant 0 : index
    %23 = vector.load %arg1[%c0_22, %c35, %c0_23] : memref<1x1158x128xf32, #tpu.memory_space<vmem>>, vector<1x1088x128xf32>
    %24 = vector.shape_cast %23 : vector<1x1088x128xf32> to vector<1088x128xf32>
    %c4 = arith.constant 4 : index
    %c0_24 = arith.constant 0 : index
    %c0_25 = arith.constant 0 : index
    %25 = vector.load %arg2[%c4, %c0_24, %c0_25] : memref<9x128x128xf32, #tpu.memory_space<vmem>>, vector<1x128x128xf32>
    %26 = vector.shape_cast %25 : vector<1x128x128xf32> to vector<128x128xf32>
    %cst_26 = arith.constant dense<0.000000e+00> : vector<1088x128xf32>
    %27 = tpu.matmul %24, %26, %cst_26 {dimension_numbers = #tpu.dot_dimension_numbers<[1], [0], [0], [1], [0, 0, 1, 1], [], []>} : vector<1088x128xf32>, vector<128x128xf32>, vector<1088x128xf32> -> vector<1088x128xf32>
    %28 = arith.addf %22, %27 : vector<1088x128xf32>
    %c0_27 = arith.constant 0 : index
    %c36 = arith.constant 36 : index
    %c0_28 = arith.constant 0 : index
    %29 = vector.load %arg1[%c0_27, %c36, %c0_28] : memref<1x1158x128xf32, #tpu.memory_space<vmem>>, vector<1x1088x128xf32>
    %30 = vector.shape_cast %29 : vector<1x1088x128xf32> to vector<1088x128xf32>
    %c5 = arith.constant 5 : index
    %c0_29 = arith.constant 0 : index
    %c0_30 = arith.constant 0 : index
    %31 = vector.load %arg2[%c5, %c0_29, %c0_30] : memref<9x128x128xf32, #tpu.memory_space<vmem>>, vector<1x128x128xf32>
    %32 = vector.shape_cast %31 : vector<1x128x128xf32> to vector<128x128xf32>
    %cst_31 = arith.constant dense<0.000000e+00> : vector<1088x128xf32>
    %33 = tpu.matmul %30, %32, %cst_31 {dimension_numbers = #tpu.dot_dimension_numbers<[1], [0], [0], [1], [0, 0, 1, 1], [], []>} : vector<1088x128xf32>, vector<128x128xf32>, vector<1088x128xf32> -> vector<1088x128xf32>
    %34 = arith.addf %28, %33 : vector<1088x128xf32>
    %c0_32 = arith.constant 0 : index
    %c68 = arith.constant 68 : index
    %c0_33 = arith.constant 0 : index
    %35 = vector.load %arg1[%c0_32, %c68, %c0_33] : memref<1x1158x128xf32, #tpu.memory_space<vmem>>, vector<1x1088x128xf32>
    %36 = vector.shape_cast %35 : vector<1x1088x128xf32> to vector<1088x128xf32>
    %c6 = arith.constant 6 : index
    %c0_34 = arith.constant 0 : index
    %c0_35 = arith.constant 0 : index
    %37 = vector.load %arg2[%c6, %c0_34, %c0_35] : memref<9x128x128xf32, #tpu.memory_space<vmem>>, vector<1x128x128xf32>
    %38 = vector.shape_cast %37 : vector<1x128x128xf32> to vector<128x128xf32>
    %cst_36 = arith.constant dense<0.000000e+00> : vector<1088x128xf32>
    %39 = tpu.matmul %36, %38, %cst_36 {dimension_numbers = #tpu.dot_dimension_numbers<[1], [0], [0], [1], [0, 0, 1, 1], [], []>} : vector<1088x128xf32>, vector<128x128xf32>, vector<1088x128xf32> -> vector<1088x128xf32>
    %40 = arith.addf %34, %39 : vector<1088x128xf32>
    %c0_37 = arith.constant 0 : index
    %c69 = arith.constant 69 : index
    %c0_38 = arith.constant 0 : index
    %41 = vector.load %arg1[%c0_37, %c69, %c0_38] : memref<1x1158x128xf32, #tpu.memory_space<vmem>>, vector<1x1088x128xf32>
    %42 = vector.shape_cast %41 : vector<1x1088x128xf32> to vector<1088x128xf32>
    %c7 = arith.constant 7 : index
    %c0_39 = arith.constant 0 : index
    %c0_40 = arith.constant 0 : index
    %43 = vector.load %arg2[%c7, %c0_39, %c0_40] : memref<9x128x128xf32, #tpu.memory_space<vmem>>, vector<1x128x128xf32>
    %44 = vector.shape_cast %43 : vector<1x128x128xf32> to vector<128x128xf32>
    %cst_41 = arith.constant dense<0.000000e+00> : vector<1088x128xf32>
    %45 = tpu.matmul %42, %44, %cst_41 {dimension_numbers = #tpu.dot_dimension_numbers<[1], [0], [0], [1], [0, 0, 1, 1], [], []>} : vector<1088x128xf32>, vector<128x128xf32>, vector<1088x128xf32> -> vector<1088x128xf32>
    %46 = arith.addf %40, %45 : vector<1088x128xf32>
    %c0_42 = arith.constant 0 : index
    %c70 = arith.constant 70 : index
    %c0_43 = arith.constant 0 : index
    %47 = vector.load %arg1[%c0_42, %c70, %c0_43] : memref<1x1158x128xf32, #tpu.memory_space<vmem>>, vector<1x1088x128xf32>
    %48 = vector.shape_cast %47 : vector<1x1088x128xf32> to vector<1088x128xf32>
    %c8 = arith.constant 8 : index
    %c0_44 = arith.constant 0 : index
    %c0_45 = arith.constant 0 : index
    %49 = vector.load %arg2[%c8, %c0_44, %c0_45] : memref<9x128x128xf32, #tpu.memory_space<vmem>>, vector<1x128x128xf32>
    %50 = vector.shape_cast %49 : vector<1x128x128xf32> to vector<128x128xf32>
    %cst_46 = arith.constant dense<0.000000e+00> : vector<1088x128xf32>
    %51 = tpu.matmul %48, %50, %cst_46 {dimension_numbers = #tpu.dot_dimension_numbers<[1], [0], [0], [1], [0, 0, 1, 1], [], []>} : vector<1088x128xf32>, vector<128x128xf32>, vector<1088x128xf32> -> vector<1088x128xf32>
    %52 = arith.addf %46, %51 : vector<1088x128xf32>
    %c0_47 = arith.constant 0 : index
    %c0_48 = arith.constant 0 : index
    %53 = vector.load %arg3[%c0_47, %c0_48] : memref<1x128xf32, #tpu.memory_space<vmem>>, vector<1x128xf32>
    %54 = vector.broadcast %53 : vector<1x128xf32> to vector<1088x128xf32>
    %55 = arith.mulf %52, %54 : vector<1088x128xf32>
    %c0_49 = arith.constant 0 : index
    %c0_50 = arith.constant 0 : index
    %56 = vector.load %arg4[%c0_49, %c0_50] : memref<1x128xf32, #tpu.memory_space<vmem>>, vector<1x128xf32>
    %57 = vector.broadcast %56 : vector<1x128xf32> to vector<1088x128xf32>
    %58 = arith.addf %55, %57 : vector<1088x128xf32>
    %cst_51 = arith.constant 0.000000e+00 : f32
    %59 = vector.broadcast %cst_51 : f32 to vector<1088x128xf32>
    %60 = arith.cmpf ogt, %58, %59 : vector<1088x128xf32>
    %cst_52 = arith.constant 1.000000e-01 : f32
    %61 = vector.broadcast %cst_52 : f32 to vector<1088x128xf32>
    %62 = arith.mulf %61, %58 : vector<1088x128xf32>
    %63 = arith.select %60, %58, %62 : vector<1088x128xi1>, vector<1088x128xf32>
    %c0_53 = arith.constant 0 : index
    %c0_54 = arith.constant 0 : index
    %c0_55 = arith.constant 0 : index
    %64 = vector.load %arg5[%c0_53, %c0_54, %c0_55] : memref<1x1088x128xf32, #tpu.memory_space<vmem>>, vector<1x1088x128xf32>
    %65 = vector.shape_cast %64 : vector<1x1088x128xf32> to vector<1088x128xf32>
    %66 = vector.shape_cast %63 : vector<1088x128xf32> to vector<1x1088x128xf32>
    tpu.vector_store %arg5[%c0_53, %c0_54, %c0_55], %66 {strides = array<i32>} : memref<1x1088x128xf32, #tpu.memory_space<vmem>>, vector<1x1088x128xf32>,
    return
  }
  func.func @transform_0(%arg0: i32) -> (i32, i32, i32) {
    %c0_i32 = arith.constant 0 : i32
    %c0_i32_0 = arith.constant 0 : i32
    %c0_i32_1 = arith.constant 0 : i32
    return %arg0, %c0_i32, %c0_i32_0 : i32, i32, i32
  }
  func.func @transform_1(%arg0: i32) -> (i32, i32, i32) {
    %c0_i32 = arith.constant 0 : i32
    %c0_i32_0 = arith.constant 0 : i32
    %c0_i32_1 = arith.constant 0 : i32
    %c0_i32_2 = arith.constant 0 : i32
    return %c0_i32, %c0_i32_0, %c0_i32_1 : i32, i32, i32
  }
  func.func @transform_2(%arg0: i32) -> (i32, i32) {
    %c0_i32 = arith.constant 0 : i32
    %c0_i32_0 = arith.constant 0 : i32
    %c0_i32_1 = arith.constant 0 : i32
    return %c0_i32, %c0_i32_0 : i32, i32
  }
  func.func @transform_3(%arg0: i32) -> (i32, i32) {
    %c0_i32 = arith.constant 0 : i32
    %c0_i32_0 = arith.constant 0 : i32
    %c0_i32_1 = arith.constant 0 : i32
    return %c0_i32, %c0_i32_0 : i32, i32
  }
  func.func @transform_4(%arg0: i32) -> (i32, i32, i32) {
    %c0_i32 = arith.constant 0 : i32
    %c0_i32_0 = arith.constant 0 : i32
    %c0_i32_1 = arith.constant 0 : i32
    return %arg0, %c0_i32, %c0_i32_0 : i32, i32, i32
  }
}

</mosaic_0001>

<llo_original>
// kernel: tpu_custom_call.1
$region0: #{tpu_custom_call.1}
  #allocation0 [shape = 'u32[]', space=smem, size = 0x4, offset = 0x4, fixed_abs, tag = 'smem constant byte address 0x4 - core index']
  #allocation1 [shape = 'u32[72,128]{1,0:T(1,128)}', space=vmem, size = 0x9000, scoped, tag = 'internal scratch']
  %s0 = inlined_call_operand.vmem [shape: f32[2,1158,128], index: 0, kind: input, shape index: {}]
  %s1 = inlined_call_operand.vmem [shape: f32[9,128,128], index: 1, kind: input, shape index: {}]
  %s2 = inlined_call_operand.vmem [shape: f32[1,128], index: 2, kind: input, shape index: {}]
  %s3 = inlined_call_operand.vmem [shape: f32[1,128], index: 3, kind: input, shape index: {}]
  %s4 = inlined_call_operand.hbm [shape: f32[2,1088,128], index: 4, kind: output, shape index: {}]
  %s5 = sld [smem:[#allocation0]]
  $region49: #{tpu_custom_call.1} parent=0
    _
  %s7 = ssub.s32 1, %s5
  %s8 = scalar_select 0, %s7, %s5
  $region1: #{tpu_custom_call.1} parent=0
    #allocation2 [shape = 'u8[1114112]{0}', space=vmem, size = 0x110000, scoped, tag = 'output window, operand 0']
    #allocation3 [shape = 's32[2]{0}', space=sflag, size = 0x8, scoped, tag = 'scoped memory for tpu_custom_call.1']
    %9 = vsyncpa [#allocation3], 0
    %s10 = scalar_lea.sflag [#allocation3], 1
    %11 = vsyncpa %s10, 0
    loop: start=0, step=1, limit=4
    $region2: #{tpu_custom_call.1} parent=1 // loop_pre_header
      _
    $region3: #{tpu_custom_call.1} parent=1 // loop_header
      %s13 = sphi 0, %s17
      %p14 = scmp.ge.s32.totalorder %s13, 4
      %s23 = sphi 0, %s25
      %s26 = sphi 0, %s23
      %s27 = sphi 0, %s26
      %s43 = sphi 0, %s27
      %s47 = sphi 0, %s47
      %s49 = sphi 0, %s47
      %s50 = sphi 0, %s49
      %s64 = sphi 0, %s50
      %s68 = sphi 0, %s68
      %s70 = sphi 0, %s68
      %s71 = sphi 0, %s70
      %s85 = sphi 0, %s71
      %s89 = sphi 0, %s89
      %s91 = sphi 0, %s89
      %s92 = sphi 0, %s91
      %s106 = sphi 0, %s92
      %s112 = sphi 0, %s114
      %s115 = sphi 0, %s112
      %s116 = sphi 0, %s115
      %s132 = sphi 0, %s116
    $region4: #{tpu_custom_call.1} parent=1 // loop_header_branch
      %16 = sbr.rel (%p14) target = $region8
    $region5: #{tpu_custom_call.1} parent=1 // loop_body
      %s18 = ssub.s32 %s13, 1
      %s19 = ssub.s32 %s13, 2
      %s20 = sadd.s32 %s13, 1
      %s21 = ssub.s32 %s13, %s20
      %p22 = scmp.eq.s32.totalorder %s21, 0
      %s24 = sadd.s32 %s23, 1
      %s25 = scalar_select %p22, %s23, %s24
      %p28 = pneg %p22
      %p29 = scmp.eq.s32.totalorder %s13, 1
      %p30 = por %p28, %p29
      %p31 = scmp.ne.s32.totalorder %s23, %s26
      %p32 = scmp.eq.s32.totalorder %s13, 0
      %p33 = por %p31, %p32
      %p34 = scmp.ne.s32.totalorder %s23, %s26
      %p35 = scmp.eq.s32.totalorder %s18, 1
      %p36 = por %p34, %p35
      %p37 = scmp.ne.s32.totalorder %s26, %s27
      %p38 = scmp.eq.s32.totalorder %s18, 0
      %p39 = por %p37, %p38
      %p40 = scmp.ne.s32.totalorder %s26, %s27
      %p41 = scmp.eq.s32.totalorder %s19, 1
      %p42 = por %p40, %p41
      %p44 = scmp.ne.s32.totalorder %s27, %s43
      %p45 = scmp.eq.s32.totalorder %s19, 0
      %p46 = por %p44, %p45
      %s48 = sadd.s32 %s47, 1
      %p51 = scmp.eq.s32.totalorder %s13, 1
      %p52 = scmp.ne.s32.totalorder %s47, %s49
      %p53 = scmp.eq.s32.totalorder %s13, 0
      %p54 = por %p52, %p53
      %p55 = scmp.ne.s32.totalorder %s47, %s49
      %p56 = scmp.eq.s32.totalorder %s18, 1
      %p57 = por %p55, %p56
      %p58 = scmp.ne.s32.totalorder %s49, %s50
      %p59 = scmp.eq.s32.totalorder %s18, 0
      %p60 = por %p58, %p59
      %p61 = scmp.ne.s32.totalorder %s49, %s50
      %p62 = scmp.eq.s32.totalorder %s19, 1
      %p63 = por %p61, %p62
      %p65 = scmp.ne.s32.totalorder %s50, %s64
      %p66 = scmp.eq.s32.totalorder %s19, 0
      %p67 = por %p65, %p66
      %s69 = sadd.s32 %s68, 1
      %p72 = scmp.eq.s32.totalorder %s13, 1
      %p73 = scmp.ne.s32.totalorder %s68, %s70
      %p74 = scmp.eq.s32.totalorder %s13, 0
      %p75 = por %p73, %p74
      %p76 = scmp.ne.s32.totalorder %s68, %s70
      %p77 = scmp.eq.s32.totalorder %s18, 1
      %p78 = por %p76, %p77
      %p79 = scmp.ne.s32.totalorder %s70, %s71
      %p80 = scmp.eq.s32.totalorder %s18, 0
      %p81 = por %p79, %p80
      %p82 = scmp.ne.s32.totalorder %s70, %s71
      %p83 = scmp.eq.s32.totalorder %s19, 1
      %p84 = por %p82, %p83
      %p86 = scmp.ne.s32.totalorder %s71, %s85
      %p87 = scmp.eq.s32.totalorder %s19, 0
      %p88 = por %p86, %p87
      %s90 = sadd.s32 %s89, 1
      %p93 = scmp.eq.s32.totalorder %s13, 1
      %p94 = scmp.ne.s32.totalorder %s89, %s91
      %p95 = scmp.eq.s32.totalorder %s13, 0
      %p96 = por %p94, %p95
      %p97 = scmp.ne.s32.totalorder %s89, %s91
      %p98 = scmp.eq.s32.totalorder %s18, 1
      %p99 = por %p97, %p98
      %p100 = scmp.ne.s32.totalorder %s91, %s92
      %p101 = scmp.eq.s32.totalorder %s18, 0
      %p102 = por %p100, %p101
      %p103 = scmp.ne.s32.totalorder %s91, %s92
      %p104 = scmp.eq.s32.totalorder %s19, 1
      %p105 = por %p103, %p104
      %p107 = scmp.ne.s32.totalorder %s92, %s106
      %p108 = scmp.eq.s32.totalorder %s19, 0
      %p109 = por %p107, %p108
      %s110 = ssub.s32 %s13, %s20
      %p111 = scmp.eq.s32.totalorder %s110, 0
      %s113 = sadd.s32 %s112, 1
      %s114 = scalar_select %p111, %s112, %s113
      %p117 = pneg %p111
      %p118 = scmp.eq.s32.totalorder %s13, 1
      %p119 = por %p117, %p118
      %p120 = scmp.ne.s32.totalorder %s112, %s115
      %p121 = scmp.eq.s32.totalorder %s13, 0
      %p122 = por %p120, %p121
      %p123 = scmp.ne.s32.totalorder %s112, %s115
      %p124 = scmp.eq.s32.totalorder %s18, 1
      %p125 = por %p123, %p124
      %p126 = scmp.ne.s32.totalorder %s115, %s116
      %p127 = scmp.eq.s32.totalorder %s18, 0
      %p128 = por %p126, %p127
      %p129 = scmp.ne.s32.totalorder %s115, %s116
      %p130 = scmp.eq.s32.totalorder %s19, 1
      %p131 = por %p129, %p130
      %p133 = scmp.ne.s32.totalorder %s116, %s132
      %p134 = scmp.eq.s32.totalorder %s19, 0
      %p135 = por %p133, %p134
      %p136 = scmp.le.s32.totalorder 1, %s13
      %p137 = scmp.lt.s32.totalorder %s13, 3
      %p138 = pnand %p136, %p137
      %p139 = pneg %p138
      // Predicated region
      $region9: #{tpu_custom_call.1} parent=5 // pred_check
        _
      $region10: #{tpu_custom_call.1} parent=5 // pred_check_branch
        %141 = sbr.rel (%p138) target = $region12
      $region11: #{tpu_custom_call.1} parent=5 // pred_region
        %s142 = ssub.s32 %s13, 1
        // Predicated region
        $region13: #{tpu_custom_call.1} parent=11 // pred_check
          %p143 = pneg %p60
        $region14: #{tpu_custom_call.1} parent=11 // pred_check_branch
          %145 = sbr.rel (%p143) target = $region16
        $region15: #{tpu_custom_call.1} parent=11 // pred_region
          _
        $region16: #{tpu_custom_call.1} parent=11 // pred_fallthru
          _
        // Predicated region
        $region17: #{tpu_custom_call.1} parent=11 // pred_check
          %p146 = pneg %p81
        $region18: #{tpu_custom_call.1} parent=11 // pred_check_branch
          %148 = sbr.rel (%p146) target = $region20
        $region19: #{tpu_custom_call.1} parent=11 // pred_region
          _
        $region20: #{tpu_custom_call.1} parent=11 // pred_fallthru
          _
        // Predicated region
        $region21: #{tpu_custom_call.1} parent=11 // pred_check
          %p149 = pneg %p102
        $region22: #{tpu_custom_call.1} parent=11 // pred_check_branch
          %151 = sbr.rel (%p149) target = $region24
        $region23: #{tpu_custom_call.1} parent=11 // pred_region
          _
        $region24: #{tpu_custom_call.1} parent=11 // pred_fallthru
          _
      $region12: #{tpu_custom_call.1} parent=5 // pred_fallthru
        _
      %p152 = scmp.lt.s32.totalorder %s13, 2
      // Predicated region
      $region25: #{tpu_custom_call.1} parent=5 // pred_check
        %p153 = pneg %p152
      $region26: #{tpu_custom_call.1} parent=5 // pred_check_branch
        %155 = sbr.rel (%p153) target = $region28
      $region27: #{tpu_custom_call.1} parent=5 // pred_region
        // Predicated region
        $region29: #{tpu_custom_call.1} parent=27 // pred_check
          %p156 = pneg %p33
        $region30: #{tpu_custom_call.1} parent=27 // pred_check_branch
          %158 = sbr.rel (%p156) target = $region32
        $region31: #{tpu_custom_call.1} parent=27 // pred_region
          %p159 = scmp.lt.s32.totalorder %s13, 1
          %s160 = scalar_select %p159, %s13, 1
          %s161 = smul.addr %s160, 145
          %s162 = smul.addr %s161, 8
          %s163 = scalar_lea.vmem %s0, %s162
        $region32: #{tpu_custom_call.1} parent=27 // pred_fallthru
          _
      $region28: #{tpu_custom_call.1} parent=5 // pred_fallthru
        _
      %p164 = scmp.le.s32.totalorder 1, %s13
      %p165 = scmp.lt.s32.totalorder %s13, 3
      %p166 = pnand %p164, %p165
      %p167 = pneg %p166
      // Predicated region
      $region33: #{tpu_custom_call.1} parent=5 // pred_check
        _
      $region34: #{tpu_custom_call.1} parent=5 // pred_check_branch
        %169 = sbr.rel (%p166) target = $region36
      $region35: #{tpu_custom_call.1} parent=5 // pred_region
        %s170 = ssub.s32 %s13, 1
        %p171 = scmp.lt.s32.totalorder %s18, 1
        %s172 = scalar_select %p171, %s18, 1
        %s173 = smul.addr %s172, 145
        %s174 = smul.addr %s173, 8
        %s175 = scalar_lea.vmem %s0, %s174
        %p176 = pneg %p39
        %p177 = pneg %p36
        %p178 = pneg %p60
        %p179 = pneg %p57
        %p180 = pneg %p81
        %p181 = pneg %p78
        %p182 = pneg %p102
        %p183 = pneg %p99
        %p184 = pneg %p128
        %p185 = pneg %p125
        %s186 = sand.u32 %s115, 1
        %s187 = scalar_lea.sflag [#allocation3], %s186
        %s188 = sand.u32 %s115, 1
        %s189 = smul.addr %s188, 1088
        %s190 = scalar_lea.vmem [#allocation2], %s189
        %p191 = scmp.lt.s32.totalorder %s18, 1
        %s192 = scalar_select %p191, %s18, 1
        %s193 = smul.addr %s192, 145
        %s194 = smul.addr %s193, 8
        %s195 = scalar_lea.vmem %s0, %s194
        %v196 = vld [vmem:[%s195] sm:$0xff]
        %v197 = vld [vmem:[%s195 + $0x8] sm:$0xff]
        %v198 = vld [vmem:[%s195 + $0x10] sm:$0xff]
        %v199 = vld [vmem:[%s195 + $0x18] sm:$0xff]
        %v200 = vld [vmem:[%s195 + $0x20] sm:$0xff]
        %v201 = vld [vmem:[%s195 + $0x28] sm:$0xff]
        %v202 = vld [vmem:[%s195 + $0x30] sm:$0xff]
        %v203 = vld [vmem:[%s195 + $0x38] sm:$0xff]
        %v204 = vld [vmem:[%s195 + $0x40] sm:$0xff]
        %v205 = vld [vmem:[%s195 + $0x48] sm:$0xff]
        %v206 = vld [vmem:[%s195 + $0x50] sm:$0xff]
        %v207 = vld [vmem:[%s195 + $0x58] sm:$0xff]
        %v208 = vld [vmem:[%s195 + $0x60] sm:$0xff]
        %v209 = vld [vmem:[%s195 + $0x68] sm:$0xff]
        %v210 = vld [vmem:[%s195 + $0x70] sm:$0xff]
        %v211 = vld [vmem:[%s195 + $0x78] sm:$0xff]
        %v212 = vld [vmem:[%s195 + $0x80] sm:$0xff]
        %v213 = vld [vmem:[%s195 + $0x88] sm:$0xff]
        %v214 = vld [vmem:[%s195 + $0x90] sm:$0xff]
        %v215 = vld [vmem:[%s195 + $0x98] sm:$0xff]
        %v216 = vld [vmem:[%s195 + $0xa0] sm:$0xff]
        %v217 = vld [vmem:[%s195 + $0xa8] sm:$0xff]
        %v218 = vld [vmem:[%s195 + $0xb0] sm:$0xff]
        %v219 = vld [vmem:[%s195 + $0xb8] sm:$0xff]
        %v220 = vld [vmem:[%s195 + $0xc0] sm:$0xff]
        %v221 = vld [vmem:[%s195 + $0xc8] sm:$0xff]
        %v222 = vld [vmem:[%s195 + $0xd0] sm:$0xff]
        %v223 = vld [vmem:[%s195 + $0xd8] sm:$0xff]
        %v224 = vld [vmem:[%s195 + $0xe0] sm:$0xff]
        %v225 = vld [vmem:[%s195 + $0xe8] sm:$0xff]
        %v226 = vld [vmem:[%s195 + $0xf0] sm:$0xff]
        %v227 = vld [vmem:[%s195 + $0xf8] sm:$0xff]
        %v228 = vld [vmem:[%s195 + $0x100] sm:$0xff]
        %v229 = vld [vmem:[%s195 + $0x108] sm:$0xff]
        %v230 = vld [vmem:[%s195 + $0x110] sm:$0xff]
        %v231 = vld [vmem:[%s195 + $0x118] sm:$0xff]
        %v232 = vld [vmem:[%s195 + $0x120] sm:$0xff]
        %v233 = vld [vmem:[%s195 + $0x128] sm:$0xff]
        %v234 = vld [vmem:[%s195 + $0x130] sm:$0xff]
        %v235 = vld [vmem:[%s195 + $0x138] sm:$0xff]
        %v236 = vld [vmem:[%s195 + $0x140] sm:$0xff]
        %v237 = vld [vmem:[%s195 + $0x148] sm:$0xff]
        %v238 = vld [vmem:[%s195 + $0x150] sm:$0xff]
        %v239 = vld [vmem:[%s195 + $0x158] sm:$0xff]
        %v240 = vld [vmem:[%s195 + $0x160] sm:$0xff]
        %v241 = vld [vmem:[%s195 + $0x168] sm:$0xff]
        %v242 = vld [vmem:[%s195 + $0x170] sm:$0xff]
        %v243 = vld [vmem:[%s195 + $0x178] sm:$0xff]
        %v244 = vld [vmem:[%s195 + $0x180] sm:$0xff]
        %v245 = vld [vmem:[%s195 + $0x188] sm:$0xff]
        %v246 = vld [vmem:[%s195 + $0x190] sm:$0xff]
        %v247 = vld [vmem:[%s195 + $0x198] sm:$0xff]
        %v248 = vld [vmem:[%s195 + $0x1a0] sm:$0xff]
        %v249 = vld [vmem:[%s195 + $0x1a8] sm:$0xff]
        %v250 = vld [vmem:[%s195 + $0x1b0] sm:$0xff]
        %v251 = vld [vmem:[%s195 + $0x1b8] sm:$0xff]
        %v252 = vld [vmem:[%s195 + $0x1c0] sm:$0xff]
        %v253 = vld [vmem:[%s195 + $0x1c8] sm:$0xff]
        %v254 = vld [vmem:[%s195 + $0x1d0] sm:$0xff]
        %v255 = vld [vmem:[%s195 + $0x1d8] sm:$0xff]
        %v256 = vld [vmem:[%s195 + $0x1e0] sm:$0xff]
        %v257 = vld [vmem:[%s195 + $0x1e8] sm:$0xff]
        %v258 = vld [vmem:[%s195 + $0x1f0] sm:$0xff]
        %v259 = vld [vmem:[%s195 + $0x1f8] sm:$0xff]
        %v260 = vld [vmem:[%s195 + $0x200] sm:$0xff]
        %v261 = vld [vmem:[%s195 + $0x208] sm:$0xff]
        %v262 = vld [vmem:[%s195 + $0x210] sm:$0xff]
        %v263 = vld [vmem:[%s195 + $0x218] sm:$0xff]
        %v264 = vld [vmem:[%s195 + $0x220] sm:$0xff]
        %v265 = vld [vmem:[%s195 + $0x228] sm:$0xff]
        %v266 = vld [vmem:[%s195 + $0x230] sm:$0xff]
        %v267 = vld [vmem:[%s195 + $0x238] sm:$0xff]
        %v268 = vld [vmem:[%s195 + $0x240] sm:$0xff]
        %v269 = vld [vmem:[%s195 + $0x248] sm:$0xff]
        %v270 = vld [vmem:[%s195 + $0x250] sm:$0xff]
        %v271 = vld [vmem:[%s195 + $0x258] sm:$0xff]
        %v272 = vld [vmem:[%s195 + $0x260] sm:$0xff]
        %v273 = vld [vmem:[%s195 + $0x268] sm:$0xff]
        %v274 = vld [vmem:[%s195 + $0x270] sm:$0xff]
        %v275 = vld [vmem:[%s195 + $0x278] sm:$0xff]
        %v276 = vld [vmem:[%s195 + $0x280] sm:$0xff]
        %v277 = vld [vmem:[%s195 + $0x288] sm:$0xff]
        %v278 = vld [vmem:[%s195 + $0x290] sm:$0xff]
        %v279 = vld [vmem:[%s195 + $0x298] sm:$0xff]
        %v280 = vld [vmem:[%s195 + $0x2a0] sm:$0xff]
        %v281 = vld [vmem:[%s195 + $0x2a8] sm:$0xff]
        %v282 = vld [vmem:[%s195 + $0x2b0] sm:$0xff]
        %v283 = vld [vmem:[%s195 + $0x2b8] sm:$0xff]
        %v284 = vld [vmem:[%s195 + $0x2c0] sm:$0xff]
        %v285 = vld [vmem:[%s195 + $0x2c8] sm:$0xff]
        %v286 = vld [vmem:[%s195 + $0x2d0] sm:$0xff]
        %v287 = vld [vmem:[%s195 + $0x2d8] sm:$0xff]
        %v288 = vld [vmem:[%s195 + $0x2e0] sm:$0xff]
        %v289 = vld [vmem:[%s195 + $0x2e8] sm:$0xff]
        %v290 = vld [vmem:[%s195 + $0x2f0] sm:$0xff]
        %v291 = vld [vmem:[%s195 + $0x2f8] sm:$0xff]
        %v292 = vld [vmem:[%s195 + $0x300] sm:$0xff]
        %v293 = vld [vmem:[%s195 + $0x308] sm:$0xff]
        %v294 = vld [vmem:[%s195 + $0x310] sm:$0xff]
        %v295 = vld [vmem:[%s195 + $0x318] sm:$0xff]
        %v296 = vld [vmem:[%s195 + $0x320] sm:$0xff]
        %v297 = vld [vmem:[%s195 + $0x328] sm:$0xff]
        %v298 = vld [vmem:[%s195 + $0x330] sm:$0xff]
        %v299 = vld [vmem:[%s195 + $0x338] sm:$0xff]
        %v300 = vld [vmem:[%s195 + $0x340] sm:$0xff]
        %v301 = vld [vmem:[%s195 + $0x348] sm:$0xff]
        %v302 = vld [vmem:[%s195 + $0x350] sm:$0xff]
        %v303 = vld [vmem:[%s195 + $0x358] sm:$0xff]
        %v304 = vld [vmem:[%s195 + $0x360] sm:$0xff]
        %v305 = vld [vmem:[%s195 + $0x368] sm:$0xff]
        %v306 = vld [vmem:[%s195 + $0x370] sm:$0xff]
        %v307 = vld [vmem:[%s195 + $0x378] sm:$0xff]
        %v308 = vld [vmem:[%s195 + $0x380] sm:$0xff]
        %v309 = vld [vmem:[%s195 + $0x388] sm:$0xff]
        %v310 = vld [vmem:[%s195 + $0x390] sm:$0xff]
        %v311 = vld [vmem:[%s195 + $0x398] sm:$0xff]
        %v312 = vld [vmem:[%s195 + $0x3a0] sm:$0xff]
        %v313 = vld [vmem:[%s195 + $0x3a8] sm:$0xff]
        %v314 = vld [vmem:[%s195 + $0x3b0] sm:$0xff]
        %v315 = vld [vmem:[%s195 + $0x3b8] sm:$0xff]
        %v316 = vld [vmem:[%s195 + $0x3c0] sm:$0xff]
        %v317 = vld [vmem:[%s195 + $0x3c8] sm:$0xff]
        %v318 = vld [vmem:[%s195 + $0x3d0] sm:$0xff]
        %v319 = vld [vmem:[%s195 + $0x3d8] sm:$0xff]
        %v320 = vld [vmem:[%s195 + $0x3e0] sm:$0xff]
        %v321 = vld [vmem:[%s195 + $0x3e8] sm:$0xff]
        %v322 = vld [vmem:[%s195 + $0x3f0] sm:$0xff]
        %v323 = vld [vmem:[%s195 + $0x3f8] sm:$0xff]
        %v324 = vld [vmem:[%s195 + $0x400] sm:$0xff]
        %v325 = vld [vmem:[%s195 + $0x408] sm:$0xff]
        %v326 = vld [vmem:[%s195 + $0x410] sm:$0xff]
        %v327 = vld [vmem:[%s195 + $0x418] sm:$0xff]
        %v328 = vld [vmem:[%s195 + $0x420] sm:$0xff]
        %v329 = vld [vmem:[%s195 + $0x428] sm:$0xff]
        %v330 = vld [vmem:[%s195 + $0x430] sm:$0xff]
        %v331 = vld [vmem:[%s195 + $0x438] sm:$0xff]
        %v332 = vld [vmem:[%s1] sm:$0xff]
        %v333 = vld [vmem:[%s1 + $0x8] sm:$0xff]
        %v334 = vld [vmem:[%s1 + $0x10] sm:$0xff]
        %v335 = vld [vmem:[%s1 + $0x18] sm:$0xff]
        %v336 = vld [vmem:[%s1 + $0x20] sm:$0xff]
        %v337 = vld [vmem:[%s1 + $0x28] sm:$0xff]
        %v338 = vld [vmem:[%s1 + $0x30] sm:$0xff]
        %v339 = vld [vmem:[%s1 + $0x38] sm:$0xff]
        %v340 = vld [vmem:[%s1 + $0x40] sm:$0xff]
        %v341 = vld [vmem:[%s1 + $0x48] sm:$0xff]
        %v342 = vld [vmem:[%s1 + $0x50] sm:$0xff]
        %v343 = vld [vmem:[%s1 + $0x58] sm:$0xff]
        %v344 = vld [vmem:[%s1 + $0x60] sm:$0xff]
        %v345 = vld [vmem:[%s1 + $0x68] sm:$0xff]
        %v346 = vld [vmem:[%s1 + $0x70] sm:$0xff]
        %v347 = vld [vmem:[%s1 + $0x78] sm:$0xff]
        %v348 = vld [vmem:[%s195 + $0x1] sm:$0xff]
        %v349 = vld [vmem:[%s195 + $0x9] sm:$0xff]
        %v350 = vld [vmem:[%s195 + $0x11] sm:$0xff]
        %v351 = vld [vmem:[%s195 + $0x19] sm:$0xff]
        %v352 = vld [vmem:[%s195 + $0x21] sm:$0xff]
        %v353 = vld [vmem:[%s195 + $0x29] sm:$0xff]
        %v354 = vld [vmem:[%s195 + $0x31] sm:$0xff]
        %v355 = vld [vmem:[%s195 + $0x39] sm:$0xff]
        %v356 = vld [vmem:[%s195 + $0x41] sm:$0xff]
        %v357 = vld [vmem:[%s195 + $0x49] sm:$0xff]
        %v358 = vld [vmem:[%s195 + $0x51] sm:$0xff]
        %v359 = vld [vmem:[%s195 + $0x59] sm:$0xff]
        %v360 = vld [vmem:[%s195 + $0x61] sm:$0xff]
        %v361 = vld [vmem:[%s195 + $0x69] sm:$0xff]
        %v362 = vld [vmem:[%s195 + $0x71] sm:$0xff]
        %v363 = vld [vmem:[%s195 + $0x79] sm:$0xff]
        %v364 = vld [vmem:[%s195 + $0x81] sm:$0xff]
        %v365 = vld [vmem:[%s195 + $0x89] sm:$0xff]
        %v366 = vld [vmem:[%s195 + $0x91] sm:$0xff]
        %v367 = vld [vmem:[%s195 + $0x99] sm:$0xff]
        %v368 = vld [vmem:[%s195 + $0xa1] sm:$0xff]
        %v369 = vld [vmem:[%s195 + $0xa9] sm:$0xff]
        %v370 = vld [vmem:[%s195 + $0xb1] sm:$0xff]
        %v371 = vld [vmem:[%s195 + $0xb9] sm:$0xff]
        %v372 = vld [vmem:[%s195 + $0xc1] sm:$0xff]
        %v373 = vld [vmem:[%s195 + $0xc9] sm:$0xff]
        %v374 = vld [vmem:[%s195 + $0xd1] sm:$0xff]
        %v375 = vld [vmem:[%s195 + $0xd9] sm:$0xff]
        %v376 = vld [vmem:[%s195 + $0xe1] sm:$0xff]
        %v377 = vld [vmem:[%s195 + $0xe9] sm:$0xff]
        %v378 = vld [vmem:[%s195 + $0xf1] sm:$0xff]
        %v379 = vld [vmem:[%s195 + $0xf9] sm:$0xff]
        %v380 = vld [vmem:[%s195 + $0x101] sm:$0xff]
        %v381 = vld [vmem:[%s195 + $0x109] sm:$0xff]
        %v382 = vld [vmem:[%s195 + $0x111] sm:$0xff]
        %v383 = vld [vmem:[%s195 + $0x119] sm:$0xff]
        %v384 = vld [vmem:[%s195 + $0x121] sm:$0xff]
        %v385 = vld [vmem:[%s195 + $0x129] sm:$0xff]
        %v386 = vld [vmem:[%s195 + $0x131] sm:$0xff]
        %v387 = vld [vmem:[%s195 + $0x139] sm:$0xff]
        %v388 = vld [vmem:[%s195 + $0x141] sm:$0xff]
        %v389 = vld [vmem:[%s195 + $0x149] sm:$0xff]
        %v390 = vld [vmem:[%s195 + $0x151] sm:$0xff]
        %v391 = vld [vmem:[%s195 + $0x159] sm:$0xff]
        %v392 = vld [vmem:[%s195 + $0x161] sm:$0xff]
        %v393 = vld [vmem:[%s195 + $0x169] sm:$0xff]
        %v394 = vld [vmem:[%s195 + $0x171] sm:$0xff]
        %v395 = vld [vmem:[%s195 + $0x179] sm:$0xff]
        %v396 = vld [vmem:[%s195 + $0x181] sm:$0xff]
        %v397 = vld [vmem:[%s195 + $0x189] sm:$0xff]
        %v398 = vld [vmem:[%s195 + $0x191] sm:$0xff]
        %v399 = vld [vmem:[%s195 + $0x199] sm:$0xff]
        %v400 = vld [vmem:[%s195 + $0x1a1] sm:$0xff]
        %v401 = vld [vmem:[%s195 + $0x1a9] sm:$0xff]
        %v402 = vld [vmem:[%s195 + $0x1b1] sm:$0xff]
        %v403 = vld [vmem:[%s195 + $0x1b9] sm:$0xff]
        %v404 = vld [vmem:[%s195 + $0x1c1] sm:$0xff]
        %v405 = vld [vmem:[%s195 + $0x1c9] sm:$0xff]
        %v406 = vld [vmem:[%s195 + $0x1d1] sm:$0xff]
        %v407 = vld [vmem:[%s195 + $0x1d9] sm:$0xff]
        %v408 = vld [vmem:[%s195 + $0x1e1] sm:$0xff]
        %v409 = vld [vmem:[%s195 + $0x1e9] sm:$0xff]
        %v410 = vld [vmem:[%s195 + $0x1f1] sm:$0xff]
        %v411 = vld [vmem:[%s195 + $0x1f9] sm:$0xff]
        %v412 = vld [vmem:[%s195 + $0x201] sm:$0xff]
        %v413 = vld [vmem:[%s195 + $0x209] sm:$0xff]
        %v414 = vld [vmem:[%s195 + $0x211] sm:$0xff]
        %v415 = vld [vmem:[%s195 + $0x219] sm:$0xff]
        %v416 = vld [vmem:[%s195 + $0x221] sm:$0xff]
        %v417 = vld [vmem:[%s195 + $0x229] sm:$0xff]
        %v418 = vld [vmem:[%s195 + $0x231] sm:$0xff]
        %v419 = vld [vmem:[%s195 + $0x239] sm:$0xff]
        %v420 = vld [vmem:[%s195 + $0x241] sm:$0xff]
        %v421 = vld [vmem:[%s195 + $0x249] sm:$0xff]
        %v422 = vld [vmem:[%s195 + $0x251] sm:$0xff]
        %v423 = vld [vmem:[%s195 + $0x259] sm:$0xff]
        %v424 = vld [vmem:[%s195 + $0x261] sm:$0xff]
        %v425 = vld [vmem:[%s195 + $0x269] sm:$0xff]
        %v426 = vld [vmem:[%s195 + $0x271] sm:$0xff]
        %v427 = vld [vmem:[%s195 + $0x279] sm:$0xff]
        %v428 = vld [vmem:[%s195 + $0x281] sm:$0xff]
        %v429 = vld [vmem:[%s195 + $0x289] sm:$0xff]
        %v430 = vld [vmem:[%s195 + $0x291] sm:$0xff]
        %v431 = vld [vmem:[%s195 + $0x299] sm:$0xff]
        %v432 = vld [vmem:[%s195 + $0x2a1] sm:$0xff]
        %v433 = vld [vmem:[%s195 + $0x2a9] sm:$0xff]
        %v434 = vld [vmem:[%s195 + $0x2b1] sm:$0xff]
        %v435 = vld [vmem:[%s195 + $0x2b9] sm:$0xff]
        %v436 = vld [vmem:[%s195 + $0x2c1] sm:$0xff]
        %v437 = vld [vmem:[%s195 + $0x2c9] sm:$0xff]
        %v438 = vld [vmem:[%s195 + $0x2d1] sm:$0xff]
        %v439 = vld [vmem:[%s195 + $0x2d9] sm:$0xff]
        %v440 = vld [vmem:[%s195 + $0x2e1] sm:$0xff]
        %v441 = vld [vmem:[%s195 + $0x2e9] sm:$0xff]
        %v442 = vld [vmem:[%s195 + $0x2f1] sm:$0xff]
        %v443 = vld [vmem:[%s195 + $0x2f9] sm:$0xff]
        %v444 = vld [vmem:[%s195 + $0x301] sm:$0xff]
        %v445 = vld [vmem:[%s195 + $0x309] sm:$0xff]
        %v446 = vld [vmem:[%s195 + $0x311] sm:$0xff]
        %v447 = vld [vmem:[%s195 + $0x319] sm:$0xff]
        %v448 = vld [vmem:[%s195 + $0x321] sm:$0xff]
        %v449 = vld [vmem:[%s195 + $0x329] sm:$0xff]
        %v450 = vld [vmem:[%s195 + $0x331] sm:$0xff]
        %v451 = vld [vmem:[%s195 + $0x339] sm:$0xff]
        %v452 = vld [vmem:[%s195 + $0x341] sm:$0xff]
        %v453 = vld [vmem:[%s195 + $0x349] sm:$0xff]
        %v454 = vld [vmem:[%s195 + $0x351] sm:$0xff]
        %v455 = vld [vmem:[%s195 + $0x359] sm:$0xff]
        %v456 = vld [vmem:[%s195 + $0x361] sm:$0xff]
        %v457 = vld [vmem:[%s195 + $0x369] sm:$0xff]
        %v458 = vld [vmem:[%s195 + $0x371] sm:$0xff]
        %v459 = vld [vmem:[%s195 + $0x379] sm:$0xff]
        %v460 = vld [vmem:[%s195 + $0x381] sm:$0xff]
        %v461 = vld [vmem:[%s195 + $0x389] sm:$0xff]
        %v462 = vld [vmem:[%s195 + $0x391] sm:$0xff]
        %v463 = vld [vmem:[%s195 + $0x399] sm:$0xff]
        %v464 = vld [vmem:[%s195 + $0x3a1] sm:$0xff]
        %v465 = vld [vmem:[%s195 + $0x3a9] sm:$0xff]
        %v466 = vld [vmem:[%s195 + $0x3b1] sm:$0xff]
        %v467 = vld [vmem:[%s195 + $0x3b9] sm:$0xff]
        %v468 = vld [vmem:[%s195 + $0x3c1] sm:$0xff]
        %v469 = vld [vmem:[%s195 + $0x3c9] sm:$0xff]
        %v470 = vld [vmem:[%s195 + $0x3d1] sm:$0xff]
        %v471 = vld [vmem:[%s195 + $0x3d9] sm:$0xff]
        %v472 = vld [vmem:[%s195 + $0x3e1] sm:$0xff]
        %v473 = vld [vmem:[%s195 + $0x3e9] sm:$0xff]
        %v474 = vld [vmem:[%s195 + $0x3f1] sm:$0xff]
        %v475 = vld [vmem:[%s195 + $0x3f9] sm:$0xff]
        %v476 = vld [vmem:[%s195 + $0x401] sm:$0xff]
        %v477 = vld [vmem:[%s195 + $0x409] sm:$0xff]
        %v478 = vld [vmem:[%s195 + $0x411] sm:$0xff]
        %v479 = vld [vmem:[%s195 + $0x419] sm:$0xff]
        %v480 = vld [vmem:[%s195 + $0x421] sm:$0xff]
        %v481 = vld [vmem:[%s195 + $0x429] sm:$0xff]
        %v482 = vld [vmem:[%s195 + $0x431] sm:$0xff]
        %v483 = vld [vmem:[%s195 + $0x439] sm:$0xff]
        %s484 = scalar_lea.vmem %s1, 128
        %v485 = vld [vmem:[%s484] sm:$0xff]
        %v486 = vld [vmem:[%s484 + $0x8] sm:$0xff]
        %v487 = vld [vmem:[%s484 + $0x10] sm:$0xff]
        %v488 = vld [vmem:[%s484 + $0x18] sm:$0xff]
        %v489 = vld [vmem:[%s484 + $0x20] sm:$0xff]
        %v490 = vld [vmem:[%s484 + $0x28] sm:$0xff]
        %v491 = vld [vmem:[%s484 + $0x30] sm:$0xff]
        %v492 = vld [vmem:[%s484 + $0x38] sm:$0xff]
        %v493 = vld [vmem:[%s484 + $0x40] sm:$0xff]
        %v494 = vld [vmem:[%s484 + $0x48] sm:$0xff]
        %v495 = vld [vmem:[%s484 + $0x50] sm:$0xff]
        %v496 = vld [vmem:[%s484 + $0x58] sm:$0xff]
        %v497 = vld [vmem:[%s484 + $0x60] sm:$0xff]
        %v498 = vld [vmem:[%s484 + $0x68] sm:$0xff]
        %v499 = vld [vmem:[%s484 + $0x70] sm:$0xff]
        %v500 = vld [vmem:[%s484 + $0x78] sm:$0xff]
        %501 = vmatpush.msra.mxu0 %v500
        %502 = vmatpush.msra.mxu0 %v499
        %503 = vmatpush.msra.mxu0 %v498
        %504 = vmatpush.msra.mxu0 %v497
        %505 = vmatpush.msra.mxu0 %v496
        %506 = vmatpush.msra.mxu0 %v495
        %507 = vmatpush.msra.mxu0 %v494
        %508 = vmatpush.msra.mxu0 %v493
        %509 = vmatpush.msra.mxu0 %v492
        %510 = vmatpush.msra.mxu0 %v491
        %511 = vmatpush.msra.mxu0 %v490
        %512 = vmatpush.msra.mxu0 %v489
        %513 = vmatpush.msra.mxu0 %v488
        %514 = vmatpush.msra.mxu0 %v487
        %515 = vmatpush.msra.mxu0 %v486
        %516 = vmatpush.msra.mxu0 %v485
        %517 = vmatmul.f32.gmra.mxu0 %v348
        %v518 = vpop.f32.mrf.mxu0
        %v519 = vadd.f32 0.0, %v518
        %520 = vmatmul.f32.gmra.mxu0 %v349
        %v521 = vpop.f32.mrf.mxu0
        %v522 = vadd.f32 0.0, %v521
        %523 = vmatmul.f32.gmra.mxu0 %v350
        %v524 = vpop.f32.mrf.mxu0
        %v525 = vadd.f32 0.0, %v524
        %526 = vmatmul.f32.gmra.mxu0 %v351
        %v527 = vpop.f32.mrf.mxu0
        %v528 = vadd.f32 0.0, %v527
        %529 = vmatmul.f32.gmra.mxu0 %v352
        %v530 = vpop.f32.mrf.mxu0
        %v531 = vadd.f32 0.0, %v530
        %532 = vmatmul.f32.gmra.mxu0 %v353
        %v533 = vpop.f32.mrf.mxu0
        %v534 = vadd.f32 0.0, %v533
        %535 = vmatmul.f32.gmra.mxu0 %v354
        %v536 = vpop.f32.mrf.mxu0
        %v537 = vadd.f32 0.0, %v536
        %538 = vmatmul.f32.gmra.mxu0 %v355
        %v539 = vpop.f32.mrf.mxu0
        %v540 = vadd.f32 0.0, %v539
        %541 = vmatmul.f32.gmra.mxu0 %v356
        %v542 = vpop.f32.mrf.mxu0
        %v543 = vadd.f32 0.0, %v542
        %544 = vmatmul.f32.gmra.mxu0 %v357
        %v545 = vpop.f32.mrf.mxu0
        %v546 = vadd.f32 0.0, %v545
        %547 = vmatmul.f32.gmra.mxu0 %v358
        %v548 = vpop.f32.mrf.mxu0
        %v549 = vadd.f32 0.0, %v548
        %550 = vmatmul.f32.gmra.mxu0 %v359
        %v551 = vpop.f32.mrf.mxu0
        %v552 = vadd.f32 0.0, %v551
        %553 = vmatmul.f32.gmra.mxu0 %v360
        %v554 = vpop.f32.mrf.mxu0
        %v555 = vadd.f32 0.0, %v554
        %556 = vmatmul.f32.gmra.mxu0 %v361
        %v557 = vpop.f32.mrf.mxu0
        %v558 = vadd.f32 0.0, %v557
        %559 = vmatmul.f32.gmra.mxu0 %v362
        %v560 = vpop.f32.mrf.mxu0
        %v561 = vadd.f32 0.0, %v560
        %562 = vmatmul.f32.gmra.mxu0 %v363
        %v563 = vpop.f32.mrf.mxu0
        %v564 = vadd.f32 0.0, %v563
        %565 = vmatmul.f32.gmra.mxu0 %v364
        %v566 = vpop.f32.mrf.mxu0
        %v567 = vadd.f32 0.0, %v566
        %568 = vmatmul.f32.gmra.mxu0 %v365
        %v569 = vpop.f32.mrf.mxu0
        %v570 = vadd.f32 0.0, %v569
        %571 = vmatmul.f32.gmra.mxu0 %v366
        %v572 = vpop.f32.mrf.mxu0
        %v573 = vadd.f32 0.0, %v572
        %574 = vmatmul.f32.gmra.mxu0 %v367
        %v575 = vpop.f32.mrf.mxu0
        %v576 = vadd.f32 0.0, %v575
        %577 = vmatmul.f32.gmra.mxu0 %v368
        %v578 = vpop.f32.mrf.mxu0
        %v579 = vadd.f32 0.0, %v578
        %580 = vmatmul.f32.gmra.mxu0 %v369
        %v581 = vpop.f32.mrf.mxu0
        %v582 = vadd.f32 0.0, %v581
        %583 = vmatmul.f32.gmra.mxu0 %v370
        %v584 = vpop.f32.mrf.mxu0
        %v585 = vadd.f32 0.0, %v584
        %586 = vmatmul.f32.gmra.mxu0 %v371
        %v587 = vpop.f32.mrf.mxu0
        %v588 = vadd.f32 0.0, %v587
        %589 = vmatmul.f32.gmra.mxu0 %v372
        %v590 = vpop.f32.mrf.mxu0
        %v591 = vadd.f32 0.0, %v590
        %592 = vmatmul.f32.gmra.mxu0 %v373
        %v593 = vpop.f32.mrf.mxu0
        %v594 = vadd.f32 0.0, %v593
        %595 = vmatmul.f32.gmra.mxu0 %v374
        %v596 = vpop.f32.mrf.mxu0
        %v597 = vadd.f32 0.0, %v596
        %598 = vmatmul.f32.gmra.mxu0 %v375
        %v599 = vpop.f32.mrf.mxu0
        %v600 = vadd.f32 0.0, %v599
        %601 = vmatmul.f32.gmra.mxu0 %v376
        %v602 = vpop.f32.mrf.mxu0
        %v603 = vadd.f32 0.0, %v602
        %604 = vmatmul.f32.gmra.mxu0 %v377
        %v605 = vpop.f32.mrf.mxu0
        %v606 = vadd.f32 0.0, %v605
        %607 = vmatmul.f32.gmra.mxu0 %v378
        %v608 = vpop.f32.mrf.mxu0
        %v609 = vadd.f32 0.0, %v608
        %610 = vmatmul.f32.gmra.mxu0 %v379
        %v611 = vpop.f32.mrf.mxu0
        %v612 = vadd.f32 0.0, %v611
        %613 = vmatmul.f32.gmra.mxu0 %v380
        %v614 = vpop.f32.mrf.mxu0
        %v615 = vadd.f32 0.0, %v614
        %616 = vmatmul.f32.gmra.mxu0 %v381
        %v617 = vpop.f32.mrf.mxu0
        %v618 = vadd.f32 0.0, %v617
        %619 = vmatmul.f32.gmra.mxu0 %v382
        %v620 = vpop.f32.mrf.mxu0
        %v621 = vadd.f32 0.0, %v620
        %622 = vmatmul.f32.gmra.mxu0 %v383
        %v623 = vpop.f32.mrf.mxu0
        %v624 = vadd.f32 0.0, %v623
        %625 = vmatmul.f32.gmra.mxu0 %v384
        %v626 = vpop.f32.mrf.mxu0
        %v627 = vadd.f32 0.0, %v626
        %628 = vmatmul.f32.gmra.mxu0 %v385
        %v629 = vpop.f32.mrf.mxu0
        %v630 = vadd.f32 0.0, %v629
        %631 = vmatmul.f32.gmra.mxu0 %v386
        %v632 = vpop.f32.mrf.mxu0
        %v633 = vadd.f32 0.0, %v632
        %634 = vmatmul.f32.gmra.mxu0 %v387
        %v635 = vpop.f32.mrf.mxu0
        %v636 = vadd.f32 0.0, %v635
        %637 = vmatmul.f32.gmra.mxu0 %v388
        %v638 = vpop.f32.mrf.mxu0
        %v639 = vadd.f32 0.0, %v638
        %640 = vmatmul.f32.gmra.mxu0 %v389
        %v641 = vpop.f32.mrf.mxu0
        %v642 = vadd.f32 0.0, %v641
        %643 = vmatmul.f32.gmra.mxu0 %v390
        %v644 = vpop.f32.mrf.mxu0
        %v645 = vadd.f32 0.0, %v644
        %646 = vmatmul.f32.gmra.mxu0 %v391
        %v647 = vpop.f32.mrf.mxu0
        %v648 = vadd.f32 0.0, %v647
        %649 = vmatmul.f32.gmra.mxu0 %v392
        %v650 = vpop.f32.mrf.mxu0
        %v651 = vadd.f32 0.0, %v650
        %652 = vmatmul.f32.gmra.mxu0 %v393
        %v653 = vpop.f32.mrf.mxu0
        %v654 = vadd.f32 0.0, %v653
        %655 = vmatmul.f32.gmra.mxu0 %v394
        %v656 = vpop.f32.mrf.mxu0
        %v657 = vadd.f32 0.0, %v656
        %658 = vmatmul.f32.gmra.mxu0 %v395
        %v659 = vpop.f32.mrf.mxu0
        %v660 = vadd.f32 0.0, %v659
        %661 = vmatmul.f32.gmra.mxu0 %v396
        %v662 = vpop.f32.mrf.mxu0
        %v663 = vadd.f32 0.0, %v662
        %664 = vmatmul.f32.gmra.mxu0 %v397
        %v665 = vpop.f32.mrf.mxu0
        %v666 = vadd.f32 0.0, %v665
        %667 = vmatmul.f32.gmra.mxu0 %v398
        %v668 = vpop.f32.mrf.mxu0
        %v669 = vadd.f32 0.0, %v668
        %670 = vmatmul.f32.gmra.mxu0 %v399
        %v671 = vpop.f32.mrf.mxu0
        %v672 = vadd.f32 0.0, %v671
        %673 = vmatmul.f32.gmra.mxu0 %v400
        %v674 = vpop.f32.mrf.mxu0
        %v675 = vadd.f32 0.0, %v674
        %676 = vmatmul.f32.gmra.mxu0 %v401
        %v677 = vpop.f32.mrf.mxu0
        %v678 = vadd.f32 0.0, %v677
        %679 = vmatmul.f32.gmra.mxu0 %v402
        %v680 = vpop.f32.mrf.mxu0
        %v681 = vadd.f32 0.0, %v680
        %682 = vmatmul.f32.gmra.mxu0 %v403
        %v683 = vpop.f32.mrf.mxu0
        %v684 = vadd.f32 0.0, %v683
        %685 = vmatmul.f32.gmra.mxu0 %v404
        %v686 = vpop.f32.mrf.mxu0
        %v687 = vadd.f32 0.0, %v686
        %688 = vmatmul.f32.gmra.mxu0 %v405
        %v689 = vpop.f32.mrf.mxu0
        %v690 = vadd.f32 0.0, %v689
        %691 = vmatmul.f32.gmra.mxu0 %v406
        %v692 = vpop.f32.mrf.mxu0
        %v693 = vadd.f32 0.0, %v692
        %694 = vmatmul.f32.gmra.mxu0 %v407
        %v695 = vpop.f32.mrf.mxu0
        %v696 = vadd.f32 0.0, %v695
        %697 = vmatmul.f32.gmra.mxu0 %v408
        %v698 = vpop.f32.mrf.mxu0
        %v699 = vadd.f32 0.0, %v698
        %700 = vmatmul.f32.gmra.mxu0 %v409
        %v701 = vpop.f32.mrf.mxu0
        %v702 = vadd.f32 0.0, %v701
        %703 = vmatmul.f32.gmra.mxu0 %v410
        %v704 = vpop.f32.mrf.mxu0
        %v705 = vadd.f32 0.0, %v704
        %706 = vmatmul.f32.gmra.mxu0 %v411
        %v707 = vpop.f32.mrf.mxu0
        %v708 = vadd.f32 0.0, %v707
        %709 = vmatmul.f32.gmra.mxu0 %v412
        %v710 = vpop.f32.mrf.mxu0
        %v711 = vadd.f32 0.0, %v710
        %712 = vmatmul.f32.gmra.mxu0 %v413
        %v713 = vpop.f32.mrf.mxu0
        %v714 = vadd.f32 0.0, %v713
        %715 = vmatmul.f32.gmra.mxu0 %v414
        %v716 = vpop.f32.mrf.mxu0
        %v717 = vadd.f32 0.0, %v716
        %718 = vmatmul.f32.gmra.mxu0 %v415
        %v719 = vpop.f32.mrf.mxu0
        %v720 = vadd.f32 0.0, %v719
        %721 = vmatmul.f32.gmra.mxu0 %v416
        %v722 = vpop.f32.mrf.mxu0
        %v723 = vadd.f32 0.0, %v722
        %724 = vmatmul.f32.gmra.mxu0 %v417
        %v725 = vpop.f32.mrf.mxu0
        %v726 = vadd.f32 0.0, %v725
        %727 = vmatmul.f32.gmra.mxu0 %v418
        %v728 = vpop.f32.mrf.mxu0
        %v729 = vadd.f32 0.0, %v728
        %730 = vmatmul.f32.gmra.mxu0 %v419
        %v731 = vpop.f32.mrf.mxu0
        %v732 = vadd.f32 0.0, %v731
        %733 = vmatmul.f32.gmra.mxu0 %v420
        %v734 = vpop.f32.mrf.mxu0
        %v735 = vadd.f32 0.0, %v734
        %736 = vmatmul.f32.gmra.mxu0 %v421
        %v737 = vpop.f32.mrf.mxu0
        %v738 = vadd.f32 0.0, %v737
        %739 = vmatmul.f32.gmra.mxu0 %v422
        %v740 = vpop.f32.mrf.mxu0
        %v741 = vadd.f32 0.0, %v740
        %742 = vmatmul.f32.gmra.mxu0 %v423
        %v743 = vpop.f32.mrf.mxu0
        %v744 = vadd.f32 0.0, %v743
        %745 = vmatmul.f32.gmra.mxu0 %v424
        %v746 = vpop.f32.mrf.mxu0
        %v747 = vadd.f32 0.0, %v746
        %748 = vmatmul.f32.gmra.mxu0 %v425
        %v749 = vpop.f32.mrf.mxu0
        %v750 = vadd.f32 0.0, %v749
        %751 = vmatmul.f32.gmra.mxu0 %v426
        %v752 = vpop.f32.mrf.mxu0
        %v753 = vadd.f32 0.0, %v752
        %754 = vmatmul.f32.gmra.mxu0 %v427
        %v755 = vpop.f32.mrf.mxu0
        %v756 = vadd.f32 0.0, %v755
        %757 = vmatmul.f32.gmra.mxu0 %v428
        %v758 = vpop.f32.mrf.mxu0
        %v759 = vadd.f32 0.0, %v758
        %760 = vmatmul.f32.gmra.mxu0 %v429
        %v761 = vpop.f32.mrf.mxu0
        %v762 = vadd.f32 0.0, %v761
        %763 = vmatmul.f32.gmra.mxu0 %v430
        %v764 = vpop.f32.mrf.mxu0
        %v765 = vadd.f32 0.0, %v764
        %766 = vmatmul.f32.gmra.mxu0 %v431
        %v767 = vpop.f32.mrf.mxu0
        %v768 = vadd.f32 0.0, %v767
        %769 = vmatmul.f32.gmra.mxu0 %v432
        %v770 = vpop.f32.mrf.mxu0
        %v771 = vadd.f32 0.0, %v770
        %772 = vmatmul.f32.gmra.mxu0 %v433
        %v773 = vpop.f32.mrf.mxu0
        %v774 = vadd.f32 0.0, %v773
        %775 = vmatmul.f32.gmra.mxu0 %v434
        %v776 = vpop.f32.mrf.mxu0
        %v777 = vadd.f32 0.0, %v776
        %778 = vmatmul.f32.gmra.mxu0 %v435
        %v779 = vpop.f32.mrf.mxu0
        %v780 = vadd.f32 0.0, %v779
        %781 = vmatmul.f32.gmra.mxu0 %v436
        %v782 = vpop.f32.mrf.mxu0
        %v783 = vadd.f32 0.0, %v782
        %784 = vmatmul.f32.gmra.mxu0 %v437
        %v785 = vpop.f32.mrf.mxu0
        %v786 = vadd.f32 0.0, %v785
        %787 = vmatmul.f32.gmra.mxu0 %v438
        %v788 = vpop.f32.mrf.mxu0
        %v789 = vadd.f32 0.0, %v788
        %790 = vmatmul.f32.gmra.mxu0 %v439
        %v791 = vpop.f32.mrf.mxu0
        %v792 = vadd.f32 0.0, %v791
        %793 = vmatmul.f32.gmra.mxu0 %v440
        %v794 = vpop.f32.mrf.mxu0
        %v795 = vadd.f32 0.0, %v794
        %796 = vmatmul.f32.gmra.mxu0 %v441
        %v797 = vpop.f32.mrf.mxu0
        %v798 = vadd.f32 0.0, %v797
        %799 = vmatmul.f32.gmra.mxu0 %v442
        %v800 = vpop.f32.mrf.mxu0
        %v801 = vadd.f32 0.0, %v800
        %802 = vmatmul.f32.gmra.mxu0 %v443
        %v803 = vpop.f32.mrf.mxu0
        %v804 = vadd.f32 0.0, %v803
        %805 = vmatmul.f32.gmra.mxu0 %v444
        %v806 = vpop.f32.mrf.mxu0
        %v807 = vadd.f32 0.0, %v806
        %808 = vmatmul.f32.gmra.mxu0 %v445
        %v809 = vpop.f32.mrf.mxu0
        %v810 = vadd.f32 0.0, %v809
        %811 = vmatmul.f32.gmra.mxu0 %v446
        %v812 = vpop.f32.mrf.mxu0
        %v813 = vadd.f32 0.0, %v812
        %814 = vmatmul.f32.gmra.mxu0 %v447
        %v815 = vpop.f32.mrf.mxu0
        %v816 = vadd.f32 0.0, %v815
        %817 = vmatmul.f32.gmra.mxu0 %v448
        %v818 = vpop.f32.mrf.mxu0
        %v819 = vadd.f32 0.0, %v818
        %820 = vmatmul.f32.gmra.mxu0 %v449
        %v821 = vpop.f32.mrf.mxu0
        %v822 = vadd.f32 0.0, %v821
        %823 = vmatmul.f32.gmra.mxu0 %v450
        %v824 = vpop.f32.mrf.mxu0
        %v825 = vadd.f32 0.0, %v824
        %826 = vmatmul.f32.gmra.mxu0 %v451
        %v827 = vpop.f32.mrf.mxu0
        %v828 = vadd.f32 0.0, %v827
        %829 = vmatmul.f32.gmra.mxu0 %v452
        %v830 = vpop.f32.mrf.mxu0
        %v831 = vadd.f32 0.0, %v830
        %832 = vmatmul.f32.gmra.mxu0 %v453
        %v833 = vpop.f32.mrf.mxu0
        %v834 = vadd.f32 0.0, %v833
        %835 = vmatmul.f32.gmra.mxu0 %v454
        %v836 = vpop.f32.mrf.mxu0
        %v837 = vadd.f32 0.0, %v836
        %838 = vmatmul.f32.gmra.mxu0 %v455
        %v839 = vpop.f32.mrf.mxu0
        %v840 = vadd.f32 0.0, %v839
        %841 = vmatmul.f32.gmra.mxu0 %v456
        %v842 = vpop.f32.mrf.mxu0
        %v843 = vadd.f32 0.0, %v842
        %844 = vmatmul.f32.gmra.mxu0 %v457
        %v845 = vpop.f32.mrf.mxu0
        %v846 = vadd.f32 0.0, %v845
        %847 = vmatmul.f32.gmra.mxu0 %v458
        %v848 = vpop.f32.mrf.mxu0
        %v849 = vadd.f32 0.0, %v848
        %850 = vmatmul.f32.gmra.mxu0 %v459
        %v851 = vpop.f32.mrf.mxu0
        %v852 = vadd.f32 0.0, %v851
        %853 = vmatmul.f32.gmra.mxu0 %v460
        %v854 = vpop.f32.mrf.mxu0
        %v855 = vadd.f32 0.0, %v854
        %856 = vmatmul.f32.gmra.mxu0 %v461
        %v857 = vpop.f32.mrf.mxu0
        %v858 = vadd.f32 0.0, %v857
        %859 = vmatmul.f32.gmra.mxu0 %v462
        %v860 = vpop.f32.mrf.mxu0
        %v861 = vadd.f32 0.0, %v860
        %862 = vmatmul.f32.gmra.mxu0 %v463
        %v863 = vpop.f32.mrf.mxu0
        %v864 = vadd.f32 0.0, %v863
        %865 = vmatmul.f32.gmra.mxu0 %v464
        %v866 = vpop.f32.mrf.mxu0
        %v867 = vadd.f32 0.0, %v866
        %868 = vmatmul.f32.gmra.mxu0 %v465
        %v869 = vpop.f32.mrf.mxu0
        %v870 = vadd.f32 0.0, %v869
        %871 = vmatmul.f32.gmra.mxu0 %v466
        %v872 = vpop.f32.mrf.mxu0
        %v873 = vadd.f32 0.0, %v872
        %874 = vmatmul.f32.gmra.mxu0 %v467
        %v875 = vpop.f32.mrf.mxu0
        %v876 = vadd.f32 0.0, %v875
        %877 = vmatmul.f32.gmra.mxu0 %v468
        %v878 = vpop.f32.mrf.mxu0
        %v879 = vadd.f32 0.0, %v878
        %880 = vmatmul.f32.gmra.mxu0 %v469
        %v881 = vpop.f32.mrf.mxu0
        %v882 = vadd.f32 0.0, %v881
        %883 = vmatmul.f32.gmra.mxu0 %v470
        %v884 = vpop.f32.mrf.mxu0
        %v885 = vadd.f32 0.0, %v884
        %886 = vmatmul.f32.gmra.mxu0 %v471
        %v887 = vpop.f32.mrf.mxu0
        %v888 = vadd.f32 0.0, %v887
        %889 = vmatmul.f32.gmra.mxu0 %v472
        %v890 = vpop.f32.mrf.mxu0
        %v891 = vadd.f32 0.0, %v890
        %892 = vmatmul.f32.gmra.mxu0 %v473
        %v893 = vpop.f32.mrf.mxu0
        %v894 = vadd.f32 0.0, %v893
        %895 = vmatmul.f32.gmra.mxu0 %v474
        %v896 = vpop.f32.mrf.mxu0
        %v897 = vadd.f32 0.0, %v896
        %898 = vmatmul.f32.gmra.mxu0 %v475
        %v899 = vpop.f32.mrf.mxu0
        %v900 = vadd.f32 0.0, %v899
        %901 = vmatmul.f32.gmra.mxu0 %v476
        %v902 = vpop.f32.mrf.mxu0
        %v903 = vadd.f32 0.0, %v902
        %904 = vmatmul.f32.gmra.mxu0 %v477
        %v905 = vpop.f32.mrf.mxu0
        %v906 = vadd.f32 0.0, %v905
        %907 = vmatmul.f32.gmra.mxu0 %v478
        %v908 = vpop.f32.mrf.mxu0
        %v909 = vadd.f32 0.0, %v908
        %910 = vmatmul.f32.gmra.mxu0 %v479
        %v911 = vpop.f32.mrf.mxu0
        %v912 = vadd.f32 0.0, %v911
        %913 = vmatmul.f32.gmra.mxu0 %v480
        %v914 = vpop.f32.mrf.mxu0
        %v915 = vadd.f32 0.0, %v914
        %916 = vmatmul.f32.gmra.mxu0 %v481
        %v917 = vpop.f32.mrf.mxu0
        %v918 = vadd.f32 0.0, %v917
        %919 = vmatmul.f32.gmra.mxu0 %v482
        %v920 = vpop.f32.mrf.mxu0
        %v921 = vadd.f32 0.0, %v920
        %922 = vmatmul.f32.gmra.mxu0 %v483
        %v923 = vpop.f32.mrf.mxu0
        %v924 = vadd.f32 0.0, %v923
        %925 = vdwg.mxu0
        %926 = vmatpush.msra.mxu0 %v347
        %927 = vmatpush.msra.mxu0 %v346
        %928 = vmatpush.msra.mxu0 %v345
        %929 = vmatpush.msra.mxu0 %v344
        %930 = vmatpush.msra.mxu0 %v343
        %931 = vmatpush.msra.mxu0 %v342
        %932 = vmatpush.msra.mxu0 %v341
        %933 = vmatpush.msra.mxu0 %v340
        %934 = vmatpush.msra.mxu0 %v339
        %935 = vmatpush.msra.mxu0 %v338
        %936 = vmatpush.msra.mxu0 %v337
        %937 = vmatpush.msra.mxu0 %v336
        %938 = vmatpush.msra.mxu0 %v335
        %939 = vmatpush.msra.mxu0 %v334
        %940 = vmatpush.msra.mxu0 %v333
        %941 = vmatpush.msra.mxu0 %v332
        %942 = vmatmul.f32.gmra.mxu0 %v196
        %v943 = vpop.f32.mrf.mxu0
        %v944 = vadd.f32 %v519, %v943
        %945 = vmatmul.f32.gmra.mxu0 %v197
        %v946 = vpop.f32.mrf.mxu0
        %v947 = vadd.f32 %v522, %v946
        %948 = vmatmul.f32.gmra.mxu0 %v198
        %v949 = vpop.f32.mrf.mxu0
        %v950 = vadd.f32 %v525, %v949
        %951 = vmatmul.f32.gmra.mxu0 %v199
        %v952 = vpop.f32.mrf.mxu0
        %v953 = vadd.f32 %v528, %v952
        %954 = vmatmul.f32.gmra.mxu0 %v200
        %v955 = vpop.f32.mrf.mxu0
        %v956 = vadd.f32 %v531, %v955
        %957 = vmatmul.f32.gmra.mxu0 %v201
        %v958 = vpop.f32.mrf.mxu0
        %v959 = vadd.f32 %v534, %v958
        %960 = vmatmul.f32.gmra.mxu0 %v202
        %v961 = vpop.f32.mrf.mxu0
        %v962 = vadd.f32 %v537, %v961
        %963 = vmatmul.f32.gmra.mxu0 %v203
        %v964 = vpop.f32.mrf.mxu0
        %v965 = vadd.f32 %v540, %v964
        %966 = vmatmul.f32.gmra.mxu0 %v204
        %v967 = vpop.f32.mrf.mxu0
        %v968 = vadd.f32 %v543, %v967
        %969 = vmatmul.f32.gmra.mxu0 %v205
        %v970 = vpop.f32.mrf.mxu0
        %v971 = vadd.f32 %v546, %v970
        %972 = vmatmul.f32.gmra.mxu0 %v206
        %v973 = vpop.f32.mrf.mxu0
        %v974 = vadd.f32 %v549, %v973
        %975 = vmatmul.f32.gmra.mxu0 %v207
        %v976 = vpop.f32.mrf.mxu0
        %v977 = vadd.f32 %v552, %v976
        %978 = vmatmul.f32.gmra.mxu0 %v208
        %v979 = vpop.f32.mrf.mxu0
        %v980 = vadd.f32 %v555, %v979
        %981 = vmatmul.f32.gmra.mxu0 %v209
        %v982 = vpop.f32.mrf.mxu0
        %v983 = vadd.f32 %v558, %v982
        %984 = vmatmul.f32.gmra.mxu0 %v210
        %v985 = vpop.f32.mrf.mxu0
        %v986 = vadd.f32 %v561, %v985
        %987 = vmatmul.f32.gmra.mxu0 %v211
        %v988 = vpop.f32.mrf.mxu0
        %v989 = vadd.f32 %v564, %v988
        %990 = vmatmul.f32.gmra.mxu0 %v212
        %v991 = vpop.f32.mrf.mxu0
        %v992 = vadd.f32 %v567, %v991
        %993 = vmatmul.f32.gmra.mxu0 %v213
        %v994 = vpop.f32.mrf.mxu0
        %v995 = vadd.f32 %v570, %v994
        %996 = vmatmul.f32.gmra.mxu0 %v214
        %v997 = vpop.f32.mrf.mxu0
        %v998 = vadd.f32 %v573, %v997
        %999 = vmatmul.f32.gmra.mxu0 %v215
        %v1000 = vpop.f32.mrf.mxu0
        %v1001 = vadd.f32 %v576, %v1000
        %1002 = vmatmul.f32.gmra.mxu0 %v216
        %v1003 = vpop.f32.mrf.mxu0
        %v1004 = vadd.f32 %v579, %v1003
        %1005 = vmatmul.f32.gmra.mxu0 %v217
        %v1006 = vpop.f32.mrf.mxu0
        %v1007 = vadd.f32 %v582, %v1006
        %1008 = vmatmul.f32.gmra.mxu0 %v218
        %v1009 = vpop.f32.mrf.mxu0
        %v1010 = vadd.f32 %v585, %v1009
        %1011 = vmatmul.f32.gmra.mxu0 %v219
        %v1012 = vpop.f32.mrf.mxu0
        %v1013 = vadd.f32 %v588, %v1012
        %1014 = vmatmul.f32.gmra.mxu0 %v220
        %v1015 = vpop.f32.mrf.mxu0
        %v1016 = vadd.f32 %v591, %v1015
        %1017 = vmatmul.f32.gmra.mxu0 %v221
        %v1018 = vpop.f32.mrf.mxu0
        %v1019 = vadd.f32 %v594, %v1018
        %1020 = vmatmul.f32.gmra.mxu0 %v222
        %v1021 = vpop.f32.mrf.mxu0
        %v1022 = vadd.f32 %v597, %v1021
        %1023 = vmatmul.f32.gmra.mxu0 %v223
        %v1024 = vpop.f32.mrf.mxu0
        %v1025 = vadd.f32 %v600, %v1024
        %1026 = vmatmul.f32.gmra.mxu0 %v224
        %v1027 = vpop.f32.mrf.mxu0
        %v1028 = vadd.f32 %v603, %v1027
        %1029 = vmatmul.f32.gmra.mxu0 %v225
        %v1030 = vpop.f32.mrf.mxu0
        %v1031 = vadd.f32 %v606, %v1030
        %1032 = vmatmul.f32.gmra.mxu0 %v226
        %v1033 = vpop.f32.mrf.mxu0
        %v1034 = vadd.f32 %v609, %v1033
        %1035 = vmatmul.f32.gmra.mxu0 %v227
        %v1036 = vpop.f32.mrf.mxu0
        %v1037 = vadd.f32 %v612, %v1036
        %1038 = vmatmul.f32.gmra.mxu0 %v228
        %v1039 = vpop.f32.mrf.mxu0
        %v1040 = vadd.f32 %v615, %v1039
        %1041 = vmatmul.f32.gmra.mxu0 %v229
        %v1042 = vpop.f32.mrf.mxu0
        %v1043 = vadd.f32 %v618, %v1042
        %1044 = vmatmul.f32.gmra.mxu0 %v230
        %v1045 = vpop.f32.mrf.mxu0
        %v1046 = vadd.f32 %v621, %v1045
        %1047 = vmatmul.f32.gmra.mxu0 %v231
        %v1048 = vpop.f32.mrf.mxu0
        %v1049 = vadd.f32 %v624, %v1048
        %1050 = vmatmul.f32.gmra.mxu0 %v232
        %v1051 = vpop.f32.mrf.mxu0
        %v1052 = vadd.f32 %v627, %v1051
        %1053 = vmatmul.f32.gmra.mxu0 %v233
        %v1054 = vpop.f32.mrf.mxu0
        %v1055 = vadd.f32 %v630, %v1054
        %1056 = vmatmul.f32.gmra.mxu0 %v234
        %v1057 = vpop.f32.mrf.mxu0
        %v1058 = vadd.f32 %v633, %v1057
        %1059 = vmatmul.f32.gmra.mxu0 %v235
        %v1060 = vpop.f32.mrf.mxu0
        %v1061 = vadd.f32 %v636, %v1060
        %1062 = vmatmul.f32.gmra.mxu0 %v236
        %v1063 = vpop.f32.mrf.mxu0
        %v1064 = vadd.f32 %v639, %v1063
        %1065 = vmatmul.f32.gmra.mxu0 %v237
        %v1066 = vpop.f32.mrf.mxu0
        %v1067 = vadd.f32 %v642, %v1066
        %1068 = vmatmul.f32.gmra.mxu0 %v238
        %v1069 = vpop.f32.mrf.mxu0
        %v1070 = vadd.f32 %v645, %v1069
        %1071 = vmatmul.f32.gmra.mxu0 %v239
        %v1072 = vpop.f32.mrf.mxu0
        %v1073 = vadd.f32 %v648, %v1072
        %1074 = vmatmul.f32.gmra.mxu0 %v240
        %v1075 = vpop.f32.mrf.mxu0
        %v1076 = vadd.f32 %v651, %v1075
        %1077 = vmatmul.f32.gmra.mxu0 %v241
        %v1078 = vpop.f32.mrf.mxu0
        %v1079 = vadd.f32 %v654, %v1078
        %1080 = vmatmul.f32.gmra.mxu0 %v242
        %v1081 = vpop.f32.mrf.mxu0
        %v1082 = vadd.f32 %v657, %v1081
        %1083 = vmatmul.f32.gmra.mxu0 %v243
        %v1084 = vpop.f32.mrf.mxu0
        %v1085 = vadd.f32 %v660, %v1084
        %1086 = vmatmul.f32.gmra.mxu0 %v244
        %v1087 = vpop.f32.mrf.mxu0
        %v1088 = vadd.f32 %v663, %v1087
        %1089 = vmatmul.f32.gmra.mxu0 %v245
        %v1090 = vpop.f32.mrf.mxu0
        %v1091 = vadd.f32 %v666, %v1090
        %1092 = vmatmul.f32.gmra.mxu0 %v246
        %v1093 = vpop.f32.mrf.mxu0
        %v1094 = vadd.f32 %v669, %v1093
        %1095 = vmatmul.f32.gmra.mxu0 %v247
        %v1096 = vpop.f32.mrf.mxu0
        %v1097 = vadd.f32 %v672, %v1096
        %1098 = vmatmul.f32.gmra.mxu0 %v248
        %v1099 = vpop.f32.mrf.mxu0
        %v1100 = vadd.f32 %v675, %v1099
        %1101 = vmatmul.f32.gmra.mxu0 %v249
        %v1102 = vpop.f32.mrf.mxu0
        %v1103 = vadd.f32 %v678, %v1102
        %1104 = vmatmul.f32.gmra.mxu0 %v250
        %v1105 = vpop.f32.mrf.mxu0
        %v1106 = vadd.f32 %v681, %v1105
        %1107 = vmatmul.f32.gmra.mxu0 %v251
        %v1108 = vpop.f32.mrf.mxu0
        %v1109 = vadd.f32 %v684, %v1108
        %1110 = vmatmul.f32.gmra.mxu0 %v252
        %v1111 = vpop.f32.mrf.mxu0
        %v1112 = vadd.f32 %v687, %v1111
        %1113 = vmatmul.f32.gmra.mxu0 %v253
        %v1114 = vpop.f32.mrf.mxu0
        %v1115 = vadd.f32 %v690, %v1114
        %1116 = vmatmul.f32.gmra.mxu0 %v254
        %v1117 = vpop.f32.mrf.mxu0
        %v1118 = vadd.f32 %v693, %v1117
        %1119 = vmatmul.f32.gmra.mxu0 %v255
        %v1120 = vpop.f32.mrf.mxu0
        %v1121 = vadd.f32 %v696, %v1120
        %1122 = vmatmul.f32.gmra.mxu0 %v256
        %v1123 = vpop.f32.mrf.mxu0
        %v1124 = vadd.f32 %v699, %v1123
        %1125 = vmatmul.f32.gmra.mxu0 %v257
        %v1126 = vpop.f32.mrf.mxu0
        %v1127 = vadd.f32 %v702, %v1126
        %1128 = vmatmul.f32.gmra.mxu0 %v258
        %v1129 = vpop.f32.mrf.mxu0
        %v1130 = vadd.f32 %v705, %v1129
        %1131 = vmatmul.f32.gmra.mxu0 %v259
        %v1132 = vpop.f32.mrf.mxu0
        %v1133 = vadd.f32 %v708, %v1132
        %1134 = vmatmul.f32.gmra.mxu0 %v260
        %v1135 = vpop.f32.mrf.mxu0
        %v1136 = vadd.f32 %v711, %v1135
        %1137 = vmatmul.f32.gmra.mxu0 %v261
        %v1138 = vpop.f32.mrf.mxu0
        %v1139 = vadd.f32 %v714, %v1138
        %1140 = vmatmul.f32.gmra.mxu0 %v262
        %v1141 = vpop.f32.mrf.mxu0
        %v1142 = vadd.f32 %v717, %v1141
        %1143 = vmatmul.f32.gmra.mxu0 %v263
        %v1144 = vpop.f32.mrf.mxu0
        %v1145 = vadd.f32 %v720, %v1144
        %1146 = vmatmul.f32.gmra.mxu0 %v264
        %v1147 = vpop.f32.mrf.mxu0
        %v1148 = vadd.f32 %v723, %v1147
        %1149 = vmatmul.f32.gmra.mxu0 %v265
        %v1150 = vpop.f32.mrf.mxu0
        %v1151 = vadd.f32 %v726, %v1150
        %1152 = vmatmul.f32.gmra.mxu0 %v266
        %v1153 = vpop.f32.mrf.mxu0
        %v1154 = vadd.f32 %v729, %v1153
        %1155 = vmatmul.f32.gmra.mxu0 %v267
        %v1156 = vpop.f32.mrf.mxu0
        %v1157 = vadd.f32 %v732, %v1156
        %1158 = vmatmul.f32.gmra.mxu0 %v268
        %v1159 = vpop.f32.mrf.mxu0
        %v1160 = vadd.f32 %v735, %v1159
        %1161 = vmatmul.f32.gmra.mxu0 %v269
        %v1162 = vpop.f32.mrf.mxu0
        %v1163 = vadd.f32 %v738, %v1162
        %1164 = vmatmul.f32.gmra.mxu0 %v270
        %v1165 = vpop.f32.mrf.mxu0
        %v1166 = vadd.f32 %v741, %v1165
        %1167 = vmatmul.f32.gmra.mxu0 %v271
        %v1168 = vpop.f32.mrf.mxu0
        %v1169 = vadd.f32 %v744, %v1168
        %1170 = vmatmul.f32.gmra.mxu0 %v272
        %v1171 = vpop.f32.mrf.mxu0
        %v1172 = vadd.f32 %v747, %v1171
        %1173 = vmatmul.f32.gmra.mxu0 %v273
        %v1174 = vpop.f32.mrf.mxu0
        %v1175 = vadd.f32 %v750, %v1174
        %1176 = vmatmul.f32.gmra.mxu0 %v274
        %v1177 = vpop.f32.mrf.mxu0
        %v1178 = vadd.f32 %v753, %v1177
        %1179 = vmatmul.f32.gmra.mxu0 %v275
        %v1180 = vpop.f32.mrf.mxu0
        %v1181 = vadd.f32 %v756, %v1180
        %1182 = vmatmul.f32.gmra.mxu0 %v276
        %v1183 = vpop.f32.mrf.mxu0
        %v1184 = vadd.f32 %v759, %v1183
        %1185 = vmatmul.f32.gmra.mxu0 %v277
        %v1186 = vpop.f32.mrf.mxu0
        %v1187 = vadd.f32 %v762, %v1186
        %1188 = vmatmul.f32.gmra.mxu0 %v278
        %v1189 = vpop.f32.mrf.mxu0
        %v1190 = vadd.f32 %v765, %v1189
        %1191 = vmatmul.f32.gmra.mxu0 %v279
        %v1192 = vpop.f32.mrf.mxu0
        %v1193 = vadd.f32 %v768, %v1192
        %1194 = vmatmul.f32.gmra.mxu0 %v280
        %v1195 = vpop.f32.mrf.mxu0
        %v1196 = vadd.f32 %v771, %v1195
        %1197 = vmatmul.f32.gmra.mxu0 %v281
        %v1198 = vpop.f32.mrf.mxu0
        %v1199 = vadd.f32 %v774, %v1198
        %1200 = vmatmul.f32.gmra.mxu0 %v282
        %v1201 = vpop.f32.mrf.mxu0
        %v1202 = vadd.f32 %v777, %v1201
        %1203 = vmatmul.f32.gmra.mxu0 %v283
        %v1204 = vpop.f32.mrf.mxu0
        %v1205 = vadd.f32 %v780, %v1204
        %1206 = vmatmul.f32.gmra.mxu0 %v284
        %v1207 = vpop.f32.mrf.mxu0
        %v1208 = vadd.f32 %v783, %v1207
        %1209 = vmatmul.f32.gmra.mxu0 %v285
        %v1210 = vpop.f32.mrf.mxu0
        %v1211 = vadd.f32 %v786, %v1210
        %1212 = vmatmul.f32.gmra.mxu0 %v286
        %v1213 = vpop.f32.mrf.mxu0
        %v1214 = vadd.f32 %v789, %v1213
        %1215 = vmatmul.f32.gmra.mxu0 %v287
        %v1216 = vpop.f32.mrf.mxu0
        %v1217 = vadd.f32 %v792, %v1216
        %1218 = vmatmul.f32.gmra.mxu0 %v288
        %v1219 = vpop.f32.mrf.mxu0
        %v1220 = vadd.f32 %v795, %v1219
        %1221 = vmatmul.f32.gmra.mxu0 %v289
        %v1222 = vpop.f32.mrf.mxu0
        %v1223 = vadd.f32 %v798, %v1222
        %1224 = vmatmul.f32.gmra.mxu0 %v290
        %v1225 = vpop.f32.mrf.mxu0
        %v1226 = vadd.f32 %v801, %v1225
        %1227 = vmatmul.f32.gmra.mxu0 %v291
        %v1228 = vpop.f32.mrf.mxu0
        %v1229 = vadd.f32 %v804, %v1228
        %1230 = vmatmul.f32.gmra.mxu0 %v292
        %v1231 = vpop.f32.mrf.mxu0
        %v1232 = vadd.f32 %v807, %v1231
        %1233 = vmatmul.f32.gmra.mxu0 %v293
        %v1234 = vpop.f32.mrf.mxu0
        %v1235 = vadd.f32 %v810, %v1234
        %1236 = vmatmul.f32.gmra.mxu0 %v294
        %v1237 = vpop.f32.mrf.mxu0
        %v1238 = vadd.f32 %v813, %v1237
        %1239 = vmatmul.f32.gmra.mxu0 %v295
        %v1240 = vpop.f32.mrf.mxu0
        %v1241 = vadd.f32 %v816, %v1240
        %1242 = vmatmul.f32.gmra.mxu0 %v296
        %v1243 = vpop.f32.mrf.mxu0
        %v1244 = vadd.f32 %v819, %v1243
        %1245 = vmatmul.f32.gmra.mxu0 %v297
        %v1246 = vpop.f32.mrf.mxu0
        %v1247 = vadd.f32 %v822, %v1246
        %1248 = vmatmul.f32.gmra.mxu0 %v298
        %v1249 = vpop.f32.mrf.mxu0
        %v1250 = vadd.f32 %v825, %v1249
        %1251 = vmatmul.f32.gmra.mxu0 %v299
        %v1252 = vpop.f32.mrf.mxu0
        %v1253 = vadd.f32 %v828, %v1252
        %1254 = vmatmul.f32.gmra.mxu0 %v300
        %v1255 = vpop.f32.mrf.mxu0
        %v1256 = vadd.f32 %v831, %v1255
        %1257 = vmatmul.f32.gmra.mxu0 %v301
        %v1258 = vpop.f32.mrf.mxu0
        %v1259 = vadd.f32 %v834, %v1258
        %1260 = vmatmul.f32.gmra.mxu0 %v302
        %v1261 = vpop.f32.mrf.mxu0
        %v1262 = vadd.f32 %v837, %v1261
        %1263 = vmatmul.f32.gmra.mxu0 %v303
        %v1264 = vpop.f32.mrf.mxu0
        %v1265 = vadd.f32 %v840, %v1264
        %1266 = vmatmul.f32.gmra.mxu0 %v304
        %v1267 = vpop.f32.mrf.mxu0
        %v1268 = vadd.f32 %v843, %v1267
        %1269 = vmatmul.f32.gmra.mxu0 %v305
        %v1270 = vpop.f32.mrf.mxu0
        %v1271 = vadd.f32 %v846, %v1270
        %1272 = vmatmul.f32.gmra.mxu0 %v306
        %v1273 = vpop.f32.mrf.mxu0
        %v1274 = vadd.f32 %v849, %v1273
        %1275 = vmatmul.f32.gmra.mxu0 %v307
        %v1276 = vpop.f32.mrf.mxu0
        %v1277 = vadd.f32 %v852, %v1276
        %1278 = vmatmul.f32.gmra.mxu0 %v308
        %v1279 = vpop.f32.mrf.mxu0
        %v1280 = vadd.f32 %v855, %v1279
        %1281 = vmatmul.f32.gmra.mxu0 %v309
        %v1282 = vpop.f32.mrf.mxu0
        %v1283 = vadd.f32 %v858, %v1282
        %1284 = vmatmul.f32.gmra.mxu0 %v310
        %v1285 = vpop.f32.mrf.mxu0
        %v1286 = vadd.f32 %v861, %v1285
        %1287 = vmatmul.f32.gmra.mxu0 %v311
        %v1288 = vpop.f32.mrf.mxu0
        %v1289 = vadd.f32 %v864, %v1288
        %1290 = vmatmul.f32.gmra.mxu0 %v312
        %v1291 = vpop.f32.mrf.mxu0
        %v1292 = vadd.f32 %v867, %v1291
        %1293 = vmatmul.f32.gmra.mxu0 %v313
        %v1294 = vpop.f32.mrf.mxu0
        %v1295 = vadd.f32 %v870, %v1294
        %1296 = vmatmul.f32.gmra.mxu0 %v314
        %v1297 = vpop.f32.mrf.mxu0
        %v1298 = vadd.f32 %v873, %v1297
        %1299 = vmatmul.f32.gmra.mxu0 %v315
        %v1300 = vpop.f32.mrf.mxu0
        %v1301 = vadd.f32 %v876, %v1300
        %1302 = vmatmul.f32.gmra.mxu0 %v316
        %v1303 = vpop.f32.mrf.mxu0
        %v1304 = vadd.f32 %v879, %v1303
        %1305 = vmatmul.f32.gmra.mxu0 %v317
        %v1306 = vpop.f32.mrf.mxu0
        %v1307 = vadd.f32 %v882, %v1306
        %1308 = vmatmul.f32.gmra.mxu0 %v318
        %v1309 = vpop.f32.mrf.mxu0
        %v1310 = vadd.f32 %v885, %v1309
        %1311 = vmatmul.f32.gmra.mxu0 %v319
        %v1312 = vpop.f32.mrf.mxu0
        %v1313 = vadd.f32 %v888, %v1312
        %1314 = vmatmul.f32.gmra.mxu0 %v320
        %v1315 = vpop.f32.mrf.mxu0
        %v1316 = vadd.f32 %v891, %v1315
        %1317 = vmatmul.f32.gmra.mxu0 %v321
        %v1318 = vpop.f32.mrf.mxu0
        %v1319 = vadd.f32 %v894, %v1318
        %1320 = vmatmul.f32.gmra.mxu0 %v322
        %v1321 = vpop.f32.mrf.mxu0
        %v1322 = vadd.f32 %v897, %v1321
        %1323 = vmatmul.f32.gmra.mxu0 %v323
        %v1324 = vpop.f32.mrf.mxu0
        %v1325 = vadd.f32 %v900, %v1324
        %1326 = vmatmul.f32.gmra.mxu0 %v324
        %v1327 = vpop.f32.mrf.mxu0
        %v1328 = vadd.f32 %v903, %v1327
        %1329 = vmatmul.f32.gmra.mxu0 %v325
        %v1330 = vpop.f32.mrf.mxu0
        %v1331 = vadd.f32 %v906, %v1330
        %1332 = vmatmul.f32.gmra.mxu0 %v326
        %v1333 = vpop.f32.mrf.mxu0
        %v1334 = vadd.f32 %v909, %v1333
        %1335 = vmatmul.f32.gmra.mxu0 %v327
        %v1336 = vpop.f32.mrf.mxu0
        %v1337 = vadd.f32 %v912, %v1336
        %1338 = vmatmul.f32.gmra.mxu0 %v328
        %v1339 = vpop.f32.mrf.mxu0
        %v1340 = vadd.f32 %v915, %v1339
        %1341 = vmatmul.f32.gmra.mxu0 %v329
        %v1342 = vpop.f32.mrf.mxu0
        %v1343 = vadd.f32 %v918, %v1342
        %1344 = vmatmul.f32.gmra.mxu0 %v330
        %v1345 = vpop.f32.mrf.mxu0
        %v1346 = vadd.f32 %v921, %v1345
        %1347 = vmatmul.f32.gmra.mxu0 %v331
        %v1348 = vpop.f32.mrf.mxu0
        %v1349 = vadd.f32 %v924, %v1348
        %1350 = vdwg.mxu0
        %v1351 = vld [vmem:[%s195 + $0x2] sm:$0xff]
        %v1352 = vld [vmem:[%s195 + $0xa] sm:$0xff]
        %v1353 = vld [vmem:[%s195 + $0x12] sm:$0xff]
        %v1354 = vld [vmem:[%s195 + $0x1a] sm:$0xff]
        %v1355 = vld [vmem:[%s195 + $0x22] sm:$0xff]
        %v1356 = vld [vmem:[%s195 + $0x2a] sm:$0xff]
        %v1357 = vld [vmem:[%s195 + $0x32] sm:$0xff]
        %v1358 = vld [vmem:[%s195 + $0x3a] sm:$0xff]
        %v1359 = vld [vmem:[%s195 + $0x42] sm:$0xff]
        %v1360 = vld [vmem:[%s195 + $0x4a] sm:$0xff]
        %v1361 = vld [vmem:[%s195 + $0x52] sm:$0xff]
        %v1362 = vld [vmem:[%s195 + $0x5a] sm:$0xff]
        %v1363 = vld [vmem:[%s195 + $0x62] sm:$0xff]
        %v1364 = vld [vmem:[%s195 + $0x6a] sm:$0xff]
        %v1365 = vld [vmem:[%s195 + $0x72] sm:$0xff]
        %v1366 = vld [vmem:[%s195 + $0x7a] sm:$0xff]
        %v1367 = vld [vmem:[%s195 + $0x82] sm:$0xff]
        %v1368 = vld [vmem:[%s195 + $0x8a] sm:$0xff]
        %v1369 = vld [vmem:[%s195 + $0x92] sm:$0xff]
        %v1370 = vld [vmem:[%s195 + $0x9a] sm:$0xff]
        %v1371 = vld [vmem:[%s195 + $0xa2] sm:$0xff]
        %v1372 = vld [vmem:[%s195 + $0xaa] sm:$0xff]
        %v1373 = vld [vmem:[%s195 + $0xb2] sm:$0xff]
        %v1374 = vld [vmem:[%s195 + $0xba] sm:$0xff]
        %v1375 = vld [vmem:[%s195 + $0xc2] sm:$0xff]
        %v1376 = vld [vmem:[%s195 + $0xca] sm:$0xff]
        %v1377 = vld [vmem:[%s195 + $0xd2] sm:$0xff]
        %v1378 = vld [vmem:[%s195 + $0xda] sm:$0xff]
        %v1379 = vld [vmem:[%s195 + $0xe2] sm:$0xff]
        %v1380 = vld [vmem:[%s195 + $0xea] sm:$0xff]
        %v1381 = vld [vmem:[%s195 + $0xf2] sm:$0xff]
        %v1382 = vld [vmem:[%s195 + $0xfa] sm:$0xff]
        %v1383 = vld [vmem:[%s195 + $0x102] sm:$0xff]
        %v1384 = vld [vmem:[%s195 + $0x10a] sm:$0xff]
        %v1385 = vld [vmem:[%s195 + $0x112] sm:$0xff]
        %v1386 = vld [vmem:[%s195 + $0x11a] sm:$0xff]
        %v1387 = vld [vmem:[%s195 + $0x122] sm:$0xff]
        %v1388 = vld [vmem:[%s195 + $0x12a] sm:$0xff]
        %v1389 = vld [vmem:[%s195 + $0x132] sm:$0xff]
        %v1390 = vld [vmem:[%s195 + $0x13a] sm:$0xff]
        %v1391 = vld [vmem:[%s195 + $0x142] sm:$0xff]
        %v1392 = vld [vmem:[%s195 + $0x14a] sm:$0xff]
        %v1393 = vld [vmem:[%s195 + $0x152] sm:$0xff]
        %v1394 = vld [vmem:[%s195 + $0x15a] sm:$0xff]
        %v1395 = vld [vmem:[%s195 + $0x162] sm:$0xff]
        %v1396 = vld [vmem:[%s195 + $0x16a] sm:$0xff]
        %v1397 = vld [vmem:[%s195 + $0x172] sm:$0xff]
        %v1398 = vld [vmem:[%s195 + $0x17a] sm:$0xff]
        %v1399 = vld [vmem:[%s195 + $0x182] sm:$0xff]
        %v1400 = vld [vmem:[%s195 + $0x18a] sm:$0xff]
        %v1401 = vld [vmem:[%s195 + $0x192] sm:$0xff]
        %v1402 = vld [vmem:[%s195 + $0x19a] sm:$0xff]
        %v1403 = vld [vmem:[%s195 + $0x1a2] sm:$0xff]
        %v1404 = vld [vmem:[%s195 + $0x1aa] sm:$0xff]
        %v1405 = vld [vmem:[%s195 + $0x1b2] sm:$0xff]
        %v1406 = vld [vmem:[%s195 + $0x1ba] sm:$0xff]
        %v1407 = vld [vmem:[%s195 + $0x1c2] sm:$0xff]
        %v1408 = vld [vmem:[%s195 + $0x1ca] sm:$0xff]
        %v1409 = vld [vmem:[%s195 + $0x1d2] sm:$0xff]
        %v1410 = vld [vmem:[%s195 + $0x1da] sm:$0xff]
        %v1411 = vld [vmem:[%s195 + $0x1e2] sm:$0xff]
        %v1412 = vld [vmem:[%s195 + $0x1ea] sm:$0xff]
        %v1413 = vld [vmem:[%s195 + $0x1f2] sm:$0xff]
        %v1414 = vld [vmem:[%s195 + $0x1fa] sm:$0xff]
        %v1415 = vld [vmem:[%s195 + $0x202] sm:$0xff]
        %v1416 = vld [vmem:[%s195 + $0x20a] sm:$0xff]
        %v1417 = vld [vmem:[%s195 + $0x212] sm:$0xff]
        %v1418 = vld [vmem:[%s195 + $0x21a] sm:$0xff]
        %v1419 = vld [vmem:[%s195 + $0x222] sm:$0xff]
        %v1420 = vld [vmem:[%s195 + $0x22a] sm:$0xff]
        %v1421 = vld [vmem:[%s195 + $0x232] sm:$0xff]
        %v1422 = vld [vmem:[%s195 + $0x23a] sm:$0xff]
        %v1423 = vld [vmem:[%s195 + $0x242] sm:$0xff]
        %v1424 = vld [vmem:[%s195 + $0x24a] sm:$0xff]
        %v1425 = vld [vmem:[%s195 + $0x252] sm:$0xff]
        %v1426 = vld [vmem:[%s195 + $0x25a] sm:$0xff]
        %v1427 = vld [vmem:[%s195 + $0x262] sm:$0xff]
        %v1428 = vld [vmem:[%s195 + $0x26a] sm:$0xff]
        %v1429 = vld [vmem:[%s195 + $0x272] sm:$0xff]
        %v1430 = vld [vmem:[%s195 + $0x27a] sm:$0xff]
        %v1431 = vld [vmem:[%s195 + $0x282] sm:$0xff]
        %v1432 = vld [vmem:[%s195 + $0x28a] sm:$0xff]
        %v1433 = vld [vmem:[%s195 + $0x292] sm:$0xff]
        %v1434 = vld [vmem:[%s195 + $0x29a] sm:$0xff]
        %v1435 = vld [vmem:[%s195 + $0x2a2] sm:$0xff]
        %v1436 = vld [vmem:[%s195 + $0x2aa] sm:$0xff]
        %v1437 = vld [vmem:[%s195 + $0x2b2] sm:$0xff]
        %v1438 = vld [vmem:[%s195 + $0x2ba] sm:$0xff]
        %v1439 = vld [vmem:[%s195 + $0x2c2] sm:$0xff]
        %v1440 = vld [vmem:[%s195 + $0x2ca] sm:$0xff]
        %v1441 = vld [vmem:[%s195 + $0x2d2] sm:$0xff]
        %v1442 = vld [vmem:[%s195 + $0x2da] sm:$0xff]
        %v1443 = vld [vmem:[%s195 + $0x2e2] sm:$0xff]
        %v1444 = vld [vmem:[%s195 + $0x2ea] sm:$0xff]
        %v1445 = vld [vmem:[%s195 + $0x2f2] sm:$0xff]
        %v1446 = vld [vmem:[%s195 + $0x2fa] sm:$0xff]
        %v1447 = vld [vmem:[%s195 + $0x302] sm:$0xff]
        %v1448 = vld [vmem:[%s195 + $0x30a] sm:$0xff]
        %v1449 = vld [vmem:[%s195 + $0x312] sm:$0xff]
        %v1450 = vld [vmem:[%s195 + $0x31a] sm:$0xff]
        %v1451 = vld [vmem:[%s195 + $0x322] sm:$0xff]
        %v1452 = vld [vmem:[%s195 + $0x32a] sm:$0xff]
        %v1453 = vld [vmem:[%s195 + $0x332] sm:$0xff]
        %v1454 = vld [vmem:[%s195 + $0x33a] sm:$0xff]
        %v1455 = vld [vmem:[%s195 + $0x342] sm:$0xff]
        %v1456 = vld [vmem:[%s195 + $0x34a] sm:$0xff]
        %v1457 = vld [vmem:[%s195 + $0x352] sm:$0xff]
        %v1458 = vld [vmem:[%s195 + $0x35a] sm:$0xff]
        %v1459 = vld [vmem:[%s195 + $0x362] sm:$0xff]
        %v1460 = vld [vmem:[%s195 + $0x36a] sm:$0xff]
        %v1461 = vld [vmem:[%s195 + $0x372] sm:$0xff]
        %v1462 = vld [vmem:[%s195 + $0x37a] sm:$0xff]
        %v1463 = vld [vmem:[%s195 + $0x382] sm:$0xff]
        %v1464 = vld [vmem:[%s195 + $0x38a] sm:$0xff]
        %v1465 = vld [vmem:[%s195 + $0x392] sm:$0xff]
        %v1466 = vld [vmem:[%s195 + $0x39a] sm:$0xff]
        %v1467 = vld [vmem:[%s195 + $0x3a2] sm:$0xff]
        %v1468 = vld [vmem:[%s195 + $0x3aa] sm:$0xff]
        %v1469 = vld [vmem:[%s195 + $0x3b2] sm:$0xff]
        %v1470 = vld [vmem:[%s195 + $0x3ba] sm:$0xff]
        %v1471 = vld [vmem:[%s195 + $0x3c2] sm:$0xff]
        %v1472 = vld [vmem:[%s195 + $0x3ca] sm:$0xff]
        %v1473 = vld [vmem:[%s195 + $0x3d2] sm:$0xff]
        %v1474 = vld [vmem:[%s195 + $0x3da] sm:$0xff]
        %v1475 = vld [vmem:[%s195 + $0x3e2] sm:$0xff]
        %v1476 = vld [vmem:[%s195 + $0x3ea] sm:$0xff]
        %v1477 = vld [vmem:[%s195 + $0x3f2] sm:$0xff]
        %v1478 = vld [vmem:[%s195 + $0x3fa] sm:$0xff]
        %v1479 = vld [vmem:[%s195 + $0x402] sm:$0xff]
        %v1480 = vld [vmem:[%s195 + $0x40a] sm:$0xff]
        %v1481 = vld [vmem:[%s195 + $0x412] sm:$0xff]
        %v1482 = vld [vmem:[%s195 + $0x41a] sm:$0xff]
        %v1483 = vld [vmem:[%s195 + $0x422] sm:$0xff]
        %v1484 = vld [vmem:[%s195 + $0x42a] sm:$0xff]
        %v1485 = vld [vmem:[%s195 + $0x432] sm:$0xff]
        %v1486 = vld [vmem:[%s195 + $0x43a] sm:$0xff]
        %s1487 = scalar_lea.vmem %s1, 256
        %v1488 = vld [vmem:[%s1487] sm:$0xff]
        %v1489 = vld [vmem:[%s1487 + $0x8] sm:$0xff]
        %v1490 = vld [vmem:[%s1487 + $0x10] sm:$0xff]
        %v1491 = vld [vmem:[%s1487 + $0x18] sm:$0xff]
        %v1492 = vld [vmem:[%s1487 + $0x20] sm:$0xff]
        %v1493 = vld [vmem:[%s1487 + $0x28] sm:$0xff]
        %v1494 = vld [vmem:[%s1487 + $0x30] sm:$0xff]
        %v1495 = vld [vmem:[%s1487 + $0x38] sm:$0xff]
        %v1496 = vld [vmem:[%s1487 + $0x40] sm:$0xff]
        %v1497 = vld [vmem:[%s1487 + $0x48] sm:$0xff]
        %v1498 = vld [vmem:[%s1487 + $0x50] sm:$0xff]
        %v1499 = vld [vmem:[%s1487 + $0x58] sm:$0xff]
        %v1500 = vld [vmem:[%s1487 + $0x60] sm:$0xff]
        %v1501 = vld [vmem:[%s1487 + $0x68] sm:$0xff]
        %v1502 = vld [vmem:[%s1487 + $0x70] sm:$0xff]
        %v1503 = vld [vmem:[%s1487 + $0x78] sm:$0xff]
        %1504 = vmatpush.msra.mxu0 %v1503
        %1505 = vmatpush.msra.mxu0 %v1502
        %1506 = vmatpush.msra.mxu0 %v1501
        %1507 = vmatpush.msra.mxu0 %v1500
        %1508 = vmatpush.msra.mxu0 %v1499
        %1509 = vmatpush.msra.mxu0 %v1498
        %1510 = vmatpush.msra.mxu0 %v1497
        %1511 = vmatpush.msra.mxu0 %v1496
        %1512 = vmatpush.msra.mxu0 %v1495
        %1513 = vmatpush.msra.mxu0 %v1494
        %1514 = vmatpush.msra.mxu0 %v1493
        %1515 = vmatpush.msra.mxu0 %v1492
        %1516 = vmatpush.msra.mxu0 %v1491
        %1517 = vmatpush.msra.mxu0 %v1490
        %1518 = vmatpush.msra.mxu0 %v1489
        %1519 = vmatpush.msra.mxu0 %v1488
        %1520 = vmatmul.f32.gmra.mxu0 %v1351
        %v1521 = vpop.f32.mrf.mxu0
        %v1522 = vadd.f32 0.0, %v1521
        %1523 = vmatmul.f32.gmra.mxu0 %v1352
        %v1524 = vpop.f32.mrf.mxu0
        %v1525 = vadd.f32 0.0, %v1524
        %1526 = vmatmul.f32.gmra.mxu0 %v1353
        %v1527 = vpop.f32.mrf.mxu0
        %v1528 = vadd.f32 0.0, %v1527
        %1529 = vmatmul.f32.gmra.mxu0 %v1354
        %v1530 = vpop.f32.mrf.mxu0
        %v1531 = vadd.f32 0.0, %v1530
        %1532 = vmatmul.f32.gmra.mxu0 %v1355
        %v1533 = vpop.f32.mrf.mxu0
        %v1534 = vadd.f32 0.0, %v1533
        %1535 = vmatmul.f32.gmra.mxu0 %v1356
        %v1536 = vpop.f32.mrf.mxu0
        %v1537 = vadd.f32 0.0, %v1536
        %1538 = vmatmul.f32.gmra.mxu0 %v1357
        %v1539 = vpop.f32.mrf.mxu0
        %v1540 = vadd.f32 0.0, %v1539
        %1541 = vmatmul.f32.gmra.mxu0 %v1358
        %v1542 = vpop.f32.mrf.mxu0
        %v1543 = vadd.f32 0.0, %v1542
        %1544 = vmatmul.f32.gmra.mxu0 %v1359
        %v1545 = vpop.f32.mrf.mxu0
        %v1546 = vadd.f32 0.0, %v1545
        %1547 = vmatmul.f32.gmra.mxu0 %v1360
        %v1548 = vpop.f32.mrf.mxu0
        %v1549 = vadd.f32 0.0, %v1548
        %1550 = vmatmul.f32.gmra.mxu0 %v1361
        %v1551 = vpop.f32.mrf.mxu0
        %v1552 = vadd.f32 0.0, %v1551
        %1553 = vmatmul.f32.gmra.mxu0 %v1362
        %v1554 = vpop.f32.mrf.mxu0
        %v1555 = vadd.f32 0.0, %v1554
        %1556 = vmatmul.f32.gmra.mxu0 %v1363
        %v1557 = vpop.f32.mrf.mxu0
        %v1558 = vadd.f32 0.0, %v1557
        %1559 = vmatmul.f32.gmra.mxu0 %v1364
        %v1560 = vpop.f32.mrf.mxu0
        %v1561 = vadd.f32 0.0, %v1560
        %1562 = vmatmul.f32.gmra.mxu0 %v1365
        %v1563 = vpop.f32.mrf.mxu0
        %v1564 = vadd.f32 0.0, %v1563
        %1565 = vmatmul.f32.gmra.mxu0 %v1366
        %v1566 = vpop.f32.mrf.mxu0
        %v1567 = vadd.f32 0.0, %v1566
        %1568 = vmatmul.f32.gmra.mxu0 %v1367
        %v1569 = vpop.f32.mrf.mxu0
        %v1570 = vadd.f32 0.0, %v1569
        %1571 = vmatmul.f32.gmra.mxu0 %v1368
        %v1572 = vpop.f32.mrf.mxu0
        %v1573 = vadd.f32 0.0, %v1572
        %1574 = vmatmul.f32.gmra.mxu0 %v1369
        %v1575 = vpop.f32.mrf.mxu0
        %v1576 = vadd.f32 0.0, %v1575
        %1577 = vmatmul.f32.gmra.mxu0 %v1370
        %v1578 = vpop.f32.mrf.mxu0
        %v1579 = vadd.f32 0.0, %v1578
        %1580 = vmatmul.f32.gmra.mxu0 %v1371
        %v1581 = vpop.f32.mrf.mxu0
        %v1582 = vadd.f32 0.0, %v1581
        %1583 = vmatmul.f32.gmra.mxu0 %v1372
        %v1584 = vpop.f32.mrf.mxu0
        %v1585 = vadd.f32 0.0, %v1584
        %1586 = vmatmul.f32.gmra.mxu0 %v1373
        %v1587 = vpop.f32.mrf.mxu0
        %v1588 = vadd.f32 0.0, %v1587
        %1589 = vmatmul.f32.gmra.mxu0 %v1374
        %v1590 = vpop.f32.mrf.mxu0
        %v1591 = vadd.f32 0.0, %v1590
        %1592 = vmatmul.f32.gmra.mxu0 %v1375
        %v1593 = vpop.f32.mrf.mxu0
        %v1594 = vadd.f32 0.0, %v1593
        %1595 = vmatmul.f32.gmra.mxu0 %v1376
        %v1596 = vpop.f32.mrf.mxu0
        %v1597 = vadd.f32 0.0, %v1596
        %1598 = vmatmul.f32.gmra.mxu0 %v1377
        %v1599 = vpop.f32.mrf.mxu0
        %v1600 = vadd.f32 0.0, %v1599
        %1601 = vmatmul.f32.gmra.mxu0 %v1378
        %v1602 = vpop.f32.mrf.mxu0
        %v1603 = vadd.f32 0.0, %v1602
        %1604 = vmatmul.f32.gmra.mxu0 %v1379
        %v1605 = vpop.f32.mrf.mxu0
        %v1606 = vadd.f32 0.0, %v1605
        %1607 = vmatmul.f32.gmra.mxu0 %v1380
        %v1608 = vpop.f32.mrf.mxu0
        %v1609 = vadd.f32 0.0, %v1608
        %1610 = vmatmul.f32.gmra.mxu0 %v1381
        %v1611 = vpop.f32.mrf.mxu0
        %v1612 = vadd.f32 0.0, %v1611
        %1613 = vmatmul.f32.gmra.mxu0 %v1382
        %v1614 = vpop.f32.mrf.mxu0
        %v1615 = vadd.f32 0.0, %v1614
        %1616 = vmatmul.f32.gmra.mxu0 %v1383
        %v1617 = vpop.f32.mrf.mxu0
        %v1618 = vadd.f32 0.0, %v1617
        %1619 = vmatmul.f32.gmra.mxu0 %v1384
        %v1620 = vpop.f32.mrf.mxu0
        %v1621 = vadd.f32 0.0, %v1620
        %1622 = vmatmul.f32.gmra.mxu0 %v1385
        %v1623 = vpop.f32.mrf.mxu0
        %v1624 = vadd.f32 0.0, %v1623
        %1625 = vmatmul.f32.gmra.mxu0 %v1386
        %v1626 = vpop.f32.mrf.mxu0
        %v1627 = vadd.f32 0.0, %v1626
        %1628 = vmatmul.f32.gmra.mxu0 %v1387
        %v1629 = vpop.f32.mrf.mxu0
        %v1630 = vadd.f32 0.0, %v1629
        %1631 = vmatmul.f32.gmra.mxu0 %v1388
        %v1632 = vpop.f32.mrf.mxu0
        %v1633 = vadd.f32 0.0, %v1632
        %1634 = vmatmul.f32.gmra.mxu0 %v1389
        %v1635 = vpop.f32.mrf.mxu0
        %v1636 = vadd.f32 0.0, %v1635
        %1637 = vmatmul.f32.gmra.mxu0 %v1390
        %v1638 = vpop.f32.mrf.mxu0
        %v1639 = vadd.f32 0.0, %v1638
        %1640 = vmatmul.f32.gmra.mxu0 %v1391
        %v1641 = vpop.f32.mrf.mxu0
        %v1642 = vadd.f32 0.0, %v1641
        %1643 = vmatmul.f32.gmra.mxu0 %v1392
        %v1644 = vpop.f32.mrf.mxu0
        %v1645 = vadd.f32 0.0, %v1644
        %1646 = vmatmul.f32.gmra.mxu0 %v1393
        %v1647 = vpop.f32.mrf.mxu0
        %v1648 = vadd.f32 0.0, %v1647
        %1649 = vmatmul.f32.gmra.mxu0 %v1394
        %v1650 = vpop.f32.mrf.mxu0
        %v1651 = vadd.f32 0.0, %v1650
        %1652 = vmatmul.f32.gmra.mxu0 %v1395
        %v1653 = vpop.f32.mrf.mxu0
        %v1654 = vadd.f32 0.0, %v1653
        %1655 = vmatmul.f32.gmra.mxu0 %v1396
        %v1656 = vpop.f32.mrf.mxu0
        %v1657 = vadd.f32 0.0, %v1656
        %1658 = vmatmul.f32.gmra.mxu0 %v1397
        %v1659 = vpop.f32.mrf.mxu0
        %v1660 = vadd.f32 0.0, %v1659
        %1661 = vmatmul.f32.gmra.mxu0 %v1398
        %v1662 = vpop.f32.mrf.mxu0
        %v1663 = vadd.f32 0.0, %v1662
        %1664 = vmatmul.f32.gmra.mxu0 %v1399
        %v1665 = vpop.f32.mrf.mxu0
        %v1666 = vadd.f32 0.0, %v1665
        %1667 = vmatmul.f32.gmra.mxu0 %v1400
        %v1668 = vpop.f32.mrf.mxu0
        %v1669 = vadd.f32 0.0, %v1668
        %1670 = vmatmul.f32.gmra.mxu0 %v1401
        %v1671 = vpop.f32.mrf.mxu0
        %v1672 = vadd.f32 0.0, %v1671
        %1673 = vmatmul.f32.gmra.mxu0 %v1402
        %v1674 = vpop.f32.mrf.mxu0
        %v1675 = vadd.f32 0.0, %v1674
        %1676 = vmatmul.f32.gmra.mxu0 %v1403
        %v1677 = vpop.f32.mrf.mxu0
        %v1678 = vadd.f32 0.0, %v1677
        %1679 = vmatmul.f32.gmra.mxu0 %v1404
        %v1680 = vpop.f32.mrf.mxu0
        %v1681 = vadd.f32 0.0, %v1680
        %1682 = vmatmul.f32.gmra.mxu0 %v1405
        %v1683 = vpop.f32.mrf.mxu0
        %v1684 = vadd.f32 0.0, %v1683
        %1685 = vmatmul.f32.gmra.mxu0 %v1406
        %v1686 = vpop.f32.mrf.mxu0
        %v1687 = vadd.f32 0.0, %v1686
        %1688 = vmatmul.f32.gmra.mxu0 %v1407
        %v1689 = vpop.f32.mrf.mxu0
        %v1690 = vadd.f32 0.0, %v1689
        %1691 = vmatmul.f32.gmra.mxu0 %v1408
        %v1692 = vpop.f32.mrf.mxu0
        %v1693 = vadd.f32 0.0, %v1692
        %1694 = vmatmul.f32.gmra.mxu0 %v1409
        %v1695 = vpop.f32.mrf.mxu0
        %v1696 = vadd.f32 0.0, %v1695
        %1697 = vmatmul.f32.gmra.mxu0 %v1410
        %v1698 = vpop.f32.mrf.mxu0
        %v1699 = vadd.f32 0.0, %v1698
        %1700 = vmatmul.f32.gmra.mxu0 %v1411
        %v1701 = vpop.f32.mrf.mxu0
        %v1702 = vadd.f32 0.0, %v1701
        %1703 = vmatmul.f32.gmra.mxu0 %v1412
        %v1704 = vpop.f32.mrf.mxu0
        %v1705 = vadd.f32 0.0, %v1704
        %1706 = vmatmul.f32.gmra.mxu0 %v1413
        %v1707 = vpop.f32.mrf.mxu0
        %v1708 = vadd.f32 0.0, %v1707
        %1709 = vmatmul.f32.gmra.mxu0 %v1414
        %v1710 = vpop.f32.mrf.mxu0
        %v1711 = vadd.f32 0.0, %v1710
        %1712 = vmatmul.f32.gmra.mxu0 %v1415
        %v1713 = vpop.f32.mrf.mxu0
        %v1714 = vadd.f32 0.0, %v1713
        %1715 = vmatmul.f32.gmra.mxu0 %v1416
        %v1716 = vpop.f32.mrf.mxu0
        %v1717 = vadd.f32 0.0, %v1716
        %1718 = vmatmul.f32.gmra.mxu0 %v1417
        %v1719 = vpop.f32.mrf.mxu0
        %v1720 = vadd.f32 0.0, %v1719
        %1721 = vmatmul.f32.gmra.mxu0 %v1418
        %v1722 = vpop.f32.mrf.mxu0
        %v1723 = vadd.f32 0.0, %v1722
        %1724 = vmatmul.f32.gmra.mxu0 %v1419
        %v1725 = vpop.f32.mrf.mxu0
        %v1726 = vadd.f32 0.0, %v1725
        %1727 = vmatmul.f32.gmra.mxu0 %v1420
        %v1728 = vpop.f32.mrf.mxu0
        %v1729 = vadd.f32 0.0, %v1728
        %1730 = vmatmul.f32.gmra.mxu0 %v1421
        %v1731 = vpop.f32.mrf.mxu0
        %v1732 = vadd.f32 0.0, %v1731
        %1733 = vmatmul.f32.gmra.mxu0 %v1422
        %v1734 = vpop.f32.mrf.mxu0
        %v1735 = vadd.f32 0.0, %v1734
        %1736 = vmatmul.f32.gmra.mxu0 %v1423
        %v1737 = vpop.f32.mrf.mxu0
        %v1738 = vadd.f32 0.0, %v1737
        %1739 = vmatmul.f32.gmra.mxu0 %v1424
        %v1740 = vpop.f32.mrf.mxu0
        %v1741 = vadd.f32 0.0, %v1740
        %1742 = vmatmul.f32.gmra.mxu0 %v1425
        %v1743 = vpop.f32.mrf.mxu0
        %v1744 = vadd.f32 0.0, %v1743
        %1745 = vmatmul.f32.gmra.mxu0 %v1426
        %v1746 = vpop.f32.mrf.mxu0
        %v1747 = vadd.f32 0.0, %v1746
        %1748 = vmatmul.f32.gmra.mxu0 %v1427
        %v1749 = vpop.f32.mrf.mxu0
        %v1750 = vadd.f32 0.0, %v1749
        %1751 = vmatmul.f32.gmra.mxu0 %v1428
        %v1752 = vpop.f32.mrf.mxu0
        %v1753 = vadd.f32 0.0, %v1752
        %1754 = vmatmul.f32.gmra.mxu0 %v1429
        %v1755 = vpop.f32.mrf.mxu0
        %v1756 = vadd.f32 0.0, %v1755
        %1757 = vmatmul.f32.gmra.mxu0 %v1430
        %v1758 = vpop.f32.mrf.mxu0
        %v1759 = vadd.f32 0.0, %v1758
        %1760 = vmatmul.f32.gmra.mxu0 %v1431
        %v1761 = vpop.f32.mrf.mxu0
        %v1762 = vadd.f32 0.0, %v1761
        %1763 = vmatmul.f32.gmra.mxu0 %v1432
        %v1764 = vpop.f32.mrf.mxu0
        %v1765 = vadd.f32 0.0, %v1764
        %1766 = vmatmul.f32.gmra.mxu0 %v1433
        %v1767 = vpop.f32.mrf.mxu0
        %v1768 = vadd.f32 0.0, %v1767
        %1769 = vmatmul.f32.gmra.mxu0 %v1434
        %v1770 = vpop.f32.mrf.mxu0
        %v1771 = vadd.f32 0.0, %v1770
        %1772 = vmatmul.f32.gmra.mxu0 %v1435
        %v1773 = vpop.f32.mrf.mxu0
        %v1774 = vadd.f32 0.0, %v1773
        %1775 = vmatmul.f32.gmra.mxu0 %v1436
        %v1776 = vpop.f32.mrf.mxu0
        %v1777 = vadd.f32 0.0, %v1776
        %1778 = vmatmul.f32.gmra.mxu0 %v1437
        %v1779 = vpop.f32.mrf.mxu0
        %v1780 = vadd.f32 0.0, %v1779
        %1781 = vmatmul.f32.gmra.mxu0 %v1438
        %v1782 = vpop.f32.mrf.mxu0
        %v1783 = vadd.f32 0.0, %v1782
        %1784 = vmatmul.f32.gmra.mxu0 %v1439
        %v1785 = vpop.f32.mrf.mxu0
        %v1786 = vadd.f32 0.0, %v1785
        %1787 = vmatmul.f32.gmra.mxu0 %v1440
        %v1788 = vpop.f32.mrf.mxu0
        %v1789 = vadd.f32 0.0, %v1788
        %1790 = vmatmul.f32.gmra.mxu0 %v1441
        %v1791 = vpop.f32.mrf.mxu0
        %v1792 = vadd.f32 0.0, %v1791
        %1793 = vmatmul.f32.gmra.mxu0 %v1442
        %v1794 = vpop.f32.mrf.mxu0
        %v1795 = vadd.f32 0.0, %v1794
        %1796 = vmatmul.f32.gmra.mxu0 %v1443
        %v1797 = vpop.f32.mrf.mxu0
        %v1798 = vadd.f32 0.0, %v1797
        %1799 = vmatmul.f32.gmra.mxu0 %v1444
        %v1800 = vpop.f32.mrf.mxu0
        %v1801 = vadd.f32 0.0, %v1800
        %1802 = vmatmul.f32.gmra.mxu0 %v1445
        %v1803 = vpop.f32.mrf.mxu0
        %v1804 = vadd.f32 0.0, %v1803
        %1805 = vmatmul.f32.gmra.mxu0 %v1446
        %v1806 = vpop.f32.mrf.mxu0
        %v1807 = vadd.f32 0.0, %v1806
        %1808 = vmatmul.f32.gmra.mxu0 %v1447
        %v1809 = vpop.f32.mrf.mxu0
        %v1810 = vadd.f32 0.0, %v1809
        %1811 = vmatmul.f32.gmra.mxu0 %v1448
        %v1812 = vpop.f32.mrf.mxu0
        %v1813 = vadd.f32 0.0, %v1812
        %1814 = vmatmul.f32.gmra.mxu0 %v1449
        %v1815 = vpop.f32.mrf.mxu0
        %v1816 = vadd.f32 0.0, %v1815
        %1817 = vmatmul.f32.gmra.mxu0 %v1450
        %v1818 = vpop.f32.mrf.mxu0
        %v1819 = vadd.f32 0.0, %v1818
        %1820 = vmatmul.f32.gmra.mxu0 %v1451
        %v1821 = vpop.f32.mrf.mxu0
        %v1822 = vadd.f32 0.0, %v1821
        %1823 = vmatmul.f32.gmra.mxu0 %v1452
        %v1824 = vpop.f32.mrf.mxu0
        %v1825 = vadd.f32 0.0, %v1824
        %1826 = vmatmul.f32.gmra.mxu0 %v1453
        %v1827 = vpop.f32.mrf.mxu0
        %v1828 = vadd.f32 0.0, %v1827
        %1829 = vmatmul.f32.gmra.mxu0 %v1454
        %v1830 = vpop.f32.mrf.mxu0
        %v1831 = vadd.f32 0.0, %v1830
        %1832 = vmatmul.f32.gmra.mxu0 %v1455
        %v1833 = vpop.f32.mrf.mxu0
        %v1834 = vadd.f32 0.0, %v1833
        %1835 = vmatmul.f32.gmra.mxu0 %v1456
        %v1836 = vpop.f32.mrf.mxu0
        %v1837 = vadd.f32 0.0, %v1836
        %1838 = vmatmul.f32.gmra.mxu0 %v1457
        %v1839 = vpop.f32.mrf.mxu0
        %v1840 = vadd.f32 0.0, %v1839
        %1841 = vmatmul.f32.gmra.mxu0 %v1458
        %v1842 = vpop.f32.mrf.mxu0
        %v1843 = vadd.f32 0.0, %v1842
        %1844 = vmatmul.f32.gmra.mxu0 %v1459
        %v1845 = vpop.f32.mrf.mxu0
        %v1846 = vadd.f32 0.0, %v1845
        %1847 = vmatmul.f32.gmra.mxu0 %v1460
        %v1848 = vpop.f32.mrf.mxu0
        %v1849 = vadd.f32 0.0, %v1848
        %1850 = vmatmul.f32.gmra.mxu0 %v1461
        %v1851 = vpop.f32.mrf.mxu0
        %v1852 = vadd.f32 0.0, %v1851
        %1853 = vmatmul.f32.gmra.mxu0 %v1462
        %v1854 = vpop.f32.mrf.mxu0
        %v1855 = vadd.f32 0.0, %v1854
        %1856 = vmatmul.f32.gmra.mxu0 %v1463
        %v1857 = vpop.f32.mrf.mxu0
        %v1858 = vadd.f32 0.0, %v1857
        %1859 = vmatmul.f32.gmra.mxu0 %v1464
        %v1860 = vpop.f32.mrf.mxu0
        %v1861 = vadd.f32 0.0, %v1860
        %1862 = vmatmul.f32.gmra.mxu0 %v1465
        %v1863 = vpop.f32.mrf.mxu0
        %v1864 = vadd.f32 0.0, %v1863
        %1865 = vmatmul.f32.gmra.mxu0 %v1466
        %v1866 = vpop.f32.mrf.mxu0
        %v1867 = vadd.f32 0.0, %v1866
        %1868 = vmatmul.f32.gmra.mxu0 %v1467
        %v1869 = vpop.f32.mrf.mxu0
        %v1870 = vadd.f32 0.0, %v1869
        %1871 = vmatmul.f32.gmra.mxu0 %v1468
        %v1872 = vpop.f32.mrf.mxu0
        %v1873 = vadd.f32 0.0, %v1872
        %1874 = vmatmul.f32.gmra.mxu0 %v1469
        %v1875 = vpop.f32.mrf.mxu0
        %v1876 = vadd.f32 0.0, %v1875
        %1877 = vmatmul.f32.gmra.mxu0 %v1470
        %v1878 = vpop.f32.mrf.mxu0
        %v1879 = vadd.f32 0.0, %v1878
        %1880 = vmatmul.f32.gmra.mxu0 %v1471
        %v1881 = vpop.f32.mrf.mxu0
        %v1882 = vadd.f32 0.0, %v1881
        %1883 = vmatmul.f32.gmra.mxu0 %v1472
        %v1884 = vpop.f32.mrf.mxu0
        %v1885 = vadd.f32 0.0, %v1884
        %1886 = vmatmul.f32.gmra.mxu0 %v1473
        %v1887 = vpop.f32.mrf.mxu0
        %v1888 = vadd.f32 0.0, %v1887
        %1889 = vmatmul.f32.gmra.mxu0 %v1474
        %v1890 = vpop.f32.mrf.mxu0
        %v1891 = vadd.f32 0.0, %v1890
        %1892 = vmatmul.f32.gmra.mxu0 %v1475
        %v1893 = vpop.f32.mrf.mxu0
        %v1894 = vadd.f32 0.0, %v1893
        %1895 = vmatmul.f32.gmra.mxu0 %v1476
        %v1896 = vpop.f32.mrf.mxu0
        %v1897 = vadd.f32 0.0, %v1896
        %1898 = vmatmul.f32.gmra.mxu0 %v1477
        %v1899 = vpop.f32.mrf.mxu0
        %v1900 = vadd.f32 0.0, %v1899
        %1901 = vmatmul.f32.gmra.mxu0 %v1478
        %v1902 = vpop.f32.mrf.mxu0
        %v1903 = vadd.f32 0.0, %v1902
        %1904 = vmatmul.f32.gmra.mxu0 %v1479
        %v1905 = vpop.f32.mrf.mxu0
        %v1906 = vadd.f32 0.0, %v1905
        %1907 = vmatmul.f32.gmra.mxu0 %v1480
        %v1908 = vpop.f32.mrf.mxu0
        %v1909 = vadd.f32 0.0, %v1908
        %1910 = vmatmul.f32.gmra.mxu0 %v1481
        %v1911 = vpop.f32.mrf.mxu0
        %v1912 = vadd.f32 0.0, %v1911
        %1913 = vmatmul.f32.gmra.mxu0 %v1482
        %v1914 = vpop.f32.mrf.mxu0
        %v1915 = vadd.f32 0.0, %v1914
        %1916 = vmatmul.f32.gmra.mxu0 %v1483
        %v1917 = vpop.f32.mrf.mxu0
        %v1918 = vadd.f32 0.0, %v1917
        %1919 = vmatmul.f32.gmra.mxu0 %v1484
        %v1920 = vpop.f32.mrf.mxu0
        %v1921 = vadd.f32 0.0, %v1920
        %1922 = vmatmul.f32.gmra.mxu0 %v1485
        %v1923 = vpop.f32.mrf.mxu0
        %v1924 = vadd.f32 0.0, %v1923
        %1925 = vmatmul.f32.gmra.mxu0 %v1486
        %v1926 = vpop.f32.mrf.mxu0
        %v1927 = vadd.f32 0.0, %v1926
        %1928 = vdwg.mxu0
        %v1929 = vadd.f32 %v944, %v1522
        %v1930 = vadd.f32 %v947, %v1525
        %v1931 = vadd.f32 %v950, %v1528
        %v1932 = vadd.f32 %v953, %v1531
        %v1933 = vadd.f32 %v956, %v1534
        %v1934 = vadd.f32 %v959, %v1537
        %v1935 = vadd.f32 %v962, %v1540
        %v1936 = vadd.f32 %v965, %v1543
        %v1937 = vadd.f32 %v968, %v1546
        %v1938 = vadd.f32 %v971, %v1549
        %v1939 = vadd.f32 %v974, %v1552
        %v1940 = vadd.f32 %v977, %v1555
        %v1941 = vadd.f32 %v980, %v1558
        %v1942 = vadd.f32 %v983, %v1561
        %v1943 = vadd.f32 %v986, %v1564
        %v1944 = vadd.f32 %v989, %v1567
        %v1945 = vadd.f32 %v992, %v1570
        %v1946 = vadd.f32 %v995, %v1573
        %v1947 = vadd.f32 %v998, %v1576
        %v1948 = vadd.f32 %v1001, %v1579
        %v1949 = vadd.f32 %v1004, %v1582
        %v1950 = vadd.f32 %v1007, %v1585
        %v1951 = vadd.f32 %v1010, %v1588
        %v1952 = vadd.f32 %v1013, %v1591
        %v1953 = vadd.f32 %v1016, %v1594
        %v1954 = vadd.f32 %v1019, %v1597
        %v1955 = vadd.f32 %v1022, %v1600
        %v1956 = vadd.f32 %v1025, %v1603
        %v1957 = vadd.f32 %v1028, %v1606
        %v1958 = vadd.f32 %v1031, %v1609
        %v1959 = vadd.f32 %v1034, %v1612
        %v1960 = vadd.f32 %v1037, %v1615
        %v1961 = vadd.f32 %v1040, %v1618
        %v1962 = vadd.f32 %v1043, %v1621
        %v1963 = vadd.f32 %v1046, %v1624
        %v1964 = vadd.f32 %v1049, %v1627
        %v1965 = vadd.f32 %v1052, %v1630
        %v1966 = vadd.f32 %v1055, %v1633
        %v1967 = vadd.f32 %v1058, %v1636
        %v1968 = vadd.f32 %v1061, %v1639
        %v1969 = vadd.f32 %v1064, %v1642
        %v1970 = vadd.f32 %v1067, %v1645
        %v1971 = vadd.f32 %v1070, %v1648
        %v1972 = vadd.f32 %v1073, %v1651
        %v1973 = vadd.f32 %v1076, %v1654
        %v1974 = vadd.f32 %v1079, %v1657
        %v1975 = vadd.f32 %v1082, %v1660
        %v1976 = vadd.f32 %v1085, %v1663
        %v1977 = vadd.f32 %v1088, %v1666
        %v1978 = vadd.f32 %v1091, %v1669
        %v1979 = vadd.f32 %v1094, %v1672
        %v1980 = vadd.f32 %v1097, %v1675
        %v1981 = vadd.f32 %v1100, %v1678
        %v1982 = vadd.f32 %v1103, %v1681
        %v1983 = vadd.f32 %v1106, %v1684
        %v1984 = vadd.f32 %v1109, %v1687
        %v1985 = vadd.f32 %v1112, %v1690
        %v1986 = vadd.f32 %v1115, %v1693
        %v1987 = vadd.f32 %v1118, %v1696
        %v1988 = vadd.f32 %v1121, %v1699
        %v1989 = vadd.f32 %v1124, %v1702
        %v1990 = vadd.f32 %v1127, %v1705
        %v1991 = vadd.f32 %v1130, %v1708
        %v1992 = vadd.f32 %v1133, %v1711
        %v1993 = vadd.f32 %v1136, %v1714
        %v1994 = vadd.f32 %v1139, %v1717
        %v1995 = vadd.f32 %v1142, %v1720
        %v1996 = vadd.f32 %v1145, %v1723
        %v1997 = vadd.f32 %v1148, %v1726
        %v1998 = vadd.f32 %v1151, %v1729
        %v1999 = vadd.f32 %v1154, %v1732
        %v2000 = vadd.f32 %v1157, %v1735
        %v2001 = vadd.f32 %v1160, %v1738
        %v2002 = vadd.f32 %v1163, %v1741
        %v2003 = vadd.f32 %v1166, %v1744
        %v2004 = vadd.f32 %v1169, %v1747
        %v2005 = vadd.f32 %v1172, %v1750
        %v2006 = vadd.f32 %v1175, %v1753
        %v2007 = vadd.f32 %v1178, %v1756
        %v2008 = vadd.f32 %v1181, %v1759
        %v2009 = vadd.f32 %v1184, %v1762
        %v2010 = vadd.f32 %v1187, %v1765
        %v2011 = vadd.f32 %v1190, %v1768
        %v2012 = vadd.f32 %v1193, %v1771
        %v2013 = vadd.f32 %v1196, %v1774
        %v2014 = vadd.f32 %v1199, %v1777
        %v2015 = vadd.f32 %v1202, %v1780
        %v2016 = vadd.f32 %v1205, %v1783
        %v2017 = vadd.f32 %v1208, %v1786
        %v2018 = vadd.f32 %v1211, %v1789
        %v2019 = vadd.f32 %v1214, %v1792
        %v2020 = vadd.f32 %v1217, %v1795
        %v2021 = vadd.f32 %v1220, %v1798
        %v2022 = vadd.f32 %v1223, %v1801
        %v2023 = vadd.f32 %v1226, %v1804
        %v2024 = vadd.f32 %v1229, %v1807
        %v2025 = vadd.f32 %v1232, %v1810
        %v2026 = vadd.f32 %v1235, %v1813
        %v2027 = vadd.f32 %v1238, %v1816
        %v2028 = vadd.f32 %v1241, %v1819
        %v2029 = vadd.f32 %v1244, %v1822
        %v2030 = vadd.f32 %v1247, %v1825
        %v2031 = vadd.f32 %v1250, %v1828
        %v2032 = vadd.f32 %v1253, %v1831
        %v2033 = vadd.f32 %v1256, %v1834
        %v2034 = vadd.f32 %v1259, %v1837
        %v2035 = vadd.f32 %v1262, %v1840
        %v2036 = vadd.f32 %v1265, %v1843
        %v2037 = vadd.f32 %v1268, %v1846
        %v2038 = vadd.f32 %v1271, %v1849
        %v2039 = vadd.f32 %v1274, %v1852
        %v2040 = vadd.f32 %v1277, %v1855
        %v2041 = vadd.f32 %v1280, %v1858
        %v2042 = vadd.f32 %v1283, %v1861
        %v2043 = vadd.f32 %v1286, %v1864
        %v2044 = vadd.f32 %v1289, %v1867
        %v2045 = vadd.f32 %v1292, %v1870
        %v2046 = vadd.f32 %v1295, %v1873
        %v2047 = vadd.f32 %v1298, %v1876
        %v2048 = vadd.f32 %v1301, %v1879
        %v2049 = vadd.f32 %v1304, %v1882
        %v2050 = vadd.f32 %v1307, %v1885
        %v2051 = vadd.f32 %v1310, %v1888
        %v2052 = vadd.f32 %v1313, %v1891
        %v2053 = vadd.f32 %v1316, %v1894
        %v2054 = vadd.f32 %v1319, %v1897
        %v2055 = vadd.f32 %v1322, %v1900
        %v2056 = vadd.f32 %v1325, %v1903
        %v2057 = vadd.f32 %v1328, %v1906
        %v2058 = vadd.f32 %v1331, %v1909
        %v2059 = vadd.f32 %v1334, %v1912
        %v2060 = vadd.f32 %v1337, %v1915
        %v2061 = vadd.f32 %v1340, %v1918
        %v2062 = vadd.f32 %v1343, %v1921
        %v2063 = vadd.f32 %v1346, %v1924
        %v2064 = vadd.f32 %v1349, %v1927
        %v2065 = vld [vmem:[%s195 + $0x22] sm:$0xff]
        %v2066 = vld [vmem:[%s195 + $0x2a] sm:$0xff]
        %v2067 = vld [vmem:[%s195 + $0x32] sm:$0xff]
        %v2068 = vld [vmem:[%s195 + $0x3a] sm:$0xff]
        %v2069 = vld [vmem:[%s195 + $0x42] sm:$0xff]
        %v2070 = vld [vmem:[%s195 + $0x4a] sm:$0xff]
        %v2071 = vld [vmem:[%s195 + $0x52] sm:$0xff]
        %v2072 = vld [vmem:[%s195 + $0x5a] sm:$0xff]
        %v2073 = vld [vmem:[%s195 + $0x62] sm:$0xff]
        %v2074 = vld [vmem:[%s195 + $0x6a] sm:$0xff]
        %v2075 = vld [vmem:[%s195 + $0x72] sm:$0xff]
        %v2076 = vld [vmem:[%s195 + $0x7a] sm:$0xff]
        %v2077 = vld [vmem:[%s195 + $0x82] sm:$0xff]
        %v2078 = vld [vmem:[%s195 + $0x8a] sm:$0xff]
        %v2079 = vld [vmem:[%s195 + $0x92] sm:$0xff]
        %v2080 = vld [vmem:[%s195 + $0x9a] sm:$0xff]
        %v2081 = vld [vmem:[%s195 + $0xa2] sm:$0xff]
        %v2082 = vld [vmem:[%s195 + $0xaa] sm:$0xff]
        %v2083 = vld [vmem:[%s195 + $0xb2] sm:$0xff]
        %v2084 = vld [vmem:[%s195 + $0xba] sm:$0xff]
        %v2085 = vld [vmem:[%s195 + $0xc2] sm:$0xff]
        %v2086 = vld [vmem:[%s195 + $0xca] sm:$0xff]
        %v2087 = vld [vmem:[%s195 + $0xd2] sm:$0xff]
        %v2088 = vld [vmem:[%s195 + $0xda] sm:$0xff]
        %v2089 = vld [vmem:[%s195 + $0xe2] sm:$0xff]
        %v2090 = vld [vmem:[%s195 + $0xea] sm:$0xff]
        %v2091 = vld [vmem:[%s195 + $0xf2] sm:$0xff]
        %v2092 = vld [vmem:[%s195 + $0xfa] sm:$0xff]
        %v2093 = vld [vmem:[%s195 + $0x102] sm:$0xff]
        %v2094 = vld [vmem:[%s195 + $0x10a] sm:$0xff]
        %v2095 = vld [vmem:[%s195 + $0x112] sm:$0xff]
        %v2096 = vld [vmem:[%s195 + $0x11a] sm:$0xff]
        %v2097 = vld [vmem:[%s195 + $0x122] sm:$0xff]
        %v2098 = vld [vmem:[%s195 + $0x12a] sm:$0xff]
        %v2099 = vld [vmem:[%s195 + $0x132] sm:$0xff]
        %v2100 = vld [vmem:[%s195 + $0x13a] sm:$0xff]
        %v2101 = vld [vmem:[%s195 + $0x142] sm:$0xff]
        %v2102 = vld [vmem:[%s195 + $0x14a] sm:$0xff]
        %v2103 = vld [vmem:[%s195 + $0x152] sm:$0xff]
        %v2104 = vld [vmem:[%s195 + $0x15a] sm:$0xff]
        %v2105 = vld [vmem:[%s195 + $0x162] sm:$0xff]
        %v2106 = vld [vmem:[%s195 + $0x16a] sm:$0xff]
        %v2107 = vld [vmem:[%s195 + $0x172] sm:$0xff]
        %v2108 = vld [vmem:[%s195 + $0x17a] sm:$0xff]
        %v2109 = vld [vmem:[%s195 + $0x182] sm:$0xff]
        %v2110 = vld [vmem:[%s195 + $0x18a] sm:$0xff]
        %v2111 = vld [vmem:[%s195 + $0x192] sm:$0xff]
        %v2112 = vld [vmem:[%s195 + $0x19a] sm:$0xff]
        %v2113 = vld [vmem:[%s195 + $0x1a2] sm:$0xff]
        %v2114 = vld [vmem:[%s195 + $0x1aa] sm:$0xff]
        %v2115 = vld [vmem:[%s195 + $0x1b2] sm:$0xff]
        %v2116 = vld [vmem:[%s195 + $0x1ba] sm:$0xff]
        %v2117 = vld [vmem:[%s195 + $0x1c2] sm:$0xff]
        %v2118 = vld [vmem:[%s195 + $0x1ca] sm:$0xff]
        %v2119 = vld [vmem:[%s195 + $0x1d2] sm:$0xff]
        %v2120 = vld [vmem:[%s195 + $0x1da] sm:$0xff]
        %v2121 = vld [vmem:[%s195 + $0x1e2] sm:$0xff]
        %v2122 = vld [vmem:[%s195 + $0x1ea] sm:$0xff]
        %v2123 = vld [vmem:[%s195 + $0x1f2] sm:$0xff]
        %v2124 = vld [vmem:[%s195 + $0x1fa] sm:$0xff]
        %v2125 = vld [vmem:[%s195 + $0x202] sm:$0xff]
        %v2126 = vld [vmem:[%s195 + $0x20a] sm:$0xff]
        %v2127 = vld [vmem:[%s195 + $0x212] sm:$0xff]
        %v2128 = vld [vmem:[%s195 + $0x21a] sm:$0xff]
        %v2129 = vld [vmem:[%s195 + $0x222] sm:$0xff]
        %v2130 = vld [vmem:[%s195 + $0x22a] sm:$0xff]
        %v2131 = vld [vmem:[%s195 + $0x232] sm:$0xff]
        %v2132 = vld [vmem:[%s195 + $0x23a] sm:$0xff]
        %v2133 = vld [vmem:[%s195 + $0x242] sm:$0xff]
        %v2134 = vld [vmem:[%s195 + $0x24a] sm:$0xff]
        %v2135 = vld [vmem:[%s195 + $0x252] sm:$0xff]
        %v2136 = vld [vmem:[%s195 + $0x25a] sm:$0xff]
        %v2137 = vld [vmem:[%s195 + $0x262] sm:$0xff]
        %v2138 = vld [vmem:[%s195 + $0x26a] sm:$0xff]
        %v2139 = vld [vmem:[%s195 + $0x272] sm:$0xff]
        %v2140 = vld [vmem:[%s195 + $0x27a] sm:$0xff]
        %v2141 = vld [vmem:[%s195 + $0x282] sm:$0xff]
        %v2142 = vld [vmem:[%s195 + $0x28a] sm:$0xff]
        %v2143 = vld [vmem:[%s195 + $0x292] sm:$0xff]
        %v2144 = vld [vmem:[%s195 + $0x29a] sm:$0xff]
        %v2145 = vld [vmem:[%s195 + $0x2a2] sm:$0xff]
        %v2146 = vld [vmem:[%s195 + $0x2aa] sm:$0xff]
        %v2147 = vld [vmem:[%s195 + $0x2b2] sm:$0xff]
        %v2148 = vld [vmem:[%s195 + $0x2ba] sm:$0xff]
        %v2149 = vld [vmem:[%s195 + $0x2c2] sm:$0xff]
        %v2150 = vld [vmem:[%s195 + $0x2ca] sm:$0xff]
        %v2151 = vld [vmem:[%s195 + $0x2d2] sm:$0xff]
        %v2152 = vld [vmem:[%s195 + $0x2da] sm:$0xff]
        %v2153 = vld [vmem:[%s195 + $0x2e2] sm:$0xff]
        %v2154 = vld [vmem:[%s195 + $0x2ea] sm:$0xff]
        %v2155 = vld [vmem:[%s195 + $0x2f2] sm:$0xff]
        %v2156 = vld [vmem:[%s195 + $0x2fa] sm:$0xff]
        %v2157 = vld [vmem:[%s195 + $0x302] sm:$0xff]
        %v2158 = vld [vmem:[%s195 + $0x30a] sm:$0xff]
        %v2159 = vld [vmem:[%s195 + $0x312] sm:$0xff]
        %v2160 = vld [vmem:[%s195 + $0x31a] sm:$0xff]
        %v2161 = vld [vmem:[%s195 + $0x322] sm:$0xff]
        %v2162 = vld [vmem:[%s195 + $0x32a] sm:$0xff]
        %v2163 = vld [vmem:[%s195 + $0x332] sm:$0xff]
        %v2164 = vld [vmem:[%s195 + $0x33a] sm:$0xff]
        %v2165 = vld [vmem:[%s195 + $0x342] sm:$0xff]
        %v2166 = vld [vmem:[%s195 + $0x34a] sm:$0xff]
        %v2167 = vld [vmem:[%s195 + $0x352] sm:$0xff]
        %v2168 = vld [vmem:[%s195 + $0x35a] sm:$0xff]
        %v2169 = vld [vmem:[%s195 + $0x362] sm:$0xff]
        %v2170 = vld [vmem:[%s195 + $0x36a] sm:$0xff]
        %v2171 = vld [vmem:[%s195 + $0x372] sm:$0xff]
        %v2172 = vld [vmem:[%s195 + $0x37a] sm:$0xff]
        %v2173 = vld [vmem:[%s195 + $0x382] sm:$0xff]
        %v2174 = vld [vmem:[%s195 + $0x38a] sm:$0xff]
        %v2175 = vld [vmem:[%s195 + $0x392] sm:$0xff]
        %v2176 = vld [vmem:[%s195 + $0x39a] sm:$0xff]
        %v2177 = vld [vmem:[%s195 + $0x3a2] sm:$0xff]
        %v2178 = vld [vmem:[%s195 + $0x3aa] sm:$0xff]
        %v2179 = vld [vmem:[%s195 + $0x3b2] sm:$0xff]
        %v2180 = vld [vmem:[%s195 + $0x3ba] sm:$0xff]
        %v2181 = vld [vmem:[%s195 + $0x3c2] sm:$0xff]
        %v2182 = vld [vmem:[%s195 + $0x3ca] sm:$0xff]
        %v2183 = vld [vmem:[%s195 + $0x3d2] sm:$0xff]
        %v2184 = vld [vmem:[%s195 + $0x3da] sm:$0xff]
        %v2185 = vld [vmem:[%s195 + $0x3e2] sm:$0xff]
        %v2186 = vld [vmem:[%s195 + $0x3ea] sm:$0xff]
        %v2187 = vld [vmem:[%s195 + $0x3f2] sm:$0xff]
        %v2188 = vld [vmem:[%s195 + $0x3fa] sm:$0xff]
        %v2189 = vld [vmem:[%s195 + $0x402] sm:$0xff]
        %v2190 = vld [vmem:[%s195 + $0x40a] sm:$0xff]
        %v2191 = vld [vmem:[%s195 + $0x412] sm:$0xff]
        %v2192 = vld [vmem:[%s195 + $0x41a] sm:$0xff]
        %v2193 = vld [vmem:[%s195 + $0x422] sm:$0xff]
        %v2194 = vld [vmem:[%s195 + $0x42a] sm:$0xff]
        %v2195 = vld [vmem:[%s195 + $0x432] sm:$0xff]
        %v2196 = vld [vmem:[%s195 + $0x43a] sm:$0xff]
        %v2197 = vld [vmem:[%s195 + $0x442] sm:$0xff]
        %v2198 = vld [vmem:[%s195 + $0x44a] sm:$0xff]
        %v2199 = vld [vmem:[%s195 + $0x452] sm:$0xff]
        %v2200 = vld [vmem:[%s195 + $0x45a] sm:$0xff]
        %s2201 = scalar_lea.vmem %s1, 384
        %v2202 = vld [vmem:[%s2201] sm:$0xff]
        %v2203 = vld [vmem:[%s2201 + $0x8] sm:$0xff]
        %v2204 = vld [vmem:[%s2201 + $0x10] sm:$0xff]
        %v2205 = vld [vmem:[%s2201 + $0x18] sm:$0xff]
        %v2206 = vld [vmem:[%s2201 + $0x20] sm:$0xff]
        %v2207 = vld [vmem:[%s2201 + $0x28] sm:$0xff]
        %v2208 = vld [vmem:[%s2201 + $0x30] sm:$0xff]
        %v2209 = vld [vmem:[%s2201 + $0x38] sm:$0xff]
        %v2210 = vld [vmem:[%s2201 + $0x40] sm:$0xff]
        %v2211 = vld [vmem:[%s2201 + $0x48] sm:$0xff]
        %v2212 = vld [vmem:[%s2201 + $0x50] sm:$0xff]
        %v2213 = vld [vmem:[%s2201 + $0x58] sm:$0xff]
        %v2214 = vld [vmem:[%s2201 + $0x60] sm:$0xff]
        %v2215 = vld [vmem:[%s2201 + $0x68] sm:$0xff]
        %v2216 = vld [vmem:[%s2201 + $0x70] sm:$0xff]
        %v2217 = vld [vmem:[%s2201 + $0x78] sm:$0xff]
        %2218 = vmatpush.msra.mxu0 %v2217
        %2219 = vmatpush.msra.mxu0 %v2216
        %2220 = vmatpush.msra.mxu0 %v2215
        %2221 = vmatpush.msra.mxu0 %v2214
        %2222 = vmatpush.msra.mxu0 %v2213
        %2223 = vmatpush.msra.mxu0 %v2212
        %2224 = vmatpush.msra.mxu0 %v2211
        %2225 = vmatpush.msra.mxu0 %v2210
        %2226 = vmatpush.msra.mxu0 %v2209
        %2227 = vmatpush.msra.mxu0 %v2208
        %2228 = vmatpush.msra.mxu0 %v2207
        %2229 = vmatpush.msra.mxu0 %v2206
        %2230 = vmatpush.msra.mxu0 %v2205
        %2231 = vmatpush.msra.mxu0 %v2204
        %2232 = vmatpush.msra.mxu0 %v2203
        %2233 = vmatpush.msra.mxu0 %v2202
        %2234 = vmatmul.f32.gmra.mxu0 %v2065
        %v2235 = vpop.f32.mrf.mxu0
        %v2236 = vadd.f32 0.0, %v2235
        %2237 = vmatmul.f32.gmra.mxu0 %v2066
        %v2238 = vpop.f32.mrf.mxu0
        %v2239 = vadd.f32 0.0, %v2238
        %2240 = vmatmul.f32.gmra.mxu0 %v2067
        %v2241 = vpop.f32.mrf.mxu0
        %v2242 = vadd.f32 0.0, %v2241
        %2243 = vmatmul.f32.gmra.mxu0 %v2068
        %v2244 = vpop.f32.mrf.mxu0
        %v2245 = vadd.f32 0.0, %v2244
        %2246 = vmatmul.f32.gmra.mxu0 %v2069
        %v2247 = vpop.f32.mrf.mxu0
        %v2248 = vadd.f32 0.0, %v2247
        %2249 = vmatmul.f32.gmra.mxu0 %v2070
        %v2250 = vpop.f32.mrf.mxu0
        %v2251 = vadd.f32 0.0, %v2250
        %2252 = vmatmul.f32.gmra.mxu0 %v2071
        %v2253 = vpop.f32.mrf.mxu0
        %v2254 = vadd.f32 0.0, %v2253
        %2255 = vmatmul.f32.gmra.mxu0 %v2072
        %v2256 = vpop.f32.mrf.mxu0
        %v2257 = vadd.f32 0.0, %v2256
        %2258 = vmatmul.f32.gmra.mxu0 %v2073
        %v2259 = vpop.f32.mrf.mxu0
        %v2260 = vadd.f32 0.0, %v2259
        %2261 = vmatmul.f32.gmra.mxu0 %v2074
        %v2262 = vpop.f32.mrf.mxu0
        %v2263 = vadd.f32 0.0, %v2262
        %2264 = vmatmul.f32.gmra.mxu0 %v2075
        %v2265 = vpop.f32.mrf.mxu0
        %v2266 = vadd.f32 0.0, %v2265
        %2267 = vmatmul.f32.gmra.mxu0 %v2076
        %v2268 = vpop.f32.mrf.mxu0
        %v2269 = vadd.f32 0.0, %v2268
        %2270 = vmatmul.f32.gmra.mxu0 %v2077
        %v2271 = vpop.f32.mrf.mxu0
        %v2272 = vadd.f32 0.0, %v2271
        %2273 = vmatmul.f32.gmra.mxu0 %v2078
        %v2274 = vpop.f32.mrf.mxu0
        %v2275 = vadd.f32 0.0, %v2274
        %2276 = vmatmul.f32.gmra.mxu0 %v2079
        %v2277 = vpop.f32.mrf.mxu0
        %v2278 = vadd.f32 0.0, %v2277
        %2279 = vmatmul.f32.gmra.mxu0 %v2080
        %v2280 = vpop.f32.mrf.mxu0
        %v2281 = vadd.f32 0.0, %v2280
        %2282 = vmatmul.f32.gmra.mxu0 %v2081
        %v2283 = vpop.f32.mrf.mxu0
        %v2284 = vadd.f32 0.0, %v2283
        %2285 = vmatmul.f32.gmra.mxu0 %v2082
        %v2286 = vpop.f32.mrf.mxu0
        %v2287 = vadd.f32 0.0, %v2286
        %2288 = vmatmul.f32.gmra.mxu0 %v2083
        %v2289 = vpop.f32.mrf.mxu0
        %v2290 = vadd.f32 0.0, %v2289
        %2291 = vmatmul.f32.gmra.mxu0 %v2084
        %v2292 = vpop.f32.mrf.mxu0
        %v2293 = vadd.f32 0.0, %v2292
        %2294 = vmatmul.f32.gmra.mxu0 %v2085
        %v2295 = vpop.f32.mrf.mxu0
        %v2296 = vadd.f32 0.0, %v2295
        %2297 = vmatmul.f32.gmra.mxu0 %v2086
        %v2298 = vpop.f32.mrf.mxu0
        %v2299 = vadd.f32 0.0, %v2298
        %2300 = vmatmul.f32.gmra.mxu0 %v2087
        %v2301 = vpop.f32.mrf.mxu0
        %v2302 = vadd.f32 0.0, %v2301
        %2303 = vmatmul.f32.gmra.mxu0 %v2088
        %v2304 = vpop.f32.mrf.mxu0
        %v2305 = vadd.f32 0.0, %v2304
        %2306 = vmatmul.f32.gmra.mxu0 %v2089
        %v2307 = vpop.f32.mrf.mxu0
        %v2308 = vadd.f32 0.0, %v2307
        %2309 = vmatmul.f32.gmra.mxu0 %v2090
        %v2310 = vpop.f32.mrf.mxu0
        %v2311 = vadd.f32 0.0, %v2310
        %2312 = vmatmul.f32.gmra.mxu0 %v2091
        %v2313 = vpop.f32.mrf.mxu0
        %v2314 = vadd.f32 0.0, %v2313
        %2315 = vmatmul.f32.gmra.mxu0 %v2092
        %v2316 = vpop.f32.mrf.mxu0
        %v2317 = vadd.f32 0.0, %v2316
        %2318 = vmatmul.f32.gmra.mxu0 %v2093
        %v2319 = vpop.f32.mrf.mxu0
        %v2320 = vadd.f32 0.0, %v2319
        %2321 = vmatmul.f32.gmra.mxu0 %v2094
        %v2322 = vpop.f32.mrf.mxu0
        %v2323 = vadd.f32 0.0, %v2322
        %2324 = vmatmul.f32.gmra.mxu0 %v2095
        %v2325 = vpop.f32.mrf.mxu0
        %v2326 = vadd.f32 0.0, %v2325
        %2327 = vmatmul.f32.gmra.mxu0 %v2096
        %v2328 = vpop.f32.mrf.mxu0
        %v2329 = vadd.f32 0.0, %v2328
        %2330 = vmatmul.f32.gmra.mxu0 %v2097
        %v2331 = vpop.f32.mrf.mxu0
        %v2332 = vadd.f32 0.0, %v2331
        %2333 = vmatmul.f32.gmra.mxu0 %v2098
        %v2334 = vpop.f32.mrf.mxu0
        %v2335 = vadd.f32 0.0, %v2334
        %2336 = vmatmul.f32.gmra.mxu0 %v2099
        %v2337 = vpop.f32.mrf.mxu0
        %v2338 = vadd.f32 0.0, %v2337
        %2339 = vmatmul.f32.gmra.mxu0 %v2100
        %v2340 = vpop.f32.mrf.mxu0
        %v2341 = vadd.f32 0.0, %v2340
        %2342 = vmatmul.f32.gmra.mxu0 %v2101
        %v2343 = vpop.f32.mrf.mxu0
        %v2344 = vadd.f32 0.0, %v2343
        %2345 = vmatmul.f32.gmra.mxu0 %v2102
        %v2346 = vpop.f32.mrf.mxu0
        %v2347 = vadd.f32 0.0, %v2346
        %2348 = vmatmul.f32.gmra.mxu0 %v2103
        %v2349 = vpop.f32.mrf.mxu0
        %v2350 = vadd.f32 0.0, %v2349
        %2351 = vmatmul.f32.gmra.mxu0 %v2104
        %v2352 = vpop.f32.mrf.mxu0
        %v2353 = vadd.f32 0.0, %v2352
        %2354 = vmatmul.f32.gmra.mxu0 %v2105
        %v2355 = vpop.f32.mrf.mxu0
        %v2356 = vadd.f32 0.0, %v2355
        %2357 = vmatmul.f32.gmra.mxu0 %v2106
        %v2358 = vpop.f32.mrf.mxu0
        %v2359 = vadd.f32 0.0, %v2358
        %2360 = vmatmul.f32.gmra.mxu0 %v2107
        %v2361 = vpop.f32.mrf.mxu0
        %v2362 = vadd.f32 0.0, %v2361
        %2363 = vmatmul.f32.gmra.mxu0 %v2108
        %v2364 = vpop.f32.mrf.mxu0
        %v2365 = vadd.f32 0.0, %v2364
        %2366 = vmatmul.f32.gmra.mxu0 %v2109
        %v2367 = vpop.f32.mrf.mxu0
        %v2368 = vadd.f32 0.0, %v2367
        %2369 = vmatmul.f32.gmra.mxu0 %v2110
        %v2370 = vpop.f32.mrf.mxu0
        %v2371 = vadd.f32 0.0, %v2370
        %2372 = vmatmul.f32.gmra.mxu0 %v2111
        %v2373 = vpop.f32.mrf.mxu0
        %v2374 = vadd.f32 0.0, %v2373
        %2375 = vmatmul.f32.gmra.mxu0 %v2112
        %v2376 = vpop.f32.mrf.mxu0
        %v2377 = vadd.f32 0.0, %v2376
        %2378 = vmatmul.f32.gmra.mxu0 %v2113
        %v2379 = vpop.f32.mrf.mxu0
        %v2380 = vadd.f32 0.0, %v2379
        %2381 = vmatmul.f32.gmra.mxu0 %v2114
        %v2382 = vpop.f32.mrf.mxu0
        %v2383 = vadd.f32 0.0, %v2382
        %2384 = vmatmul.f32.gmra.mxu0 %v2115
        %v2385 = vpop.f32.mrf.mxu0
        %v2386 = vadd.f32 0.0, %v2385
        %2387 = vmatmul.f32.gmra.mxu0 %v2116
        %v2388 = vpop.f32.mrf.mxu0
        %v2389 = vadd.f32 0.0, %v2388
        %2390 = vmatmul.f32.gmra.mxu0 %v2117
        %v2391 = vpop.f32.mrf.mxu0
        %v2392 = vadd.f32 0.0, %v2391
        %2393 = vmatmul.f32.gmra.mxu0 %v2118
        %v2394 = vpop.f32.mrf.mxu0
        %v2395 = vadd.f32 0.0, %v2394
        %2396 = vmatmul.f32.gmra.mxu0 %v2119
        %v2397 = vpop.f32.mrf.mxu0
        %v2398 = vadd.f32 0.0, %v2397
        %2399 = vmatmul.f32.gmra.mxu0 %v2120
        %v2400 = vpop.f32.mrf.mxu0
        %v2401 = vadd.f32 0.0, %v2400
        %2402 = vmatmul.f32.gmra.mxu0 %v2121
        %v2403 = vpop.f32.mrf.mxu0
        %v2404 = vadd.f32 0.0, %v2403
        %2405 = vmatmul.f32.gmra.mxu0 %v2122
        %v2406 = vpop.f32.mrf.mxu0
        %v2407 = vadd.f32 0.0, %v2406
        %2408 = vmatmul.f32.gmra.mxu0 %v2123
        %v2409 = vpop.f32.mrf.mxu0
        %v2410 = vadd.f32 0.0, %v2409
        %2411 = vmatmul.f32.gmra.mxu0 %v2124
        %v2412 = vpop.f32.mrf.mxu0
        %v2413 = vadd.f32 0.0, %v2412
        %2414 = vmatmul.f32.gmra.mxu0 %v2125
        %v2415 = vpop.f32.mrf.mxu0
        %v2416 = vadd.f32 0.0, %v2415
        %2417 = vmatmul.f32.gmra.mxu0 %v2126
        %v2418 = vpop.f32.mrf.mxu0
        %v2419 = vadd.f32 0.0, %v2418
        %2420 = vmatmul.f32.gmra.mxu0 %v2127
        %v2421 = vpop.f32.mrf.mxu0
        %v2422 = vadd.f32 0.0, %v2421
        %2423 = vmatmul.f32.gmra.mxu0 %v2128
        %v2424 = vpop.f32.mrf.mxu0
        %v2425 = vadd.f32 0.0, %v2424
        %2426 = vmatmul.f32.gmra.mxu0 %v2129
        %v2427 = vpop.f32.mrf.mxu0
        %v2428 = vadd.f32 0.0, %v2427
        %2429 = vmatmul.f32.gmra.mxu0 %v2130
        %v2430 = vpop.f32.mrf.mxu0
        %v2431 = vadd.f32 0.0, %v2430
        %2432 = vmatmul.f32.gmra.mxu0 %v2131
        %v2433 = vpop.f32.mrf.mxu0
        %v2434 = vadd.f32 0.0, %v2433
        %2435 = vmatmul.f32.gmra.mxu0 %v2132
        %v2436 = vpop.f32.mrf.mxu0
        %v2437 = vadd.f32 0.0, %v2436
        %2438 = vmatmul.f32.gmra.mxu0 %v2133
        %v2439 = vpop.f32.mrf.mxu0
        %v2440 = vadd.f32 0.0, %v2439
        %2441 = vmatmul.f32.gmra.mxu0 %v2134
        %v2442 = vpop.f32.mrf.mxu0
        %v2443 = vadd.f32 0.0, %v2442
        %2444 = vmatmul.f32.gmra.mxu0 %v2135
        %v2445 = vpop.f32.mrf.mxu0
        %v2446 = vadd.f32 0.0, %v2445
        %2447 = vmatmul.f32.gmra.mxu0 %v2136
        %v2448 = vpop.f32.mrf.mxu0
        %v2449 = vadd.f32 0.0, %v2448
        %2450 = vmatmul.f32.gmra.mxu0 %v2137
        %v2451 = vpop.f32.mrf.mxu0
        %v2452 = vadd.f32 0.0, %v2451
        %2453 = vmatmul.f32.gmra.mxu0 %v2138
        %v2454 = vpop.f32.mrf.mxu0
        %v2455 = vadd.f32 0.0, %v2454
        %2456 = vmatmul.f32.gmra.mxu0 %v2139
        %v2457 = vpop.f32.mrf.mxu0
        %v2458 = vadd.f32 0.0, %v2457
        %2459 = vmatmul.f32.gmra.mxu0 %v2140
        %v2460 = vpop.f32.mrf.mxu0
        %v2461 = vadd.f32 0.0, %v2460
        %2462 = vmatmul.f32.gmra.mxu0 %v2141
        %v2463 = vpop.f32.mrf.mxu0
        %v2464 = vadd.f32 0.0, %v2463
        %2465 = vmatmul.f32.gmra.mxu0 %v2142
        %v2466 = vpop.f32.mrf.mxu0
        %v2467 = vadd.f32 0.0, %v2466
        %2468 = vmatmul.f32.gmra.mxu0 %v2143
        %v2469 = vpop.f32.mrf.mxu0
        %v2470 = vadd.f32 0.0, %v2469
        %2471 = vmatmul.f32.gmra.mxu0 %v2144
        %v2472 = vpop.f32.mrf.mxu0
        %v2473 = vadd.f32 0.0, %v2472
        %2474 = vmatmul.f32.gmra.mxu0 %v2145
        %v2475 = vpop.f32.mrf.mxu0
        %v2476 = vadd.f32 0.0, %v2475
        %2477 = vmatmul.f32.gmra.mxu0 %v2146
        %v2478 = vpop.f32.mrf.mxu0
        %v2479 = vadd.f32 0.0, %v2478
        %2480 = vmatmul.f32.gmra.mxu0 %v2147
        %v2481 = vpop.f32.mrf.mxu0
        %v2482 = vadd.f32 0.0, %v2481
        %2483 = vmatmul.f32.gmra.mxu0 %v2148
        %v2484 = vpop.f32.mrf.mxu0
        %v2485 = vadd.f32 0.0, %v2484
        %2486 = vmatmul.f32.gmra.mxu0 %v2149
        %v2487 = vpop.f32.mrf.mxu0
        %v2488 = vadd.f32 0.0, %v2487
        %2489 = vmatmul.f32.gmra.mxu0 %v2150
        %v2490 = vpop.f32.mrf.mxu0
        %v2491 = vadd.f32 0.0, %v2490
        %2492 = vmatmul.f32.gmra.mxu0 %v2151
        %v2493 = vpop.f32.mrf.mxu0
        %v2494 = vadd.f32 0.0, %v2493
        %2495 = vmatmul.f32.gmra.mxu0 %v2152
        %v2496 = vpop.f32.mrf.mxu0
        %v2497 = vadd.f32 0.0, %v2496
        %2498 = vmatmul.f32.gmra.mxu0 %v2153
        %v2499 = vpop.f32.mrf.mxu0
        %v2500 = vadd.f32 0.0, %v2499
        %2501 = vmatmul.f32.gmra.mxu0 %v2154
        %v2502 = vpop.f32.mrf.mxu0
        %v2503 = vadd.f32 0.0, %v2502
        %2504 = vmatmul.f32.gmra.mxu0 %v2155
        %v2505 = vpop.f32.mrf.mxu0
        %v2506 = vadd.f32 0.0, %v2505
        %2507 = vmatmul.f32.gmra.mxu0 %v2156
        %v2508 = vpop.f32.mrf.mxu0
        %v2509 = vadd.f32 0.0, %v2508
        %2510 = vmatmul.f32.gmra.mxu0 %v2157
        %v2511 = vpop.f32.mrf.mxu0
        %v2512 = vadd.f32 0.0, %v2511
        %2513 = vmatmul.f32.gmra.mxu0 %v2158
        %v2514 = vpop.f32.mrf.mxu0
        %v2515 = vadd.f32 0.0, %v2514
        %2516 = vmatmul.f32.gmra.mxu0 %v2159
        %v2517 = vpop.f32.mrf.mxu0
        %v2518 = vadd.f32 0.0, %v2517
        %2519 = vmatmul.f32.gmra.mxu0 %v2160
        %v2520 = vpop.f32.mrf.mxu0
        %v2521 = vadd.f32 0.0, %v2520
        %2522 = vmatmul.f32.gmra.mxu0 %v2161
        %v2523 = vpop.f32.mrf.mxu0
        %v2524 = vadd.f32 0.0, %v2523
        %2525 = vmatmul.f32.gmra.mxu0 %v2162
        %v2526 = vpop.f32.mrf.mxu0
        %v2527 = vadd.f32 0.0, %v2526
        %2528 = vmatmul.f32.gmra.mxu0 %v2163
        %v2529 = vpop.f32.mrf.mxu0
        %v2530 = vadd.f32 0.0, %v2529
        %2531 = vmatmul.f32.gmra.mxu0 %v2164
        %v2532 = vpop.f32.mrf.mxu0
        %v2533 = vadd.f32 0.0, %v2532
        %2534 = vmatmul.f32.gmra.mxu0 %v2165
        %v2535 = vpop.f32.mrf.mxu0
        %v2536 = vadd.f32 0.0, %v2535
        %2537 = vmatmul.f32.gmra.mxu0 %v2166
        %v2538 = vpop.f32.mrf.mxu0
        %v2539 = vadd.f32 0.0, %v2538
        %2540 = vmatmul.f32.gmra.mxu0 %v2167
        %v2541 = vpop.f32.mrf.mxu0
        %v2542 = vadd.f32 0.0, %v2541
        %2543 = vmatmul.f32.gmra.mxu0 %v2168
        %v2544 = vpop.f32.mrf.mxu0
        %v2545 = vadd.f32 0.0, %v2544
        %2546 = vmatmul.f32.gmra.mxu0 %v2169
        %v2547 = vpop.f32.mrf.mxu0
        %v2548 = vadd.f32 0.0, %v2547
        %2549 = vmatmul.f32.gmra.mxu0 %v2170
        %v2550 = vpop.f32.mrf.mxu0
        %v2551 = vadd.f32 0.0, %v2550
        %2552 = vmatmul.f32.gmra.mxu0 %v2171
        %v2553 = vpop.f32.mrf.mxu0
        %v2554 = vadd.f32 0.0, %v2553
        %2555 = vmatmul.f32.gmra.mxu0 %v2172
        %v2556 = vpop.f32.mrf.mxu0
        %v2557 = vadd.f32 0.0, %v2556
        %2558 = vmatmul.f32.gmra.mxu0 %v2173
        %v2559 = vpop.f32.mrf.mxu0
        %v2560 = vadd.f32 0.0, %v2559
        %2561 = vmatmul.f32.gmra.mxu0 %v2174
        %v2562 = vpop.f32.mrf.mxu0
        %v2563 = vadd.f32 0.0, %v2562
        %2564 = vmatmul.f32.gmra.mxu0 %v2175
        %v2565 = vpop.f32.mrf.mxu0
        %v2566 = vadd.f32 0.0, %v2565
        %2567 = vmatmul.f32.gmra.mxu0 %v2176
        %v2568 = vpop.f32.mrf.mxu0
        %v2569 = vadd.f32 0.0, %v2568
        %2570 = vmatmul.f32.gmra.mxu0 %v2177
        %v2571 = vpop.f32.mrf.mxu0
        %v2572 = vadd.f32 0.0, %v2571
        %2573 = vmatmul.f32.gmra.mxu0 %v2178
        %v2574 = vpop.f32.mrf.mxu0
        %v2575 = vadd.f32 0.0, %v2574
        %2576 = vmatmul.f32.gmra.mxu0 %v2179
        %v2577 = vpop.f32.mrf.mxu0
        %v2578 = vadd.f32 0.0, %v2577
        %2579 = vmatmul.f32.gmra.mxu0 %v2180
        %v2580 = vpop.f32.mrf.mxu0
        %v2581 = vadd.f32 0.0, %v2580
        %2582 = vmatmul.f32.gmra.mxu0 %v2181
        %v2583 = vpop.f32.mrf.mxu0
        %v2584 = vadd.f32 0.0, %v2583
        %2585 = vmatmul.f32.gmra.mxu0 %v2182
        %v2586 = vpop.f32.mrf.mxu0
        %v2587 = vadd.f32 0.0, %v2586
        %2588 = vmatmul.f32.gmra.mxu0 %v2183
        %v2589 = vpop.f32.mrf.mxu0
        %v2590 = vadd.f32 0.0, %v2589
        %2591 = vmatmul.f32.gmra.mxu0 %v2184
        %v2592 = vpop.f32.mrf.mxu0
        %v2593 = vadd.f32 0.0, %v2592
        %2594 = vmatmul.f32.gmra.mxu0 %v2185
        %v2595 = vpop.f32.mrf.mxu0
        %v2596 = vadd.f32 0.0, %v2595
        %2597 = vmatmul.f32.gmra.mxu0 %v2186
        %v2598 = vpop.f32.mrf.mxu0
        %v2599 = vadd.f32 0.0, %v2598
        %2600 = vmatmul.f32.gmra.mxu0 %v2187
        %v2601 = vpop.f32.mrf.mxu0
        %v2602 = vadd.f32 0.0, %v2601
        %2603 = vmatmul.f32.gmra.mxu0 %v2188
        %v2604 = vpop.f32.mrf.mxu0
        %v2605 = vadd.f32 0.0, %v2604
        %2606 = vmatmul.f32.gmra.mxu0 %v2189
        %v2607 = vpop.f32.mrf.mxu0
        %v2608 = vadd.f32 0.0, %v2607
        %2609 = vmatmul.f32.gmra.mxu0 %v2190
        %v2610 = vpop.f32.mrf.mxu0
        %v2611 = vadd.f32 0.0, %v2610
        %2612 = vmatmul.f32.gmra.mxu0 %v2191
        %v2613 = vpop.f32.mrf.mxu0
        %v2614 = vadd.f32 0.0, %v2613
        %2615 = vmatmul.f32.gmra.mxu0 %v2192
        %v2616 = vpop.f32.mrf.mxu0
        %v2617 = vadd.f32 0.0, %v2616
        %2618 = vmatmul.f32.gmra.mxu0 %v2193
        %v2619 = vpop.f32.mrf.mxu0
        %v2620 = vadd.f32 0.0, %v2619
        %2621 = vmatmul.f32.gmra.mxu0 %v2194
        %v2622 = vpop.f32.mrf.mxu0
        %v2623 = vadd.f32 0.0, %v2622
        %2624 = vmatmul.f32.gmra.mxu0 %v2195
        %v2625 = vpop.f32.mrf.mxu0
        %v2626 = vadd.f32 0.0, %v2625
        %2627 = vmatmul.f32.gmra.mxu0 %v2196
        %v2628 = vpop.f32.mrf.mxu0
        %v2629 = vadd.f32 0.0, %v2628
        %2630 = vmatmul.f32.gmra.mxu0 %v2197
        %v2631 = vpop.f32.mrf.mxu0
        %v2632 = vadd.f32 0.0, %v2631
        %2633 = vmatmul.f32.gmra.mxu0 %v2198
        %v2634 = vpop.f32.mrf.mxu0
        %v2635 = vadd.f32 0.0, %v2634
        %2636 = vmatmul.f32.gmra.mxu0 %v2199
        %v2637 = vpop.f32.mrf.mxu0
        %v2638 = vadd.f32 0.0, %v2637
        %2639 = vmatmul.f32.gmra.mxu0 %v2200
        %v2640 = vpop.f32.mrf.mxu0
        %v2641 = vadd.f32 0.0, %v2640
        %2642 = vdwg.mxu0
        %v2643 = vadd.f32 %v1929, %v2236
        %v2644 = vadd.f32 %v1930, %v2239
        %v2645 = vadd.f32 %v1931, %v2242
        %v2646 = vadd.f32 %v1932, %v2245
        %v2647 = vadd.f32 %v1933, %v2248
        %v2648 = vadd.f32 %v1934, %v2251
        %v2649 = vadd.f32 %v1935, %v2254
        %v2650 = vadd.f32 %v1936, %v2257
        %v2651 = vadd.f32 %v1937, %v2260
        %v2652 = vadd.f32 %v1938, %v2263
        %v2653 = vadd.f32 %v1939, %v2266
        %v2654 = vadd.f32 %v1940, %v2269
        %v2655 = vadd.f32 %v1941, %v2272
        %v2656 = vadd.f32 %v1942, %v2275
        %v2657 = vadd.f32 %v1943, %v2278
        %v2658 = vadd.f32 %v1944, %v2281
        %v2659 = vadd.f32 %v1945, %v2284
        %v2660 = vadd.f32 %v1946, %v2287
        %v2661 = vadd.f32 %v1947, %v2290
        %v2662 = vadd.f32 %v1948, %v2293
        %v2663 = vadd.f32 %v1949, %v2296
        %v2664 = vadd.f32 %v1950, %v2299
        %v2665 = vadd.f32 %v1951, %v2302
        %v2666 = vadd.f32 %v1952, %v2305
        %v2667 = vadd.f32 %v1953, %v2308
        %v2668 = vadd.f32 %v1954, %v2311
        %v2669 = vadd.f32 %v1955, %v2314
        %v2670 = vadd.f32 %v1956, %v2317
        %v2671 = vadd.f32 %v1957, %v2320
        %v2672 = vadd.f32 %v1958, %v2323
        %v2673 = vadd.f32 %v1959, %v2326
        %v2674 = vadd.f32 %v1960, %v2329
        %v2675 = vadd.f32 %v1961, %v2332
        %v2676 = vadd.f32 %v1962, %v2335
        %v2677 = vadd.f32 %v1963, %v2338
        %v2678 = vadd.f32 %v1964, %v2341
        %v2679 = vadd.f32 %v1965, %v2344
        %v2680 = vadd.f32 %v1966, %v2347
        %v2681 = vadd.f32 %v1967, %v2350
        %v2682 = vadd.f32 %v1968, %v2353
        %v2683 = vadd.f32 %v1969, %v2356
        %v2684 = vadd.f32 %v1970, %v2359
        %v2685 = vadd.f32 %v1971, %v2362
        %v2686 = vadd.f32 %v1972, %v2365
        %v2687 = vadd.f32 %v1973, %v2368
        %v2688 = vadd.f32 %v1974, %v2371
        %v2689 = vadd.f32 %v1975, %v2374
        %v2690 = vadd.f32 %v1976, %v2377
        %v2691 = vadd.f32 %v1977, %v2380
        %v2692 = vadd.f32 %v1978, %v2383
        %v2693 = vadd.f32 %v1979, %v2386
        %v2694 = vadd.f32 %v1980, %v2389
        %v2695 = vadd.f32 %v1981, %v2392
        %v2696 = vadd.f32 %v1982, %v2395
        %v2697 = vadd.f32 %v1983, %v2398
        %v2698 = vadd.f32 %v1984, %v2401
        %v2699 = vadd.f32 %v1985, %v2404
        %v2700 = vadd.f32 %v1986, %v2407
        %v2701 = vadd.f32 %v1987, %v2410
        %v2702 = vadd.f32 %v1988, %v2413
        %v2703 = vadd.f32 %v1989, %v2416
        %v2704 = vadd.f32 %v1990, %v2419
        %v2705 = vadd.f32 %v1991, %v2422
        %v2706 = vadd.f32 %v1992, %v2425
        %v2707 = vadd.f32 %v1993, %v2428
        %v2708 = vadd.f32 %v1994, %v2431
        %v2709 = vadd.f32 %v1995, %v2434
        %v2710 = vadd.f32 %v1996, %v2437
        %v2711 = vadd.f32 %v1997, %v2440
        %v2712 = vadd.f32 %v1998, %v2443
        %v2713 = vadd.f32 %v1999, %v2446
        %v2714 = vadd.f32 %v2000, %v2449
        %v2715 = vadd.f32 %v2001, %v2452
        %v2716 = vadd.f32 %v2002, %v2455
        %v2717 = vadd.f32 %v2003, %v2458
        %v2718 = vadd.f32 %v2004, %v2461
        %v2719 = vadd.f32 %v2005, %v2464
        %v2720 = vadd.f32 %v2006, %v2467
        %v2721 = vadd.f32 %v2007, %v2470
        %v2722 = vadd.f32 %v2008, %v2473
        %v2723 = vadd.f32 %v2009, %v2476
        %v2724 = vadd.f32 %v2010, %v2479
        %v2725 = vadd.f32 %v2011, %v2482
        %v2726 = vadd.f32 %v2012, %v2485
        %v2727 = vadd.f32 %v2013, %v2488
        %v2728 = vadd.f32 %v2014, %v2491
        %v2729 = vadd.f32 %v2015, %v2494
        %v2730 = vadd.f32 %v2016, %v2497
        %v2731 = vadd.f32 %v2017, %v2500
        %v2732 = vadd.f32 %v2018, %v2503
        %v2733 = vadd.f32 %v2019, %v2506
        %v2734 = vadd.f32 %v2020, %v2509
        %v2735 = vadd.f32 %v2021, %v2512
        %v2736 = vadd.f32 %v2022, %v2515
        %v2737 = vadd.f32 %v2023, %v2518
        %v2738 = vadd.f32 %v2024, %v2521
        %v2739 = vadd.f32 %v2025, %v2524
        %v2740 = vadd.f32 %v2026, %v2527
        %v2741 = vadd.f32 %v2027, %v2530
        %v2742 = vadd.f32 %v2028, %v2533
        %v2743 = vadd.f32 %v2029, %v2536
        %v2744 = vadd.f32 %v2030, %v2539
        %v2745 = vadd.f32 %v2031, %v2542
        %v2746 = vadd.f32 %v2032, %v2545
        %v2747 = vadd.f32 %v2033, %v2548
        %v2748 = vadd.f32 %v2034, %v2551
        %v2749 = vadd.f32 %v2035, %v2554
        %v2750 = vadd.f32 %v2036, %v2557
        %v2751 = vadd.f32 %v2037, %v2560
        %v2752 = vadd.f32 %v2038, %v2563
        %v2753 = vadd.f32 %v2039, %v2566
        %v2754 = vadd.f32 %v2040, %v2569
        %v2755 = vadd.f32 %v2041, %v2572
        %v2756 = vadd.f32 %v2042, %v2575
        %v2757 = vadd.f32 %v2043, %v2578
        %v2758 = vadd.f32 %v2044, %v2581
        %v2759 = vadd.f32 %v2045, %v2584
        %v2760 = vadd.f32 %v2046, %v2587
        %v2761 = vadd.f32 %v2047, %v2590
        %v2762 = vadd.f32 %v2048, %v2593
        %v2763 = vadd.f32 %v2049, %v2596
        %v2764 = vadd.f32 %v2050, %v2599
        %v2765 = vadd.f32 %v2051, %v2602
        %v2766 = vadd.f32 %v2052, %v2605
        %v2767 = vadd.f32 %v2053, %v2608
        %v2768 = vadd.f32 %v2054, %v2611
        %v2769 = vadd.f32 %v2055, %v2614
        %v2770 = vadd.f32 %v2056, %v2617
        %v2771 = vadd.f32 %v2057, %v2620
        %v2772 = vadd.f32 %v2058, %v2623
        %v2773 = vadd.f32 %v2059, %v2626
        %v2774 = vadd.f32 %v2060, %v2629
        %v2775 = vadd.f32 %v2061, %v2632
        %v2776 = vadd.f32 %v2062, %v2635
        %v2777 = vadd.f32 %v2063, %v2638
        %v2778 = vadd.f32 %v2064, %v2641
        %v2779 = vld [vmem:[%s195 + $0x23] sm:$0xff]
        %v2780 = vld [vmem:[%s195 + $0x2b] sm:$0xff]
        %v2781 = vld [vmem:[%s195 + $0x33] sm:$0xff]
        %v2782 = vld [vmem:[%s195 + $0x3b] sm:$0xff]
        %v2783 = vld [vmem:[%s195 + $0x43] sm:$0xff]
        %v2784 = vld [vmem:[%s195 + $0x4b] sm:$0xff]
        %v2785 = vld [vmem:[%s195 + $0x53] sm:$0xff]
        %v2786 = vld [vmem:[%s195 + $0x5b] sm:$0xff]
        %v2787 = vld [vmem:[%s195 + $0x63] sm:$0xff]
        %v2788 = vld [vmem:[%s195 + $0x6b] sm:$0xff]
        %v2789 = vld [vmem:[%s195 + $0x73] sm:$0xff]
        %v2790 = vld [vmem:[%s195 + $0x7b] sm:$0xff]
        %v2791 = vld [vmem:[%s195 + $0x83] sm:$0xff]
        %v2792 = vld [vmem:[%s195 + $0x8b] sm:$0xff]
        %v2793 = vld [vmem:[%s195 + $0x93] sm:$0xff]
        %v2794 = vld [vmem:[%s195 + $0x9b] sm:$0xff]
        %v2795 = vld [vmem:[%s195 + $0xa3] sm:$0xff]
        %v2796 = vld [vmem:[%s195 + $0xab] sm:$0xff]
        %v2797 = vld [vmem:[%s195 + $0xb3] sm:$0xff]
        %v2798 = vld [vmem:[%s195 + $0xbb] sm:$0xff]
        %v2799 = vld [vmem:[%s195 + $0xc3] sm:$0xff]
        %v2800 = vld [vmem:[%s195 + $0xcb] sm:$0xff]
        %v2801 = vld [vmem:[%s195 + $0xd3] sm:$0xff]
        %v2802 = vld [vmem:[%s195 + $0xdb] sm:$0xff]
        %v2803 = vld [vmem:[%s195 + $0xe3] sm:$0xff]
        %v2804 = vld [vmem:[%s195 + $0xeb] sm:$0xff]
        %v2805 = vld [vmem:[%s195 + $0xf3] sm:$0xff]
        %v2806 = vld [vmem:[%s195 + $0xfb] sm:$0xff]
        %v2807 = vld [vmem:[%s195 + $0x103] sm:$0xff]
        %v2808 = vld [vmem:[%s195 + $0x10b] sm:$0xff]
        %v2809 = vld [vmem:[%s195 + $0x113] sm:$0xff]
        %v2810 = vld [vmem:[%s195 + $0x11b] sm:$0xff]
        %v2811 = vld [vmem:[%s195 + $0x123] sm:$0xff]
        %v2812 = vld [vmem:[%s195 + $0x12b] sm:$0xff]
        %v2813 = vld [vmem:[%s195 + $0x133] sm:$0xff]
        %v2814 = vld [vmem:[%s195 + $0x13b] sm:$0xff]
        %v2815 = vld [vmem:[%s195 + $0x143] sm:$0xff]
        %v2816 = vld [vmem:[%s195 + $0x14b] sm:$0xff]
        %v2817 = vld [vmem:[%s195 + $0x153] sm:$0xff]
        %v2818 = vld [vmem:[%s195 + $0x15b] sm:$0xff]
        %v2819 = vld [vmem:[%s195 + $0x163] sm:$0xff]
        %v2820 = vld [vmem:[%s195 + $0x16b] sm:$0xff]
        %v2821 = vld [vmem:[%s195 + $0x173] sm:$0xff]
        %v2822 = vld [vmem:[%s195 + $0x17b] sm:$0xff]
        %v2823 = vld [vmem:[%s195 + $0x183] sm:$0xff]
        %v2824 = vld [vmem:[%s195 + $0x18b] sm:$0xff]
        %v2825 = vld [vmem:[%s195 + $0x193] sm:$0xff]
        %v2826 = vld [vmem:[%s195 + $0x19b] sm:$0xff]
        %v2827 = vld [vmem:[%s195 + $0x1a3] sm:$0xff]
        %v2828 = vld [vmem:[%s195 + $0x1ab] sm:$0xff]
        %v2829 = vld [vmem:[%s195 + $0x1b3] sm:$0xff]
        %v2830 = vld [vmem:[%s195 + $0x1bb] sm:$0xff]
        %v2831 = vld [vmem:[%s195 + $0x1c3] sm:$0xff]
        %v2832 = vld [vmem:[%s195 + $0x1cb] sm:$0xff]
        %v2833 = vld [vmem:[%s195 + $0x1d3] sm:$0xff]
        %v2834 = vld [vmem:[%s195 + $0x1db] sm:$0xff]
        %v2835 = vld [vmem:[%s195 + $0x1e3] sm:$0xff]
        %v2836 = vld [vmem:[%s195 + $0x1eb] sm:$0xff]
        %v2837 = vld [vmem:[%s195 + $0x1f3] sm:$0xff]
        %v2838 = vld [vmem:[%s195 + $0x1fb] sm:$0xff]
        %v2839 = vld [vmem:[%s195 + $0x203] sm:$0xff]
        %v2840 = vld [vmem:[%s195 + $0x20b] sm:$0xff]
        %v2841 = vld [vmem:[%s195 + $0x213] sm:$0xff]
        %v2842 = vld [vmem:[%s195 + $0x21b] sm:$0xff]
        %v2843 = vld [vmem:[%s195 + $0x223] sm:$0xff]
        %v2844 = vld [vmem:[%s195 + $0x22b] sm:$0xff]
        %v2845 = vld [vmem:[%s195 + $0x233] sm:$0xff]
        %v2846 = vld [vmem:[%s195 + $0x23b] sm:$0xff]
        %v2847 = vld [vmem:[%s195 + $0x243] sm:$0xff]
        %v2848 = vld [vmem:[%s195 + $0x24b] sm:$0xff]
        %v2849 = vld [vmem:[%s195 + $0x253] sm:$0xff]
        %v2850 = vld [vmem:[%s195 + $0x25b] sm:$0xff]
        %v2851 = vld [vmem:[%s195 + $0x263] sm:$0xff]
        %v2852 = vld [vmem:[%s195 + $0x26b] sm:$0xff]
        %v2853 = vld [vmem:[%s195 + $0x273] sm:$0xff]
        %v2854 = vld [vmem:[%s195 + $0x27b] sm:$0xff]
        %v2855 = vld [vmem:[%s195 + $0x283] sm:$0xff]
        %v2856 = vld [vmem:[%s195 + $0x28b] sm:$0xff]
        %v2857 = vld [vmem:[%s195 + $0x293] sm:$0xff]
        %v2858 = vld [vmem:[%s195 + $0x29b] sm:$0xff]
        %v2859 = vld [vmem:[%s195 + $0x2a3] sm:$0xff]
        %v2860 = vld [vmem:[%s195 + $0x2ab] sm:$0xff]
        %v2861 = vld [vmem:[%s195 + $0x2b3] sm:$0xff]
        %v2862 = vld [vmem:[%s195 + $0x2bb] sm:$0xff]
        %v2863 = vld [vmem:[%s195 + $0x2c3] sm:$0xff]
        %v2864 = vld [vmem:[%s195 + $0x2cb] sm:$0xff]
        %v2865 = vld [vmem:[%s195 + $0x2d3] sm:$0xff]
        %v2866 = vld [vmem:[%s195 + $0x2db] sm:$0xff]
        %v2867 = vld [vmem:[%s195 + $0x2e3] sm:$0xff]
        %v2868 = vld [vmem:[%s195 + $0x2eb] sm:$0xff]
        %v2869 = vld [vmem:[%s195 + $0x2f3] sm:$0xff]
        %v2870 = vld [vmem:[%s195 + $0x2fb] sm:$0xff]
        %v2871 = vld [vmem:[%s195 + $0x303] sm:$0xff]
        %v2872 = vld [vmem:[%s195 + $0x30b] sm:$0xff]
        %v2873 = vld [vmem:[%s195 + $0x313] sm:$0xff]
        %v2874 = vld [vmem:[%s195 + $0x31b] sm:$0xff]
        %v2875 = vld [vmem:[%s195 + $0x323] sm:$0xff]
        %v2876 = vld [vmem:[%s195 + $0x32b] sm:$0xff]
        %v2877 = vld [vmem:[%s195 + $0x333] sm:$0xff]
        %v2878 = vld [vmem:[%s195 + $0x33b] sm:$0xff]
        %v2879 = vld [vmem:[%s195 + $0x343] sm:$0xff]
        %v2880 = vld [vmem:[%s195 + $0x34b] sm:$0xff]
        %v2881 = vld [vmem:[%s195 + $0x353] sm:$0xff]
        %v2882 = vld [vmem:[%s195 + $0x35b] sm:$0xff]
        %v2883 = vld [vmem:[%s195 + $0x363] sm:$0xff]
        %v2884 = vld [vmem:[%s195 + $0x36b] sm:$0xff]
        %v2885 = vld [vmem:[%s195 + $0x373] sm:$0xff]
        %v2886 = vld [vmem:[%s195 + $0x37b] sm:$0xff]
        %v2887 = vld [vmem:[%s195 + $0x383] sm:$0xff]
        %v2888 = vld [vmem:[%s195 + $0x38b] sm:$0xff]
        %v2889 = vld [vmem:[%s195 + $0x393] sm:$0xff]
        %v2890 = vld [vmem:[%s195 + $0x39b] sm:$0xff]
        %v2891 = vld [vmem:[%s195 + $0x3a3] sm:$0xff]
        %v2892 = vld [vmem:[%s195 + $0x3ab] sm:$0xff]
        %v2893 = vld [vmem:[%s195 + $0x3b3] sm:$0xff]
        %v2894 = vld [vmem:[%s195 + $0x3bb] sm:$0xff]
        %v2895 = vld [vmem:[%s195 + $0x3c3] sm:$0xff]
        %v2896 = vld [vmem:[%s195 + $0x3cb] sm:$0xff]
        %v2897 = vld [vmem:[%s195 + $0x3d3] sm:$0xff]
        %v2898 = vld [vmem:[%s195 + $0x3db] sm:$0xff]
        %v2899 = vld [vmem:[%s195 + $0x3e3] sm:$0xff]
        %v2900 = vld [vmem:[%s195 + $0x3eb] sm:$0xff]
        %v2901 = vld [vmem:[%s195 + $0x3f3] sm:$0xff]
        %v2902 = vld [vmem:[%s195 + $0x3fb] sm:$0xff]
        %v2903 = vld [vmem:[%s195 + $0x403] sm:$0xff]
        %v2904 = vld [vmem:[%s195 + $0x40b] sm:$0xff]
        %v2905 = vld [vmem:[%s195 + $0x413] sm:$0xff]
        %v2906 = vld [vmem:[%s195 + $0x41b] sm:$0xff]
        %v2907 = vld [vmem:[%s195 + $0x423] sm:$0xff]
        %v2908 = vld [vmem:[%s195 + $0x42b] sm:$0xff]
        %v2909 = vld [vmem:[%s195 + $0x433] sm:$0xff]
        %v2910 = vld [vmem:[%s195 + $0x43b] sm:$0xff]
        %v2911 = vld [vmem:[%s195 + $0x443] sm:$0xff]
        %v2912 = vld [vmem:[%s195 + $0x44b] sm:$0xff]
        %v2913 = vld [vmem:[%s195 + $0x453] sm:$0xff]
        %v2914 = vld [vmem:[%s195 + $0x45b] sm:$0xff]
        %s2915 = scalar_lea.vmem %s1, 512
        %v2916 = vld [vmem:[%s2915] sm:$0xff]
        %v2917 = vld [vmem:[%s2915 + $0x8] sm:$0xff]
        %v2918 = vld [vmem:[%s2915 + $0x10] sm:$0xff]
        %v2919 = vld [vmem:[%s2915 + $0x18] sm:$0xff]
        %v2920 = vld [vmem:[%s2915 + $0x20] sm:$0xff]
        %v2921 = vld [vmem:[%s2915 + $0x28] sm:$0xff]
        %v2922 = vld [vmem:[%s2915 + $0x30] sm:$0xff]
        %v2923 = vld [vmem:[%s2915 + $0x38] sm:$0xff]
        %v2924 = vld [vmem:[%s2915 + $0x40] sm:$0xff]
        %v2925 = vld [vmem:[%s2915 + $0x48] sm:$0xff]
        %v2926 = vld [vmem:[%s2915 + $0x50] sm:$0xff]
        %v2927 = vld [vmem:[%s2915 + $0x58] sm:$0xff]
        %v2928 = vld [vmem:[%s2915 + $0x60] sm:$0xff]
        %v2929 = vld [vmem:[%s2915 + $0x68] sm:$0xff]
        %v2930 = vld [vmem:[%s2915 + $0x70] sm:$0xff]
        %v2931 = vld [vmem:[%s2915 + $0x78] sm:$0xff]
        %2932 = vmatpush.msra.mxu0 %v2931
        %2933 = vmatpush.msra.mxu0 %v2930
        %2934 = vmatpush.msra.mxu0 %v2929
        %2935 = vmatpush.msra.mxu0 %v2928
        %2936 = vmatpush.msra.mxu0 %v2927
        %2937 = vmatpush.msra.mxu0 %v2926
        %2938 = vmatpush.msra.mxu0 %v2925
        %2939 = vmatpush.msra.mxu0 %v2924
        %2940 = vmatpush.msra.mxu0 %v2923
        %2941 = vmatpush.msra.mxu0 %v2922
        %2942 = vmatpush.msra.mxu0 %v2921
        %2943 = vmatpush.msra.mxu0 %v2920
        %2944 = vmatpush.msra.mxu0 %v2919
        %2945 = vmatpush.msra.mxu0 %v2918
        %2946 = vmatpush.msra.mxu0 %v2917
        %2947 = vmatpush.msra.mxu0 %v2916
        %2948 = vmatmul.f32.gmra.mxu0 %v2779
        %v2949 = vpop.f32.mrf.mxu0
        %v2950 = vadd.f32 0.0, %v2949
        %2951 = vmatmul.f32.gmra.mxu0 %v2780
        %v2952 = vpop.f32.mrf.mxu0
        %v2953 = vadd.f32 0.0, %v2952
        %2954 = vmatmul.f32.gmra.mxu0 %v2781
        %v2955 = vpop.f32.mrf.mxu0
        %v2956 = vadd.f32 0.0, %v2955
        %2957 = vmatmul.f32.gmra.mxu0 %v2782
        %v2958 = vpop.f32.mrf.mxu0
        %v2959 = vadd.f32 0.0, %v2958
        %2960 = vmatmul.f32.gmra.mxu0 %v2783
        %v2961 = vpop.f32.mrf.mxu0
        %v2962 = vadd.f32 0.0, %v2961
        %2963 = vmatmul.f32.gmra.mxu0 %v2784
        %v2964 = vpop.f32.mrf.mxu0
        %v2965 = vadd.f32 0.0, %v2964
        %2966 = vmatmul.f32.gmra.mxu0 %v2785
        %v2967 = vpop.f32.mrf.mxu0
        %v2968 = vadd.f32 0.0, %v2967
        %2969 = vmatmul.f32.gmra.mxu0 %v2786
        %v2970 = vpop.f32.mrf.mxu0
        %v2971 = vadd.f32 0.0, %v2970
        %2972 = vmatmul.f32.gmra.mxu0 %v2787
        %v2973 = vpop.f32.mrf.mxu0
        %v2974 = vadd.f32 0.0, %v2973
        %2975 = vmatmul.f32.gmra.mxu0 %v2788
        %v2976 = vpop.f32.mrf.mxu0
        %v2977 = vadd.f32 0.0, %v2976
        %2978 = vmatmul.f32.gmra.mxu0 %v2789
        %v2979 = vpop.f32.mrf.mxu0
        %v2980 = vadd.f32 0.0, %v2979
        %2981 = vmatmul.f32.gmra.mxu0 %v2790
        %v2982 = vpop.f32.mrf.mxu0
        %v2983 = vadd.f32 0.0, %v2982
        %2984 = vmatmul.f32.gmra.mxu0 %v2791
        %v2985 = vpop.f32.mrf.mxu0
        %v2986 = vadd.f32 0.0, %v2985
        %2987 = vmatmul.f32.gmra.mxu0 %v2792
        %v2988 = vpop.f32.mrf.mxu0
        %v2989 = vadd.f32 0.0, %v2988
        %2990 = vmatmul.f32.gmra.mxu0 %v2793
        %v2991 = vpop.f32.mrf.mxu0
        %v2992 = vadd.f32 0.0, %v2991
        %2993 = vmatmul.f32.gmra.mxu0 %v2794
        %v2994 = vpop.f32.mrf.mxu0
        %v2995 = vadd.f32 0.0, %v2994
        %2996 = vmatmul.f32.gmra.mxu0 %v2795
        %v2997 = vpop.f32.mrf.mxu0
        %v2998 = vadd.f32 0.0, %v2997
        %2999 = vmatmul.f32.gmra.mxu0 %v2796
        %v3000 = vpop.f32.mrf.mxu0
        %v3001 = vadd.f32 0.0, %v3000
        %3002 = vmatmul.f32.gmra.mxu0 %v2797
        %v3003 = vpop.f32.mrf.mxu0
        %v3004 = vadd.f32 0.0, %v3003
        %3005 = vmatmul.f32.gmra.mxu0 %v2798
        %v3006 = vpop.f32.mrf.mxu0
        %v3007 = vadd.f32 0.0, %v3006
        %3008 = vmatmul.f32.gmra.mxu0 %v2799
        %v3009 = vpop.f32.mrf.mxu0
        %v3010 = vadd.f32 0.0, %v3009
        %3011 = vmatmul.f32.gmra.mxu0 %v2800
        %v3012 = vpop.f32.mrf.mxu0
        %v3013 = vadd.f32 0.0, %v3012
        %3014 = vmatmul.f32.gmra.mxu0 %v2801
        %v3015 = vpop.f32.mrf.mxu0
        %v3016 = vadd.f32 0.0, %v3015
        %3017 = vmatmul.f32.gmra.mxu0 %v2802
        %v3018 = vpop.f32.mrf.mxu0
        %v3019 = vadd.f32 0.0, %v3018
        %3020 = vmatmul.f32.gmra.mxu0 %v2803
        %v3021 = vpop.f32.mrf.mxu0
        %v3022 = vadd.f32 0.0, %v3021
        %3023 = vmatmul.f32.gmra.mxu0 %v2804
        %v3024 = vpop.f32.mrf.mxu0
        %v3025 = vadd.f32 0.0, %v3024
        %3026 = vmatmul.f32.gmra.mxu0 %v2805
        %v3027 = vpop.f32.mrf.mxu0
        %v3028 = vadd.f32 0.0, %v3027
        %3029 = vmatmul.f32.gmra.mxu0 %v2806
        %v3030 = vpop.f32.mrf.mxu0
        %v3031 = vadd.f32 0.0, %v3030
        %3032 = vmatmul.f32.gmra.mxu0 %v2807
        %v3033 = vpop.f32.mrf.mxu0
        %v3034 = vadd.f32 0.0, %v3033
        %3035 = vmatmul.f32.gmra.mxu0 %v2808
        %v3036 = vpop.f32.mrf.mxu0
        %v3037 = vadd.f32 0.0, %v3036
        %3038 = vmatmul.f32.gmra.mxu0 %v2809
        %v3039 = vpop.f32.mrf.mxu0
        %v3040 = vadd.f32 0.0, %v3039
        %3041 = vmatmul.f32.gmra.mxu0 %v2810
        %v3042 = vpop.f32.mrf.mxu0
        %v3043 = vadd.f32 0.0, %v3042
        %3044 = vmatmul.f32.gmra.mxu0 %v2811
        %v3045 = vpop.f32.mrf.mxu0
        %v3046 = vadd.f32 0.0, %v3045
        %3047 = vmatmul.f32.gmra.mxu0 %v2812
        %v3048 = vpop.f32.mrf.mxu0
        %v3049 = vadd.f32 0.0, %v3048
        %3050 = vmatmul.f32.gmra.mxu0 %v2813
        %v3051 = vpop.f32.mrf.mxu0
        %v3052 = vadd.f32 0.0, %v3051
        %3053 = vmatmul.f32.gmra.mxu0 %v2814
        %v3054 = vpop.f32.mrf.mxu0
        %v3055 = vadd.f32 0.0, %v3054
        %3056 = vmatmul.f32.gmra.mxu0 %v2815
        %v3057 = vpop.f32.mrf.mxu0
        %v3058 = vadd.f32 0.0, %v3057
        %3059 = vmatmul.f32.gmra.mxu0 %v2816
        %v3060 = vpop.f32.mrf.mxu0
        %v3061 = vadd.f32 0.0, %v3060
        %3062 = vmatmul.f32.gmra.mxu0 %v2817
        %v3063 = vpop.f32.mrf.mxu0
        %v3064 = vadd.f32 0.0, %v3063
        %3065 = vmatmul.f32.gmra.mxu0 %v2818
        %v3066 = vpop.f32.mrf.mxu0
        %v3067 = vadd.f32 0.0, %v3066
        %3068 = vmatmul.f32.gmra.mxu0 %v2819
        %v3069 = vpop.f32.mrf.mxu0
        %v3070 = vadd.f32 0.0, %v3069
        %3071 = vmatmul.f32.gmra.mxu0 %v2820
        %v3072 = vpop.f32.mrf.mxu0
        %v3073 = vadd.f32 0.0, %v3072
        %3074 = vmatmul.f32.gmra.mxu0 %v2821
        %v3075 = vpop.f32.mrf.mxu0
        %v3076 = vadd.f32 0.0, %v3075
        %3077 = vmatmul.f32.gmra.mxu0 %v2822
        %v3078 = vpop.f32.mrf.mxu0
        %v3079 = vadd.f32 0.0, %v3078
        %3080 = vmatmul.f32.gmra.mxu0 %v2823
        %v3081 = vpop.f32.mrf.mxu0
        %v3082 = vadd.f32 0.0, %v3081
        %3083 = vmatmul.f32.gmra.mxu0 %v2824
        %v3084 = vpop.f32.mrf.mxu0
        %v3085 = vadd.f32 0.0, %v3084
        %3086 = vmatmul.f32.gmra.mxu0 %v2825
        %v3087 = vpop.f32.mrf.mxu0
        %v3088 = vadd.f32 0.0, %v3087
        %3089 = vmatmul.f32.gmra.mxu0 %v2826
        %v3090 = vpop.f32.mrf.mxu0
        %v3091 = vadd.f32 0.0, %v3090
        %3092 = vmatmul.f32.gmra.mxu0 %v2827
        %v3093 = vpop.f32.mrf.mxu0
        %v3094 = vadd.f32 0.0, %v3093
        %3095 = vmatmul.f32.gmra.mxu0 %v2828
        %v3096 = vpop.f32.mrf.mxu0
        %v3097 = vadd.f32 0.0, %v3096
        %3098 = vmatmul.f32.gmra.mxu0 %v2829
        %v3099 = vpop.f32.mrf.mxu0
        %v3100 = vadd.f32 0.0, %v3099
        %3101 = vmatmul.f32.gmra.mxu0 %v2830
        %v3102 = vpop.f32.mrf.mxu0
        %v3103 = vadd.f32 0.0, %v3102
        %3104 = vmatmul.f32.gmra.mxu0 %v2831
        %v3105 = vpop.f32.mrf.mxu0
        %v3106 = vadd.f32 0.0, %v3105
        %3107 = vmatmul.f32.gmra.mxu0 %v2832
        %v3108 = vpop.f32.mrf.mxu0
        %v3109 = vadd.f32 0.0, %v3108
        %3110 = vmatmul.f32.gmra.mxu0 %v2833
        %v3111 = vpop.f32.mrf.mxu0
        %v3112 = vadd.f32 0.0, %v3111
        %3113 = vmatmul.f32.gmra.mxu0 %v2834
        %v3114 = vpop.f32.mrf.mxu0
        %v3115 = vadd.f32 0.0, %v3114
        %3116 = vmatmul.f32.gmra.mxu0 %v2835
        %v3117 = vpop.f32.mrf.mxu0
        %v3118 = vadd.f32 0.0, %v3117
        %3119 = vmatmul.f32.gmra.mxu0 %v2836
        %v3120 = vpop.f32.mrf.mxu0
        %v3121 = vadd.f32 0.0, %v3120
        %3122 = vmatmul.f32.gmra.mxu0 %v2837
        %v3123 = vpop.f32.mrf.mxu0
        %v3124 = vadd.f32 0.0, %v3123
        %3125 = vmatmul.f32.gmra.mxu0 %v2838
        %v3126 = vpop.f32.mrf.mxu0
        %v3127 = vadd.f32 0.0, %v3126
        %3128 = vmatmul.f32.gmra.mxu0 %v2839
        %v3129 = vpop.f32.mrf.mxu0
        %v3130 = vadd.f32 0.0, %v3129
        %3131 = vmatmul.f32.gmra.mxu0 %v2840
        %v3132 = vpop.f32.mrf.mxu0
        %v3133 = vadd.f32 0.0, %v3132
        %3134 = vmatmul.f32.gmra.mxu0 %v2841
        %v3135 = vpop.f32.mrf.mxu0
        %v3136 = vadd.f32 0.0, %v3135
        %3137 = vmatmul.f32.gmra.mxu0 %v2842
        %v3138 = vpop.f32.mrf.mxu0
        %v3139 = vadd.f32 0.0, %v3138
        %3140 = vmatmul.f32.gmra.mxu0 %v2843
        %v3141 = vpop.f32.mrf.mxu0
        %v3142 = vadd.f32 0.0, %v3141
        %3143 = vmatmul.f32.gmra.mxu0 %v2844
        %v3144 = vpop.f32.mrf.mxu0
        %v3145 = vadd.f32 0.0, %v3144
        %3146 = vmatmul.f32.gmra.mxu0 %v2845
        %v3147 = vpop.f32.mrf.mxu0
        %v3148 = vadd.f32 0.0, %v3147
        %3149 = vmatmul.f32.gmra.mxu0 %v2846
        %v3150 = vpop.f32.mrf.mxu0
        %v3151 = vadd.f32 0.0, %v3150
        %3152 = vmatmul.f32.gmra.mxu0 %v2847
        %v3153 = vpop.f32.mrf.mxu0
        %v3154 = vadd.f32 0.0, %v3153
        %3155 = vmatmul.f32.gmra.mxu0 %v2848
        %v3156 = vpop.f32.mrf.mxu0
        %v3157 = vadd.f32 0.0, %v3156
        %3158 = vmatmul.f32.gmra.mxu0 %v2849
        %v3159 = vpop.f32.mrf.mxu0
        %v3160 = vadd.f32 0.0, %v3159
        %3161 = vmatmul.f32.gmra.mxu0 %v2850
        %v3162 = vpop.f32.mrf.mxu0
        %v3163 = vadd.f32 0.0, %v3162
        %3164 = vmatmul.f32.gmra.mxu0 %v2851
        %v3165 = vpop.f32.mrf.mxu0
        %v3166 = vadd.f32 0.0, %v3165
        %3167 = vmatmul.f32.gmra.mxu0 %v2852
        %v3168 = vpop.f32.mrf.mxu0
        %v3169 = vadd.f32 0.0, %v3168
        %3170 = vmatmul.f32.gmra.mxu0 %v2853
        %v3171 = vpop.f32.mrf.mxu0
        %v3172 = vadd.f32 0.0, %v3171
        %3173 = vmatmul.f32.gmra.mxu0 %v2854
        %v3174 = vpop.f32.mrf.mxu0
        %v3175 = vadd.f32 0.0, %v3174
        %3176 = vmatmul.f32.gmra.mxu0 %v2855
        %v3177 = vpop.f32.mrf.mxu0
        %v3178 = vadd.f32 0.0, %v3177
        %3179 = vmatmul.f32.gmra.mxu0 %v2856
        %v3180 = vpop.f32.mrf.mxu0
        %v3181 = vadd.f32 0.0, %v3180
        %3182 = vmatmul.f32.gmra.mxu0 %v2857
        %v3183 = vpop.f32.mrf.mxu0
        %v3184 = vadd.f32 0.0, %v3183
        %3185 = vmatmul.f32.gmra.mxu0 %v2858
        %v3186 = vpop.f32.mrf.mxu0
        %v3187 = vadd.f32 0.0, %v3186
        %3188 = vmatmul.f32.gmra.mxu0 %v2859
        %v3189 = vpop.f32.mrf.mxu0
        %v3190 = vadd.f32 0.0, %v3189
        %3191 = vmatmul.f32.gmra.mxu0 %v2860
        %v3192 = vpop.f32.mrf.mxu0
        %v3193 = vadd.f32 0.0, %v3192
        %3194 = vmatmul.f32.gmra.mxu0 %v2861
        %v3195 = vpop.f32.mrf.mxu0
        %v3196 = vadd.f32 0.0, %v3195
        %3197 = vmatmul.f32.gmra.mxu0 %v2862
        %v3198 = vpop.f32.mrf.mxu0
        %v3199 = vadd.f32 0.0, %v3198
        %3200 = vmatmul.f32.gmra.mxu0 %v2863
        %v3201 = vpop.f32.mrf.mxu0
        %v3202 = vadd.f32 0.0, %v3201
        %3203 = vmatmul.f32.gmra.mxu0 %v2864
        %v3204 = vpop.f32.mrf.mxu0
        %v3205 = vadd.f32 0.0, %v3204
        %3206 = vmatmul.f32.gmra.mxu0 %v2865
        %v3207 = vpop.f32.mrf.mxu0
        %v3208 = vadd.f32 0.0, %v3207
        %3209 = vmatmul.f32.gmra.mxu0 %v2866
        %v3210 = vpop.f32.mrf.mxu0
        %v3211 = vadd.f32 0.0, %v3210
        %3212 = vmatmul.f32.gmra.mxu0 %v2867
        %v3213 = vpop.f32.mrf.mxu0
        %v3214 = vadd.f32 0.0, %v3213
        %3215 = vmatmul.f32.gmra.mxu0 %v2868
        %v3216 = vpop.f32.mrf.mxu0
        %v3217 = vadd.f32 0.0, %v3216
        %3218 = vmatmul.f32.gmra.mxu0 %v2869
        %v3219 = vpop.f32.mrf.mxu0
        %v3220 = vadd.f32 0.0, %v3219
        %3221 = vmatmul.f32.gmra.mxu0 %v2870
        %v3222 = vpop.f32.mrf.mxu0
        %v3223 = vadd.f32 0.0, %v3222
        %3224 = vmatmul.f32.gmra.mxu0 %v2871
        %v3225 = vpop.f32.mrf.mxu0
        %v3226 = vadd.f32 0.0, %v3225
        %3227 = vmatmul.f32.gmra.mxu0 %v2872
        %v3228 = vpop.f32.mrf.mxu0
        %v3229 = vadd.f32 0.0, %v3228
        %3230 = vmatmul.f32.gmra.mxu0 %v2873
        %v3231 = vpop.f32.mrf.mxu0
        %v3232 = vadd.f32 0.0, %v3231
        %3233 = vmatmul.f32.gmra.mxu0 %v2874
        %v3234 = vpop.f32.mrf.mxu0
        %v3235 = vadd.f32 0.0, %v3234
        %3236 = vmatmul.f32.gmra.mxu0 %v2875
        %v3237 = vpop.f32.mrf.mxu0
        %v3238 = vadd.f32 0.0, %v3237
        %3239 = vmatmul.f32.gmra.mxu0 %v2876
        %v3240 = vpop.f32.mrf.mxu0
        %v3241 = vadd.f32 0.0, %v3240
        %3242 = vmatmul.f32.gmra.mxu0 %v2877
        %v3243 = vpop.f32.mrf.mxu0
        %v3244 = vadd.f32 0.0, %v3243
        %3245 = vmatmul.f32.gmra.mxu0 %v2878
        %v3246 = vpop.f32.mrf.mxu0
        %v3247 = vadd.f32 0.0, %v3246
        %3248 = vmatmul.f32.gmra.mxu0 %v2879
        %v3249 = vpop.f32.mrf.mxu0
        %v3250 = vadd.f32 0.0, %v3249
        %3251 = vmatmul.f32.gmra.mxu0 %v2880
        %v3252 = vpop.f32.mrf.mxu0
        %v3253 = vadd.f32 0.0, %v3252
        %3254 = vmatmul.f32.gmra.mxu0 %v2881
        %v3255 = vpop.f32.mrf.mxu0
        %v3256 = vadd.f32 0.0, %v3255
        %3257 = vmatmul.f32.gmra.mxu0 %v2882
        %v3258 = vpop.f32.mrf.mxu0
        %v3259 = vadd.f32 0.0, %v3258
        %3260 = vmatmul.f32.gmra.mxu0 %v2883
        %v3261 = vpop.f32.mrf.mxu0
        %v3262 = vadd.f32 0.0, %v3261
        %3263 = vmatmul.f32.gmra.mxu0 %v2884
        %v3264 = vpop.f32.mrf.mxu0
        %v3265 = vadd.f32 0.0, %v3264
        %3266 = vmatmul.f32.gmra.mxu0 %v2885
        %v3267 = vpop.f32.mrf.mxu0
        %v3268 = vadd.f32 0.0, %v3267
        %3269 = vmatmul.f32.gmra.mxu0 %v2886
        %v3270 = vpop.f32.mrf.mxu0
        %v3271 = vadd.f32 0.0, %v3270
        %3272 = vmatmul.f32.gmra.mxu0 %v2887
        %v3273 = vpop.f32.mrf.mxu0
        %v3274 = vadd.f32 0.0, %v3273
        %3275 = vmatmul.f32.gmra.mxu0 %v2888
        %v3276 = vpop.f32.mrf.mxu0
        %v3277 = vadd.f32 0.0, %v3276
        %3278 = vmatmul.f32.gmra.mxu0 %v2889
        %v3279 = vpop.f32.mrf.mxu0
        %v3280 = vadd.f32 0.0, %v3279
        %3281 = vmatmul.f32.gmra.mxu0 %v2890
        %v3282 = vpop.f32.mrf.mxu0
        %v3283 = vadd.f32 0.0, %v3282
        %3284 = vmatmul.f32.gmra.mxu0 %v2891
        %v3285 = vpop.f32.mrf.mxu0
        %v3286 = vadd.f32 0.0, %v3285
        %3287 = vmatmul.f32.gmra.mxu0 %v2892
        %v3288 = vpop.f32.mrf.mxu0
        %v3289 = vadd.f32 0.0, %v3288
        %3290 = vmatmul.f32.gmra.mxu0 %v2893
        %v3291 = vpop.f32.mrf.mxu0
        %v3292 = vadd.f32 0.0, %v3291
        %3293 = vmatmul.f32.gmra.mxu0 %v2894
        %v3294 = vpop.f32.mrf.mxu0
        %v3295 = vadd.f32 0.0, %v3294
        %3296 = vmatmul.f32.gmra.mxu0 %v2895
        %v3297 = vpop.f32.mrf.mxu0
        %v3298 = vadd.f32 0.0, %v3297
        %3299 = vmatmul.f32.gmra.mxu0 %v2896
        %v3300 = vpop.f32.mrf.mxu0
        %v3301 = vadd.f32 0.0, %v3300
        %3302 = vmatmul.f32.gmra.mxu0 %v2897
        %v3303 = vpop.f32.mrf.mxu0
        %v3304 = vadd.f32 0.0, %v3303
        %3305 = vmatmul.f32.gmra.mxu0 %v2898
        %v3306 = vpop.f32.mrf.mxu0
        %v3307 = vadd.f32 0.0, %v3306
        %3308 = vmatmul.f32.gmra.mxu0 %v2899
        %v3309 = vpop.f32.mrf.mxu0
        %v3310 = vadd.f32 0.0, %v3309
        %3311 = vmatmul.f32.gmra.mxu0 %v2900
        %v3312 = vpop.f32.mrf.mxu0
        %v3313 = vadd.f32 0.0, %v3312
        %3314 = vmatmul.f32.gmra.mxu0 %v2901
        %v3315 = vpop.f32.mrf.mxu0
        %v3316 = vadd.f32 0.0, %v3315
        %3317 = vmatmul.f32.gmra.mxu0 %v2902
        %v3318 = vpop.f32.mrf.mxu0
        %v3319 = vadd.f32 0.0, %v3318
        %3320 = vmatmul.f32.gmra.mxu0 %v2903
        %v3321 = vpop.f32.mrf.mxu0
        %v3322 = vadd.f32 0.0, %v3321
        %3323 = vmatmul.f32.gmra.mxu0 %v2904
        %v3324 = vpop.f32.mrf.mxu0
        %v3325 = vadd.f32 0.0, %v3324
        %3326 = vmatmul.f32.gmra.mxu0 %v2905
        %v3327 = vpop.f32.mrf.mxu0
        %v3328 = vadd.f32 0.0, %v3327
        %3329 = vmatmul.f32.gmra.mxu0 %v2906
        %v3330 = vpop.f32.mrf.mxu0
        %v3331 = vadd.f32 0.0, %v3330
        %3332 = vmatmul.f32.gmra.mxu0 %v2907
        %v3333 = vpop.f32.mrf.mxu0
        %v3334 = vadd.f32 0.0, %v3333
        %3335 = vmatmul.f32.gmra.mxu0 %v2908
        %v3336 = vpop.f32.mrf.mxu0
        %v3337 = vadd.f32 0.0, %v3336
        %3338 = vmatmul.f32.gmra.mxu0 %v2909
        %v3339 = vpop.f32.mrf.mxu0
        %v3340 = vadd.f32 0.0, %v3339
        %3341 = vmatmul.f32.gmra.mxu0 %v2910
        %v3342 = vpop.f32.mrf.mxu0
        %v3343 = vadd.f32 0.0, %v3342
        %3344 = vmatmul.f32.gmra.mxu0 %v2911
        %v3345 = vpop.f32.mrf.mxu0
        %v3346 = vadd.f32 0.0, %v3345
        %3347 = vmatmul.f32.gmra.mxu0 %v2912
        %v3348 = vpop.f32.mrf.mxu0
        %v3349 = vadd.f32 0.0, %v3348
        %3350 = vmatmul.f32.gmra.mxu0 %v2913
        %v3351 = vpop.f32.mrf.mxu0
        %v3352 = vadd.f32 0.0, %v3351
        %3353 = vmatmul.f32.gmra.mxu0 %v2914
        %v3354 = vpop.f32.mrf.mxu0
        %v3355 = vadd.f32 0.0, %v3354
        %3356 = vdwg.mxu0
        %v3357 = vadd.f32 %v2643, %v2950
        %v3358 = vadd.f32 %v2644, %v2953
        %v3359 = vadd.f32 %v2645, %v2956
        %v3360 = vadd.f32 %v2646, %v2959
        %v3361 = vadd.f32 %v2647, %v2962
        %v3362 = vadd.f32 %v2648, %v2965
        %v3363 = vadd.f32 %v2649, %v2968
        %v3364 = vadd.f32 %v2650, %v2971
        %v3365 = vadd.f32 %v2651, %v2974
        %v3366 = vadd.f32 %v2652, %v2977
        %v3367 = vadd.f32 %v2653, %v2980
        %v3368 = vadd.f32 %v2654, %v2983
        %v3369 = vadd.f32 %v2655, %v2986
        %v3370 = vadd.f32 %v2656, %v2989
        %v3371 = vadd.f32 %v2657, %v2992
        %v3372 = vadd.f32 %v2658, %v2995
        %v3373 = vadd.f32 %v2659, %v2998
        %v3374 = vadd.f32 %v2660, %v3001
        %v3375 = vadd.f32 %v2661, %v3004
        %v3376 = vadd.f32 %v2662, %v3007
        %v3377 = vadd.f32 %v2663, %v3010
        %v3378 = vadd.f32 %v2664, %v3013
        %v3379 = vadd.f32 %v2665, %v3016
        %v3380 = vadd.f32 %v2666, %v3019
        %v3381 = vadd.f32 %v2667, %v3022
        %v3382 = vadd.f32 %v2668, %v3025
        %v3383 = vadd.f32 %v2669, %v3028
        %v3384 = vadd.f32 %v2670, %v3031
        %v3385 = vadd.f32 %v2671, %v3034
        %v3386 = vadd.f32 %v2672, %v3037
        %v3387 = vadd.f32 %v2673, %v3040
        %v3388 = vadd.f32 %v2674, %v3043
        %v3389 = vadd.f32 %v2675, %v3046
        %v3390 = vadd.f32 %v2676, %v3049
        %v3391 = vadd.f32 %v2677, %v3052
        %v3392 = vadd.f32 %v2678, %v3055
        %v3393 = vadd.f32 %v2679, %v3058
        %v3394 = vadd.f32 %v2680, %v3061
        %v3395 = vadd.f32 %v2681, %v3064
        %v3396 = vadd.f32 %v2682, %v3067
        %v3397 = vadd.f32 %v2683, %v3070
        %v3398 = vadd.f32 %v2684, %v3073
        %v3399 = vadd.f32 %v2685, %v3076
        %v3400 = vadd.f32 %v2686, %v3079
        %v3401 = vadd.f32 %v2687, %v3082
        %v3402 = vadd.f32 %v2688, %v3085
        %v3403 = vadd.f32 %v2689, %v3088
        %v3404 = vadd.f32 %v2690, %v3091
        %v3405 = vadd.f32 %v2691, %v3094
        %v3406 = vadd.f32 %v2692, %v3097
        %v3407 = vadd.f32 %v2693, %v3100
        %v3408 = vadd.f32 %v2694, %v3103
        %v3409 = vadd.f32 %v2695, %v3106
        %v3410 = vadd.f32 %v2696, %v3109
        %v3411 = vadd.f32 %v2697, %v3112
        %v3412 = vadd.f32 %v2698, %v3115
        %v3413 = vadd.f32 %v2699, %v3118
        %v3414 = vadd.f32 %v2700, %v3121
        %v3415 = vadd.f32 %v2701, %v3124
        %v3416 = vadd.f32 %v2702, %v3127
        %v3417 = vadd.f32 %v2703, %v3130
        %v3418 = vadd.f32 %v2704, %v3133
        %v3419 = vadd.f32 %v2705, %v3136
        %v3420 = vadd.f32 %v2706, %v3139
        %v3421 = vadd.f32 %v2707, %v3142
        %v3422 = vadd.f32 %v2708, %v3145
        %v3423 = vadd.f32 %v2709, %v3148
        %v3424 = vadd.f32 %v2710, %v3151
        %v3425 = vadd.f32 %v2711, %v3154
        %v3426 = vadd.f32 %v2712, %v3157
        %v3427 = vadd.f32 %v2713, %v3160
        %v3428 = vadd.f32 %v2714, %v3163
        %v3429 = vadd.f32 %v2715, %v3166
        %v3430 = vadd.f32 %v2716, %v3169
        %v3431 = vadd.f32 %v2717, %v3172
        %v3432 = vadd.f32 %v2718, %v3175
        %v3433 = vadd.f32 %v2719, %v3178
        %v3434 = vadd.f32 %v2720, %v3181
        %v3435 = vadd.f32 %v2721, %v3184
        %v3436 = vadd.f32 %v2722, %v3187
        %v3437 = vadd.f32 %v2723, %v3190
        %v3438 = vadd.f32 %v2724, %v3193
        %v3439 = vadd.f32 %v2725, %v3196
        %v3440 = vadd.f32 %v2726, %v3199
        %v3441 = vadd.f32 %v2727, %v3202
        %v3442 = vadd.f32 %v2728, %v3205
        %v3443 = vadd.f32 %v2729, %v3208
        %v3444 = vadd.f32 %v2730, %v3211
        %v3445 = vadd.f32 %v2731, %v3214
        %v3446 = vadd.f32 %v2732, %v3217
        %v3447 = vadd.f32 %v2733, %v3220
        %v3448 = vadd.f32 %v2734, %v3223
        %v3449 = vadd.f32 %v2735, %v3226
        %v3450 = vadd.f32 %v2736, %v3229
        %v3451 = vadd.f32 %v2737, %v3232
        %v3452 = vadd.f32 %v2738, %v3235
        %v3453 = vadd.f32 %v2739, %v3238
        %v3454 = vadd.f32 %v2740, %v3241
        %v3455 = vadd.f32 %v2741, %v3244
        %v3456 = vadd.f32 %v2742, %v3247
        %v3457 = vadd.f32 %v2743, %v3250
        %v3458 = vadd.f32 %v2744, %v3253
        %v3459 = vadd.f32 %v2745, %v3256
        %v3460 = vadd.f32 %v2746, %v3259
        %v3461 = vadd.f32 %v2747, %v3262
        %v3462 = vadd.f32 %v2748, %v3265
        %v3463 = vadd.f32 %v2749, %v3268
        %v3464 = vadd.f32 %v2750, %v3271
        %v3465 = vadd.f32 %v2751, %v3274
        %v3466 = vadd.f32 %v2752, %v3277
        %v3467 = vadd.f32 %v2753, %v3280
        %v3468 = vadd.f32 %v2754, %v3283
        %v3469 = vadd.f32 %v2755, %v3286
        %v3470 = vadd.f32 %v2756, %v3289
        %v3471 = vadd.f32 %v2757, %v3292
        %v3472 = vadd.f32 %v2758, %v3295
        %v3473 = vadd.f32 %v2759, %v3298
        %v3474 = vadd.f32 %v2760, %v3301
        %v3475 = vadd.f32 %v2761, %v3304
        %v3476 = vadd.f32 %v2762, %v3307
        %v3477 = vadd.f32 %v2763, %v3310
        %v3478 = vadd.f32 %v2764, %v3313
        %v3479 = vadd.f32 %v2765, %v3316
        %v3480 = vadd.f32 %v2766, %v3319
        %v3481 = vadd.f32 %v2767, %v3322
        %v3482 = vadd.f32 %v2768, %v3325
        %v3483 = vadd.f32 %v2769, %v3328
        %v3484 = vadd.f32 %v2770, %v3331
        %v3485 = vadd.f32 %v2771, %v3334
        %v3486 = vadd.f32 %v2772, %v3337
        %v3487 = vadd.f32 %v2773, %v3340
        %v3488 = vadd.f32 %v2774, %v3343
        %v3489 = vadd.f32 %v2775, %v3346
        %v3490 = vadd.f32 %v2776, %v3349
        %v3491 = vadd.f32 %v2777, %v3352
        %v3492 = vadd.f32 %v2778, %v3355
        %v3493 = vld [vmem:[%s195 + $0x24] sm:$0xff]
        %v3494 = vld [vmem:[%s195 + $0x2c] sm:$0xff]
        %v3495 = vld [vmem:[%s195 + $0x34] sm:$0xff]
        %v3496 = vld [vmem:[%s195 + $0x3c] sm:$0xff]
        %v3497 = vld [vmem:[%s195 + $0x44] sm:$0xff]
        %v3498 = vld [vmem:[%s195 + $0x4c] sm:$0xff]
        %v3499 = vld [vmem:[%s195 + $0x54] sm:$0xff]
        %v3500 = vld [vmem:[%s195 + $0x5c] sm:$0xff]
        %v3501 = vld [vmem:[%s195 + $0x64] sm:$0xff]
        %v3502 = vld [vmem:[%s195 + $0x6c] sm:$0xff]
        %v3503 = vld [vmem:[%s195 + $0x74] sm:$0xff]
        %v3504 = vld [vmem:[%s195 + $0x7c] sm:$0xff]
        %v3505 = vld [vmem:[%s195 + $0x84] sm:$0xff]
        %v3506 = vld [vmem:[%s195 + $0x8c] sm:$0xff]
        %v3507 = vld [vmem:[%s195 + $0x94] sm:$0xff]
        %v3508 = vld [vmem:[%s195 + $0x9c] sm:$0xff]
        %v3509 = vld [vmem:[%s195 + $0xa4] sm:$0xff]
        %v3510 = vld [vmem:[%s195 + $0xac] sm:$0xff]
        %v3511 = vld [vmem:[%s195 + $0xb4] sm:$0xff]
        %v3512 = vld [vmem:[%s195 + $0xbc] sm:$0xff]
        %v3513 = vld [vmem:[%s195 + $0xc4] sm:$0xff]
        %v3514 = vld [vmem:[%s195 + $0xcc] sm:$0xff]
        %v3515 = vld [vmem:[%s195 + $0xd4] sm:$0xff]
        %v3516 = vld [vmem:[%s195 + $0xdc] sm:$0xff]
        %v3517 = vld [vmem:[%s195 + $0xe4] sm:$0xff]
        %v3518 = vld [vmem:[%s195 + $0xec] sm:$0xff]
        %v3519 = vld [vmem:[%s195 + $0xf4] sm:$0xff]
        %v3520 = vld [vmem:[%s195 + $0xfc] sm:$0xff]
        %v3521 = vld [vmem:[%s195 + $0x104] sm:$0xff]
        %v3522 = vld [vmem:[%s195 + $0x10c] sm:$0xff]
        %v3523 = vld [vmem:[%s195 + $0x114] sm:$0xff]
        %v3524 = vld [vmem:[%s195 + $0x11c] sm:$0xff]
        %v3525 = vld [vmem:[%s195 + $0x124] sm:$0xff]
        %v3526 = vld [vmem:[%s195 + $0x12c] sm:$0xff]
        %v3527 = vld [vmem:[%s195 + $0x134] sm:$0xff]
        %v3528 = vld [vmem:[%s195 + $0x13c] sm:$0xff]
        %v3529 = vld [vmem:[%s195 + $0x144] sm:$0xff]
        %v3530 = vld [vmem:[%s195 + $0x14c] sm:$0xff]
        %v3531 = vld [vmem:[%s195 + $0x154] sm:$0xff]
        %v3532 = vld [vmem:[%s195 + $0x15c] sm:$0xff]
        %v3533 = vld [vmem:[%s195 + $0x164] sm:$0xff]
        %v3534 = vld [vmem:[%s195 + $0x16c] sm:$0xff]
        %v3535 = vld [vmem:[%s195 + $0x174] sm:$0xff]
        %v3536 = vld [vmem:[%s195 + $0x17c] sm:$0xff]
        %v3537 = vld [vmem:[%s195 + $0x184] sm:$0xff]
        %v3538 = vld [vmem:[%s195 + $0x18c] sm:$0xff]
        %v3539 = vld [vmem:[%s195 + $0x194] sm:$0xff]
        %v3540 = vld [vmem:[%s195 + $0x19c] sm:$0xff]
        %v3541 = vld [vmem:[%s195 + $0x1a4] sm:$0xff]
        %v3542 = vld [vmem:[%s195 + $0x1ac] sm:$0xff]
        %v3543 = vld [vmem:[%s195 + $0x1b4] sm:$0xff]
        %v3544 = vld [vmem:[%s195 + $0x1bc] sm:$0xff]
        %v3545 = vld [vmem:[%s195 + $0x1c4] sm:$0xff]
        %v3546 = vld [vmem:[%s195 + $0x1cc] sm:$0xff]
        %v3547 = vld [vmem:[%s195 + $0x1d4] sm:$0xff]
        %v3548 = vld [vmem:[%s195 + $0x1dc] sm:$0xff]
        %v3549 = vld [vmem:[%s195 + $0x1e4] sm:$0xff]
        %v3550 = vld [vmem:[%s195 + $0x1ec] sm:$0xff]
        %v3551 = vld [vmem:[%s195 + $0x1f4] sm:$0xff]
        %v3552 = vld [vmem:[%s195 + $0x1fc] sm:$0xff]
        %v3553 = vld [vmem:[%s195 + $0x204] sm:$0xff]
        %v3554 = vld [vmem:[%s195 + $0x20c] sm:$0xff]
        %v3555 = vld [vmem:[%s195 + $0x214] sm:$0xff]
        %v3556 = vld [vmem:[%s195 + $0x21c] sm:$0xff]
        %v3557 = vld [vmem:[%s195 + $0x224] sm:$0xff]
        %v3558 = vld [vmem:[%s195 + $0x22c] sm:$0xff]
        %v3559 = vld [vmem:[%s195 + $0x234] sm:$0xff]
        %v3560 = vld [vmem:[%s195 + $0x23c] sm:$0xff]
        %v3561 = vld [vmem:[%s195 + $0x244] sm:$0xff]
        %v3562 = vld [vmem:[%s195 + $0x24c] sm:$0xff]
        %v3563 = vld [vmem:[%s195 + $0x254] sm:$0xff]
        %v3564 = vld [vmem:[%s195 + $0x25c] sm:$0xff]
        %v3565 = vld [vmem:[%s195 + $0x264] sm:$0xff]
        %v3566 = vld [vmem:[%s195 + $0x26c] sm:$0xff]
        %v3567 = vld [vmem:[%s195 + $0x274] sm:$0xff]
        %v3568 = vld [vmem:[%s195 + $0x27c] sm:$0xff]
        %v3569 = vld [vmem:[%s195 + $0x284] sm:$0xff]
        %v3570 = vld [vmem:[%s195 + $0x28c] sm:$0xff]
        %v3571 = vld [vmem:[%s195 + $0x294] sm:$0xff]
        %v3572 = vld [vmem:[%s195 + $0x29c] sm:$0xff]
        %v3573 = vld [vmem:[%s195 + $0x2a4] sm:$0xff]
        %v3574 = vld [vmem:[%s195 + $0x2ac] sm:$0xff]
        %v3575 = vld [vmem:[%s195 + $0x2b4] sm:$0xff]
        %v3576 = vld [vmem:[%s195 + $0x2bc] sm:$0xff]
        %v3577 = vld [vmem:[%s195 + $0x2c4] sm:$0xff]
        %v3578 = vld [vmem:[%s195 + $0x2cc] sm:$0xff]
        %v3579 = vld [vmem:[%s195 + $0x2d4] sm:$0xff]
        %v3580 = vld [vmem:[%s195 + $0x2dc] sm:$0xff]
        %v3581 = vld [vmem:[%s195 + $0x2e4] sm:$0xff]
        %v3582 = vld [vmem:[%s195 + $0x2ec] sm:$0xff]
        %v3583 = vld [vmem:[%s195 + $0x2f4] sm:$0xff]
        %v3584 = vld [vmem:[%s195 + $0x2fc] sm:$0xff]
        %v3585 = vld [vmem:[%s195 + $0x304] sm:$0xff]
        %v3586 = vld [vmem:[%s195 + $0x30c] sm:$0xff]
        %v3587 = vld [vmem:[%s195 + $0x314] sm:$0xff]
        %v3588 = vld [vmem:[%s195 + $0x31c] sm:$0xff]
        %v3589 = vld [vmem:[%s195 + $0x324] sm:$0xff]
        %v3590 = vld [vmem:[%s195 + $0x32c] sm:$0xff]
        %v3591 = vld [vmem:[%s195 + $0x334] sm:$0xff]
        %v3592 = vld [vmem:[%s195 + $0x33c] sm:$0xff]
        %v3593 = vld [vmem:[%s195 + $0x344] sm:$0xff]
        %v3594 = vld [vmem:[%s195 + $0x34c] sm:$0xff]
        %v3595 = vld [vmem:[%s195 + $0x354] sm:$0xff]
        %v3596 = vld [vmem:[%s195 + $0x35c] sm:$0xff]
        %v3597 = vld [vmem:[%s195 + $0x364] sm:$0xff]
        %v3598 = vld [vmem:[%s195 + $0x36c] sm:$0xff]
        %v3599 = vld [vmem:[%s195 + $0x374] sm:$0xff]
        %v3600 = vld [vmem:[%s195 + $0x37c] sm:$0xff]
        %v3601 = vld [vmem:[%s195 + $0x384] sm:$0xff]
        %v3602 = vld [vmem:[%s195 + $0x38c] sm:$0xff]
        %v3603 = vld [vmem:[%s195 + $0x394] sm:$0xff]
        %v3604 = vld [vmem:[%s195 + $0x39c] sm:$0xff]
        %v3605 = vld [vmem:[%s195 + $0x3a4] sm:$0xff]
        %v3606 = vld [vmem:[%s195 + $0x3ac] sm:$0xff]
        %v3607 = vld [vmem:[%s195 + $0x3b4] sm:$0xff]
        %v3608 = vld [vmem:[%s195 + $0x3bc] sm:$0xff]
        %v3609 = vld [vmem:[%s195 + $0x3c4] sm:$0xff]
        %v3610 = vld [vmem:[%s195 + $0x3cc] sm:$0xff]
        %v3611 = vld [vmem:[%s195 + $0x3d4] sm:$0xff]
        %v3612 = vld [vmem:[%s195 + $0x3dc] sm:$0xff]
        %v3613 = vld [vmem:[%s195 + $0x3e4] sm:$0xff]
        %v3614 = vld [vmem:[%s195 + $0x3ec] sm:$0xff]
        %v3615 = vld [vmem:[%s195 + $0x3f4] sm:$0xff]
        %v3616 = vld [vmem:[%s195 + $0x3fc] sm:$0xff]
        %v3617 = vld [vmem:[%s195 + $0x404] sm:$0xff]
        %v3618 = vld [vmem:[%s195 + $0x40c] sm:$0xff]
        %v3619 = vld [vmem:[%s195 + $0x414] sm:$0xff]
        %v3620 = vld [vmem:[%s195 + $0x41c] sm:$0xff]
        %v3621 = vld [vmem:[%s195 + $0x424] sm:$0xff]
        %v3622 = vld [vmem:[%s195 + $0x42c] sm:$0xff]
        %v3623 = vld [vmem:[%s195 + $0x434] sm:$0xff]
        %v3624 = vld [vmem:[%s195 + $0x43c] sm:$0xff]
        %v3625 = vld [vmem:[%s195 + $0x444] sm:$0xff]
        %v3626 = vld [vmem:[%s195 + $0x44c] sm:$0xff]
        %v3627 = vld [vmem:[%s195 + $0x454] sm:$0xff]
        %v3628 = vld [vmem:[%s195 + $0x45c] sm:$0xff]
        %s3629 = scalar_lea.vmem %s1, 640
        %v3630 = vld [vmem:[%s3629] sm:$0xff]
        %v3631 = vld [vmem:[%s3629 + $0x8] sm:$0xff]
        %v3632 = vld [vmem:[%s3629 + $0x10] sm:$0xff]
        %v3633 = vld [vmem:[%s3629 + $0x18] sm:$0xff]
        %v3634 = vld [vmem:[%s3629 + $0x20] sm:$0xff]
        %v3635 = vld [vmem:[%s3629 + $0x28] sm:$0xff]
        %v3636 = vld [vmem:[%s3629 + $0x30] sm:$0xff]
        %v3637 = vld [vmem:[%s3629 + $0x38] sm:$0xff]
        %v3638 = vld [vmem:[%s3629 + $0x40] sm:$0xff]
        %v3639 = vld [vmem:[%s3629 + $0x48] sm:$0xff]
        %v3640 = vld [vmem:[%s3629 + $0x50] sm:$0xff]
        %v3641 = vld [vmem:[%s3629 + $0x58] sm:$0xff]
        %v3642 = vld [vmem:[%s3629 + $0x60] sm:$0xff]
        %v3643 = vld [vmem:[%s3629 + $0x68] sm:$0xff]
        %v3644 = vld [vmem:[%s3629 + $0x70] sm:$0xff]
        %v3645 = vld [vmem:[%s3629 + $0x78] sm:$0xff]
        %3646 = vmatpush.msra.mxu0 %v3645
        %3647 = vmatpush.msra.mxu0 %v3644
        %3648 = vmatpush.msra.mxu0 %v3643
        %3649 = vmatpush.msra.mxu0 %v3642
        %3650 = vmatpush.msra.mxu0 %v3641
        %3651 = vmatpush.msra.mxu0 %v3640
        %3652 = vmatpush.msra.mxu0 %v3639
        %3653 = vmatpush.msra.mxu0 %v3638
        %3654 = vmatpush.msra.mxu0 %v3637
        %3655 = vmatpush.msra.mxu0 %v3636
        %3656 = vmatpush.msra.mxu0 %v3635
        %3657 = vmatpush.msra.mxu0 %v3634
        %3658 = vmatpush.msra.mxu0 %v3633
        %3659 = vmatpush.msra.mxu0 %v3632
        %3660 = vmatpush.msra.mxu0 %v3631
        %3661 = vmatpush.msra.mxu0 %v3630
        %3662 = vmatmul.f32.gmra.mxu0 %v3493
        %v3663 = vpop.f32.mrf.mxu0
        %v3664 = vadd.f32 0.0, %v3663
        %3665 = vmatmul.f32.gmra.mxu0 %v3494
        %v3666 = vpop.f32.mrf.mxu0
        %v3667 = vadd.f32 0.0, %v3666
        %3668 = vmatmul.f32.gmra.mxu0 %v3495
        %v3669 = vpop.f32.mrf.mxu0
        %v3670 = vadd.f32 0.0, %v3669
        %3671 = vmatmul.f32.gmra.mxu0 %v3496
        %v3672 = vpop.f32.mrf.mxu0
        %v3673 = vadd.f32 0.0, %v3672
        %3674 = vmatmul.f32.gmra.mxu0 %v3497
        %v3675 = vpop.f32.mrf.mxu0
        %v3676 = vadd.f32 0.0, %v3675
        %3677 = vmatmul.f32.gmra.mxu0 %v3498
        %v3678 = vpop.f32.mrf.mxu0
        %v3679 = vadd.f32 0.0, %v3678
        %3680 = vmatmul.f32.gmra.mxu0 %v3499
        %v3681 = vpop.f32.mrf.mxu0
        %v3682 = vadd.f32 0.0, %v3681
        %3683 = vmatmul.f32.gmra.mxu0 %v3500
        %v3684 = vpop.f32.mrf.mxu0
        %v3685 = vadd.f32 0.0, %v3684
        %3686 = vmatmul.f32.gmra.mxu0 %v3501
        %v3687 = vpop.f32.mrf.mxu0
        %v3688 = vadd.f32 0.0, %v3687
        %3689 = vmatmul.f32.gmra.mxu0 %v3502
        %v3690 = vpop.f32.mrf.mxu0
        %v3691 = vadd.f32 0.0, %v3690
        %3692 = vmatmul.f32.gmra.mxu0 %v3503
        %v3693 = vpop.f32.mrf.mxu0
        %v3694 = vadd.f32 0.0, %v3693
        %3695 = vmatmul.f32.gmra.mxu0 %v3504
        %v3696 = vpop.f32.mrf.mxu0
        %v3697 = vadd.f32 0.0, %v3696
        %3698 = vmatmul.f32.gmra.mxu0 %v3505
        %v3699 = vpop.f32.mrf.mxu0
        %v3700 = vadd.f32 0.0, %v3699
        %3701 = vmatmul.f32.gmra.mxu0 %v3506
        %v3702 = vpop.f32.mrf.mxu0
        %v3703 = vadd.f32 0.0, %v3702
        %3704 = vmatmul.f32.gmra.mxu0 %v3507
        %v3705 = vpop.f32.mrf.mxu0
        %v3706 = vadd.f32 0.0, %v3705
        %3707 = vmatmul.f32.gmra.mxu0 %v3508
        %v3708 = vpop.f32.mrf.mxu0
        %v3709 = vadd.f32 0.0, %v3708
        %3710 = vmatmul.f32.gmra.mxu0 %v3509
        %v3711 = vpop.f32.mrf.mxu0
        %v3712 = vadd.f32 0.0, %v3711
        %3713 = vmatmul.f32.gmra.mxu0 %v3510
        %v3714 = vpop.f32.mrf.mxu0
        %v3715 = vadd.f32 0.0, %v3714
        %3716 = vmatmul.f32.gmra.mxu0 %v3511
        %v3717 = vpop.f32.mrf.mxu0
        %v3718 = vadd.f32 0.0, %v3717
        %3719 = vmatmul.f32.gmra.mxu0 %v3512
        %v3720 = vpop.f32.mrf.mxu0
        %v3721 = vadd.f32 0.0, %v3720
        %3722 = vmatmul.f32.gmra.mxu0 %v3513
        %v3723 = vpop.f32.mrf.mxu0
        %v3724 = vadd.f32 0.0, %v3723
        %3725 = vmatmul.f32.gmra.mxu0 %v3514
        %v3726 = vpop.f32.mrf.mxu0
        %v3727 = vadd.f32 0.0, %v3726
        %3728 = vmatmul.f32.gmra.mxu0 %v3515
        %v3729 = vpop.f32.mrf.mxu0
        %v3730 = vadd.f32 0.0, %v3729
        %3731 = vmatmul.f32.gmra.mxu0 %v3516
        %v3732 = vpop.f32.mrf.mxu0
        %v3733 = vadd.f32 0.0, %v3732
        %3734 = vmatmul.f32.gmra.mxu0 %v3517
        %v3735 = vpop.f32.mrf.mxu0
        %v3736 = vadd.f32 0.0, %v3735
        %3737 = vmatmul.f32.gmra.mxu0 %v3518
        %v3738 = vpop.f32.mrf.mxu0
        %v3739 = vadd.f32 0.0, %v3738
        %3740 = vmatmul.f32.gmra.mxu0 %v3519
        %v3741 = vpop.f32.mrf.mxu0
        %v3742 = vadd.f32 0.0, %v3741
        %3743 = vmatmul.f32.gmra.mxu0 %v3520
        %v3744 = vpop.f32.mrf.mxu0
        %v3745 = vadd.f32 0.0, %v3744
        %3746 = vmatmul.f32.gmra.mxu0 %v3521
        %v3747 = vpop.f32.mrf.mxu0
        %v3748 = vadd.f32 0.0, %v3747
        %3749 = vmatmul.f32.gmra.mxu0 %v3522
        %v3750 = vpop.f32.mrf.mxu0
        %v3751 = vadd.f32 0.0, %v3750
        %3752 = vmatmul.f32.gmra.mxu0 %v3523
        %v3753 = vpop.f32.mrf.mxu0
        %v3754 = vadd.f32 0.0, %v3753
        %3755 = vmatmul.f32.gmra.mxu0 %v3524
        %v3756 = vpop.f32.mrf.mxu0
        %v3757 = vadd.f32 0.0, %v3756
        %3758 = vmatmul.f32.gmra.mxu0 %v3525
        %v3759 = vpop.f32.mrf.mxu0
        %v3760 = vadd.f32 0.0, %v3759
        %3761 = vmatmul.f32.gmra.mxu0 %v3526
        %v3762 = vpop.f32.mrf.mxu0
        %v3763 = vadd.f32 0.0, %v3762
        %3764 = vmatmul.f32.gmra.mxu0 %v3527
        %v3765 = vpop.f32.mrf.mxu0
        %v3766 = vadd.f32 0.0, %v3765
        %3767 = vmatmul.f32.gmra.mxu0 %v3528
        %v3768 = vpop.f32.mrf.mxu0
        %v3769 = vadd.f32 0.0, %v3768
        %3770 = vmatmul.f32.gmra.mxu0 %v3529
        %v3771 = vpop.f32.mrf.mxu0
        %v3772 = vadd.f32 0.0, %v3771
        %3773 = vmatmul.f32.gmra.mxu0 %v3530
        %v3774 = vpop.f32.mrf.mxu0
        %v3775 = vadd.f32 0.0, %v3774
        %3776 = vmatmul.f32.gmra.mxu0 %v3531
        %v3777 = vpop.f32.mrf.mxu0
        %v3778 = vadd.f32 0.0, %v3777
        %3779 = vmatmul.f32.gmra.mxu0 %v3532
        %v3780 = vpop.f32.mrf.mxu0
        %v3781 = vadd.f32 0.0, %v3780
        %3782 = vmatmul.f32.gmra.mxu0 %v3533
        %v3783 = vpop.f32.mrf.mxu0
        %v3784 = vadd.f32 0.0, %v3783
        %3785 = vmatmul.f32.gmra.mxu0 %v3534
        %v3786 = vpop.f32.mrf.mxu0
        %v3787 = vadd.f32 0.0, %v3786
        %3788 = vmatmul.f32.gmra.mxu0 %v3535
        %v3789 = vpop.f32.mrf.mxu0
        %v3790 = vadd.f32 0.0, %v3789
        %3791 = vmatmul.f32.gmra.mxu0 %v3536
        %v3792 = vpop.f32.mrf.mxu0
        %v3793 = vadd.f32 0.0, %v3792
        %3794 = vmatmul.f32.gmra.mxu0 %v3537
        %v3795 = vpop.f32.mrf.mxu0
        %v3796 = vadd.f32 0.0, %v3795
        %3797 = vmatmul.f32.gmra.mxu0 %v3538
        %v3798 = vpop.f32.mrf.mxu0
        %v3799 = vadd.f32 0.0, %v3798
        %3800 = vmatmul.f32.gmra.mxu0 %v3539
        %v3801 = vpop.f32.mrf.mxu0
        %v3802 = vadd.f32 0.0, %v3801
        %3803 = vmatmul.f32.gmra.mxu0 %v3540
        %v3804 = vpop.f32.mrf.mxu0
        %v3805 = vadd.f32 0.0, %v3804
        %3806 = vmatmul.f32.gmra.mxu0 %v3541
        %v3807 = vpop.f32.mrf.mxu0
        %v3808 = vadd.f32 0.0, %v3807
        %3809 = vmatmul.f32.gmra.mxu0 %v3542
        %v3810 = vpop.f32.mrf.mxu0
        %v3811 = vadd.f32 0.0, %v3810
        %3812 = vmatmul.f32.gmra.mxu0 %v3543
        %v3813 = vpop.f32.mrf.mxu0
        %v3814 = vadd.f32 0.0, %v3813
        %3815 = vmatmul.f32.gmra.mxu0 %v3544
        %v3816 = vpop.f32.mrf.mxu0
        %v3817 = vadd.f32 0.0, %v3816
        %3818 = vmatmul.f32.gmra.mxu0 %v3545
        %v3819 = vpop.f32.mrf.mxu0
        %v3820 = vadd.f32 0.0, %v3819
        %3821 = vmatmul.f32.gmra.mxu0 %v3546
        %v3822 = vpop.f32.mrf.mxu0
        %v3823 = vadd.f32 0.0, %v3822
        %3824 = vmatmul.f32.gmra.mxu0 %v3547
        %v3825 = vpop.f32.mrf.mxu0
        %v3826 = vadd.f32 0.0, %v3825
        %3827 = vmatmul.f32.gmra.mxu0 %v3548
        %v3828 = vpop.f32.mrf.mxu0
        %v3829 = vadd.f32 0.0, %v3828
        %3830 = vmatmul.f32.gmra.mxu0 %v3549
        %v3831 = vpop.f32.mrf.mxu0
        %v3832 = vadd.f32 0.0, %v3831
        %3833 = vmatmul.f32.gmra.mxu0 %v3550
        %v3834 = vpop.f32.mrf.mxu0
        %v3835 = vadd.f32 0.0, %v3834
        %3836 = vmatmul.f32.gmra.mxu0 %v3551
        %v3837 = vpop.f32.mrf.mxu0
        %v3838 = vadd.f32 0.0, %v3837
        %3839 = vmatmul.f32.gmra.mxu0 %v3552
        %v3840 = vpop.f32.mrf.mxu0
        %v3841 = vadd.f32 0.0, %v3840
        %3842 = vmatmul.f32.gmra.mxu0 %v3553
        %v3843 = vpop.f32.mrf.mxu0
        %v3844 = vadd.f32 0.0, %v3843
        %3845 = vmatmul.f32.gmra.mxu0 %v3554
        %v3846 = vpop.f32.mrf.mxu0
        %v3847 = vadd.f32 0.0, %v3846
        %3848 = vmatmul.f32.gmra.mxu0 %v3555
        %v3849 = vpop.f32.mrf.mxu0
        %v3850 = vadd.f32 0.0, %v3849
        %3851 = vmatmul.f32.gmra.mxu0 %v3556
        %v3852 = vpop.f32.mrf.mxu0
        %v3853 = vadd.f32 0.0, %v3852
        %3854 = vmatmul.f32.gmra.mxu0 %v3557
        %v3855 = vpop.f32.mrf.mxu0
        %v3856 = vadd.f32 0.0, %v3855
        %3857 = vmatmul.f32.gmra.mxu0 %v3558
        %v3858 = vpop.f32.mrf.mxu0
        %v3859 = vadd.f32 0.0, %v3858
        %3860 = vmatmul.f32.gmra.mxu0 %v3559
        %v3861 = vpop.f32.mrf.mxu0
        %v3862 = vadd.f32 0.0, %v3861
        %3863 = vmatmul.f32.gmra.mxu0 %v3560
        %v3864 = vpop.f32.mrf.mxu0
        %v3865 = vadd.f32 0.0, %v3864
        %3866 = vmatmul.f32.gmra.mxu0 %v3561
        %v3867 = vpop.f32.mrf.mxu0
        %v3868 = vadd.f32 0.0, %v3867
        %3869 = vmatmul.f32.gmra.mxu0 %v3562
        %v3870 = vpop.f32.mrf.mxu0
        %v3871 = vadd.f32 0.0, %v3870
        %3872 = vmatmul.f32.gmra.mxu0 %v3563
        %v3873 = vpop.f32.mrf.mxu0
        %v3874 = vadd.f32 0.0, %v3873
        %3875 = vmatmul.f32.gmra.mxu0 %v3564
        %v3876 = vpop.f32.mrf.mxu0
        %v3877 = vadd.f32 0.0, %v3876
        %3878 = vmatmul.f32.gmra.mxu0 %v3565
        %v3879 = vpop.f32.mrf.mxu0
        %v3880 = vadd.f32 0.0, %v3879
        %3881 = vmatmul.f32.gmra.mxu0 %v3566
        %v3882 = vpop.f32.mrf.mxu0
        %v3883 = vadd.f32 0.0, %v3882
        %3884 = vmatmul.f32.gmra.mxu0 %v3567
        %v3885 = vpop.f32.mrf.mxu0
        %v3886 = vadd.f32 0.0, %v3885
        %3887 = vmatmul.f32.gmra.mxu0 %v3568
        %v3888 = vpop.f32.mrf.mxu0
        %v3889 = vadd.f32 0.0, %v3888
        %3890 = vmatmul.f32.gmra.mxu0 %v3569
        %v3891 = vpop.f32.mrf.mxu0
        %v3892 = vadd.f32 0.0, %v3891
        %3893 = vmatmul.f32.gmra.mxu0 %v3570
        %v3894 = vpop.f32.mrf.mxu0
        %v3895 = vadd.f32 0.0, %v3894
        %3896 = vmatmul.f32.gmra.mxu0 %v3571
        %v3897 = vpop.f32.mrf.mxu0
        %v3898 = vadd.f32 0.0, %v3897
        %3899 = vmatmul.f32.gmra.mxu0 %v3572
        %v3900 = vpop.f32.mrf.mxu0
        %v3901 = vadd.f32 0.0, %v3900
        %3902 = vmatmul.f32.gmra.mxu0 %v3573
        %v3903 = vpop.f32.mrf.mxu0
        %v3904 = vadd.f32 0.0, %v3903
        %3905 = vmatmul.f32.gmra.mxu0 %v3574
        %v3906 = vpop.f32.mrf.mxu0
        %v3907 = vadd.f32 0.0, %v3906
        %3908 = vmatmul.f32.gmra.mxu0 %v3575
        %v3909 = vpop.f32.mrf.mxu0
        %v3910 = vadd.f32 0.0, %v3909
        %3911 = vmatmul.f32.gmra.mxu0 %v3576
        %v3912 = vpop.f32.mrf.mxu0
        %v3913 = vadd.f32 0.0, %v3912
        %3914 = vmatmul.f32.gmra.mxu0 %v3577
        %v3915 = vpop.f32.mrf.mxu0
        %v3916 = vadd.f32 0.0, %v3915
        %3917 = vmatmul.f32.gmra.mxu0 %v3578
        %v3918 = vpop.f32.mrf.mxu0
        %v3919 = vadd.f32 0.0, %v3918
        %3920 = vmatmul.f32.gmra.mxu0 %v3579
        %v3921 = vpop.f32.mrf.mxu0
        %v3922 = vadd.f32 0.0, %v3921
        %3923 = vmatmul.f32.gmra.mxu0 %v3580
        %v3924 = vpop.f32.mrf.mxu0
        %v3925 = vadd.f32 0.0, %v3924
        %3926 = vmatmul.f32.gmra.mxu0 %v3581
        %v3927 = vpop.f32.mrf.mxu0
        %v3928 = vadd.f32 0.0, %v3927
        %3929 = vmatmul.f32.gmra.mxu0 %v3582
        %v3930 = vpop.f32.mrf.mxu0
        %v3931 = vadd.f32 0.0, %v3930
        %3932 = vmatmul.f32.gmra.mxu0 %v3583
        %v3933 = vpop.f32.mrf.mxu0
        %v3934 = vadd.f32 0.0, %v3933
        %3935 = vmatmul.f32.gmra.mxu0 %v3584
        %v3936 = vpop.f32.mrf.mxu0
        %v3937 = vadd.f32 0.0, %v3936
        %3938 = vmatmul.f32.gmra.mxu0 %v3585
        %v3939 = vpop.f32.mrf.mxu0
        %v3940 = vadd.f32 0.0, %v3939
        %3941 = vmatmul.f32.gmra.mxu0 %v3586
        %v3942 = vpop.f32.mrf.mxu0
        %v3943 = vadd.f32 0.0, %v3942
        %3944 = vmatmul.f32.gmra.mxu0 %v3587
        %v3945 = vpop.f32.mrf.mxu0
        %v3946 = vadd.f32 0.0, %v3945
        %3947 = vmatmul.f32.gmra.mxu0 %v3588
        %v3948 = vpop.f32.mrf.mxu0
        %v3949 = vadd.f32 0.0, %v3948
        %3950 = vmatmul.f32.gmra.mxu0 %v3589
        %v3951 = vpop.f32.mrf.mxu0
        %v3952 = vadd.f32 0.0, %v3951
        %3953 = vmatmul.f32.gmra.mxu0 %v3590
        %v3954 = vpop.f32.mrf.mxu0
        %v3955 = vadd.f32 0.0, %v3954
        %3956 = vmatmul.f32.gmra.mxu0 %v3591
        %v3957 = vpop.f32.mrf.mxu0
        %v3958 = vadd.f32 0.0, %v3957
        %3959 = vmatmul.f32.gmra.mxu0 %v3592
        %v3960 = vpop.f32.mrf.mxu0
        %v3961 = vadd.f32 0.0, %v3960
        %3962 = vmatmul.f32.gmra.mxu0 %v3593
        %v3963 = vpop.f32.mrf.mxu0
        %v3964 = vadd.f32 0.0, %v3963
        %3965 = vmatmul.f32.gmra.mxu0 %v3594
        %v3966 = vpop.f32.mrf.mxu0
        %v3967 = vadd.f32 0.0, %v3966
        %3968 = vmatmul.f32.gmra.mxu0 %v3595
        %v3969 = vpop.f32.mrf.mxu0
        %v3970 = vadd.f32 0.0, %v3969
        %3971 = vmatmul.f32.gmra.mxu0 %v3596
        %v3972 = vpop.f32.mrf.mxu0
        %v3973 = vadd.f32 0.0, %v3972
        %3974 = vmatmul.f32.gmra.mxu0 %v3597
        %v3975 = vpop.f32.mrf.mxu0
        %v3976 = vadd.f32 0.0, %v3975
        %3977 = vmatmul.f32.gmra.mxu0 %v3598
        %v3978 = vpop.f32.mrf.mxu0
        %v3979 = vadd.f32 0.0, %v3978
        %3980 = vmatmul.f32.gmra.mxu0 %v3599
        %v3981 = vpop.f32.mrf.mxu0
        %v3982 = vadd.f32 0.0, %v3981
        %3983 = vmatmul.f32.gmra.mxu0 %v3600
        %v3984 = vpop.f32.mrf.mxu0
        %v3985 = vadd.f32 0.0, %v3984
        %3986 = vmatmul.f32.gmra.mxu0 %v3601
        %v3987 = vpop.f32.mrf.mxu0
        %v3988 = vadd.f32 0.0, %v3987
        %3989 = vmatmul.f32.gmra.mxu0 %v3602
        %v3990 = vpop.f32.mrf.mxu0
        %v3991 = vadd.f32 0.0, %v3990
        %3992 = vmatmul.f32.gmra.mxu0 %v3603
        %v3993 = vpop.f32.mrf.mxu0
        %v3994 = vadd.f32 0.0, %v3993
        %3995 = vmatmul.f32.gmra.mxu0 %v3604
        %v3996 = vpop.f32.mrf.mxu0
        %v3997 = vadd.f32 0.0, %v3996
        %3998 = vmatmul.f32.gmra.mxu0 %v3605
        %v3999 = vpop.f32.mrf.mxu0
        %v4000 = vadd.f32 0.0, %v3999
        %4001 = vmatmul.f32.gmra.mxu0 %v3606
        %v4002 = vpop.f32.mrf.mxu0
        %v4003 = vadd.f32 0.0, %v4002
        %4004 = vmatmul.f32.gmra.mxu0 %v3607
        %v4005 = vpop.f32.mrf.mxu0
        %v4006 = vadd.f32 0.0, %v4005
        %4007 = vmatmul.f32.gmra.mxu0 %v3608
        %v4008 = vpop.f32.mrf.mxu0
        %v4009 = vadd.f32 0.0, %v4008
        %4010 = vmatmul.f32.gmra.mxu0 %v3609
        %v4011 = vpop.f32.mrf.mxu0
        %v4012 = vadd.f32 0.0, %v4011
        %4013 = vmatmul.f32.gmra.mxu0 %v3610
        %v4014 = vpop.f32.mrf.mxu0
        %v4015 = vadd.f32 0.0, %v4014
        %4016 = vmatmul.f32.gmra.mxu0 %v3611
        %v4017 = vpop.f32.mrf.mxu0
        %v4018 = vadd.f32 0.0, %v4017
        %4019 = vmatmul.f32.gmra.mxu0 %v3612
        %v4020 = vpop.f32.mrf.mxu0
        %v4021 = vadd.f32 0.0, %v4020
        %4022 = vmatmul.f32.gmra.mxu0 %v3613
        %v4023 = vpop.f32.mrf.mxu0
        %v4024 = vadd.f32 0.0, %v4023
        %4025 = vmatmul.f32.gmra.mxu0 %v3614
        %v4026 = vpop.f32.mrf.mxu0
        %v4027 = vadd.f32 0.0, %v4026
        %4028 = vmatmul.f32.gmra.mxu0 %v3615
        %v4029 = vpop.f32.mrf.mxu0
        %v4030 = vadd.f32 0.0, %v4029
        %4031 = vmatmul.f32.gmra.mxu0 %v3616
        %v4032 = vpop.f32.mrf.mxu0
        %v4033 = vadd.f32 0.0, %v4032
        %4034 = vmatmul.f32.gmra.mxu0 %v3617
        %v4035 = vpop.f32.mrf.mxu0
        %v4036 = vadd.f32 0.0, %v4035
        %4037 = vmatmul.f32.gmra.mxu0 %v3618
        %v4038 = vpop.f32.mrf.mxu0
        %v4039 = vadd.f32 0.0, %v4038
        %4040 = vmatmul.f32.gmra.mxu0 %v3619
        %v4041 = vpop.f32.mrf.mxu0
        %v4042 = vadd.f32 0.0, %v4041
        %4043 = vmatmul.f32.gmra.mxu0 %v3620
        %v4044 = vpop.f32.mrf.mxu0
        %v4045 = vadd.f32 0.0, %v4044
        %4046 = vmatmul.f32.gmra.mxu0 %v3621
        %v4047 = vpop.f32.mrf.mxu0
        %v4048 = vadd.f32 0.0, %v4047
        %4049 = vmatmul.f32.gmra.mxu0 %v3622
        %v4050 = vpop.f32.mrf.mxu0
        %v4051 = vadd.f32 0.0, %v4050
        %4052 = vmatmul.f32.gmra.mxu0 %v3623
        %v4053 = vpop.f32.mrf.mxu0
        %v4054 = vadd.f32 0.0, %v4053
        %4055 = vmatmul.f32.gmra.mxu0 %v3624
        %v4056 = vpop.f32.mrf.mxu0
        %v4057 = vadd.f32 0.0, %v4056
        %4058 = vmatmul.f32.gmra.mxu0 %v3625
        %v4059 = vpop.f32.mrf.mxu0
        %v4060 = vadd.f32 0.0, %v4059
        %4061 = vmatmul.f32.gmra.mxu0 %v3626
        %v4062 = vpop.f32.mrf.mxu0
        %v4063 = vadd.f32 0.0, %v4062
        %4064 = vmatmul.f32.gmra.mxu0 %v3627
        %v4065 = vpop.f32.mrf.mxu0
        %v4066 = vadd.f32 0.0, %v4065
        %4067 = vmatmul.f32.gmra.mxu0 %v3628
        %v4068 = vpop.f32.mrf.mxu0
        %v4069 = vadd.f32 0.0, %v4068
        %4070 = vdwg.mxu0
        %v4071 = vadd.f32 %v3357, %v3664
        %v4072 = vadd.f32 %v3358, %v3667
        %v4073 = vadd.f32 %v3359, %v3670
        %v4074 = vadd.f32 %v3360, %v3673
        %v4075 = vadd.f32 %v3361, %v3676
        %v4076 = vadd.f32 %v3362, %v3679
        %v4077 = vadd.f32 %v3363, %v3682
        %v4078 = vadd.f32 %v3364, %v3685
        %v4079 = vadd.f32 %v3365, %v3688
        %v4080 = vadd.f32 %v3366, %v3691
        %v4081 = vadd.f32 %v3367, %v3694
        %v4082 = vadd.f32 %v3368, %v3697
        %v4083 = vadd.f32 %v3369, %v3700
        %v4084 = vadd.f32 %v3370, %v3703
        %v4085 = vadd.f32 %v3371, %v3706
        %v4086 = vadd.f32 %v3372, %v3709
        %v4087 = vadd.f32 %v3373, %v3712
        %v4088 = vadd.f32 %v3374, %v3715
        %v4089 = vadd.f32 %v3375, %v3718
        %v4090 = vadd.f32 %v3376, %v3721
        %v4091 = vadd.f32 %v3377, %v3724
        %v4092 = vadd.f32 %v3378, %v3727
        %v4093 = vadd.f32 %v3379, %v3730
        %v4094 = vadd.f32 %v3380, %v3733
        %v4095 = vadd.f32 %v3381, %v3736
        %v4096 = vadd.f32 %v3382, %v3739
        %v4097 = vadd.f32 %v3383, %v3742
        %v4098 = vadd.f32 %v3384, %v3745
        %v4099 = vadd.f32 %v3385, %v3748
        %v4100 = vadd.f32 %v3386, %v3751
        %v4101 = vadd.f32 %v3387, %v3754
        %v4102 = vadd.f32 %v3388, %v3757
        %v4103 = vadd.f32 %v3389, %v3760
        %v4104 = vadd.f32 %v3390, %v3763
        %v4105 = vadd.f32 %v3391, %v3766
        %v4106 = vadd.f32 %v3392, %v3769
        %v4107 = vadd.f32 %v3393, %v3772
        %v4108 = vadd.f32 %v3394, %v3775
        %v4109 = vadd.f32 %v3395, %v3778
        %v4110 = vadd.f32 %v3396, %v3781
        %v4111 = vadd.f32 %v3397, %v3784
        %v4112 = vadd.f32 %v3398, %v3787
        %v4113 = vadd.f32 %v3399, %v3790
        %v4114 = vadd.f32 %v3400, %v3793
        %v4115 = vadd.f32 %v3401, %v3796
        %v4116 = vadd.f32 %v3402, %v3799
        %v4117 = vadd.f32 %v3403, %v3802
        %v4118 = vadd.f32 %v3404, %v3805
        %v4119 = vadd.f32 %v3405, %v3808
        %v4120 = vadd.f32 %v3406, %v3811
        %v4121 = vadd.f32 %v3407, %v3814
        %v4122 = vadd.f32 %v3408, %v3817
        %v4123 = vadd.f32 %v3409, %v3820
        %v4124 = vadd.f32 %v3410, %v3823
        %v4125 = vadd.f32 %v3411, %v3826
        %v4126 = vadd.f32 %v3412, %v3829
        %v4127 = vadd.f32 %v3413, %v3832
        %v4128 = vadd.f32 %v3414, %v3835
        %v4129 = vadd.f32 %v3415, %v3838
        %v4130 = vadd.f32 %v3416, %v3841
        %v4131 = vadd.f32 %v3417, %v3844
        %v4132 = vadd.f32 %v3418, %v3847
        %v4133 = vadd.f32 %v3419, %v3850
        %v4134 = vadd.f32 %v3420, %v3853
        %v4135 = vadd.f32 %v3421, %v3856
        %v4136 = vadd.f32 %v3422, %v3859
        %v4137 = vadd.f32 %v3423, %v3862
        %v4138 = vadd.f32 %v3424, %v3865
        %v4139 = vadd.f32 %v3425, %v3868
        %v4140 = vadd.f32 %v3426, %v3871
        %v4141 = vadd.f32 %v3427, %v3874
        %v4142 = vadd.f32 %v3428, %v3877
        %v4143 = vadd.f32 %v3429, %v3880
        %v4144 = vadd.f32 %v3430, %v3883
        %v4145 = vadd.f32 %v3431, %v3886
        %v4146 = vadd.f32 %v3432, %v3889
        %v4147 = vadd.f32 %v3433, %v3892
        %v4148 = vadd.f32 %v3434, %v3895
        %v4149 = vadd.f32 %v3435, %v3898
        %v4150 = vadd.f32 %v3436, %v3901
        %v4151 = vadd.f32 %v3437, %v3904
        %v4152 = vadd.f32 %v3438, %v3907
        %v4153 = vadd.f32 %v3439, %v3910
        %v4154 = vadd.f32 %v3440, %v3913
        %v4155 = vadd.f32 %v3441, %v3916
        %v4156 = vadd.f32 %v3442, %v3919
        %v4157 = vadd.f32 %v3443, %v3922
        %v4158 = vadd.f32 %v3444, %v3925
        %v4159 = vadd.f32 %v3445, %v3928
        %v4160 = vadd.f32 %v3446, %v3931
        %v4161 = vadd.f32 %v3447, %v3934
        %v4162 = vadd.f32 %v3448, %v3937
        %v4163 = vadd.f32 %v3449, %v3940
        %v4164 = vadd.f32 %v3450, %v3943
        %v4165 = vadd.f32 %v3451, %v3946
        %v4166 = vadd.f32 %v3452, %v3949
        %v4167 = vadd.f32 %v3453, %v3952
        %v4168 = vadd.f32 %v3454, %v3955
        %v4169 = vadd.f32 %v3455, %v3958
        %v4170 = vadd.f32 %v3456, %v3961
        %v4171 = vadd.f32 %v3457, %v3964
        %v4172 = vadd.f32 %v3458, %v3967
        %v4173 = vadd.f32 %v3459, %v3970
        %v4174 = vadd.f32 %v3460, %v3973
        %v4175 = vadd.f32 %v3461, %v3976
        %v4176 = vadd.f32 %v3462, %v3979
        %v4177 = vadd.f32 %v3463, %v3982
        %v4178 = vadd.f32 %v3464, %v3985
        %v4179 = vadd.f32 %v3465, %v3988
        %v4180 = vadd.f32 %v3466, %v3991
        %v4181 = vadd.f32 %v3467, %v3994
        %v4182 = vadd.f32 %v3468, %v3997
        %v4183 = vadd.f32 %v3469, %v4000
        %v4184 = vadd.f32 %v3470, %v4003
        %v4185 = vadd.f32 %v3471, %v4006
        %v4186 = vadd.f32 %v3472, %v4009
        %v4187 = vadd.f32 %v3473, %v4012
        %v4188 = vadd.f32 %v3474, %v4015
        %v4189 = vadd.f32 %v3475, %v4018
        %v4190 = vadd.f32 %v3476, %v4021
        %v4191 = vadd.f32 %v3477, %v4024
        %v4192 = vadd.f32 %v3478, %v4027
        %v4193 = vadd.f32 %v3479, %v4030
        %v4194 = vadd.f32 %v3480, %v4033
        %v4195 = vadd.f32 %v3481, %v4036
        %v4196 = vadd.f32 %v3482, %v4039
        %v4197 = vadd.f32 %v3483, %v4042
        %v4198 = vadd.f32 %v3484, %v4045
        %v4199 = vadd.f32 %v3485, %v4048
        %v4200 = vadd.f32 %v3486, %v4051
        %v4201 = vadd.f32 %v3487, %v4054
        %v4202 = vadd.f32 %v3488, %v4057
        %v4203 = vadd.f32 %v3489, %v4060
        %v4204 = vadd.f32 %v3490, %v4063
        %v4205 = vadd.f32 %v3491, %v4066
        %v4206 = vadd.f32 %v3492, %v4069
        %v4207 = vld [vmem:[%s195 + $0x44] sm:$0xff]
        %v4208 = vld [vmem:[%s195 + $0x4c] sm:$0xff]
        %v4209 = vld [vmem:[%s195 + $0x54] sm:$0xff]
        %v4210 = vld [vmem:[%s195 + $0x5c] sm:$0xff]
        %v4211 = vld [vmem:[%s195 + $0x64] sm:$0xff]
        %v4212 = vld [vmem:[%s195 + $0x6c] sm:$0xff]
        %v4213 = vld [vmem:[%s195 + $0x74] sm:$0xff]
        %v4214 = vld [vmem:[%s195 + $0x7c] sm:$0xff]
        %v4215 = vld [vmem:[%s195 + $0x84] sm:$0xff]
        %v4216 = vld [vmem:[%s195 + $0x8c] sm:$0xff]
        %v4217 = vld [vmem:[%s195 + $0x94] sm:$0xff]
        %v4218 = vld [vmem:[%s195 + $0x9c] sm:$0xff]
        %v4219 = vld [vmem:[%s195 + $0xa4] sm:$0xff]
        %v4220 = vld [vmem:[%s195 + $0xac] sm:$0xff]
        %v4221 = vld [vmem:[%s195 + $0xb4] sm:$0xff]
        %v4222 = vld [vmem:[%s195 + $0xbc] sm:$0xff]
        %v4223 = vld [vmem:[%s195 + $0xc4] sm:$0xff]
        %v4224 = vld [vmem:[%s195 + $0xcc] sm:$0xff]
        %v4225 = vld [vmem:[%s195 + $0xd4] sm:$0xff]
        %v4226 = vld [vmem:[%s195 + $0xdc] sm:$0xff]
        %v4227 = vld [vmem:[%s195 + $0xe4] sm:$0xff]
        %v4228 = vld [vmem:[%s195 + $0xec] sm:$0xff]
        %v4229 = vld [vmem:[%s195 + $0xf4] sm:$0xff]
        %v4230 = vld [vmem:[%s195 + $0xfc] sm:$0xff]
        %v4231 = vld [vmem:[%s195 + $0x104] sm:$0xff]
        %v4232 = vld [vmem:[%s195 + $0x10c] sm:$0xff]
        %v4233 = vld [vmem:[%s195 + $0x114] sm:$0xff]
        %v4234 = vld [vmem:[%s195 + $0x11c] sm:$0xff]
        %v4235 = vld [vmem:[%s195 + $0x124] sm:$0xff]
        %v4236 = vld [vmem:[%s195 + $0x12c] sm:$0xff]
        %v4237 = vld [vmem:[%s195 + $0x134] sm:$0xff]
        %v4238 = vld [vmem:[%s195 + $0x13c] sm:$0xff]
        %v4239 = vld [vmem:[%s195 + $0x144] sm:$0xff]
        %v4240 = vld [vmem:[%s195 + $0x14c] sm:$0xff]
        %v4241 = vld [vmem:[%s195 + $0x154] sm:$0xff]
        %v4242 = vld [vmem:[%s195 + $0x15c] sm:$0xff]
        %v4243 = vld [vmem:[%s195 + $0x164] sm:$0xff]
        %v4244 = vld [vmem:[%s195 + $0x16c] sm:$0xff]
        %v4245 = vld [vmem:[%s195 + $0x174] sm:$0xff]
        %v4246 = vld [vmem:[%s195 + $0x17c] sm:$0xff]
        %v4247 = vld [vmem:[%s195 + $0x184] sm:$0xff]
        %v4248 = vld [vmem:[%s195 + $0x18c] sm:$0xff]
        %v4249 = vld [vmem:[%s195 + $0x194] sm:$0xff]
        %v4250 = vld [vmem:[%s195 + $0x19c] sm:$0xff]
        %v4251 = vld [vmem:[%s195 + $0x1a4] sm:$0xff]
        %v4252 = vld [vmem:[%s195 + $0x1ac] sm:$0xff]
        %v4253 = vld [vmem:[%s195 + $0x1b4] sm:$0xff]
        %v4254 = vld [vmem:[%s195 + $0x1bc] sm:$0xff]
        %v4255 = vld [vmem:[%s195 + $0x1c4] sm:$0xff]
        %v4256 = vld [vmem:[%s195 + $0x1cc] sm:$0xff]
        %v4257 = vld [vmem:[%s195 + $0x1d4] sm:$0xff]
        %v4258 = vld [vmem:[%s195 + $0x1dc] sm:$0xff]
        %v4259 = vld [vmem:[%s195 + $0x1e4] sm:$0xff]
        %v4260 = vld [vmem:[%s195 + $0x1ec] sm:$0xff]
        %v4261 = vld [vmem:[%s195 + $0x1f4] sm:$0xff]
        %v4262 = vld [vmem:[%s195 + $0x1fc] sm:$0xff]
        %v4263 = vld [vmem:[%s195 + $0x204] sm:$0xff]
        %v4264 = vld [vmem:[%s195 + $0x20c] sm:$0xff]
        %v4265 = vld [vmem:[%s195 + $0x214] sm:$0xff]
        %v4266 = vld [vmem:[%s195 + $0x21c] sm:$0xff]
        %v4267 = vld [vmem:[%s195 + $0x224] sm:$0xff]
        %v4268 = vld [vmem:[%s195 + $0x22c] sm:$0xff]
        %v4269 = vld [vmem:[%s195 + $0x234] sm:$0xff]
        %v4270 = vld [vmem:[%s195 + $0x23c] sm:$0xff]
        %v4271 = vld [vmem:[%s195 + $0x244] sm:$0xff]
        %v4272 = vld [vmem:[%s195 + $0x24c] sm:$0xff]
        %v4273 = vld [vmem:[%s195 + $0x254] sm:$0xff]
        %v4274 = vld [vmem:[%s195 + $0x25c] sm:$0xff]
        %v4275 = vld [vmem:[%s195 + $0x264] sm:$0xff]
        %v4276 = vld [vmem:[%s195 + $0x26c] sm:$0xff]
        %v4277 = vld [vmem:[%s195 + $0x274] sm:$0xff]
        %v4278 = vld [vmem:[%s195 + $0x27c] sm:$0xff]
        %v4279 = vld [vmem:[%s195 + $0x284] sm:$0xff]
        %v4280 = vld [vmem:[%s195 + $0x28c] sm:$0xff]
        %v4281 = vld [vmem:[%s195 + $0x294] sm:$0xff]
        %v4282 = vld [vmem:[%s195 + $0x29c] sm:$0xff]
        %v4283 = vld [vmem:[%s195 + $0x2a4] sm:$0xff]
        %v4284 = vld [vmem:[%s195 + $0x2ac] sm:$0xff]
        %v4285 = vld [vmem:[%s195 + $0x2b4] sm:$0xff]
        %v4286 = vld [vmem:[%s195 + $0x2bc] sm:$0xff]
        %v4287 = vld [vmem:[%s195 + $0x2c4] sm:$0xff]
        %v4288 = vld [vmem:[%s195 + $0x2cc] sm:$0xff]
        %v4289 = vld [vmem:[%s195 + $0x2d4] sm:$0xff]
        %v4290 = vld [vmem:[%s195 + $0x2dc] sm:$0xff]
        %v4291 = vld [vmem:[%s195 + $0x2e4] sm:$0xff]
        %v4292 = vld [vmem:[%s195 + $0x2ec] sm:$0xff]
        %v4293 = vld [vmem:[%s195 + $0x2f4] sm:$0xff]
        %v4294 = vld [vmem:[%s195 + $0x2fc] sm:$0xff]
        %v4295 = vld [vmem:[%s195 + $0x304] sm:$0xff]
        %v4296 = vld [vmem:[%s195 + $0x30c] sm:$0xff]
        %v4297 = vld [vmem:[%s195 + $0x314] sm:$0xff]
        %v4298 = vld [vmem:[%s195 + $0x31c] sm:$0xff]
        %v4299 = vld [vmem:[%s195 + $0x324] sm:$0xff]
        %v4300 = vld [vmem:[%s195 + $0x32c] sm:$0xff]
        %v4301 = vld [vmem:[%s195 + $0x334] sm:$0xff]
        %v4302 = vld [vmem:[%s195 + $0x33c] sm:$0xff]
        %v4303 = vld [vmem:[%s195 + $0x344] sm:$0xff]
        %v4304 = vld [vmem:[%s195 + $0x34c] sm:$0xff]
        %v4305 = vld [vmem:[%s195 + $0x354] sm:$0xff]
        %v4306 = vld [vmem:[%s195 + $0x35c] sm:$0xff]
        %v4307 = vld [vmem:[%s195 + $0x364] sm:$0xff]
        %v4308 = vld [vmem:[%s195 + $0x36c] sm:$0xff]
        %v4309 = vld [vmem:[%s195 + $0x374] sm:$0xff]
        %v4310 = vld [vmem:[%s195 + $0x37c] sm:$0xff]
        %v4311 = vld [vmem:[%s195 + $0x384] sm:$0xff]
        %v4312 = vld [vmem:[%s195 + $0x38c] sm:$0xff]
        %v4313 = vld [vmem:[%s195 + $0x394] sm:$0xff]
        %v4314 = vld [vmem:[%s195 + $0x39c] sm:$0xff]
        %v4315 = vld [vmem:[%s195 + $0x3a4] sm:$0xff]
        %v4316 = vld [vmem:[%s195 + $0x3ac] sm:$0xff]
        %v4317 = vld [vmem:[%s195 + $0x3b4] sm:$0xff]
        %v4318 = vld [vmem:[%s195 + $0x3bc] sm:$0xff]
        %v4319 = vld [vmem:[%s195 + $0x3c4] sm:$0xff]
        %v4320 = vld [vmem:[%s195 + $0x3cc] sm:$0xff]
        %v4321 = vld [vmem:[%s195 + $0x3d4] sm:$0xff]
        %v4322 = vld [vmem:[%s195 + $0x3dc] sm:$0xff]
        %v4323 = vld [vmem:[%s195 + $0x3e4] sm:$0xff]
        %v4324 = vld [vmem:[%s195 + $0x3ec] sm:$0xff]
        %v4325 = vld [vmem:[%s195 + $0x3f4] sm:$0xff]
        %v4326 = vld [vmem:[%s195 + $0x3fc] sm:$0xff]
        %v4327 = vld [vmem:[%s195 + $0x404] sm:$0xff]
        %v4328 = vld [vmem:[%s195 + $0x40c] sm:$0xff]
        %v4329 = vld [vmem:[%s195 + $0x414] sm:$0xff]
        %v4330 = vld [vmem:[%s195 + $0x41c] sm:$0xff]
        %v4331 = vld [vmem:[%s195 + $0x424] sm:$0xff]
        %v4332 = vld [vmem:[%s195 + $0x42c] sm:$0xff]
        %v4333 = vld [vmem:[%s195 + $0x434] sm:$0xff]
        %v4334 = vld [vmem:[%s195 + $0x43c] sm:$0xff]
        %v4335 = vld [vmem:[%s195 + $0x444] sm:$0xff]
        %v4336 = vld [vmem:[%s195 + $0x44c] sm:$0xff]
        %v4337 = vld [vmem:[%s195 + $0x454] sm:$0xff]
        %v4338 = vld [vmem:[%s195 + $0x45c] sm:$0xff]
        %v4339 = vld [vmem:[%s195 + $0x464] sm:$0xff]
        %v4340 = vld [vmem:[%s195 + $0x46c] sm:$0xff]
        %v4341 = vld [vmem:[%s195 + $0x474] sm:$0xff]
        %v4342 = vld [vmem:[%s195 + $0x47c] sm:$0xff]
        %s4343 = scalar_lea.vmem %s1, 768
        %v4344 = vld [vmem:[%s4343] sm:$0xff]
        %v4345 = vld [vmem:[%s4343 + $0x8] sm:$0xff]
        %v4346 = vld [vmem:[%s4343 + $0x10] sm:$0xff]
        %v4347 = vld [vmem:[%s4343 + $0x18] sm:$0xff]
        %v4348 = vld [vmem:[%s4343 + $0x20] sm:$0xff]
        %v4349 = vld [vmem:[%s4343 + $0x28] sm:$0xff]
        %v4350 = vld [vmem:[%s4343 + $0x30] sm:$0xff]
        %v4351 = vld [vmem:[%s4343 + $0x38] sm:$0xff]
        %v4352 = vld [vmem:[%s4343 + $0x40] sm:$0xff]
        %v4353 = vld [vmem:[%s4343 + $0x48] sm:$0xff]
        %v4354 = vld [vmem:[%s4343 + $0x50] sm:$0xff]
        %v4355 = vld [vmem:[%s4343 + $0x58] sm:$0xff]
        %v4356 = vld [vmem:[%s4343 + $0x60] sm:$0xff]
        %v4357 = vld [vmem:[%s4343 + $0x68] sm:$0xff]
        %v4358 = vld [vmem:[%s4343 + $0x70] sm:$0xff]
        %v4359 = vld [vmem:[%s4343 + $0x78] sm:$0xff]
        %4360 = vmatpush.msra.mxu0 %v4359
        %4361 = vmatpush.msra.mxu0 %v4358
        %4362 = vmatpush.msra.mxu0 %v4357
        %4363 = vmatpush.msra.mxu0 %v4356
        %4364 = vmatpush.msra.mxu0 %v4355
        %4365 = vmatpush.msra.mxu0 %v4354
        %4366 = vmatpush.msra.mxu0 %v4353
        %4367 = vmatpush.msra.mxu0 %v4352
        %4368 = vmatpush.msra.mxu0 %v4351
        %4369 = vmatpush.msra.mxu0 %v4350
        %4370 = vmatpush.msra.mxu0 %v4349
        %4371 = vmatpush.msra.mxu0 %v4348
        %4372 = vmatpush.msra.mxu0 %v4347
        %4373 = vmatpush.msra.mxu0 %v4346
        %4374 = vmatpush.msra.mxu0 %v4345
        %4375 = vmatpush.msra.mxu0 %v4344
        %4376 = vmatmul.f32.gmra.mxu0 %v4207
        %v4377 = vpop.f32.mrf.mxu0
        %v4378 = vadd.f32 0.0, %v4377
        %4379 = vmatmul.f32.gmra.mxu0 %v4208
        %v4380 = vpop.f32.mrf.mxu0
        %v4381 = vadd.f32 0.0, %v4380
        %4382 = vmatmul.f32.gmra.mxu0 %v4209
        %v4383 = vpop.f32.mrf.mxu0
        %v4384 = vadd.f32 0.0, %v4383
        %4385 = vmatmul.f32.gmra.mxu0 %v4210
        %v4386 = vpop.f32.mrf.mxu0
        %v4387 = vadd.f32 0.0, %v4386
        %4388 = vmatmul.f32.gmra.mxu0 %v4211
        %v4389 = vpop.f32.mrf.mxu0
        %v4390 = vadd.f32 0.0, %v4389
        %4391 = vmatmul.f32.gmra.mxu0 %v4212
        %v4392 = vpop.f32.mrf.mxu0
        %v4393 = vadd.f32 0.0, %v4392
        %4394 = vmatmul.f32.gmra.mxu0 %v4213
        %v4395 = vpop.f32.mrf.mxu0
        %v4396 = vadd.f32 0.0, %v4395
        %4397 = vmatmul.f32.gmra.mxu0 %v4214
        %v4398 = vpop.f32.mrf.mxu0
        %v4399 = vadd.f32 0.0, %v4398
        %4400 = vmatmul.f32.gmra.mxu0 %v4215
        %v4401 = vpop.f32.mrf.mxu0
        %v4402 = vadd.f32 0.0, %v4401
        %4403 = vmatmul.f32.gmra.mxu0 %v4216
        %v4404 = vpop.f32.mrf.mxu0
        %v4405 = vadd.f32 0.0, %v4404
        %4406 = vmatmul.f32.gmra.mxu0 %v4217
        %v4407 = vpop.f32.mrf.mxu0
        %v4408 = vadd.f32 0.0, %v4407
        %4409 = vmatmul.f32.gmra.mxu0 %v4218
        %v4410 = vpop.f32.mrf.mxu0
        %v4411 = vadd.f32 0.0, %v4410
        %4412 = vmatmul.f32.gmra.mxu0 %v4219
        %v4413 = vpop.f32.mrf.mxu0
        %v4414 = vadd.f32 0.0, %v4413
        %4415 = vmatmul.f32.gmra.mxu0 %v4220
        %v4416 = vpop.f32.mrf.mxu0
        %v4417 = vadd.f32 0.0, %v4416
        %4418 = vmatmul.f32.gmra.mxu0 %v4221
        %v4419 = vpop.f32.mrf.mxu0
        %v4420 = vadd.f32 0.0, %v4419
        %4421 = vmatmul.f32.gmra.mxu0 %v4222
        %v4422 = vpop.f32.mrf.mxu0
        %v4423 = vadd.f32 0.0, %v4422
        %4424 = vmatmul.f32.gmra.mxu0 %v4223
        %v4425 = vpop.f32.mrf.mxu0
        %v4426 = vadd.f32 0.0, %v4425
        %4427 = vmatmul.f32.gmra.mxu0 %v4224
        %v4428 = vpop.f32.mrf.mxu0
        %v4429 = vadd.f32 0.0, %v4428
        %4430 = vmatmul.f32.gmra.mxu0 %v4225
        %v4431 = vpop.f32.mrf.mxu0
        %v4432 = vadd.f32 0.0, %v4431
        %4433 = vmatmul.f32.gmra.mxu0 %v4226
        %v4434 = vpop.f32.mrf.mxu0
        %v4435 = vadd.f32 0.0, %v4434
        %4436 = vmatmul.f32.gmra.mxu0 %v4227
        %v4437 = vpop.f32.mrf.mxu0
        %v4438 = vadd.f32 0.0, %v4437
        %4439 = vmatmul.f32.gmra.mxu0 %v4228
        %v4440 = vpop.f32.mrf.mxu0
        %v4441 = vadd.f32 0.0, %v4440
        %4442 = vmatmul.f32.gmra.mxu0 %v4229
        %v4443 = vpop.f32.mrf.mxu0
        %v4444 = vadd.f32 0.0, %v4443
        %4445 = vmatmul.f32.gmra.mxu0 %v4230
        %v4446 = vpop.f32.mrf.mxu0
        %v4447 = vadd.f32 0.0, %v4446
        %4448 = vmatmul.f32.gmra.mxu0 %v4231
        %v4449 = vpop.f32.mrf.mxu0
        %v4450 = vadd.f32 0.0, %v4449
        %4451 = vmatmul.f32.gmra.mxu0 %v4232
        %v4452 = vpop.f32.mrf.mxu0
        %v4453 = vadd.f32 0.0, %v4452
        %4454 = vmatmul.f32.gmra.mxu0 %v4233
        %v4455 = vpop.f32.mrf.mxu0
        %v4456 = vadd.f32 0.0, %v4455
        %4457 = vmatmul.f32.gmra.mxu0 %v4234
        %v4458 = vpop.f32.mrf.mxu0
        %v4459 = vadd.f32 0.0, %v4458
        %4460 = vmatmul.f32.gmra.mxu0 %v4235
        %v4461 = vpop.f32.mrf.mxu0
        %v4462 = vadd.f32 0.0, %v4461
        %4463 = vmatmul.f32.gmra.mxu0 %v4236
        %v4464 = vpop.f32.mrf.mxu0
        %v4465 = vadd.f32 0.0, %v4464
        %4466 = vmatmul.f32.gmra.mxu0 %v4237
        %v4467 = vpop.f32.mrf.mxu0
        %v4468 = vadd.f32 0.0, %v4467
        %4469 = vmatmul.f32.gmra.mxu0 %v4238
        %v4470 = vpop.f32.mrf.mxu0
        %v4471 = vadd.f32 0.0, %v4470
        %4472 = vmatmul.f32.gmra.mxu0 %v4239
        %v4473 = vpop.f32.mrf.mxu0
        %v4474 = vadd.f32 0.0, %v4473
        %4475 = vmatmul.f32.gmra.mxu0 %v4240
        %v4476 = vpop.f32.mrf.mxu0
        %v4477 = vadd.f32 0.0, %v4476
        %4478 = vmatmul.f32.gmra.mxu0 %v4241
        %v4479 = vpop.f32.mrf.mxu0
        %v4480 = vadd.f32 0.0, %v4479
        %4481 = vmatmul.f32.gmra.mxu0 %v4242
        %v4482 = vpop.f32.mrf.mxu0
        %v4483 = vadd.f32 0.0, %v4482
        %4484 = vmatmul.f32.gmra.mxu0 %v4243
        %v4485 = vpop.f32.mrf.mxu0
        %v4486 = vadd.f32 0.0, %v4485
        %4487 = vmatmul.f32.gmra.mxu0 %v4244
        %v4488 = vpop.f32.mrf.mxu0
        %v4489 = vadd.f32 0.0, %v4488
        %4490 = vmatmul.f32.gmra.mxu0 %v4245
        %v4491 = vpop.f32.mrf.mxu0
        %v4492 = vadd.f32 0.0, %v4491
        %4493 = vmatmul.f32.gmra.mxu0 %v4246
        %v4494 = vpop.f32.mrf.mxu0
        %v4495 = vadd.f32 0.0, %v4494
        %4496 = vmatmul.f32.gmra.mxu0 %v4247
        %v4497 = vpop.f32.mrf.mxu0
        %v4498 = vadd.f32 0.0, %v4497
        %4499 = vmatmul.f32.gmra.mxu0 %v4248
        %v4500 = vpop.f32.mrf.mxu0
        %v4501 = vadd.f32 0.0, %v4500
        %4502 = vmatmul.f32.gmra.mxu0 %v4249
        %v4503 = vpop.f32.mrf.mxu0
        %v4504 = vadd.f32 0.0, %v4503
        %4505 = vmatmul.f32.gmra.mxu0 %v4250
        %v4506 = vpop.f32.mrf.mxu0
        %v4507 = vadd.f32 0.0, %v4506
        %4508 = vmatmul.f32.gmra.mxu0 %v4251
        %v4509 = vpop.f32.mrf.mxu0
        %v4510 = vadd.f32 0.0, %v4509
        %4511 = vmatmul.f32.gmra.mxu0 %v4252
        %v4512 = vpop.f32.mrf.mxu0
        %v4513 = vadd.f32 0.0, %v4512
        %4514 = vmatmul.f32.gmra.mxu0 %v4253
        %v4515 = vpop.f32.mrf.mxu0
        %v4516 = vadd.f32 0.0, %v4515
        %4517 = vmatmul.f32.gmra.mxu0 %v4254
        %v4518 = vpop.f32.mrf.mxu0
        %v4519 = vadd.f32 0.0, %v4518
        %4520 = vmatmul.f32.gmra.mxu0 %v4255
        %v4521 = vpop.f32.mrf.mxu0
        %v4522 = vadd.f32 0.0, %v4521
        %4523 = vmatmul.f32.gmra.mxu0 %v4256
        %v4524 = vpop.f32.mrf.mxu0
        %v4525 = vadd.f32 0.0, %v4524
        %4526 = vmatmul.f32.gmra.mxu0 %v4257
        %v4527 = vpop.f32.mrf.mxu0
        %v4528 = vadd.f32 0.0, %v4527
        %4529 = vmatmul.f32.gmra.mxu0 %v4258
        %v4530 = vpop.f32.mrf.mxu0
        %v4531 = vadd.f32 0.0, %v4530
        %4532 = vmatmul.f32.gmra.mxu0 %v4259
        %v4533 = vpop.f32.mrf.mxu0
        %v4534 = vadd.f32 0.0, %v4533
        %4535 = vmatmul.f32.gmra.mxu0 %v4260
        %v4536 = vpop.f32.mrf.mxu0
        %v4537 = vadd.f32 0.0, %v4536
        %4538 = vmatmul.f32.gmra.mxu0 %v4261
        %v4539 = vpop.f32.mrf.mxu0
        %v4540 = vadd.f32 0.0, %v4539
        %4541 = vmatmul.f32.gmra.mxu0 %v4262
        %v4542 = vpop.f32.mrf.mxu0
        %v4543 = vadd.f32 0.0, %v4542
        %4544 = vmatmul.f32.gmra.mxu0 %v4263
        %v4545 = vpop.f32.mrf.mxu0
        %v4546 = vadd.f32 0.0, %v4545
        %4547 = vmatmul.f32.gmra.mxu0 %v4264
        %v4548 = vpop.f32.mrf.mxu0
        %v4549 = vadd.f32 0.0, %v4548
        %4550 = vmatmul.f32.gmra.mxu0 %v4265
        %v4551 = vpop.f32.mrf.mxu0
        %v4552 = vadd.f32 0.0, %v4551
        %4553 = vmatmul.f32.gmra.mxu0 %v4266
        %v4554 = vpop.f32.mrf.mxu0
        %v4555 = vadd.f32 0.0, %v4554
        %4556 = vmatmul.f32.gmra.mxu0 %v4267
        %v4557 = vpop.f32.mrf.mxu0
        %v4558 = vadd.f32 0.0, %v4557
        %4559 = vmatmul.f32.gmra.mxu0 %v4268
        %v4560 = vpop.f32.mrf.mxu0
        %v4561 = vadd.f32 0.0, %v4560
        %4562 = vmatmul.f32.gmra.mxu0 %v4269
        %v4563 = vpop.f32.mrf.mxu0
        %v4564 = vadd.f32 0.0, %v4563
        %4565 = vmatmul.f32.gmra.mxu0 %v4270
        %v4566 = vpop.f32.mrf.mxu0
        %v4567 = vadd.f32 0.0, %v4566
        %4568 = vmatmul.f32.gmra.mxu0 %v4271
        %v4569 = vpop.f32.mrf.mxu0
        %v4570 = vadd.f32 0.0, %v4569
        %4571 = vmatmul.f32.gmra.mxu0 %v4272
        %v4572 = vpop.f32.mrf.mxu0
        %v4573 = vadd.f32 0.0, %v4572
        %4574 = vmatmul.f32.gmra.mxu0 %v4273
        %v4575 = vpop.f32.mrf.mxu0
        %v4576 = vadd.f32 0.0, %v4575
        %4577 = vmatmul.f32.gmra.mxu0 %v4274
        %v4578 = vpop.f32.mrf.mxu0
        %v4579 = vadd.f32 0.0, %v4578
        %4580 = vmatmul.f32.gmra.mxu0 %v4275
        %v4581 = vpop.f32.mrf.mxu0
        %v4582 = vadd.f32 0.0, %v4581
        %4583 = vmatmul.f32.gmra.mxu0 %v4276
        %v4584 = vpop.f32.mrf.mxu0
        %v4585 = vadd.f32 0.0, %v4584
        %4586 = vmatmul.f32.gmra.mxu0 %v4277
        %v4587 = vpop.f32.mrf.mxu0
        %v4588 = vadd.f32 0.0, %v4587
        %4589 = vmatmul.f32.gmra.mxu0 %v4278
        %v4590 = vpop.f32.mrf.mxu0
        %v4591 = vadd.f32 0.0, %v4590
        %4592 = vmatmul.f32.gmra.mxu0 %v4279
        %v4593 = vpop.f32.mrf.mxu0
        %v4594 = vadd.f32 0.0, %v4593
        %4595 = vmatmul.f32.gmra.mxu0 %v4280
        %v4596 = vpop.f32.mrf.mxu0
        %v4597 = vadd.f32 0.0, %v4596
        %4598 = vmatmul.f32.gmra.mxu0 %v4281
        %v4599 = vpop.f32.mrf.mxu0
        %v4600 = vadd.f32 0.0, %v4599
        %4601 = vmatmul.f32.gmra.mxu0 %v4282
        %v4602 = vpop.f32.mrf.mxu0
        %v4603 = vadd.f32 0.0, %v4602
        %4604 = vmatmul.f32.gmra.mxu0 %v4283
        %v4605 = vpop.f32.mrf.mxu0
        %v4606 = vadd.f32 0.0, %v4605
        %4607 = vmatmul.f32.gmra.mxu0 %v4284
        %v4608 = vpop.f32.mrf.mxu0
        %v4609 = vadd.f32 0.0, %v4608
        %4610 = vmatmul.f32.gmra.mxu0 %v4285
        %v4611 = vpop.f32.mrf.mxu0
        %v4612 = vadd.f32 0.0, %v4611
        %4613 = vmatmul.f32.gmra.mxu0 %v4286
        %v4614 = vpop.f32.mrf.mxu0
        %v4615 = vadd.f32 0.0, %v4614
        %4616 = vmatmul.f32.gmra.mxu0 %v4287
        %v4617 = vpop.f32.mrf.mxu0
        %v4618 = vadd.f32 0.0, %v4617
        %4619 = vmatmul.f32.gmra.mxu0 %v4288
        %v4620 = vpop.f32.mrf.mxu0
        %v4621 = vadd.f32 0.0, %v4620
        %4622 = vmatmul.f32.gmra.mxu0 %v4289
        %v4623 = vpop.f32.mrf.mxu0
        %v4624 = vadd.f32 0.0, %v4623
        %4625 = vmatmul.f32.gmra.mxu0 %v4290
        %v4626 = vpop.f32.mrf.mxu0
        %v4627 = vadd.f32 0.0, %v4626
        %4628 = vmatmul.f32.gmra.mxu0 %v4291
        %v4629 = vpop.f32.mrf.mxu0
        %v4630 = vadd.f32 0.0, %v4629
        %4631 = vmatmul.f32.gmra.mxu0 %v4292
        %v4632 = vpop.f32.mrf.mxu0
        %v4633 = vadd.f32 0.0, %v4632
        %4634 = vmatmul.f32.gmra.mxu0 %v4293
        %v4635 = vpop.f32.mrf.mxu0
        %v4636 = vadd.f32 0.0, %v4635
        %4637 = vmatmul.f32.gmra.mxu0 %v4294
        %v4638 = vpop.f32.mrf.mxu0
        %v4639 = vadd.f32 0.0, %v4638
        %4640 = vmatmul.f32.gmra.mxu0 %v4295
        %v4641 = vpop.f32.mrf.mxu0
        %v4642 = vadd.f32 0.0, %v4641
        %4643 = vmatmul.f32.gmra.mxu0 %v4296
        %v4644 = vpop.f32.mrf.mxu0
        %v4645 = vadd.f32 0.0, %v4644
        %4646 = vmatmul.f32.gmra.mxu0 %v4297
        %v4647 = vpop.f32.mrf.mxu0
        %v4648 = vadd.f32 0.0, %v4647
        %4649 = vmatmul.f32.gmra.mxu0 %v4298
        %v4650 = vpop.f32.mrf.mxu0
        %v4651 = vadd.f32 0.0, %v4650
        %4652 = vmatmul.f32.gmra.mxu0 %v4299
        %v4653 = vpop.f32.mrf.mxu0
        %v4654 = vadd.f32 0.0, %v4653
        %4655 = vmatmul.f32.gmra.mxu0 %v4300
        %v4656 = vpop.f32.mrf.mxu0
        %v4657 = vadd.f32 0.0, %v4656
        %4658 = vmatmul.f32.gmra.mxu0 %v4301
        %v4659 = vpop.f32.mrf.mxu0
        %v4660 = vadd.f32 0.0, %v4659
        %4661 = vmatmul.f32.gmra.mxu0 %v4302
        %v4662 = vpop.f32.mrf.mxu0
        %v4663 = vadd.f32 0.0, %v4662
        %4664 = vmatmul.f32.gmra.mxu0 %v4303
        %v4665 = vpop.f32.mrf.mxu0
        %v4666 = vadd.f32 0.0, %v4665
        %4667 = vmatmul.f32.gmra.mxu0 %v4304
        %v4668 = vpop.f32.mrf.mxu0
        %v4669 = vadd.f32 0.0, %v4668
        %4670 = vmatmul.f32.gmra.mxu0 %v4305
        %v4671 = vpop.f32.mrf.mxu0
        %v4672 = vadd.f32 0.0, %v4671
        %4673 = vmatmul.f32.gmra.mxu0 %v4306
        %v4674 = vpop.f32.mrf.mxu0
        %v4675 = vadd.f32 0.0, %v4674
        %4676 = vmatmul.f32.gmra.mxu0 %v4307
        %v4677 = vpop.f32.mrf.mxu0
        %v4678 = vadd.f32 0.0, %v4677
        %4679 = vmatmul.f32.gmra.mxu0 %v4308
        %v4680 = vpop.f32.mrf.mxu0
        %v4681 = vadd.f32 0.0, %v4680
        %4682 = vmatmul.f32.gmra.mxu0 %v4309
        %v4683 = vpop.f32.mrf.mxu0
        %v4684 = vadd.f32 0.0, %v4683
        %4685 = vmatmul.f32.gmra.mxu0 %v4310
        %v4686 = vpop.f32.mrf.mxu0
        %v4687 = vadd.f32 0.0, %v4686
        %4688 = vmatmul.f32.gmra.mxu0 %v4311
        %v4689 = vpop.f32.mrf.mxu0
        %v4690 = vadd.f32 0.0, %v4689
        %4691 = vmatmul.f32.gmra.mxu0 %v4312
        %v4692 = vpop.f32.mrf.mxu0
        %v4693 = vadd.f32 0.0, %v4692
        %4694 = vmatmul.f32.gmra.mxu0 %v4313
        %v4695 = vpop.f32.mrf.mxu0
        %v4696 = vadd.f32 0.0, %v4695
        %4697 = vmatmul.f32.gmra.mxu0 %v4314
        %v4698 = vpop.f32.mrf.mxu0
        %v4699 = vadd.f32 0.0, %v4698
        %4700 = vmatmul.f32.gmra.mxu0 %v4315
        %v4701 = vpop.f32.mrf.mxu0
        %v4702 = vadd.f32 0.0, %v4701
        %4703 = vmatmul.f32.gmra.mxu0 %v4316
        %v4704 = vpop.f32.mrf.mxu0
        %v4705 = vadd.f32 0.0, %v4704
        %4706 = vmatmul.f32.gmra.mxu0 %v4317
        %v4707 = vpop.f32.mrf.mxu0
        %v4708 = vadd.f32 0.0, %v4707
        %4709 = vmatmul.f32.gmra.mxu0 %v4318
        %v4710 = vpop.f32.mrf.mxu0
        %v4711 = vadd.f32 0.0, %v4710
        %4712 = vmatmul.f32.gmra.mxu0 %v4319
        %v4713 = vpop.f32.mrf.mxu0
        %v4714 = vadd.f32 0.0, %v4713
        %4715 = vmatmul.f32.gmra.mxu0 %v4320
        %v4716 = vpop.f32.mrf.mxu0
        %v4717 = vadd.f32 0.0, %v4716
        %4718 = vmatmul.f32.gmra.mxu0 %v4321
        %v4719 = vpop.f32.mrf.mxu0
        %v4720 = vadd.f32 0.0, %v4719
        %4721 = vmatmul.f32.gmra.mxu0 %v4322
        %v4722 = vpop.f32.mrf.mxu0
        %v4723 = vadd.f32 0.0, %v4722
        %4724 = vmatmul.f32.gmra.mxu0 %v4323
        %v4725 = vpop.f32.mrf.mxu0
        %v4726 = vadd.f32 0.0, %v4725
        %4727 = vmatmul.f32.gmra.mxu0 %v4324
        %v4728 = vpop.f32.mrf.mxu0
        %v4729 = vadd.f32 0.0, %v4728
        %4730 = vmatmul.f32.gmra.mxu0 %v4325
        %v4731 = vpop.f32.mrf.mxu0
        %v4732 = vadd.f32 0.0, %v4731
        %4733 = vmatmul.f32.gmra.mxu0 %v4326
        %v4734 = vpop.f32.mrf.mxu0
        %v4735 = vadd.f32 0.0, %v4734
        %4736 = vmatmul.f32.gmra.mxu0 %v4327
        %v4737 = vpop.f32.mrf.mxu0
        %v4738 = vadd.f32 0.0, %v4737
        %4739 = vmatmul.f32.gmra.mxu0 %v4328
        %v4740 = vpop.f32.mrf.mxu0
        %v4741 = vadd.f32 0.0, %v4740
        %4742 = vmatmul.f32.gmra.mxu0 %v4329
        %v4743 = vpop.f32.mrf.mxu0
        %v4744 = vadd.f32 0.0, %v4743
        %4745 = vmatmul.f32.gmra.mxu0 %v4330
        %v4746 = vpop.f32.mrf.mxu0
        %v4747 = vadd.f32 0.0, %v4746
        %4748 = vmatmul.f32.gmra.mxu0 %v4331
        %v4749 = vpop.f32.mrf.mxu0
        %v4750 = vadd.f32 0.0, %v4749
        %4751 = vmatmul.f32.gmra.mxu0 %v4332
        %v4752 = vpop.f32.mrf.mxu0
        %v4753 = vadd.f32 0.0, %v4752
        %4754 = vmatmul.f32.gmra.mxu0 %v4333
        %v4755 = vpop.f32.mrf.mxu0
        %v4756 = vadd.f32 0.0, %v4755
        %4757 = vmatmul.f32.gmra.mxu0 %v4334
        %v4758 = vpop.f32.mrf.mxu0
        %v4759 = vadd.f32 0.0, %v4758
        %4760 = vmatmul.f32.gmra.mxu0 %v4335
        %v4761 = vpop.f32.mrf.mxu0
        %v4762 = vadd.f32 0.0, %v4761
        %4763 = vmatmul.f32.gmra.mxu0 %v4336
        %v4764 = vpop.f32.mrf.mxu0
        %v4765 = vadd.f32 0.0, %v4764
        %4766 = vmatmul.f32.gmra.mxu0 %v4337
        %v4767 = vpop.f32.mrf.mxu0
        %v4768 = vadd.f32 0.0, %v4767
        %4769 = vmatmul.f32.gmra.mxu0 %v4338
        %v4770 = vpop.f32.mrf.mxu0
        %v4771 = vadd.f32 0.0, %v4770
        %4772 = vmatmul.f32.gmra.mxu0 %v4339
        %v4773 = vpop.f32.mrf.mxu0
        %v4774 = vadd.f32 0.0, %v4773
        %4775 = vmatmul.f32.gmra.mxu0 %v4340
        %v4776 = vpop.f32.mrf.mxu0
        %v4777 = vadd.f32 0.0, %v4776
        %4778 = vmatmul.f32.gmra.mxu0 %v4341
        %v4779 = vpop.f32.mrf.mxu0
        %v4780 = vadd.f32 0.0, %v4779
        %4781 = vmatmul.f32.gmra.mxu0 %v4342
        %v4782 = vpop.f32.mrf.mxu0
        %v4783 = vadd.f32 0.0, %v4782
        %4784 = vdwg.mxu0
        %v4785 = vadd.f32 %v4071, %v4378
        %v4786 = vadd.f32 %v4072, %v4381
        %v4787 = vadd.f32 %v4073, %v4384
        %v4788 = vadd.f32 %v4074, %v4387
        %v4789 = vadd.f32 %v4075, %v4390
        %v4790 = vadd.f32 %v4076, %v4393
        %v4791 = vadd.f32 %v4077, %v4396
        %v4792 = vadd.f32 %v4078, %v4399
        %v4793 = vadd.f32 %v4079, %v4402
        %v4794 = vadd.f32 %v4080, %v4405
        %v4795 = vadd.f32 %v4081, %v4408
        %v4796 = vadd.f32 %v4082, %v4411
        %v4797 = vadd.f32 %v4083, %v4414
        %v4798 = vadd.f32 %v4084, %v4417
        %v4799 = vadd.f32 %v4085, %v4420
        %v4800 = vadd.f32 %v4086, %v4423
        %v4801 = vadd.f32 %v4087, %v4426
        %v4802 = vadd.f32 %v4088, %v4429
        %v4803 = vadd.f32 %v4089, %v4432
        %v4804 = vadd.f32 %v4090, %v4435
        %v4805 = vadd.f32 %v4091, %v4438
        %v4806 = vadd.f32 %v4092, %v4441
        %v4807 = vadd.f32 %v4093, %v4444
        %v4808 = vadd.f32 %v4094, %v4447
        %v4809 = vadd.f32 %v4095, %v4450
        %v4810 = vadd.f32 %v4096, %v4453
        %v4811 = vadd.f32 %v4097, %v4456
        %v4812 = vadd.f32 %v4098, %v4459
        %v4813 = vadd.f32 %v4099, %v4462
        %v4814 = vadd.f32 %v4100, %v4465
        %v4815 = vadd.f32 %v4101, %v4468
        %v4816 = vadd.f32 %v4102, %v4471
        %v4817 = vadd.f32 %v4103, %v4474
        %v4818 = vadd.f32 %v4104, %v4477
        %v4819 = vadd.f32 %v4105, %v4480
        %v4820 = vadd.f32 %v4106, %v4483
        %v4821 = vadd.f32 %v4107, %v4486
        %v4822 = vadd.f32 %v4108, %v4489
        %v4823 = vadd.f32 %v4109, %v4492
        %v4824 = vadd.f32 %v4110, %v4495
        %v4825 = vadd.f32 %v4111, %v4498
        %v4826 = vadd.f32 %v4112, %v4501
        %v4827 = vadd.f32 %v4113, %v4504
        %v4828 = vadd.f32 %v4114, %v4507
        %v4829 = vadd.f32 %v4115, %v4510
        %v4830 = vadd.f32 %v4116, %v4513
        %v4831 = vadd.f32 %v4117, %v4516
        %v4832 = vadd.f32 %v4118, %v4519
        %v4833 = vadd.f32 %v4119, %v4522
        %v4834 = vadd.f32 %v4120, %v4525
        %v4835 = vadd.f32 %v4121, %v4528
        %v4836 = vadd.f32 %v4122, %v4531
        %v4837 = vadd.f32 %v4123, %v4534
        %v4838 = vadd.f32 %v4124, %v4537
        %v4839 = vadd.f32 %v4125, %v4540
        %v4840 = vadd.f32 %v4126, %v4543
        %v4841 = vadd.f32 %v4127, %v4546
        %v4842 = vadd.f32 %v4128, %v4549
        %v4843 = vadd.f32 %v4129, %v4552
        %v4844 = vadd.f32 %v4130, %v4555
        %v4845 = vadd.f32 %v4131, %v4558
        %v4846 = vadd.f32 %v4132, %v4561
        %v4847 = vadd.f32 %v4133, %v4564
        %v4848 = vadd.f32 %v4134, %v4567
        %v4849 = vadd.f32 %v4135, %v4570
        %v4850 = vadd.f32 %v4136, %v4573
        %v4851 = vadd.f32 %v4137, %v4576
        %v4852 = vadd.f32 %v4138, %v4579
        %v4853 = vadd.f32 %v4139, %v4582
        %v4854 = vadd.f32 %v4140, %v4585
        %v4855 = vadd.f32 %v4141, %v4588
        %v4856 = vadd.f32 %v4142, %v4591
        %v4857 = vadd.f32 %v4143, %v4594
        %v4858 = vadd.f32 %v4144, %v4597
        %v4859 = vadd.f32 %v4145, %v4600
        %v4860 = vadd.f32 %v4146, %v4603
        %v4861 = vadd.f32 %v4147, %v4606
        %v4862 = vadd.f32 %v4148, %v4609
        %v4863 = vadd.f32 %v4149, %v4612
        %v4864 = vadd.f32 %v4150, %v4615
        %v4865 = vadd.f32 %v4151, %v4618
        %v4866 = vadd.f32 %v4152, %v4621
        %v4867 = vadd.f32 %v4153, %v4624
        %v4868 = vadd.f32 %v4154, %v4627
        %v4869 = vadd.f32 %v4155, %v4630
        %v4870 = vadd.f32 %v4156, %v4633
        %v4871 = vadd.f32 %v4157, %v4636
        %v4872 = vadd.f32 %v4158, %v4639
        %v4873 = vadd.f32 %v4159, %v4642
        %v4874 = vadd.f32 %v4160, %v4645
        %v4875 = vadd.f32 %v4161, %v4648
        %v4876 = vadd.f32 %v4162, %v4651
        %v4877 = vadd.f32 %v4163, %v4654
        %v4878 = vadd.f32 %v4164, %v4657
        %v4879 = vadd.f32 %v4165, %v4660
        %v4880 = vadd.f32 %v4166, %v4663
        %v4881 = vadd.f32 %v4167, %v4666
        %v4882 = vadd.f32 %v4168, %v4669
        %v4883 = vadd.f32 %v4169, %v4672
        %v4884 = vadd.f32 %v4170, %v4675
        %v4885 = vadd.f32 %v4171, %v4678
        %v4886 = vadd.f32 %v4172, %v4681
        %v4887 = vadd.f32 %v4173, %v4684
        %v4888 = vadd.f32 %v4174, %v4687
        %v4889 = vadd.f32 %v4175, %v4690
        %v4890 = vadd.f32 %v4176, %v4693
        %v4891 = vadd.f32 %v4177, %v4696
        %v4892 = vadd.f32 %v4178, %v4699
        %v4893 = vadd.f32 %v4179, %v4702
        %v4894 = vadd.f32 %v4180, %v4705
        %v4895 = vadd.f32 %v4181, %v4708
        %v4896 = vadd.f32 %v4182, %v4711
        %v4897 = vadd.f32 %v4183, %v4714
        %v4898 = vadd.f32 %v4184, %v4717
        %v4899 = vadd.f32 %v4185, %v4720
        %v4900 = vadd.f32 %v4186, %v4723
        %v4901 = vadd.f32 %v4187, %v4726
        %v4902 = vadd.f32 %v4188, %v4729
        %v4903 = vadd.f32 %v4189, %v4732
        %v4904 = vadd.f32 %v4190, %v4735
        %v4905 = vadd.f32 %v4191, %v4738
        %v4906 = vadd.f32 %v4192, %v4741
        %v4907 = vadd.f32 %v4193, %v4744
        %v4908 = vadd.f32 %v4194, %v4747
        %v4909 = vadd.f32 %v4195, %v4750
        %v4910 = vadd.f32 %v4196, %v4753
        %v4911 = vadd.f32 %v4197, %v4756
        %v4912 = vadd.f32 %v4198, %v4759
        %v4913 = vadd.f32 %v4199, %v4762
        %v4914 = vadd.f32 %v4200, %v4765
        %v4915 = vadd.f32 %v4201, %v4768
        %v4916 = vadd.f32 %v4202, %v4771
        %v4917 = vadd.f32 %v4203, %v4774
        %v4918 = vadd.f32 %v4204, %v4777
        %v4919 = vadd.f32 %v4205, %v4780
        %v4920 = vadd.f32 %v4206, %v4783
        %v4921 = vld [vmem:[%s195 + $0x45] sm:$0xff]
        %v4922 = vld [vmem:[%s195 + $0x4d] sm:$0xff]
        %v4923 = vld [vmem:[%s195 + $0x55] sm:$0xff]
        %v4924 = vld [vmem:[%s195 + $0x5d] sm:$0xff]
        %v4925 = vld [vmem:[%s195 + $0x65] sm:$0xff]
        %v4926 = vld [vmem:[%s195 + $0x6d] sm:$0xff]
        %v4927 = vld [vmem:[%s195 + $0x75] sm:$0xff]
        %v4928 = vld [vmem:[%s195 + $0x7d] sm:$0xff]
        %v4929 = vld [vmem:[%s195 + $0x85] sm:$0xff]
        %v4930 = vld [vmem:[%s195 + $0x8d] sm:$0xff]
        %v4931 = vld [vmem:[%s195 + $0x95] sm:$0xff]
        %v4932 = vld [vmem:[%s195 + $0x9d] sm:$0xff]
        %v4933 = vld [vmem:[%s195 + $0xa5] sm:$0xff]
        %v4934 = vld [vmem:[%s195 + $0xad] sm:$0xff]
        %v4935 = vld [vmem:[%s195 + $0xb5] sm:$0xff]
        %v4936 = vld [vmem:[%s195 + $0xbd] sm:$0xff]
        %v4937 = vld [vmem:[%s195 + $0xc5] sm:$0xff]
        %v4938 = vld [vmem:[%s195 + $0xcd] sm:$0xff]
        %v4939 = vld [vmem:[%s195 + $0xd5] sm:$0xff]
        %v4940 = vld [vmem:[%s195 + $0xdd] sm:$0xff]
        %v4941 = vld [vmem:[%s195 + $0xe5] sm:$0xff]
        %v4942 = vld [vmem:[%s195 + $0xed] sm:$0xff]
        %v4943 = vld [vmem:[%s195 + $0xf5] sm:$0xff]
        %v4944 = vld [vmem:[%s195 + $0xfd] sm:$0xff]
        %v4945 = vld [vmem:[%s195 + $0x105] sm:$0xff]
        %v4946 = vld [vmem:[%s195 + $0x10d] sm:$0xff]
        %v4947 = vld [vmem:[%s195 + $0x115] sm:$0xff]
        %v4948 = vld [vmem:[%s195 + $0x11d] sm:$0xff]
        %v4949 = vld [vmem:[%s195 + $0x125] sm:$0xff]
        %v4950 = vld [vmem:[%s195 + $0x12d] sm:$0xff]
        %v4951 = vld [vmem:[%s195 + $0x135] sm:$0xff]
        %v4952 = vld [vmem:[%s195 + $0x13d] sm:$0xff]
        %v4953 = vld [vmem:[%s195 + $0x145] sm:$0xff]
        %v4954 = vld [vmem:[%s195 + $0x14d] sm:$0xff]
        %v4955 = vld [vmem:[%s195 + $0x155] sm:$0xff]
        %v4956 = vld [vmem:[%s195 + $0x15d] sm:$0xff]
        %v4957 = vld [vmem:[%s195 + $0x165] sm:$0xff]
        %v4958 = vld [vmem:[%s195 + $0x16d] sm:$0xff]
        %v4959 = vld [vmem:[%s195 + $0x175] sm:$0xff]
        %v4960 = vld [vmem:[%s195 + $0x17d] sm:$0xff]
        %v4961 = vld [vmem:[%s195 + $0x185] sm:$0xff]
        %v4962 = vld [vmem:[%s195 + $0x18d] sm:$0xff]
        %v4963 = vld [vmem:[%s195 + $0x195] sm:$0xff]
        %v4964 = vld [vmem:[%s195 + $0x19d] sm:$0xff]
        %v4965 = vld [vmem:[%s195 + $0x1a5] sm:$0xff]
        %v4966 = vld [vmem:[%s195 + $0x1ad] sm:$0xff]
        %v4967 = vld [vmem:[%s195 + $0x1b5] sm:$0xff]
        %v4968 = vld [vmem:[%s195 + $0x1bd] sm:$0xff]
        %v4969 = vld [vmem:[%s195 + $0x1c5] sm:$0xff]
        %v4970 = vld [vmem:[%s195 + $0x1cd] sm:$0xff]
        %v4971 = vld [vmem:[%s195 + $0x1d5] sm:$0xff]
        %v4972 = vld [vmem:[%s195 + $0x1dd] sm:$0xff]
        %v4973 = vld [vmem:[%s195 + $0x1e5] sm:$0xff]
        %v4974 = vld [vmem:[%s195 + $0x1ed] sm:$0xff]
        %v4975 = vld [vmem:[%s195 + $0x1f5] sm:$0xff]
        %v4976 = vld [vmem:[%s195 + $0x1fd] sm:$0xff]
        %v4977 = vld [vmem:[%s195 + $0x205] sm:$0xff]
        %v4978 = vld [vmem:[%s195 + $0x20d] sm:$0xff]
        %v4979 = vld [vmem:[%s195 + $0x215] sm:$0xff]
        %v4980 = vld [vmem:[%s195 + $0x21d] sm:$0xff]
        %v4981 = vld [vmem:[%s195 + $0x225] sm:$0xff]
        %v4982 = vld [vmem:[%s195 + $0x22d] sm:$0xff]
        %v4983 = vld [vmem:[%s195 + $0x235] sm:$0xff]
        %v4984 = vld [vmem:[%s195 + $0x23d] sm:$0xff]
        %v4985 = vld [vmem:[%s195 + $0x245] sm:$0xff]
        %v4986 = vld [vmem:[%s195 + $0x24d] sm:$0xff]
        %v4987 = vld [vmem:[%s195 + $0x255] sm:$0xff]
        %v4988 = vld [vmem:[%s195 + $0x25d] sm:$0xff]
        %v4989 = vld [vmem:[%s195 + $0x265] sm:$0xff]
        %v4990 = vld [vmem:[%s195 + $0x26d] sm:$0xff]
        %v4991 = vld [vmem:[%s195 + $0x275] sm:$0xff]
        %v4992 = vld [vmem:[%s195 + $0x27d] sm:$0xff]
        %v4993 = vld [vmem:[%s195 + $0x285] sm:$0xff]
        %v4994 = vld [vmem:[%s195 + $0x28d] sm:$0xff]
        %v4995 = vld [vmem:[%s195 + $0x295] sm:$0xff]
        %v4996 = vld [vmem:[%s195 + $0x29d] sm:$0xff]
        %v4997 = vld [vmem:[%s195 + $0x2a5] sm:$0xff]
        %v4998 = vld [vmem:[%s195 + $0x2ad] sm:$0xff]
        %v4999 = vld [vmem:[%s195 + $0x2b5] sm:$0xff]
        %v5000 = vld [vmem:[%s195 + $0x2bd] sm:$0xff]
        %v5001 = vld [vmem:[%s195 + $0x2c5] sm:$0xff]
        %v5002 = vld [vmem:[%s195 + $0x2cd] sm:$0xff]
        %v5003 = vld [vmem:[%s195 + $0x2d5] sm:$0xff]
        %v5004 = vld [vmem:[%s195 + $0x2dd] sm:$0xff]
        %v5005 = vld [vmem:[%s195 + $0x2e5] sm:$0xff]
        %v5006 = vld [vmem:[%s195 + $0x2ed] sm:$0xff]
        %v5007 = vld [vmem:[%s195 + $0x2f5] sm:$0xff]
        %v5008 = vld [vmem:[%s195 + $0x2fd] sm:$0xff]
        %v5009 = vld [vmem:[%s195 + $0x305] sm:$0xff]
        %v5010 = vld [vmem:[%s195 + $0x30d] sm:$0xff]
        %v5011 = vld [vmem:[%s195 + $0x315] sm:$0xff]
        %v5012 = vld [vmem:[%s195 + $0x31d] sm:$0xff]
        %v5013 = vld [vmem:[%s195 + $0x325] sm:$0xff]
        %v5014 = vld [vmem:[%s195 + $0x32d] sm:$0xff]
        %v5015 = vld [vmem:[%s195 + $0x335] sm:$0xff]
        %v5016 = vld [vmem:[%s195 + $0x33d] sm:$0xff]
        %v5017 = vld [vmem:[%s195 + $0x345] sm:$0xff]
        %v5018 = vld [vmem:[%s195 + $0x34d] sm:$0xff]
        %v5019 = vld [vmem:[%s195 + $0x355] sm:$0xff]
        %v5020 = vld [vmem:[%s195 + $0x35d] sm:$0xff]
        %v5021 = vld [vmem:[%s195 + $0x365] sm:$0xff]
        %v5022 = vld [vmem:[%s195 + $0x36d] sm:$0xff]
        %v5023 = vld [vmem:[%s195 + $0x375] sm:$0xff]
        %v5024 = vld [vmem:[%s195 + $0x37d] sm:$0xff]
        %v5025 = vld [vmem:[%s195 + $0x385] sm:$0xff]
        %v5026 = vld [vmem:[%s195 + $0x38d] sm:$0xff]
        %v5027 = vld [vmem:[%s195 + $0x395] sm:$0xff]
        %v5028 = vld [vmem:[%s195 + $0x39d] sm:$0xff]
        %v5029 = vld [vmem:[%s195 + $0x3a5] sm:$0xff]
        %v5030 = vld [vmem:[%s195 + $0x3ad] sm:$0xff]
        %v5031 = vld [vmem:[%s195 + $0x3b5] sm:$0xff]
        %v5032 = vld [vmem:[%s195 + $0x3bd] sm:$0xff]
        %v5033 = vld [vmem:[%s195 + $0x3c5] sm:$0xff]
        %v5034 = vld [vmem:[%s195 + $0x3cd] sm:$0xff]
        %v5035 = vld [vmem:[%s195 + $0x3d5] sm:$0xff]
        %v5036 = vld [vmem:[%s195 + $0x3dd] sm:$0xff]
        %v5037 = vld [vmem:[%s195 + $0x3e5] sm:$0xff]
        %v5038 = vld [vmem:[%s195 + $0x3ed] sm:$0xff]
        %v5039 = vld [vmem:[%s195 + $0x3f5] sm:$0xff]
        %v5040 = vld [vmem:[%s195 + $0x3fd] sm:$0xff]
        %v5041 = vld [vmem:[%s195 + $0x405] sm:$0xff]
        %v5042 = vld [vmem:[%s195 + $0x40d] sm:$0xff]
        %v5043 = vld [vmem:[%s195 + $0x415] sm:$0xff]
        %v5044 = vld [vmem:[%s195 + $0x41d] sm:$0xff]
        %v5045 = vld [vmem:[%s195 + $0x425] sm:$0xff]
        %v5046 = vld [vmem:[%s195 + $0x42d] sm:$0xff]
        %v5047 = vld [vmem:[%s195 + $0x435] sm:$0xff]
        %v5048 = vld [vmem:[%s195 + $0x43d] sm:$0xff]
        %v5049 = vld [vmem:[%s195 + $0x445] sm:$0xff]
        %v5050 = vld [vmem:[%s195 + $0x44d] sm:$0xff]
        %v5051 = vld [vmem:[%s195 + $0x455] sm:$0xff]
        %v5052 = vld [vmem:[%s195 + $0x45d] sm:$0xff]
        %v5053 = vld [vmem:[%s195 + $0x465] sm:$0xff]
        %v5054 = vld [vmem:[%s195 + $0x46d] sm:$0xff]
        %v5055 = vld [vmem:[%s195 + $0x475] sm:$0xff]
        %v5056 = vld [vmem:[%s195 + $0x47d] sm:$0xff]
        %s5057 = scalar_lea.vmem %s1, 896
        %v5058 = vld [vmem:[%s5057] sm:$0xff]
        %v5059 = vld [vmem:[%s5057 + $0x8] sm:$0xff]
        %v5060 = vld [vmem:[%s5057 + $0x10] sm:$0xff]
        %v5061 = vld [vmem:[%s5057 + $0x18] sm:$0xff]
        %v5062 = vld [vmem:[%s5057 + $0x20] sm:$0xff]
        %v5063 = vld [vmem:[%s5057 + $0x28] sm:$0xff]
        %v5064 = vld [vmem:[%s5057 + $0x30] sm:$0xff]
        %v5065 = vld [vmem:[%s5057 + $0x38] sm:$0xff]
        %v5066 = vld [vmem:[%s5057 + $0x40] sm:$0xff]
        %v5067 = vld [vmem:[%s5057 + $0x48] sm:$0xff]
        %v5068 = vld [vmem:[%s5057 + $0x50] sm:$0xff]
        %v5069 = vld [vmem:[%s5057 + $0x58] sm:$0xff]
        %v5070 = vld [vmem:[%s5057 + $0x60] sm:$0xff]
        %v5071 = vld [vmem:[%s5057 + $0x68] sm:$0xff]
        %v5072 = vld [vmem:[%s5057 + $0x70] sm:$0xff]
        %v5073 = vld [vmem:[%s5057 + $0x78] sm:$0xff]
        %5074 = vmatpush.msra.mxu0 %v5073
        %5075 = vmatpush.msra.mxu0 %v5072
        %5076 = vmatpush.msra.mxu0 %v5071
        %5077 = vmatpush.msra.mxu0 %v5070
        %5078 = vmatpush.msra.mxu0 %v5069
        %5079 = vmatpush.msra.mxu0 %v5068
        %5080 = vmatpush.msra.mxu0 %v5067
        %5081 = vmatpush.msra.mxu0 %v5066
        %5082 = vmatpush.msra.mxu0 %v5065
        %5083 = vmatpush.msra.mxu0 %v5064
        %5084 = vmatpush.msra.mxu0 %v5063
        %5085 = vmatpush.msra.mxu0 %v5062
        %5086 = vmatpush.msra.mxu0 %v5061
        %5087 = vmatpush.msra.mxu0 %v5060
        %5088 = vmatpush.msra.mxu0 %v5059
        %5089 = vmatpush.msra.mxu0 %v5058
        %5090 = vmatmul.f32.gmra.mxu0 %v4921
        %v5091 = vpop.f32.mrf.mxu0
        %v5092 = vadd.f32 0.0, %v5091
        %5093 = vmatmul.f32.gmra.mxu0 %v4922
        %v5094 = vpop.f32.mrf.mxu0
        %v5095 = vadd.f32 0.0, %v5094
        %5096 = vmatmul.f32.gmra.mxu0 %v4923
        %v5097 = vpop.f32.mrf.mxu0
        %v5098 = vadd.f32 0.0, %v5097
        %5099 = vmatmul.f32.gmra.mxu0 %v4924
        %v5100 = vpop.f32.mrf.mxu0
        %v5101 = vadd.f32 0.0, %v5100
        %5102 = vmatmul.f32.gmra.mxu0 %v4925
        %v5103 = vpop.f32.mrf.mxu0
        %v5104 = vadd.f32 0.0, %v5103
        %5105 = vmatmul.f32.gmra.mxu0 %v4926
        %v5106 = vpop.f32.mrf.mxu0
        %v5107 = vadd.f32 0.0, %v5106
        %5108 = vmatmul.f32.gmra.mxu0 %v4927
        %v5109 = vpop.f32.mrf.mxu0
        %v5110 = vadd.f32 0.0, %v5109
        %5111 = vmatmul.f32.gmra.mxu0 %v4928
        %v5112 = vpop.f32.mrf.mxu0
        %v5113 = vadd.f32 0.0, %v5112
        %5114 = vmatmul.f32.gmra.mxu0 %v4929
        %v5115 = vpop.f32.mrf.mxu0
        %v5116 = vadd.f32 0.0, %v5115
        %5117 = vmatmul.f32.gmra.mxu0 %v4930
        %v5118 = vpop.f32.mrf.mxu0
        %v5119 = vadd.f32 0.0, %v5118
        %5120 = vmatmul.f32.gmra.mxu0 %v4931
        %v5121 = vpop.f32.mrf.mxu0
        %v5122 = vadd.f32 0.0, %v5121
        %5123 = vmatmul.f32.gmra.mxu0 %v4932
        %v5124 = vpop.f32.mrf.mxu0
        %v5125 = vadd.f32 0.0, %v5124
        %5126 = vmatmul.f32.gmra.mxu0 %v4933
        %v5127 = vpop.f32.mrf.mxu0
        %v5128 = vadd.f32 0.0, %v5127
        %5129 = vmatmul.f32.gmra.mxu0 %v4934
        %v5130 = vpop.f32.mrf.mxu0
        %v5131 = vadd.f32 0.0, %v5130
        %5132 = vmatmul.f32.gmra.mxu0 %v4935
        %v5133 = vpop.f32.mrf.mxu0
        %v5134 = vadd.f32 0.0, %v5133
        %5135 = vmatmul.f32.gmra.mxu0 %v4936
        %v5136 = vpop.f32.mrf.mxu0
        %v5137 = vadd.f32 0.0, %v5136
        %5138 = vmatmul.f32.gmra.mxu0 %v4937
        %v5139 = vpop.f32.mrf.mxu0
        %v5140 = vadd.f32 0.0, %v5139
        %5141 = vmatmul.f32.gmra.mxu0 %v4938
        %v5142 = vpop.f32.mrf.mxu0
        %v5143 = vadd.f32 0.0, %v5142
        %5144 = vmatmul.f32.gmra.mxu0 %v4939
        %v5145 = vpop.f32.mrf.mxu0
        %v5146 = vadd.f32 0.0, %v5145
        %5147 = vmatmul.f32.gmra.mxu0 %v4940
        %v5148 = vpop.f32.mrf.mxu0
        %v5149 = vadd.f32 0.0, %v5148
        %5150 = vmatmul.f32.gmra.mxu0 %v4941
        %v5151 = vpop.f32.mrf.mxu0
        %v5152 = vadd.f32 0.0, %v5151
        %5153 = vmatmul.f32.gmra.mxu0 %v4942
        %v5154 = vpop.f32.mrf.mxu0
        %v5155 = vadd.f32 0.0, %v5154
        %5156 = vmatmul.f32.gmra.mxu0 %v4943
        %v5157 = vpop.f32.mrf.mxu0
        %v5158 = vadd.f32 0.0, %v5157
        %5159 = vmatmul.f32.gmra.mxu0 %v4944
        %v5160 = vpop.f32.mrf.mxu0
        %v5161 = vadd.f32 0.0, %v5160
        %5162 = vmatmul.f32.gmra.mxu0 %v4945
        %v5163 = vpop.f32.mrf.mxu0
        %v5164 = vadd.f32 0.0, %v5163
        %5165 = vmatmul.f32.gmra.mxu0 %v4946
        %v5166 = vpop.f32.mrf.mxu0
        %v5167 = vadd.f32 0.0, %v5166
        %5168 = vmatmul.f32.gmra.mxu0 %v4947
        %v5169 = vpop.f32.mrf.mxu0
        %v5170 = vadd.f32 0.0, %v5169
        %5171 = vmatmul.f32.gmra.mxu0 %v4948
        %v5172 = vpop.f32.mrf.mxu0
        %v5173 = vadd.f32 0.0, %v5172
        %5174 = vmatmul.f32.gmra.mxu0 %v4949
        %v5175 = vpop.f32.mrf.mxu0
        %v5176 = vadd.f32 0.0, %v5175
        %5177 = vmatmul.f32.gmra.mxu0 %v4950
        %v5178 = vpop.f32.mrf.mxu0
        %v5179 = vadd.f32 0.0, %v5178
        %5180 = vmatmul.f32.gmra.mxu0 %v4951
        %v5181 = vpop.f32.mrf.mxu0
        %v5182 = vadd.f32 0.0, %v5181
        %5183 = vmatmul.f32.gmra.mxu0 %v4952
        %v5184 = vpop.f32.mrf.mxu0
        %v5185 = vadd.f32 0.0, %v5184
        %5186 = vmatmul.f32.gmra.mxu0 %v4953
        %v5187 = vpop.f32.mrf.mxu0
        %v5188 = vadd.f32 0.0, %v5187
        %5189 = vmatmul.f32.gmra.mxu0 %v4954
        %v5190 = vpop.f32.mrf.mxu0
        %v5191 = vadd.f32 0.0, %v5190
        %5192 = vmatmul.f32.gmra.mxu0 %v4955
        %v5193 = vpop.f32.mrf.mxu0
        %v5194 = vadd.f32 0.0, %v5193
        %5195 = vmatmul.f32.gmra.mxu0 %v4956
        %v5196 = vpop.f32.mrf.mxu0
        %v5197 = vadd.f32 0.0, %v5196
        %5198 = vmatmul.f32.gmra.mxu0 %v4957
        %v5199 = vpop.f32.mrf.mxu0
        %v5200 = vadd.f32 0.0, %v5199
        %5201 = vmatmul.f32.gmra.mxu0 %v4958
        %v5202 = vpop.f32.mrf.mxu0
        %v5203 = vadd.f32 0.0, %v5202
        %5204 = vmatmul.f32.gmra.mxu0 %v4959
        %v5205 = vpop.f32.mrf.mxu0
        %v5206 = vadd.f32 0.0, %v5205
        %5207 = vmatmul.f32.gmra.mxu0 %v4960
        %v5208 = vpop.f32.mrf.mxu0
        %v5209 = vadd.f32 0.0, %v5208
        %5210 = vmatmul.f32.gmra.mxu0 %v4961
        %v5211 = vpop.f32.mrf.mxu0
        %v5212 = vadd.f32 0.0, %v5211
        %5213 = vmatmul.f32.gmra.mxu0 %v4962
        %v5214 = vpop.f32.mrf.mxu0
        %v5215 = vadd.f32 0.0, %v5214
        %5216 = vmatmul.f32.gmra.mxu0 %v4963
        %v5217 = vpop.f32.mrf.mxu0
        %v5218 = vadd.f32 0.0, %v5217
        %5219 = vmatmul.f32.gmra.mxu0 %v4964
        %v5220 = vpop.f32.mrf.mxu0
        %v5221 = vadd.f32 0.0, %v5220
        %5222 = vmatmul.f32.gmra.mxu0 %v4965
        %v5223 = vpop.f32.mrf.mxu0
        %v5224 = vadd.f32 0.0, %v5223
        %5225 = vmatmul.f32.gmra.mxu0 %v4966
        %v5226 = vpop.f32.mrf.mxu0
        %v5227 = vadd.f32 0.0, %v5226
        %5228 = vmatmul.f32.gmra.mxu0 %v4967
        %v5229 = vpop.f32.mrf.mxu0
        %v5230 = vadd.f32 0.0, %v5229
        %5231 = vmatmul.f32.gmra.mxu0 %v4968
        %v5232 = vpop.f32.mrf.mxu0
        %v5233 = vadd.f32 0.0, %v5232
        %5234 = vmatmul.f32.gmra.mxu0 %v4969
        %v5235 = vpop.f32.mrf.mxu0
        %v5236 = vadd.f32 0.0, %v5235
        %5237 = vmatmul.f32.gmra.mxu0 %v4970
        %v5238 = vpop.f32.mrf.mxu0
        %v5239 = vadd.f32 0.0, %v5238
        %5240 = vmatmul.f32.gmra.mxu0 %v4971
        %v5241 = vpop.f32.mrf.mxu0
        %v5242 = vadd.f32 0.0, %v5241
        %5243 = vmatmul.f32.gmra.mxu0 %v4972
        %v5244 = vpop.f32.mrf.mxu0
        %v5245 = vadd.f32 0.0, %v5244
        %5246 = vmatmul.f32.gmra.mxu0 %v4973
        %v5247 = vpop.f32.mrf.mxu0
        %v5248 = vadd.f32 0.0, %v5247
        %5249 = vmatmul.f32.gmra.mxu0 %v4974
        %v5250 = vpop.f32.mrf.mxu0
        %v5251 = vadd.f32 0.0, %v5250
        %5252 = vmatmul.f32.gmra.mxu0 %v4975
        %v5253 = vpop.f32.mrf.mxu0
        %v5254 = vadd.f32 0.0, %v5253
        %5255 = vmatmul.f32.gmra.mxu0 %v4976
        %v5256 = vpop.f32.mrf.mxu0
        %v5257 = vadd.f32 0.0, %v5256
        %5258 = vmatmul.f32.gmra.mxu0 %v4977
        %v5259 = vpop.f32.mrf.mxu0
        %v5260 = vadd.f32 0.0, %v5259
        %5261 = vmatmul.f32.gmra.mxu0 %v4978
        %v5262 = vpop.f32.mrf.mxu0
        %v5263 = vadd.f32 0.0, %v5262
        %5264 = vmatmul.f32.gmra.mxu0 %v4979
        %v5265 = vpop.f32.mrf.mxu0
        %v5266 = vadd.f32 0.0, %v5265
        %5267 = vmatmul.f32.gmra.mxu0 %v4980
        %v5268 = vpop.f32.mrf.mxu0
        %v5269 = vadd.f32 0.0, %v5268
        %5270 = vmatmul.f32.gmra.mxu0 %v4981
        %v5271 = vpop.f32.mrf.mxu0
        %v5272 = vadd.f32 0.0, %v5271
        %5273 = vmatmul.f32.gmra.mxu0 %v4982
        %v5274 = vpop.f32.mrf.mxu0
        %v5275 = vadd.f32 0.0, %v5274
        %5276 = vmatmul.f32.gmra.mxu0 %v4983
        %v5277 = vpop.f32.mrf.mxu0
        %v5278 = vadd.f32 0.0, %v5277
        %5279 = vmatmul.f32.gmra.mxu0 %v4984
        %v5280 = vpop.f32.mrf.mxu0
        %v5281 = vadd.f32 0.0, %v5280
        %5282 = vmatmul.f32.gmra.mxu0 %v4985
        %v5283 = vpop.f32.mrf.mxu0
        %v5284 = vadd.f32 0.0, %v5283
        %5285 = vmatmul.f32.gmra.mxu0 %v4986
        %v5286 = vpop.f32.mrf.mxu0
        %v5287 = vadd.f32 0.0, %v5286
        %5288 = vmatmul.f32.gmra.mxu0 %v4987
        %v5289 = vpop.f32.mrf.mxu0
        %v5290 = vadd.f32 0.0, %v5289
        %5291 = vmatmul.f32.gmra.mxu0 %v4988
        %v5292 = vpop.f32.mrf.mxu0
        %v5293 = vadd.f32 0.0, %v5292
        %5294 = vmatmul.f32.gmra.mxu0 %v4989
        %v5295 = vpop.f32.mrf.mxu0
        %v5296 = vadd.f32 0.0, %v5295
        %5297 = vmatmul.f32.gmra.mxu0 %v4990
        %v5298 = vpop.f32.mrf.mxu0
        %v5299 = vadd.f32 0.0, %v5298
        %5300 = vmatmul.f32.gmra.mxu0 %v4991
        %v5301 = vpop.f32.mrf.mxu0
        %v5302 = vadd.f32 0.0, %v5301
        %5303 = vmatmul.f32.gmra.mxu0 %v4992
        %v5304 = vpop.f32.mrf.mxu0
        %v5305 = vadd.f32 0.0, %v5304
        %5306 = vmatmul.f32.gmra.mxu0 %v4993
        %v5307 = vpop.f32.mrf.mxu0
        %v5308 = vadd.f32 0.0, %v5307
        %5309 = vmatmul.f32.gmra.mxu0 %v4994
        %v5310 = vpop.f32.mrf.mxu0
        %v5311 = vadd.f32 0.0, %v5310
        %5312 = vmatmul.f32.gmra.mxu0 %v4995
        %v5313 = vpop.f32.mrf.mxu0
        %v5314 = vadd.f32 0.0, %v5313
        %5315 = vmatmul.f32.gmra.mxu0 %v4996
        %v5316 = vpop.f32.mrf.mxu0
        %v5317 = vadd.f32 0.0, %v5316
        %5318 = vmatmul.f32.gmra.mxu0 %v4997
        %v5319 = vpop.f32.mrf.mxu0
        %v5320 = vadd.f32 0.0, %v5319
        %5321 = vmatmul.f32.gmra.mxu0 %v4998
        %v5322 = vpop.f32.mrf.mxu0
        %v5323 = vadd.f32 0.0, %v5322
        %5324 = vmatmul.f32.gmra.mxu0 %v4999
        %v5325 = vpop.f32.mrf.mxu0
        %v5326 = vadd.f32 0.0, %v5325
        %5327 = vmatmul.f32.gmra.mxu0 %v5000
        %v5328 = vpop.f32.mrf.mxu0
        %v5329 = vadd.f32 0.0, %v5328
        %5330 = vmatmul.f32.gmra.mxu0 %v5001
        %v5331 = vpop.f32.mrf.mxu0
        %v5332 = vadd.f32 0.0, %v5331
        %5333 = vmatmul.f32.gmra.mxu0 %v5002
        %v5334 = vpop.f32.mrf.mxu0
        %v5335 = vadd.f32 0.0, %v5334
        %5336 = vmatmul.f32.gmra.mxu0 %v5003
        %v5337 = vpop.f32.mrf.mxu0
        %v5338 = vadd.f32 0.0, %v5337
        %5339 = vmatmul.f32.gmra.mxu0 %v5004
        %v5340 = vpop.f32.mrf.mxu0
        %v5341 = vadd.f32 0.0, %v5340
        %5342 = vmatmul.f32.gmra.mxu0 %v5005
        %v5343 = vpop.f32.mrf.mxu0
        %v5344 = vadd.f32 0.0, %v5343
        %5345 = vmatmul.f32.gmra.mxu0 %v5006
        %v5346 = vpop.f32.mrf.mxu0
        %v5347 = vadd.f32 0.0, %v5346
        %5348 = vmatmul.f32.gmra.mxu0 %v5007
        %v5349 = vpop.f32.mrf.mxu0
        %v5350 = vadd.f32 0.0, %v5349
        %5351 = vmatmul.f32.gmra.mxu0 %v5008
        %v5352 = vpop.f32.mrf.mxu0
        %v5353 = vadd.f32 0.0, %v5352
        %5354 = vmatmul.f32.gmra.mxu0 %v5009
        %v5355 = vpop.f32.mrf.mxu0
        %v5356 = vadd.f32 0.0, %v5355
        %5357 = vmatmul.f32.gmra.mxu0 %v5010
        %v5358 = vpop.f32.mrf.mxu0
        %v5359 = vadd.f32 0.0, %v5358
        %5360 = vmatmul.f32.gmra.mxu0 %v5011
        %v5361 = vpop.f32.mrf.mxu0
        %v5362 = vadd.f32 0.0, %v5361
        %5363 = vmatmul.f32.gmra.mxu0 %v5012
        %v5364 = vpop.f32.mrf.mxu0
        %v5365 = vadd.f32 0.0, %v5364
        %5366 = vmatmul.f32.gmra.mxu0 %v5013
        %v5367 = vpop.f32.mrf.mxu0
        %v5368 = vadd.f32 0.0, %v5367
        %5369 = vmatmul.f32.gmra.mxu0 %v5014
        %v5370 = vpop.f32.mrf.mxu0
        %v5371 = vadd.f32 0.0, %v5370
        %5372 = vmatmul.f32.gmra.mxu0 %v5015
        %v5373 = vpop.f32.mrf.mxu0
        %v5374 = vadd.f32 0.0, %v5373
        %5375 = vmatmul.f32.gmra.mxu0 %v5016
        %v5376 = vpop.f32.mrf.mxu0
        %v5377 = vadd.f32 0.0, %v5376
        %5378 = vmatmul.f32.gmra.mxu0 %v5017
        %v5379 = vpop.f32.mrf.mxu0
        %v5380 = vadd.f32 0.0, %v5379
        %5381 = vmatmul.f32.gmra.mxu0 %v5018
        %v5382 = vpop.f32.mrf.mxu0
        %v5383 = vadd.f32 0.0, %v5382
        %5384 = vmatmul.f32.gmra.mxu0 %v5019
        %v5385 = vpop.f32.mrf.mxu0
        %v5386 = vadd.f32 0.0, %v5385
        %5387 = vmatmul.f32.gmra.mxu0 %v5020
        %v5388 = vpop.f32.mrf.mxu0
        %v5389 = vadd.f32 0.0, %v5388
        %5390 = vmatmul.f32.gmra.mxu0 %v5021
        %v5391 = vpop.f32.mrf.mxu0
        %v5392 = vadd.f32 0.0, %v5391
        %5393 = vmatmul.f32.gmra.mxu0 %v5022
        %v5394 = vpop.f32.mrf.mxu0
        %v5395 = vadd.f32 0.0, %v5394
        %5396 = vmatmul.f32.gmra.mxu0 %v5023
        %v5397 = vpop.f32.mrf.mxu0
        %v5398 = vadd.f32 0.0, %v5397
        %5399 = vmatmul.f32.gmra.mxu0 %v5024
        %v5400 = vpop.f32.mrf.mxu0
        %v5401 = vadd.f32 0.0, %v5400
        %5402 = vmatmul.f32.gmra.mxu0 %v5025
        %v5403 = vpop.f32.mrf.mxu0
        %v5404 = vadd.f32 0.0, %v5403
        %5405 = vmatmul.f32.gmra.mxu0 %v5026
        %v5406 = vpop.f32.mrf.mxu0
        %v5407 = vadd.f32 0.0, %v5406
        %5408 = vmatmul.f32.gmra.mxu0 %v5027
        %v5409 = vpop.f32.mrf.mxu0
        %v5410 = vadd.f32 0.0, %v5409
        %5411 = vmatmul.f32.gmra.mxu0 %v5028
        %v5412 = vpop.f32.mrf.mxu0
        %v5413 = vadd.f32 0.0, %v5412
        %5414 = vmatmul.f32.gmra.mxu0 %v5029
        %v5415 = vpop.f32.mrf.mxu0
        %v5416 = vadd.f32 0.0, %v5415
        %5417 = vmatmul.f32.gmra.mxu0 %v5030
        %v5418 = vpop.f32.mrf.mxu0
        %v5419 = vadd.f32 0.0, %v5418
        %5420 = vmatmul.f32.gmra.mxu0 %v5031
        %v5421 = vpop.f32.mrf.mxu0
        %v5422 = vadd.f32 0.0, %v5421
        %5423 = vmatmul.f32.gmra.mxu0 %v5032
        %v5424 = vpop.f32.mrf.mxu0
        %v5425 = vadd.f32 0.0, %v5424
        %5426 = vmatmul.f32.gmra.mxu0 %v5033
        %v5427 = vpop.f32.mrf.mxu0
        %v5428 = vadd.f32 0.0, %v5427
        %5429 = vmatmul.f32.gmra.mxu0 %v5034
        %v5430 = vpop.f32.mrf.mxu0
        %v5431 = vadd.f32 0.0, %v5430
        %5432 = vmatmul.f32.gmra.mxu0 %v5035
        %v5433 = vpop.f32.mrf.mxu0
        %v5434 = vadd.f32 0.0, %v5433
        %5435 = vmatmul.f32.gmra.mxu0 %v5036
        %v5436 = vpop.f32.mrf.mxu0
        %v5437 = vadd.f32 0.0, %v5436
        %5438 = vmatmul.f32.gmra.mxu0 %v5037
        %v5439 = vpop.f32.mrf.mxu0
        %v5440 = vadd.f32 0.0, %v5439
        %5441 = vmatmul.f32.gmra.mxu0 %v5038
        %v5442 = vpop.f32.mrf.mxu0
        %v5443 = vadd.f32 0.0, %v5442
        %5444 = vmatmul.f32.gmra.mxu0 %v5039
        %v5445 = vpop.f32.mrf.mxu0
        %v5446 = vadd.f32 0.0, %v5445
        %5447 = vmatmul.f32.gmra.mxu0 %v5040
        %v5448 = vpop.f32.mrf.mxu0
        %v5449 = vadd.f32 0.0, %v5448
        %5450 = vmatmul.f32.gmra.mxu0 %v5041
        %v5451 = vpop.f32.mrf.mxu0
        %v5452 = vadd.f32 0.0, %v5451
        %5453 = vmatmul.f32.gmra.mxu0 %v5042
        %v5454 = vpop.f32.mrf.mxu0
        %v5455 = vadd.f32 0.0, %v5454
        %5456 = vmatmul.f32.gmra.mxu0 %v5043
        %v5457 = vpop.f32.mrf.mxu0
        %v5458 = vadd.f32 0.0, %v5457
        %5459 = vmatmul.f32.gmra.mxu0 %v5044
        %v5460 = vpop.f32.mrf.mxu0
        %v5461 = vadd.f32 0.0, %v5460
        %5462 = vmatmul.f32.gmra.mxu0 %v5045
        %v5463 = vpop.f32.mrf.mxu0
        %v5464 = vadd.f32 0.0, %v5463
        %5465 = vmatmul.f32.gmra.mxu0 %v5046
        %v5466 = vpop.f32.mrf.mxu0
        %v5467 = vadd.f32 0.0, %v5466
        %5468 = vmatmul.f32.gmra.mxu0 %v5047
        %v5469 = vpop.f32.mrf.mxu0
        %v5470 = vadd.f32 0.0, %v5469
        %5471 = vmatmul.f32.gmra.mxu0 %v5048
        %v5472 = vpop.f32.mrf.mxu0
        %v5473 = vadd.f32 0.0, %v5472
        %5474 = vmatmul.f32.gmra.mxu0 %v5049
        %v5475 = vpop.f32.mrf.mxu0
        %v5476 = vadd.f32 0.0, %v5475
        %5477 = vmatmul.f32.gmra.mxu0 %v5050
        %v5478 = vpop.f32.mrf.mxu0
        %v5479 = vadd.f32 0.0, %v5478
        %5480 = vmatmul.f32.gmra.mxu0 %v5051
        %v5481 = vpop.f32.mrf.mxu0
        %v5482 = vadd.f32 0.0, %v5481
        %5483 = vmatmul.f32.gmra.mxu0 %v5052
        %v5484 = vpop.f32.mrf.mxu0
        %v5485 = vadd.f32 0.0, %v5484
        %5486 = vmatmul.f32.gmra.mxu0 %v5053
        %v5487 = vpop.f32.mrf.mxu0
        %v5488 = vadd.f32 0.0, %v5487
        %5489 = vmatmul.f32.gmra.mxu0 %v5054
        %v5490 = vpop.f32.mrf.mxu0
        %v5491 = vadd.f32 0.0, %v5490
        %5492 = vmatmul.f32.gmra.mxu0 %v5055
        %v5493 = vpop.f32.mrf.mxu0
        %v5494 = vadd.f32 0.0, %v5493
        %5495 = vmatmul.f32.gmra.mxu0 %v5056
        %v5496 = vpop.f32.mrf.mxu0
        %v5497 = vadd.f32 0.0, %v5496
        %5498 = vdwg.mxu0
        %v5499 = vadd.f32 %v4785, %v5092
        %v5500 = vadd.f32 %v4786, %v5095
        %v5501 = vadd.f32 %v4787, %v5098
        %v5502 = vadd.f32 %v4788, %v5101
        %v5503 = vadd.f32 %v4789, %v5104
        %v5504 = vadd.f32 %v4790, %v5107
        %v5505 = vadd.f32 %v4791, %v5110
        %v5506 = vadd.f32 %v4792, %v5113
        %v5507 = vadd.f32 %v4793, %v5116
        %v5508 = vadd.f32 %v4794, %v5119
        %v5509 = vadd.f32 %v4795, %v5122
        %v5510 = vadd.f32 %v4796, %v5125
        %v5511 = vadd.f32 %v4797, %v5128
        %v5512 = vadd.f32 %v4798, %v5131
        %v5513 = vadd.f32 %v4799, %v5134
        %v5514 = vadd.f32 %v4800, %v5137
        %v5515 = vadd.f32 %v4801, %v5140
        %v5516 = vadd.f32 %v4802, %v5143
        %v5517 = vadd.f32 %v4803, %v5146
        %v5518 = vadd.f32 %v4804, %v5149
        %v5519 = vadd.f32 %v4805, %v5152
        %v5520 = vadd.f32 %v4806, %v5155
        %v5521 = vadd.f32 %v4807, %v5158
        %v5522 = vadd.f32 %v4808, %v5161
        %v5523 = vadd.f32 %v4809, %v5164
        %v5524 = vadd.f32 %v4810, %v5167
        %v5525 = vadd.f32 %v4811, %v5170
        %v5526 = vadd.f32 %v4812, %v5173
        %v5527 = vadd.f32 %v4813, %v5176
        %v5528 = vadd.f32 %v4814, %v5179
        %v5529 = vadd.f32 %v4815, %v5182
        %v5530 = vadd.f32 %v4816, %v5185
        %v5531 = vadd.f32 %v4817, %v5188
        %v5532 = vadd.f32 %v4818, %v5191
        %v5533 = vadd.f32 %v4819, %v5194
        %v5534 = vadd.f32 %v4820, %v5197
        %v5535 = vadd.f32 %v4821, %v5200
        %v5536 = vadd.f32 %v4822, %v5203
        %v5537 = vadd.f32 %v4823, %v5206
        %v5538 = vadd.f32 %v4824, %v5209
        %v5539 = vadd.f32 %v4825, %v5212
        %v5540 = vadd.f32 %v4826, %v5215
        %v5541 = vadd.f32 %v4827, %v5218
        %v5542 = vadd.f32 %v4828, %v5221
        %v5543 = vadd.f32 %v4829, %v5224
        %v5544 = vadd.f32 %v4830, %v5227
        %v5545 = vadd.f32 %v4831, %v5230
        %v5546 = vadd.f32 %v4832, %v5233
        %v5547 = vadd.f32 %v4833, %v5236
        %v5548 = vadd.f32 %v4834, %v5239
        %v5549 = vadd.f32 %v4835, %v5242
        %v5550 = vadd.f32 %v4836, %v5245
        %v5551 = vadd.f32 %v4837, %v5248
        %v5552 = vadd.f32 %v4838, %v5251
        %v5553 = vadd.f32 %v4839, %v5254
        %v5554 = vadd.f32 %v4840, %v5257
        %v5555 = vadd.f32 %v4841, %v5260
        %v5556 = vadd.f32 %v4842, %v5263
        %v5557 = vadd.f32 %v4843, %v5266
        %v5558 = vadd.f32 %v4844, %v5269
        %v5559 = vadd.f32 %v4845, %v5272
        %v5560 = vadd.f32 %v4846, %v5275
        %v5561 = vadd.f32 %v4847, %v5278
        %v5562 = vadd.f32 %v4848, %v5281
        %v5563 = vadd.f32 %v4849, %v5284
        %v5564 = vadd.f32 %v4850, %v5287
        %v5565 = vadd.f32 %v4851, %v5290
        %v5566 = vadd.f32 %v4852, %v5293
        %v5567 = vadd.f32 %v4853, %v5296
        %v5568 = vadd.f32 %v4854, %v5299
        %v5569 = vadd.f32 %v4855, %v5302
        %v5570 = vadd.f32 %v4856, %v5305
        %v5571 = vadd.f32 %v4857, %v5308
        %v5572 = vadd.f32 %v4858, %v5311
        %v5573 = vadd.f32 %v4859, %v5314
        %v5574 = vadd.f32 %v4860, %v5317
        %v5575 = vadd.f32 %v4861, %v5320
        %v5576 = vadd.f32 %v4862, %v5323
        %v5577 = vadd.f32 %v4863, %v5326
        %v5578 = vadd.f32 %v4864, %v5329
        %v5579 = vadd.f32 %v4865, %v5332
        %v5580 = vadd.f32 %v4866, %v5335
        %v5581 = vadd.f32 %v4867, %v5338
        %v5582 = vadd.f32 %v4868, %v5341
        %v5583 = vadd.f32 %v4869, %v5344
        %v5584 = vadd.f32 %v4870, %v5347
        %v5585 = vadd.f32 %v4871, %v5350
        %v5586 = vadd.f32 %v4872, %v5353
        %v5587 = vadd.f32 %v4873, %v5356
        %v5588 = vadd.f32 %v4874, %v5359
        %v5589 = vadd.f32 %v4875, %v5362
        %v5590 = vadd.f32 %v4876, %v5365
        %v5591 = vadd.f32 %v4877, %v5368
        %v5592 = vadd.f32 %v4878, %v5371
        %v5593 = vadd.f32 %v4879, %v5374
        %v5594 = vadd.f32 %v4880, %v5377
        %v5595 = vadd.f32 %v4881, %v5380
        %v5596 = vadd.f32 %v4882, %v5383
        %v5597 = vadd.f32 %v4883, %v5386
        %v5598 = vadd.f32 %v4884, %v5389
        %v5599 = vadd.f32 %v4885, %v5392
        %v5600 = vadd.f32 %v4886, %v5395
        %v5601 = vadd.f32 %v4887, %v5398
        %v5602 = vadd.f32 %v4888, %v5401
        %v5603 = vadd.f32 %v4889, %v5404
        %v5604 = vadd.f32 %v4890, %v5407
        %v5605 = vadd.f32 %v4891, %v5410
        %v5606 = vadd.f32 %v4892, %v5413
        %v5607 = vadd.f32 %v4893, %v5416
        %v5608 = vadd.f32 %v4894, %v5419
        %v5609 = vadd.f32 %v4895, %v5422
        %v5610 = vadd.f32 %v4896, %v5425
        %v5611 = vadd.f32 %v4897, %v5428
        %v5612 = vadd.f32 %v4898, %v5431
        %v5613 = vadd.f32 %v4899, %v5434
        %v5614 = vadd.f32 %v4900, %v5437
        %v5615 = vadd.f32 %v4901, %v5440
        %v5616 = vadd.f32 %v4902, %v5443
        %v5617 = vadd.f32 %v4903, %v5446
        %v5618 = vadd.f32 %v4904, %v5449
        %v5619 = vadd.f32 %v4905, %v5452
        %v5620 = vadd.f32 %v4906, %v5455
        %v5621 = vadd.f32 %v4907, %v5458
        %v5622 = vadd.f32 %v4908, %v5461
        %v5623 = vadd.f32 %v4909, %v5464
        %v5624 = vadd.f32 %v4910, %v5467
        %v5625 = vadd.f32 %v4911, %v5470
        %v5626 = vadd.f32 %v4912, %v5473
        %v5627 = vadd.f32 %v4913, %v5476
        %v5628 = vadd.f32 %v4914, %v5479
        %v5629 = vadd.f32 %v4915, %v5482
        %v5630 = vadd.f32 %v4916, %v5485
        %v5631 = vadd.f32 %v4917, %v5488
        %v5632 = vadd.f32 %v4918, %v5491
        %v5633 = vadd.f32 %v4919, %v5494
        %v5634 = vadd.f32 %v4920, %v5497
        %v5635 = vld [vmem:[%s195 + $0x46] sm:$0xff]
        %v5636 = vld [vmem:[%s195 + $0x4e] sm:$0xff]
        %v5637 = vld [vmem:[%s195 + $0x56] sm:$0xff]
        %v5638 = vld [vmem:[%s195 + $0x5e] sm:$0xff]
        %v5639 = vld [vmem:[%s195 + $0x66] sm:$0xff]
        %v5640 = vld [vmem:[%s195 + $0x6e] sm:$0xff]
        %v5641 = vld [vmem:[%s195 + $0x76] sm:$0xff]
        %v5642 = vld [vmem:[%s195 + $0x7e] sm:$0xff]
        %v5643 = vld [vmem:[%s195 + $0x86] sm:$0xff]
        %v5644 = vld [vmem:[%s195 + $0x8e] sm:$0xff]
        %v5645 = vld [vmem:[%s195 + $0x96] sm:$0xff]
        %v5646 = vld [vmem:[%s195 + $0x9e] sm:$0xff]
        %v5647 = vld [vmem:[%s195 + $0xa6] sm:$0xff]
        %v5648 = vld [vmem:[%s195 + $0xae] sm:$0xff]
        %v5649 = vld [vmem:[%s195 + $0xb6] sm:$0xff]
        %v5650 = vld [vmem:[%s195 + $0xbe] sm:$0xff]
        %v5651 = vld [vmem:[%s195 + $0xc6] sm:$0xff]
        %v5652 = vld [vmem:[%s195 + $0xce] sm:$0xff]
        %v5653 = vld [vmem:[%s195 + $0xd6] sm:$0xff]
        %v5654 = vld [vmem:[%s195 + $0xde] sm:$0xff]
        %v5655 = vld [vmem:[%s195 + $0xe6] sm:$0xff]
        %v5656 = vld [vmem:[%s195 + $0xee] sm:$0xff]
        %v5657 = vld [vmem:[%s195 + $0xf6] sm:$0xff]
        %v5658 = vld [vmem:[%s195 + $0xfe] sm:$0xff]
        %v5659 = vld [vmem:[%s195 + $0x106] sm:$0xff]
        %v5660 = vld [vmem:[%s195 + $0x10e] sm:$0xff]
        %v5661 = vld [vmem:[%s195 + $0x116] sm:$0xff]
        %v5662 = vld [vmem:[%s195 + $0x11e] sm:$0xff]
        %v5663 = vld [vmem:[%s195 + $0x126] sm:$0xff]
        %v5664 = vld [vmem:[%s195 + $0x12e] sm:$0xff]
        %v5665 = vld [vmem:[%s195 + $0x136] sm:$0xff]
        %v5666 = vld [vmem:[%s195 + $0x13e] sm:$0xff]
        %v5667 = vld [vmem:[%s195 + $0x146] sm:$0xff]
        %v5668 = vld [vmem:[%s195 + $0x14e] sm:$0xff]
        %v5669 = vld [vmem:[%s195 + $0x156] sm:$0xff]
        %v5670 = vld [vmem:[%s195 + $0x15e] sm:$0xff]
        %v5671 = vld [vmem:[%s195 + $0x166] sm:$0xff]
        %v5672 = vld [vmem:[%s195 + $0x16e] sm:$0xff]
        %v5673 = vld [vmem:[%s195 + $0x176] sm:$0xff]
        %v5674 = vld [vmem:[%s195 + $0x17e] sm:$0xff]
        %v5675 = vld [vmem:[%s195 + $0x186] sm:$0xff]
        %v5676 = vld [vmem:[%s195 + $0x18e] sm:$0xff]
        %v5677 = vld [vmem:[%s195 + $0x196] sm:$0xff]
        %v5678 = vld [vmem:[%s195 + $0x19e] sm:$0xff]
        %v5679 = vld [vmem:[%s195 + $0x1a6] sm:$0xff]
        %v5680 = vld [vmem:[%s195 + $0x1ae] sm:$0xff]
        %v5681 = vld [vmem:[%s195 + $0x1b6] sm:$0xff]
        %v5682 = vld [vmem:[%s195 + $0x1be] sm:$0xff]
        %v5683 = vld [vmem:[%s195 + $0x1c6] sm:$0xff]
        %v5684 = vld [vmem:[%s195 + $0x1ce] sm:$0xff]
        %v5685 = vld [vmem:[%s195 + $0x1d6] sm:$0xff]
        %v5686 = vld [vmem:[%s195 + $0x1de] sm:$0xff]
        %v5687 = vld [vmem:[%s195 + $0x1e6] sm:$0xff]
        %v5688 = vld [vmem:[%s195 + $0x1ee] sm:$0xff]
        %v5689 = vld [vmem:[%s195 + $0x1f6] sm:$0xff]
        %v5690 = vld [vmem:[%s195 + $0x1fe] sm:$0xff]
        %v5691 = vld [vmem:[%s195 + $0x206] sm:$0xff]
        %v5692 = vld [vmem:[%s195 + $0x20e] sm:$0xff]
        %v5693 = vld [vmem:[%s195 + $0x216] sm:$0xff]
        %v5694 = vld [vmem:[%s195 + $0x21e] sm:$0xff]
        %v5695 = vld [vmem:[%s195 + $0x226] sm:$0xff]
        %v5696 = vld [vmem:[%s195 + $0x22e] sm:$0xff]
        %v5697 = vld [vmem:[%s195 + $0x236] sm:$0xff]
        %v5698 = vld [vmem:[%s195 + $0x23e] sm:$0xff]
        %v5699 = vld [vmem:[%s195 + $0x246] sm:$0xff]
        %v5700 = vld [vmem:[%s195 + $0x24e] sm:$0xff]
        %v5701 = vld [vmem:[%s195 + $0x256] sm:$0xff]
        %v5702 = vld [vmem:[%s195 + $0x25e] sm:$0xff]
        %v5703 = vld [vmem:[%s195 + $0x266] sm:$0xff]
        %v5704 = vld [vmem:[%s195 + $0x26e] sm:$0xff]
        %v5705 = vld [vmem:[%s195 + $0x276] sm:$0xff]
        %v5706 = vld [vmem:[%s195 + $0x27e] sm:$0xff]
        %v5707 = vld [vmem:[%s195 + $0x286] sm:$0xff]
        %v5708 = vld [vmem:[%s195 + $0x28e] sm:$0xff]
        %v5709 = vld [vmem:[%s195 + $0x296] sm:$0xff]
        %v5710 = vld [vmem:[%s195 + $0x29e] sm:$0xff]
        %v5711 = vld [vmem:[%s195 + $0x2a6] sm:$0xff]
        %v5712 = vld [vmem:[%s195 + $0x2ae] sm:$0xff]
        %v5713 = vld [vmem:[%s195 + $0x2b6] sm:$0xff]
        %v5714 = vld [vmem:[%s195 + $0x2be] sm:$0xff]
        %v5715 = vld [vmem:[%s195 + $0x2c6] sm:$0xff]
        %v5716 = vld [vmem:[%s195 + $0x2ce] sm:$0xff]
        %v5717 = vld [vmem:[%s195 + $0x2d6] sm:$0xff]
        %v5718 = vld [vmem:[%s195 + $0x2de] sm:$0xff]
        %v5719 = vld [vmem:[%s195 + $0x2e6] sm:$0xff]
        %v5720 = vld [vmem:[%s195 + $0x2ee] sm:$0xff]
        %v5721 = vld [vmem:[%s195 + $0x2f6] sm:$0xff]
        %v5722 = vld [vmem:[%s195 + $0x2fe] sm:$0xff]
        %v5723 = vld [vmem:[%s195 + $0x306] sm:$0xff]
        %v5724 = vld [vmem:[%s195 + $0x30e] sm:$0xff]
        %v5725 = vld [vmem:[%s195 + $0x316] sm:$0xff]
        %v5726 = vld [vmem:[%s195 + $0x31e] sm:$0xff]
        %v5727 = vld [vmem:[%s195 + $0x326] sm:$0xff]
        %v5728 = vld [vmem:[%s195 + $0x32e] sm:$0xff]
        %v5729 = vld [vmem:[%s195 + $0x336] sm:$0xff]
        %v5730 = vld [vmem:[%s195 + $0x33e] sm:$0xff]
        %v5731 = vld [vmem:[%s195 + $0x346] sm:$0xff]
        %v5732 = vld [vmem:[%s195 + $0x34e] sm:$0xff]
        %v5733 = vld [vmem:[%s195 + $0x356] sm:$0xff]
        %v5734 = vld [vmem:[%s195 + $0x35e] sm:$0xff]
        %v5735 = vld [vmem:[%s195 + $0x366] sm:$0xff]
        %v5736 = vld [vmem:[%s195 + $0x36e] sm:$0xff]
        %v5737 = vld [vmem:[%s195 + $0x376] sm:$0xff]
        %v5738 = vld [vmem:[%s195 + $0x37e] sm:$0xff]
        %v5739 = vld [vmem:[%s195 + $0x386] sm:$0xff]
        %v5740 = vld [vmem:[%s195 + $0x38e] sm:$0xff]
        %v5741 = vld [vmem:[%s195 + $0x396] sm:$0xff]
        %v5742 = vld [vmem:[%s195 + $0x39e] sm:$0xff]
        %v5743 = vld [vmem:[%s195 + $0x3a6] sm:$0xff]
        %v5744 = vld [vmem:[%s195 + $0x3ae] sm:$0xff]
        %v5745 = vld [vmem:[%s195 + $0x3b6] sm:$0xff]
        %v5746 = vld [vmem:[%s195 + $0x3be] sm:$0xff]
        %v5747 = vld [vmem:[%s195 + $0x3c6] sm:$0xff]
        %v5748 = vld [vmem:[%s195 + $0x3ce] sm:$0xff]
        %v5749 = vld [vmem:[%s195 + $0x3d6] sm:$0xff]
        %v5750 = vld [vmem:[%s195 + $0x3de] sm:$0xff]
        %v5751 = vld [vmem:[%s195 + $0x3e6] sm:$0xff]
        %v5752 = vld [vmem:[%s195 + $0x3ee] sm:$0xff]
        %v5753 = vld [vmem:[%s195 + $0x3f6] sm:$0xff]
        %v5754 = vld [vmem:[%s195 + $0x3fe] sm:$0xff]
        %v5755 = vld [vmem:[%s195 + $0x406] sm:$0xff]
        %v5756 = vld [vmem:[%s195 + $0x40e] sm:$0xff]
        %v5757 = vld [vmem:[%s195 + $0x416] sm:$0xff]
        %v5758 = vld [vmem:[%s195 + $0x41e] sm:$0xff]
        %v5759 = vld [vmem:[%s195 + $0x426] sm:$0xff]
        %v5760 = vld [vmem:[%s195 + $0x42e] sm:$0xff]
        %v5761 = vld [vmem:[%s195 + $0x436] sm:$0xff]
        %v5762 = vld [vmem:[%s195 + $0x43e] sm:$0xff]
        %v5763 = vld [vmem:[%s195 + $0x446] sm:$0xff]
        %v5764 = vld [vmem:[%s195 + $0x44e] sm:$0xff]
        %v5765 = vld [vmem:[%s195 + $0x456] sm:$0xff]
        %v5766 = vld [vmem:[%s195 + $0x45e] sm:$0xff]
        %v5767 = vld [vmem:[%s195 + $0x466] sm:$0xff]
        %v5768 = vld [vmem:[%s195 + $0x46e] sm:$0xff]
        %v5769 = vld [vmem:[%s195 + $0x476] sm:$0xff]
        %v5770 = vld [vmem:[%s195 + $0x47e] sm:$0xff]
        %s5771 = scalar_lea.vmem %s1, 1024
        %v5772 = vld [vmem:[%s5771] sm:$0xff]
        %v5773 = vld [vmem:[%s5771 + $0x8] sm:$0xff]
        %v5774 = vld [vmem:[%s5771 + $0x10] sm:$0xff]
        %v5775 = vld [vmem:[%s5771 + $0x18] sm:$0xff]
        %v5776 = vld [vmem:[%s5771 + $0x20] sm:$0xff]
        %v5777 = vld [vmem:[%s5771 + $0x28] sm:$0xff]
        %v5778 = vld [vmem:[%s5771 + $0x30] sm:$0xff]
        %v5779 = vld [vmem:[%s5771 + $0x38] sm:$0xff]
        %v5780 = vld [vmem:[%s5771 + $0x40] sm:$0xff]
        %v5781 = vld [vmem:[%s5771 + $0x48] sm:$0xff]
        %v5782 = vld [vmem:[%s5771 + $0x50] sm:$0xff]
        %v5783 = vld [vmem:[%s5771 + $0x58] sm:$0xff]
        %v5784 = vld [vmem:[%s5771 + $0x60] sm:$0xff]
        %v5785 = vld [vmem:[%s5771 + $0x68] sm:$0xff]
        %v5786 = vld [vmem:[%s5771 + $0x70] sm:$0xff]
        %v5787 = vld [vmem:[%s5771 + $0x78] sm:$0xff]
        %5788 = vmatpush.msra.mxu0 %v5787
        %5789 = vmatpush.msra.mxu0 %v5786
        %5790 = vmatpush.msra.mxu0 %v5785
        %5791 = vmatpush.msra.mxu0 %v5784
        %5792 = vmatpush.msra.mxu0 %v5783
        %5793 = vmatpush.msra.mxu0 %v5782
        %5794 = vmatpush.msra.mxu0 %v5781
        %5795 = vmatpush.msra.mxu0 %v5780
        %5796 = vmatpush.msra.mxu0 %v5779
        %5797 = vmatpush.msra.mxu0 %v5778
        %5798 = vmatpush.msra.mxu0 %v5777
        %5799 = vmatpush.msra.mxu0 %v5776
        %5800 = vmatpush.msra.mxu0 %v5775
        %5801 = vmatpush.msra.mxu0 %v5774
        %5802 = vmatpush.msra.mxu0 %v5773
        %5803 = vmatpush.msra.mxu0 %v5772
        %5804 = vmatmul.f32.gmra.mxu0 %v5635
        %v5805 = vpop.f32.mrf.mxu0
        %v5806 = vadd.f32 0.0, %v5805
        %5807 = vmatmul.f32.gmra.mxu0 %v5636
        %v5808 = vpop.f32.mrf.mxu0
        %v5809 = vadd.f32 0.0, %v5808
        %5810 = vmatmul.f32.gmra.mxu0 %v5637
        %v5811 = vpop.f32.mrf.mxu0
        %v5812 = vadd.f32 0.0, %v5811
        %5813 = vmatmul.f32.gmra.mxu0 %v5638
        %v5814 = vpop.f32.mrf.mxu0
        %v5815 = vadd.f32 0.0, %v5814
        %5816 = vmatmul.f32.gmra.mxu0 %v5639
        %v5817 = vpop.f32.mrf.mxu0
        %v5818 = vadd.f32 0.0, %v5817
        %5819 = vmatmul.f32.gmra.mxu0 %v5640
        %v5820 = vpop.f32.mrf.mxu0
        %v5821 = vadd.f32 0.0, %v5820
        %5822 = vmatmul.f32.gmra.mxu0 %v5641
        %v5823 = vpop.f32.mrf.mxu0
        %v5824 = vadd.f32 0.0, %v5823
        %5825 = vmatmul.f32.gmra.mxu0 %v5642
        %v5826 = vpop.f32.mrf.mxu0
        %v5827 = vadd.f32 0.0, %v5826
        %5828 = vmatmul.f32.gmra.mxu0 %v5643
        %v5829 = vpop.f32.mrf.mxu0
        %v5830 = vadd.f32 0.0, %v5829
        %5831 = vmatmul.f32.gmra.mxu0 %v5644
        %v5832 = vpop.f32.mrf.mxu0
        %v5833 = vadd.f32 0.0, %v5832
        %5834 = vmatmul.f32.gmra.mxu0 %v5645
        %v5835 = vpop.f32.mrf.mxu0
        %v5836 = vadd.f32 0.0, %v5835
        %5837 = vmatmul.f32.gmra.mxu0 %v5646
        %v5838 = vpop.f32.mrf.mxu0
        %v5839 = vadd.f32 0.0, %v5838
        %5840 = vmatmul.f32.gmra.mxu0 %v5647
        %v5841 = vpop.f32.mrf.mxu0
        %v5842 = vadd.f32 0.0, %v5841
        %5843 = vmatmul.f32.gmra.mxu0 %v5648
        %v5844 = vpop.f32.mrf.mxu0
        %v5845 = vadd.f32 0.0, %v5844
        %5846 = vmatmul.f32.gmra.mxu0 %v5649
        %v5847 = vpop.f32.mrf.mxu0
        %v5848 = vadd.f32 0.0, %v5847
        %5849 = vmatmul.f32.gmra.mxu0 %v5650
        %v5850 = vpop.f32.mrf.mxu0
        %v5851 = vadd.f32 0.0, %v5850
        %5852 = vmatmul.f32.gmra.mxu0 %v5651
        %v5853 = vpop.f32.mrf.mxu0
        %v5854 = vadd.f32 0.0, %v5853
        %5855 = vmatmul.f32.gmra.mxu0 %v5652
        %v5856 = vpop.f32.mrf.mxu0
        %v5857 = vadd.f32 0.0, %v5856
        %5858 = vmatmul.f32.gmra.mxu0 %v5653
        %v5859 = vpop.f32.mrf.mxu0
        %v5860 = vadd.f32 0.0, %v5859
        %5861 = vmatmul.f32.gmra.mxu0 %v5654
        %v5862 = vpop.f32.mrf.mxu0
        %v5863 = vadd.f32 0.0, %v5862
        %5864 = vmatmul.f32.gmra.mxu0 %v5655
        %v5865 = vpop.f32.mrf.mxu0
        %v5866 = vadd.f32 0.0, %v5865
        %5867 = vmatmul.f32.gmra.mxu0 %v5656
        %v5868 = vpop.f32.mrf.mxu0
        %v5869 = vadd.f32 0.0, %v5868
        %5870 = vmatmul.f32.gmra.mxu0 %v5657
        %v5871 = vpop.f32.mrf.mxu0
        %v5872 = vadd.f32 0.0, %v5871
        %5873 = vmatmul.f32.gmra.mxu0 %v5658
        %v5874 = vpop.f32.mrf.mxu0
        %v5875 = vadd.f32 0.0, %v5874
        %5876 = vmatmul.f32.gmra.mxu0 %v5659
        %v5877 = vpop.f32.mrf.mxu0
        %v5878 = vadd.f32 0.0, %v5877
        %5879 = vmatmul.f32.gmra.mxu0 %v5660
        %v5880 = vpop.f32.mrf.mxu0
        %v5881 = vadd.f32 0.0, %v5880
        %5882 = vmatmul.f32.gmra.mxu0 %v5661
        %v5883 = vpop.f32.mrf.mxu0
        %v5884 = vadd.f32 0.0, %v5883
        %5885 = vmatmul.f32.gmra.mxu0 %v5662
        %v5886 = vpop.f32.mrf.mxu0
        %v5887 = vadd.f32 0.0, %v5886
        %5888 = vmatmul.f32.gmra.mxu0 %v5663
        %v5889 = vpop.f32.mrf.mxu0
        %v5890 = vadd.f32 0.0, %v5889
        %5891 = vmatmul.f32.gmra.mxu0 %v5664
        %v5892 = vpop.f32.mrf.mxu0
        %v5893 = vadd.f32 0.0, %v5892
        %5894 = vmatmul.f32.gmra.mxu0 %v5665
        %v5895 = vpop.f32.mrf.mxu0
        %v5896 = vadd.f32 0.0, %v5895
        %5897 = vmatmul.f32.gmra.mxu0 %v5666
        %v5898 = vpop.f32.mrf.mxu0
        %v5899 = vadd.f32 0.0, %v5898
        %5900 = vmatmul.f32.gmra.mxu0 %v5667
        %v5901 = vpop.f32.mrf.mxu0
        %v5902 = vadd.f32 0.0, %v5901
        %5903 = vmatmul.f32.gmra.mxu0 %v5668
        %v5904 = vpop.f32.mrf.mxu0
        %v5905 = vadd.f32 0.0, %v5904
        %5906 = vmatmul.f32.gmra.mxu0 %v5669
        %v5907 = vpop.f32.mrf.mxu0
        %v5908 = vadd.f32 0.0, %v5907
        %5909 = vmatmul.f32.gmra.mxu0 %v5670
        %v5910 = vpop.f32.mrf.mxu0
        %v5911 = vadd.f32 0.0, %v5910
        %5912 = vmatmul.f32.gmra.mxu0 %v5671
        %v5913 = vpop.f32.mrf.mxu0
        %v5914 = vadd.f32 0.0, %v5913
        %5915 = vmatmul.f32.gmra.mxu0 %v5672
        %v5916 = vpop.f32.mrf.mxu0
        %v5917 = vadd.f32 0.0, %v5916
        %5918 = vmatmul.f32.gmra.mxu0 %v5673
        %v5919 = vpop.f32.mrf.mxu0
        %v5920 = vadd.f32 0.0, %v5919
        %5921 = vmatmul.f32.gmra.mxu0 %v5674
        %v5922 = vpop.f32.mrf.mxu0
        %v5923 = vadd.f32 0.0, %v5922
        %5924 = vmatmul.f32.gmra.mxu0 %v5675
        %v5925 = vpop.f32.mrf.mxu0
        %v5926 = vadd.f32 0.0, %v5925
        %5927 = vmatmul.f32.gmra.mxu0 %v5676
        %v5928 = vpop.f32.mrf.mxu0
        %v5929 = vadd.f32 0.0, %v5928
        %5930 = vmatmul.f32.gmra.mxu0 %v5677
        %v5931 = vpop.f32.mrf.mxu0
        %v5932 = vadd.f32 0.0, %v5931
        %5933 = vmatmul.f32.gmra.mxu0 %v5678
        %v5934 = vpop.f32.mrf.mxu0
        %v5935 = vadd.f32 0.0, %v5934
        %5936 = vmatmul.f32.gmra.mxu0 %v5679
        %v5937 = vpop.f32.mrf.mxu0
        %v5938 = vadd.f32 0.0, %v5937
        %5939 = vmatmul.f32.gmra.mxu0 %v5680
        %v5940 = vpop.f32.mrf.mxu0
        %v5941 = vadd.f32 0.0, %v5940
        %5942 = vmatmul.f32.gmra.mxu0 %v5681
        %v5943 = vpop.f32.mrf.mxu0
        %v5944 = vadd.f32 0.0, %v5943
        %5945 = vmatmul.f32.gmra.mxu0 %v5682
        %v5946 = vpop.f32.mrf.mxu0
        %v5947 = vadd.f32 0.0, %v5946
        %5948 = vmatmul.f32.gmra.mxu0 %v5683
        %v5949 = vpop.f32.mrf.mxu0
        %v5950 = vadd.f32 0.0, %v5949
        %5951 = vmatmul.f32.gmra.mxu0 %v5684
        %v5952 = vpop.f32.mrf.mxu0
        %v5953 = vadd.f32 0.0, %v5952
        %5954 = vmatmul.f32.gmra.mxu0 %v5685
        %v5955 = vpop.f32.mrf.mxu0
        %v5956 = vadd.f32 0.0, %v5955
        %5957 = vmatmul.f32.gmra.mxu0 %v5686
        %v5958 = vpop.f32.mrf.mxu0
        %v5959 = vadd.f32 0.0, %v5958
        %5960 = vmatmul.f32.gmra.mxu0 %v5687
        %v5961 = vpop.f32.mrf.mxu0
        %v5962 = vadd.f32 0.0, %v5961
        %5963 = vmatmul.f32.gmra.mxu0 %v5688
        %v5964 = vpop.f32.mrf.mxu0
        %v5965 = vadd.f32 0.0, %v5964
        %5966 = vmatmul.f32.gmra.mxu0 %v5689
        %v5967 = vpop.f32.mrf.mxu0
        %v5968 = vadd.f32 0.0, %v5967
        %5969 = vmatmul.f32.gmra.mxu0 %v5690
        %v5970 = vpop.f32.mrf.mxu0
        %v5971 = vadd.f32 0.0, %v5970
        %5972 = vmatmul.f32.gmra.mxu0 %v5691
        %v5973 = vpop.f32.mrf.mxu0
        %v5974 = vadd.f32 0.0, %v5973
        %5975 = vmatmul.f32.gmra.mxu0 %v5692
        %v5976 = vpop.f32.mrf.mxu0
        %v5977 = vadd.f32 0.0, %v5976
        %5978 = vmatmul.f32.gmra.mxu0 %v5693
        %v5979 = vpop.f32.mrf.mxu0
        %v5980 = vadd.f32 0.0, %v5979
        %5981 = vmatmul.f32.gmra.mxu0 %v5694
        %v5982 = vpop.f32.mrf.mxu0
        %v5983 = vadd.f32 0.0, %v5982
        %5984 = vmatmul.f32.gmra.mxu0 %v5695
        %v5985 = vpop.f32.mrf.mxu0
        %v5986 = vadd.f32 0.0, %v5985
        %5987 = vmatmul.f32.gmra.mxu0 %v5696
        %v5988 = vpop.f32.mrf.mxu0
        %v5989 = vadd.f32 0.0, %v5988
        %5990 = vmatmul.f32.gmra.mxu0 %v5697
        %v5991 = vpop.f32.mrf.mxu0
        %v5992 = vadd.f32 0.0, %v5991
        %5993 = vmatmul.f32.gmra.mxu0 %v5698
        %v5994 = vpop.f32.mrf.mxu0
        %v5995 = vadd.f32 0.0, %v5994
        %5996 = vmatmul.f32.gmra.mxu0 %v5699
        %v5997 = vpop.f32.mrf.mxu0
        %v5998 = vadd.f32 0.0, %v5997
        %5999 = vmatmul.f32.gmra.mxu0 %v5700
        %v6000 = vpop.f32.mrf.mxu0
        %v6001 = vadd.f32 0.0, %v6000
        %6002 = vmatmul.f32.gmra.mxu0 %v5701
        %v6003 = vpop.f32.mrf.mxu0
        %v6004 = vadd.f32 0.0, %v6003
        %6005 = vmatmul.f32.gmra.mxu0 %v5702
        %v6006 = vpop.f32.mrf.mxu0
        %v6007 = vadd.f32 0.0, %v6006
        %6008 = vmatmul.f32.gmra.mxu0 %v5703
        %v6009 = vpop.f32.mrf.mxu0
        %v6010 = vadd.f32 0.0, %v6009
        %6011 = vmatmul.f32.gmra.mxu0 %v5704
        %v6012 = vpop.f32.mrf.mxu0
        %v6013 = vadd.f32 0.0, %v6012
        %6014 = vmatmul.f32.gmra.mxu0 %v5705
        %v6015 = vpop.f32.mrf.mxu0
        %v6016 = vadd.f32 0.0, %v6015
        %6017 = vmatmul.f32.gmra.mxu0 %v5706
        %v6018 = vpop.f32.mrf.mxu0
        %v6019 = vadd.f32 0.0, %v6018
        %6020 = vmatmul.f32.gmra.mxu0 %v5707
        %v6021 = vpop.f32.mrf.mxu0
        %v6022 = vadd.f32 0.0, %v6021
        %6023 = vmatmul.f32.gmra.mxu0 %v5708
        %v6024 = vpop.f32.mrf.mxu0
        %v6025 = vadd.f32 0.0, %v6024
        %6026 = vmatmul.f32.gmra.mxu0 %v5709
        %v6027 = vpop.f32.mrf.mxu0
        %v6028 = vadd.f32 0.0, %v6027
        %6029 = vmatmul.f32.gmra.mxu0 %v5710
        %v6030 = vpop.f32.mrf.mxu0
        %v6031 = vadd.f32 0.0, %v6030
        %6032 = vmatmul.f32.gmra.mxu0 %v5711
        %v6033 = vpop.f32.mrf.mxu0
        %v6034 = vadd.f32 0.0, %v6033
        %6035 = vmatmul.f32.gmra.mxu0 %v5712
        %v6036 = vpop.f32.mrf.mxu0
        %v6037 = vadd.f32 0.0, %v6036
        %6038 = vmatmul.f32.gmra.mxu0 %v5713
        %v6039 = vpop.f32.mrf.mxu0
        %v6040 = vadd.f32 0.0, %v6039
        %6041 = vmatmul.f32.gmra.mxu0 %v5714
        %v6042 = vpop.f32.mrf.mxu0
        %v6043 = vadd.f32 0.0, %v6042
        %6044 = vmatmul.f32.gmra.mxu0 %v5715
        %v6045 = vpop.f32.mrf.mxu0
        %v6046 = vadd.f32 0.0, %v6045
        %6047 = vmatmul.f32.gmra.mxu0 %v5716
        %v6048 = vpop.f32.mrf.mxu0
        %v6049 = vadd.f32 0.0, %v6048
        %6050 = vmatmul.f32.gmra.mxu0 %v5717
        %v6051 = vpop.f32.mrf.mxu0
        %v6052 = vadd.f32 0.0, %v6051
        %6053 = vmatmul.f32.gmra.mxu0 %v5718
        %v6054 = vpop.f32.mrf.mxu0
        %v6055 = vadd.f32 0.0, %v6054
        %6056 = vmatmul.f32.gmra.mxu0 %v5719
        %v6057 = vpop.f32.mrf.mxu0
        %v6058 = vadd.f32 0.0, %v6057
        %6059 = vmatmul.f32.gmra.mxu0 %v5720
        %v6060 = vpop.f32.mrf.mxu0
        %v6061 = vadd.f32 0.0, %v6060
        %6062 = vmatmul.f32.gmra.mxu0 %v5721
        %v6063 = vpop.f32.mrf.mxu0
        %v6064 = vadd.f32 0.0, %v6063
        %6065 = vmatmul.f32.gmra.mxu0 %v5722
        %v6066 = vpop.f32.mrf.mxu0
        %v6067 = vadd.f32 0.0, %v6066
        %6068 = vmatmul.f32.gmra.mxu0 %v5723
        %v6069 = vpop.f32.mrf.mxu0
        %v6070 = vadd.f32 0.0, %v6069
        %6071 = vmatmul.f32.gmra.mxu0 %v5724
        %v6072 = vpop.f32.mrf.mxu0
        %v6073 = vadd.f32 0.0, %v6072
        %6074 = vmatmul.f32.gmra.mxu0 %v5725
        %v6075 = vpop.f32.mrf.mxu0
        %v6076 = vadd.f32 0.0, %v6075
        %6077 = vmatmul.f32.gmra.mxu0 %v5726
        %v6078 = vpop.f32.mrf.mxu0
        %v6079 = vadd.f32 0.0, %v6078
        %6080 = vmatmul.f32.gmra.mxu0 %v5727
        %v6081 = vpop.f32.mrf.mxu0
        %v6082 = vadd.f32 0.0, %v6081
        %6083 = vmatmul.f32.gmra.mxu0 %v5728
        %v6084 = vpop.f32.mrf.mxu0
        %v6085 = vadd.f32 0.0, %v6084
        %6086 = vmatmul.f32.gmra.mxu0 %v5729
        %v6087 = vpop.f32.mrf.mxu0
        %v6088 = vadd.f32 0.0, %v6087
        %6089 = vmatmul.f32.gmra.mxu0 %v5730
        %v6090 = vpop.f32.mrf.mxu0
        %v6091 = vadd.f32 0.0, %v6090
        %6092 = vmatmul.f32.gmra.mxu0 %v5731
        %v6093 = vpop.f32.mrf.mxu0
        %v6094 = vadd.f32 0.0, %v6093
        %6095 = vmatmul.f32.gmra.mxu0 %v5732
        %v6096 = vpop.f32.mrf.mxu0
        %v6097 = vadd.f32 0.0, %v6096
        %6098 = vmatmul.f32.gmra.mxu0 %v5733
        %v6099 = vpop.f32.mrf.mxu0
        %v6100 = vadd.f32 0.0, %v6099
        %6101 = vmatmul.f32.gmra.mxu0 %v5734
        %v6102 = vpop.f32.mrf.mxu0
        %v6103 = vadd.f32 0.0, %v6102
        %6104 = vmatmul.f32.gmra.mxu0 %v5735
        %v6105 = vpop.f32.mrf.mxu0
        %v6106 = vadd.f32 0.0, %v6105
        %6107 = vmatmul.f32.gmra.mxu0 %v5736
        %v6108 = vpop.f32.mrf.mxu0
        %v6109 = vadd.f32 0.0, %v6108
        %6110 = vmatmul.f32.gmra.mxu0 %v5737
        %v6111 = vpop.f32.mrf.mxu0
        %v6112 = vadd.f32 0.0, %v6111
        %6113 = vmatmul.f32.gmra.mxu0 %v5738
        %v6114 = vpop.f32.mrf.mxu0
        %v6115 = vadd.f32 0.0, %v6114
        %6116 = vmatmul.f32.gmra.mxu0 %v5739
        %v6117 = vpop.f32.mrf.mxu0
        %v6118 = vadd.f32 0.0, %v6117
        %6119 = vmatmul.f32.gmra.mxu0 %v5740
        %v6120 = vpop.f32.mrf.mxu0
        %v6121 = vadd.f32 0.0, %v6120
        %6122 = vmatmul.f32.gmra.mxu0 %v5741
        %v6123 = vpop.f32.mrf.mxu0
        %v6124 = vadd.f32 0.0, %v6123
        %6125 = vmatmul.f32.gmra.mxu0 %v5742
        %v6126 = vpop.f32.mrf.mxu0
        %v6127 = vadd.f32 0.0, %v6126
        %6128 = vmatmul.f32.gmra.mxu0 %v5743
        %v6129 = vpop.f32.mrf.mxu0
        %v6130 = vadd.f32 0.0, %v6129
        %6131 = vmatmul.f32.gmra.mxu0 %v5744
        %v6132 = vpop.f32.mrf.mxu0
        %v6133 = vadd.f32 0.0, %v6132
        %6134 = vmatmul.f32.gmra.mxu0 %v5745
        %v6135 = vpop.f32.mrf.mxu0
        %v6136 = vadd.f32 0.0, %v6135
        %6137 = vmatmul.f32.gmra.mxu0 %v5746
        %v6138 = vpop.f32.mrf.mxu0
        %v6139 = vadd.f32 0.0, %v6138
        %6140 = vmatmul.f32.gmra.mxu0 %v5747
        %v6141 = vpop.f32.mrf.mxu0
        %v6142 = vadd.f32 0.0, %v6141
        %6143 = vmatmul.f32.gmra.mxu0 %v5748
        %v6144 = vpop.f32.mrf.mxu0
        %v6145 = vadd.f32 0.0, %v6144
        %6146 = vmatmul.f32.gmra.mxu0 %v5749
        %v6147 = vpop.f32.mrf.mxu0
        %v6148 = vadd.f32 0.0, %v6147
        %6149 = vmatmul.f32.gmra.mxu0 %v5750
        %v6150 = vpop.f32.mrf.mxu0
        %v6151 = vadd.f32 0.0, %v6150
        %6152 = vmatmul.f32.gmra.mxu0 %v5751
        %v6153 = vpop.f32.mrf.mxu0
        %v6154 = vadd.f32 0.0, %v6153
        %6155 = vmatmul.f32.gmra.mxu0 %v5752
        %v6156 = vpop.f32.mrf.mxu0
        %v6157 = vadd.f32 0.0, %v6156
        %6158 = vmatmul.f32.gmra.mxu0 %v5753
        %v6159 = vpop.f32.mrf.mxu0
        %v6160 = vadd.f32 0.0, %v6159
        %6161 = vmatmul.f32.gmra.mxu0 %v5754
        %v6162 = vpop.f32.mrf.mxu0
        %v6163 = vadd.f32 0.0, %v6162
        %6164 = vmatmul.f32.gmra.mxu0 %v5755
        %v6165 = vpop.f32.mrf.mxu0
        %v6166 = vadd.f32 0.0, %v6165
        %6167 = vmatmul.f32.gmra.mxu0 %v5756
        %v6168 = vpop.f32.mrf.mxu0
        %v6169 = vadd.f32 0.0, %v6168
        %6170 = vmatmul.f32.gmra.mxu0 %v5757
        %v6171 = vpop.f32.mrf.mxu0
        %v6172 = vadd.f32 0.0, %v6171
        %6173 = vmatmul.f32.gmra.mxu0 %v5758
        %v6174 = vpop.f32.mrf.mxu0
        %v6175 = vadd.f32 0.0, %v6174
        %6176 = vmatmul.f32.gmra.mxu0 %v5759
        %v6177 = vpop.f32.mrf.mxu0
        %v6178 = vadd.f32 0.0, %v6177
        %6179 = vmatmul.f32.gmra.mxu0 %v5760
        %v6180 = vpop.f32.mrf.mxu0
        %v6181 = vadd.f32 0.0, %v6180
        %6182 = vmatmul.f32.gmra.mxu0 %v5761
        %v6183 = vpop.f32.mrf.mxu0
        %v6184 = vadd.f32 0.0, %v6183
        %6185 = vmatmul.f32.gmra.mxu0 %v5762
        %v6186 = vpop.f32.mrf.mxu0
        %v6187 = vadd.f32 0.0, %v6186
        %6188 = vmatmul.f32.gmra.mxu0 %v5763
        %v6189 = vpop.f32.mrf.mxu0
        %v6190 = vadd.f32 0.0, %v6189
        %6191 = vmatmul.f32.gmra.mxu0 %v5764
        %v6192 = vpop.f32.mrf.mxu0
        %v6193 = vadd.f32 0.0, %v6192
        %6194 = vmatmul.f32.gmra.mxu0 %v5765
        %v6195 = vpop.f32.mrf.mxu0
        %v6196 = vadd.f32 0.0, %v6195
        %6197 = vmatmul.f32.gmra.mxu0 %v5766
        %v6198 = vpop.f32.mrf.mxu0
        %v6199 = vadd.f32 0.0, %v6198
        %6200 = vmatmul.f32.gmra.mxu0 %v5767
        %v6201 = vpop.f32.mrf.mxu0
        %v6202 = vadd.f32 0.0, %v6201
        %6203 = vmatmul.f32.gmra.mxu0 %v5768
        %v6204 = vpop.f32.mrf.mxu0
        %v6205 = vadd.f32 0.0, %v6204
        %6206 = vmatmul.f32.gmra.mxu0 %v5769
        %v6207 = vpop.f32.mrf.mxu0
        %v6208 = vadd.f32 0.0, %v6207
        %6209 = vmatmul.f32.gmra.mxu0 %v5770
        %v6210 = vpop.f32.mrf.mxu0
        %v6211 = vadd.f32 0.0, %v6210
        %6212 = vdwg.mxu0
        %v6213 = vadd.f32 %v5499, %v5806
        %v6214 = vadd.f32 %v5500, %v5809
        %v6215 = vadd.f32 %v5501, %v5812
        %v6216 = vadd.f32 %v5502, %v5815
        %v6217 = vadd.f32 %v5503, %v5818
        %v6218 = vadd.f32 %v5504, %v5821
        %v6219 = vadd.f32 %v5505, %v5824
        %v6220 = vadd.f32 %v5506, %v5827
        %v6221 = vadd.f32 %v5507, %v5830
        %v6222 = vadd.f32 %v5508, %v5833
        %v6223 = vadd.f32 %v5509, %v5836
        %v6224 = vadd.f32 %v5510, %v5839
        %v6225 = vadd.f32 %v5511, %v5842
        %v6226 = vadd.f32 %v5512, %v5845
        %v6227 = vadd.f32 %v5513, %v5848
        %v6228 = vadd.f32 %v5514, %v5851
        %v6229 = vadd.f32 %v5515, %v5854
        %v6230 = vadd.f32 %v5516, %v5857
        %v6231 = vadd.f32 %v5517, %v5860
        %v6232 = vadd.f32 %v5518, %v5863
        %v6233 = vadd.f32 %v5519, %v5866
        %v6234 = vadd.f32 %v5520, %v5869
        %v6235 = vadd.f32 %v5521, %v5872
        %v6236 = vadd.f32 %v5522, %v5875
        %v6237 = vadd.f32 %v5523, %v5878
        %v6238 = vadd.f32 %v5524, %v5881
        %v6239 = vadd.f32 %v5525, %v5884
        %v6240 = vadd.f32 %v5526, %v5887
        %v6241 = vadd.f32 %v5527, %v5890
        %v6242 = vadd.f32 %v5528, %v5893
        %v6243 = vadd.f32 %v5529, %v5896
        %v6244 = vadd.f32 %v5530, %v5899
        %v6245 = vadd.f32 %v5531, %v5902
        %v6246 = vadd.f32 %v5532, %v5905
        %v6247 = vadd.f32 %v5533, %v5908
        %v6248 = vadd.f32 %v5534, %v5911
        %v6249 = vadd.f32 %v5535, %v5914
        %v6250 = vadd.f32 %v5536, %v5917
        %v6251 = vadd.f32 %v5537, %v5920
        %v6252 = vadd.f32 %v5538, %v5923
        %v6253 = vadd.f32 %v5539, %v5926
        %v6254 = vadd.f32 %v5540, %v5929
        %v6255 = vadd.f32 %v5541, %v5932
        %v6256 = vadd.f32 %v5542, %v5935
        %v6257 = vadd.f32 %v5543, %v5938
        %v6258 = vadd.f32 %v5544, %v5941
        %v6259 = vadd.f32 %v5545, %v5944
        %v6260 = vadd.f32 %v5546, %v5947
        %v6261 = vadd.f32 %v5547, %v5950
        %v6262 = vadd.f32 %v5548, %v5953
        %v6263 = vadd.f32 %v5549, %v5956
        %v6264 = vadd.f32 %v5550, %v5959
        %v6265 = vadd.f32 %v5551, %v5962
        %v6266 = vadd.f32 %v5552, %v5965
        %v6267 = vadd.f32 %v5553, %v5968
        %v6268 = vadd.f32 %v5554, %v5971
        %v6269 = vadd.f32 %v5555, %v5974
        %v6270 = vadd.f32 %v5556, %v5977
        %v6271 = vadd.f32 %v5557, %v5980
        %v6272 = vadd.f32 %v5558, %v5983
        %v6273 = vadd.f32 %v5559, %v5986
        %v6274 = vadd.f32 %v5560, %v5989
        %v6275 = vadd.f32 %v5561, %v5992
        %v6276 = vadd.f32 %v5562, %v5995
        %v6277 = vadd.f32 %v5563, %v5998
        %v6278 = vadd.f32 %v5564, %v6001
        %v6279 = vadd.f32 %v5565, %v6004
        %v6280 = vadd.f32 %v5566, %v6007
        %v6281 = vadd.f32 %v5567, %v6010
        %v6282 = vadd.f32 %v5568, %v6013
        %v6283 = vadd.f32 %v5569, %v6016
        %v6284 = vadd.f32 %v5570, %v6019
        %v6285 = vadd.f32 %v5571, %v6022
        %v6286 = vadd.f32 %v5572, %v6025
        %v6287 = vadd.f32 %v5573, %v6028
        %v6288 = vadd.f32 %v5574, %v6031
        %v6289 = vadd.f32 %v5575, %v6034
        %v6290 = vadd.f32 %v5576, %v6037
        %v6291 = vadd.f32 %v5577, %v6040
        %v6292 = vadd.f32 %v5578, %v6043
        %v6293 = vadd.f32 %v5579, %v6046
        %v6294 = vadd.f32 %v5580, %v6049
        %v6295 = vadd.f32 %v5581, %v6052
        %v6296 = vadd.f32 %v5582, %v6055
        %v6297 = vadd.f32 %v5583, %v6058
        %v6298 = vadd.f32 %v5584, %v6061
        %v6299 = vadd.f32 %v5585, %v6064
        %v6300 = vadd.f32 %v5586, %v6067
        %v6301 = vadd.f32 %v5587, %v6070
        %v6302 = vadd.f32 %v5588, %v6073
        %v6303 = vadd.f32 %v5589, %v6076
        %v6304 = vadd.f32 %v5590, %v6079
        %v6305 = vadd.f32 %v5591, %v6082
        %v6306 = vadd.f32 %v5592, %v6085
        %v6307 = vadd.f32 %v5593, %v6088
        %v6308 = vadd.f32 %v5594, %v6091
        %v6309 = vadd.f32 %v5595, %v6094
        %v6310 = vadd.f32 %v5596, %v6097
        %v6311 = vadd.f32 %v5597, %v6100
        %v6312 = vadd.f32 %v5598, %v6103
        %v6313 = vadd.f32 %v5599, %v6106
        %v6314 = vadd.f32 %v5600, %v6109
        %v6315 = vadd.f32 %v5601, %v6112
        %v6316 = vadd.f32 %v5602, %v6115
        %v6317 = vadd.f32 %v5603, %v6118
        %v6318 = vadd.f32 %v5604, %v6121
        %v6319 = vadd.f32 %v5605, %v6124
        %v6320 = vadd.f32 %v5606, %v6127
        %v6321 = vadd.f32 %v5607, %v6130
        %v6322 = vadd.f32 %v5608, %v6133
        %v6323 = vadd.f32 %v5609, %v6136
        %v6324 = vadd.f32 %v5610, %v6139
        %v6325 = vadd.f32 %v5611, %v6142
        %v6326 = vadd.f32 %v5612, %v6145
        %v6327 = vadd.f32 %v5613, %v6148
        %v6328 = vadd.f32 %v5614, %v6151
        %v6329 = vadd.f32 %v5615, %v6154
        %v6330 = vadd.f32 %v5616, %v6157
        %v6331 = vadd.f32 %v5617, %v6160
        %v6332 = vadd.f32 %v5618, %v6163
        %v6333 = vadd.f32 %v5619, %v6166
        %v6334 = vadd.f32 %v5620, %v6169
        %v6335 = vadd.f32 %v5621, %v6172
        %v6336 = vadd.f32 %v5622, %v6175
        %v6337 = vadd.f32 %v5623, %v6178
        %v6338 = vadd.f32 %v5624, %v6181
        %v6339 = vadd.f32 %v5625, %v6184
        %v6340 = vadd.f32 %v5626, %v6187
        %v6341 = vadd.f32 %v5627, %v6190
        %v6342 = vadd.f32 %v5628, %v6193
        %v6343 = vadd.f32 %v5629, %v6196
        %v6344 = vadd.f32 %v5630, %v6199
        %v6345 = vadd.f32 %v5631, %v6202
        %v6346 = vadd.f32 %v5632, %v6205
        %v6347 = vadd.f32 %v5633, %v6208
        %v6348 = vadd.f32 %v5634, %v6211
        %v6349 = vld [vmem:[%s2] sm:$0x1]
        %v6351 = vperm.slane %v6349, 0
        %v6353 = vmul.f32 %v6213, %v6351
        %v6354 = vmul.f32 %v6214, %v6351
        %v6355 = vmul.f32 %v6215, %v6351
        %v6356 = vmul.f32 %v6216, %v6351
        %v6357 = vmul.f32 %v6217, %v6351
        %v6358 = vmul.f32 %v6218, %v6351
        %v6359 = vmul.f32 %v6219, %v6351
        %v6360 = vmul.f32 %v6220, %v6351
        %v6361 = vmul.f32 %v6221, %v6351
        %v6362 = vmul.f32 %v6222, %v6351
        %v6363 = vmul.f32 %v6223, %v6351
        %v6364 = vmul.f32 %v6224, %v6351
        %v6365 = vmul.f32 %v6225, %v6351
        %v6366 = vmul.f32 %v6226, %v6351
        %v6367 = vmul.f32 %v6227, %v6351
        %v6368 = vmul.f32 %v6228, %v6351
        %v6369 = vmul.f32 %v6229, %v6351
        %v6370 = vmul.f32 %v6230, %v6351
        %v6371 = vmul.f32 %v6231, %v6351
        %v6372 = vmul.f32 %v6232, %v6351
        %v6373 = vmul.f32 %v6233, %v6351
        %v6374 = vmul.f32 %v6234, %v6351
        %v6375 = vmul.f32 %v6235, %v6351
        %v6376 = vmul.f32 %v6236, %v6351
        %v6377 = vmul.f32 %v6237, %v6351
        %v6378 = vmul.f32 %v6238, %v6351
        %v6379 = vmul.f32 %v6239, %v6351
        %v6380 = vmul.f32 %v6240, %v6351
        %v6381 = vmul.f32 %v6241, %v6351
        %v6382 = vmul.f32 %v6242, %v6351
        %v6383 = vmul.f32 %v6243, %v6351
        %v6384 = vmul.f32 %v6244, %v6351
        %v6385 = vmul.f32 %v6245, %v6351
        %v6386 = vmul.f32 %v6246, %v6351
        %v6387 = vmul.f32 %v6247, %v6351
        %v6388 = vmul.f32 %v6248, %v6351
        %v6389 = vmul.f32 %v6249, %v6351
        %v6390 = vmul.f32 %v6250, %v6351
        %v6391 = vmul.f32 %v6251, %v6351
        %v6392 = vmul.f32 %v6252, %v6351
        %v6393 = vmul.f32 %v6253, %v6351
        %v6394 = vmul.f32 %v6254, %v6351
        %v6395 = vmul.f32 %v6255, %v6351
        %v6396 = vmul.f32 %v6256, %v6351
        %v6397 = vmul.f32 %v6257, %v6351
        %v6398 = vmul.f32 %v6258, %v6351
        %v6399 = vmul.f32 %v6259, %v6351
        %v6400 = vmul.f32 %v6260, %v6351
        %v6401 = vmul.f32 %v6261, %v6351
        %v6402 = vmul.f32 %v6262, %v6351
        %v6403 = vmul.f32 %v6263, %v6351
        %v6404 = vmul.f32 %v6264, %v6351
        %v6405 = vmul.f32 %v6265, %v6351
        %v6406 = vmul.f32 %v6266, %v6351
        %v6407 = vmul.f32 %v6267, %v6351
        %v6408 = vmul.f32 %v6268, %v6351
        %v6409 = vmul.f32 %v6269, %v6351
        %v6410 = vmul.f32 %v6270, %v6351
        %v6411 = vmul.f32 %v6271, %v6351
        %v6412 = vmul.f32 %v6272, %v6351
        %v6413 = vmul.f32 %v6273, %v6351
        %v6414 = vmul.f32 %v6274, %v6351
        %v6415 = vmul.f32 %v6275, %v6351
        %v6416 = vmul.f32 %v6276, %v6351
        %v6417 = vmul.f32 %v6277, %v6351
        %v6418 = vmul.f32 %v6278, %v6351
        %v6419 = vmul.f32 %v6279, %v6351
        %v6420 = vmul.f32 %v6280, %v6351
        %v6421 = vmul.f32 %v6281, %v6351
        %v6422 = vmul.f32 %v6282, %v6351
        %v6423 = vmul.f32 %v6283, %v6351
        %v6424 = vmul.f32 %v6284, %v6351
        %v6425 = vmul.f32 %v6285, %v6351
        %v6426 = vmul.f32 %v6286, %v6351
        %v6427 = vmul.f32 %v6287, %v6351
        %v6428 = vmul.f32 %v6288, %v6351
        %v6429 = vmul.f32 %v6289, %v6351
        %v6430 = vmul.f32 %v6290, %v6351
        %v6431 = vmul.f32 %v6291, %v6351
        %v6432 = vmul.f32 %v6292, %v6351
        %v6433 = vmul.f32 %v6293, %v6351
        %v6434 = vmul.f32 %v6294, %v6351
        %v6435 = vmul.f32 %v6295, %v6351
        %v6436 = vmul.f32 %v6296, %v6351
        %v6437 = vmul.f32 %v6297, %v6351
        %v6438 = vmul.f32 %v6298, %v6351
        %v6439 = vmul.f32 %v6299, %v6351
        %v6440 = vmul.f32 %v6300, %v6351
        %v6441 = vmul.f32 %v6301, %v6351
        %v6442 = vmul.f32 %v6302, %v6351
        %v6443 = vmul.f32 %v6303, %v6351
        %v6444 = vmul.f32 %v6304, %v6351
        %v6445 = vmul.f32 %v6305, %v6351
        %v6446 = vmul.f32 %v6306, %v6351
        %v6447 = vmul.f32 %v6307, %v6351
        %v6448 = vmul.f32 %v6308, %v6351
        %v6449 = vmul.f32 %v6309, %v6351
        %v6450 = vmul.f32 %v6310, %v6351
        %v6451 = vmul.f32 %v6311, %v6351
        %v6452 = vmul.f32 %v6312, %v6351
        %v6453 = vmul.f32 %v6313, %v6351
        %v6454 = vmul.f32 %v6314, %v6351
        %v6455 = vmul.f32 %v6315, %v6351
        %v6456 = vmul.f32 %v6316, %v6351
        %v6457 = vmul.f32 %v6317, %v6351
        %v6458 = vmul.f32 %v6318, %v6351
        %v6459 = vmul.f32 %v6319, %v6351
        %v6460 = vmul.f32 %v6320, %v6351
        %v6461 = vmul.f32 %v6321, %v6351
        %v6462 = vmul.f32 %v6322, %v6351
        %v6463 = vmul.f32 %v6323, %v6351
        %v6464 = vmul.f32 %v6324, %v6351
        %v6465 = vmul.f32 %v6325, %v6351
        %v6466 = vmul.f32 %v6326, %v6351
        %v6467 = vmul.f32 %v6327, %v6351
        %v6468 = vmul.f32 %v6328, %v6351
        %v6469 = vmul.f32 %v6329, %v6351
        %v6470 = vmul.f32 %v6330, %v6351
        %v6471 = vmul.f32 %v6331, %v6351
        %v6472 = vmul.f32 %v6332, %v6351
        %v6473 = vmul.f32 %v6333, %v6351
        %v6474 = vmul.f32 %v6334, %v6351
        %v6475 = vmul.f32 %v6335, %v6351
        %v6476 = vmul.f32 %v6336, %v6351
        %v6477 = vmul.f32 %v6337, %v6351
        %v6478 = vmul.f32 %v6338, %v6351
        %v6479 = vmul.f32 %v6339, %v6351
        %v6480 = vmul.f32 %v6340, %v6351
        %v6481 = vmul.f32 %v6341, %v6351
        %v6482 = vmul.f32 %v6342, %v6351
        %v6483 = vmul.f32 %v6343, %v6351
        %v6484 = vmul.f32 %v6344, %v6351
        %v6485 = vmul.f32 %v6345, %v6351
        %v6486 = vmul.f32 %v6346, %v6351
        %v6487 = vmul.f32 %v6347, %v6351
        %v6488 = vmul.f32 %v6348, %v6351
        %v6489 = vld [vmem:[%s3] sm:$0x1]
        %v6491 = vperm.slane %v6489, 0
        %v6493 = vadd.f32 %v6353, %v6491
        %v6494 = vadd.f32 %v6354, %v6491
        %v6495 = vadd.f32 %v6355, %v6491
        %v6496 = vadd.f32 %v6356, %v6491
        %v6497 = vadd.f32 %v6357, %v6491
        %v6498 = vadd.f32 %v6358, %v6491
        %v6499 = vadd.f32 %v6359, %v6491
        %v6500 = vadd.f32 %v6360, %v6491
        %v6501 = vadd.f32 %v6361, %v6491
        %v6502 = vadd.f32 %v6362, %v6491
        %v6503 = vadd.f32 %v6363, %v6491
        %v6504 = vadd.f32 %v6364, %v6491
        %v6505 = vadd.f32 %v6365, %v6491
        %v6506 = vadd.f32 %v6366, %v6491
        %v6507 = vadd.f32 %v6367, %v6491
        %v6508 = vadd.f32 %v6368, %v6491
        %v6509 = vadd.f32 %v6369, %v6491
        %v6510 = vadd.f32 %v6370, %v6491
        %v6511 = vadd.f32 %v6371, %v6491
        %v6512 = vadd.f32 %v6372, %v6491
        %v6513 = vadd.f32 %v6373, %v6491
        %v6514 = vadd.f32 %v6374, %v6491
        %v6515 = vadd.f32 %v6375, %v6491
        %v6516 = vadd.f32 %v6376, %v6491
        %v6517 = vadd.f32 %v6377, %v6491
        %v6518 = vadd.f32 %v6378, %v6491
        %v6519 = vadd.f32 %v6379, %v6491
        %v6520 = vadd.f32 %v6380, %v6491
        %v6521 = vadd.f32 %v6381, %v6491
        %v6522 = vadd.f32 %v6382, %v6491
        %v6523 = vadd.f32 %v6383, %v6491
        %v6524 = vadd.f32 %v6384, %v6491
        %v6525 = vadd.f32 %v6385, %v6491
        %v6526 = vadd.f32 %v6386, %v6491
        %v6527 = vadd.f32 %v6387, %v6491
        %v6528 = vadd.f32 %v6388, %v6491
        %v6529 = vadd.f32 %v6389, %v6491
        %v6530 = vadd.f32 %v6390, %v6491
        %v6531 = vadd.f32 %v6391, %v6491
        %v6532 = vadd.f32 %v6392, %v6491
        %v6533 = vadd.f32 %v6393, %v6491
        %v6534 = vadd.f32 %v6394, %v6491
        %v6535 = vadd.f32 %v6395, %v6491
        %v6536 = vadd.f32 %v6396, %v6491
        %v6537 = vadd.f32 %v6397, %v6491
        %v6538 = vadd.f32 %v6398, %v6491
        %v6539 = vadd.f32 %v6399, %v6491
        %v6540 = vadd.f32 %v6400, %v6491
        %v6541 = vadd.f32 %v6401, %v6491
        %v6542 = vadd.f32 %v6402, %v6491
        %v6543 = vadd.f32 %v6403, %v6491
        %v6544 = vadd.f32 %v6404, %v6491
        %v6545 = vadd.f32 %v6405, %v6491
        %v6546 = vadd.f32 %v6406, %v6491
        %v6547 = vadd.f32 %v6407, %v6491
        %v6548 = vadd.f32 %v6408, %v6491
        %v6549 = vadd.f32 %v6409, %v6491
        %v6550 = vadd.f32 %v6410, %v6491
        %v6551 = vadd.f32 %v6411, %v6491
        %v6552 = vadd.f32 %v6412, %v6491
        %v6553 = vadd.f32 %v6413, %v6491
        %v6554 = vadd.f32 %v6414, %v6491
        %v6555 = vadd.f32 %v6415, %v6491
        %v6556 = vadd.f32 %v6416, %v6491
        %v6557 = vadd.f32 %v6417, %v6491
        %v6558 = vadd.f32 %v6418, %v6491
        %v6559 = vadd.f32 %v6419, %v6491
        %v6560 = vadd.f32 %v6420, %v6491
        %v6561 = vadd.f32 %v6421, %v6491
        %v6562 = vadd.f32 %v6422, %v6491
        %v6563 = vadd.f32 %v6423, %v6491
        %v6564 = vadd.f32 %v6424, %v6491
        %v6565 = vadd.f32 %v6425, %v6491
        %v6566 = vadd.f32 %v6426, %v6491
        %v6567 = vadd.f32 %v6427, %v6491
        %v6568 = vadd.f32 %v6428, %v6491
        %v6569 = vadd.f32 %v6429, %v6491
        %v6570 = vadd.f32 %v6430, %v6491
        %v6571 = vadd.f32 %v6431, %v6491
        %v6572 = vadd.f32 %v6432, %v6491
        %v6573 = vadd.f32 %v6433, %v6491
        %v6574 = vadd.f32 %v6434, %v6491
        %v6575 = vadd.f32 %v6435, %v6491
        %v6576 = vadd.f32 %v6436, %v6491
        %v6577 = vadd.f32 %v6437, %v6491
        %v6578 = vadd.f32 %v6438, %v6491
        %v6579 = vadd.f32 %v6439, %v6491
        %v6580 = vadd.f32 %v6440, %v6491
        %v6581 = vadd.f32 %v6441, %v6491
        %v6582 = vadd.f32 %v6442, %v6491
        %v6583 = vadd.f32 %v6443, %v6491
        %v6584 = vadd.f32 %v6444, %v6491
        %v6585 = vadd.f32 %v6445, %v6491
        %v6586 = vadd.f32 %v6446, %v6491
        %v6587 = vadd.f32 %v6447, %v6491
        %v6588 = vadd.f32 %v6448, %v6491
        %v6589 = vadd.f32 %v6449, %v6491
        %v6590 = vadd.f32 %v6450, %v6491
        %v6591 = vadd.f32 %v6451, %v6491
        %v6592 = vadd.f32 %v6452, %v6491
        %v6593 = vadd.f32 %v6453, %v6491
        %v6594 = vadd.f32 %v6454, %v6491
        %v6595 = vadd.f32 %v6455, %v6491
        %v6596 = vadd.f32 %v6456, %v6491
        %v6597 = vadd.f32 %v6457, %v6491
        %v6598 = vadd.f32 %v6458, %v6491
        %v6599 = vadd.f32 %v6459, %v6491
        %v6600 = vadd.f32 %v6460, %v6491
        %v6601 = vadd.f32 %v6461, %v6491
        %v6602 = vadd.f32 %v6462, %v6491
        %v6603 = vadd.f32 %v6463, %v6491
        %v6604 = vadd.f32 %v6464, %v6491
        %v6605 = vadd.f32 %v6465, %v6491
        %v6606 = vadd.f32 %v6466, %v6491
        %v6607 = vadd.f32 %v6467, %v6491
        %v6608 = vadd.f32 %v6468, %v6491
        %v6609 = vadd.f32 %v6469, %v6491
        %v6610 = vadd.f32 %v6470, %v6491
        %v6611 = vadd.f32 %v6471, %v6491
        %v6612 = vadd.f32 %v6472, %v6491
        %v6613 = vadd.f32 %v6473, %v6491
        %v6614 = vadd.f32 %v6474, %v6491
        %v6615 = vadd.f32 %v6475, %v6491
        %v6616 = vadd.f32 %v6476, %v6491
        %v6617 = vadd.f32 %v6477, %v6491
        %v6618 = vadd.f32 %v6478, %v6491
        %v6619 = vadd.f32 %v6479, %v6491
        %v6620 = vadd.f32 %v6480, %v6491
        %v6621 = vadd.f32 %v6481, %v6491
        %v6622 = vadd.f32 %v6482, %v6491
        %v6623 = vadd.f32 %v6483, %v6491
        %v6624 = vadd.f32 %v6484, %v6491
        %v6625 = vadd.f32 %v6485, %v6491
        %v6626 = vadd.f32 %v6486, %v6491
        %v6627 = vadd.f32 %v6487, %v6491
        %v6628 = vadd.f32 %v6488, %v6491
        %vm6629 = vcmp.gt.f32.partialorder %v6493, 0.0
        %vm6630 = vcmp.gt.f32.partialorder %v6494, 0.0
        %vm6631 = vcmp.gt.f32.partialorder %v6495, 0.0
        %vm6632 = vcmp.gt.f32.partialorder %v6496, 0.0
        %vm6633 = vcmp.gt.f32.partialorder %v6497, 0.0
        %vm6634 = vcmp.gt.f32.partialorder %v6498, 0.0
        %vm6635 = vcmp.gt.f32.partialorder %v6499, 0.0
        %vm6636 = vcmp.gt.f32.partialorder %v6500, 0.0
        %vm6637 = vcmp.gt.f32.partialorder %v6501, 0.0
        %vm6638 = vcmp.gt.f32.partialorder %v6502, 0.0
        %vm6639 = vcmp.gt.f32.partialorder %v6503, 0.0
        %vm6640 = vcmp.gt.f32.partialorder %v6504, 0.0
        %vm6641 = vcmp.gt.f32.partialorder %v6505, 0.0
        %vm6642 = vcmp.gt.f32.partialorder %v6506, 0.0
        %vm6643 = vcmp.gt.f32.partialorder %v6507, 0.0
        %vm6644 = vcmp.gt.f32.partialorder %v6508, 0.0
        %vm6645 = vcmp.gt.f32.partialorder %v6509, 0.0
        %vm6646 = vcmp.gt.f32.partialorder %v6510, 0.0
        %vm6647 = vcmp.gt.f32.partialorder %v6511, 0.0
        %vm6648 = vcmp.gt.f32.partialorder %v6512, 0.0
        %vm6649 = vcmp.gt.f32.partialorder %v6513, 0.0
        %vm6650 = vcmp.gt.f32.partialorder %v6514, 0.0
        %vm6651 = vcmp.gt.f32.partialorder %v6515, 0.0
        %vm6652 = vcmp.gt.f32.partialorder %v6516, 0.0
        %vm6653 = vcmp.gt.f32.partialorder %v6517, 0.0
        %vm6654 = vcmp.gt.f32.partialorder %v6518, 0.0
        %vm6655 = vcmp.gt.f32.partialorder %v6519, 0.0
        %vm6656 = vcmp.gt.f32.partialorder %v6520, 0.0
        %vm6657 = vcmp.gt.f32.partialorder %v6521, 0.0
        %vm6658 = vcmp.gt.f32.partialorder %v6522, 0.0
        %vm6659 = vcmp.gt.f32.partialorder %v6523, 0.0
        %vm6660 = vcmp.gt.f32.partialorder %v6524, 0.0
        %vm6661 = vcmp.gt.f32.partialorder %v6525, 0.0
        %vm6662 = vcmp.gt.f32.partialorder %v6526, 0.0
        %vm6663 = vcmp.gt.f32.partialorder %v6527, 0.0
        %vm6664 = vcmp.gt.f32.partialorder %v6528, 0.0
        %vm6665 = vcmp.gt.f32.partialorder %v6529, 0.0
        %vm6666 = vcmp.gt.f32.partialorder %v6530, 0.0
        %vm6667 = vcmp.gt.f32.partialorder %v6531, 0.0
        %vm6668 = vcmp.gt.f32.partialorder %v6532, 0.0
        %vm6669 = vcmp.gt.f32.partialorder %v6533, 0.0
        %vm6670 = vcmp.gt.f32.partialorder %v6534, 0.0
        %vm6671 = vcmp.gt.f32.partialorder %v6535, 0.0
        %vm6672 = vcmp.gt.f32.partialorder %v6536, 0.0
        %vm6673 = vcmp.gt.f32.partialorder %v6537, 0.0
        %vm6674 = vcmp.gt.f32.partialorder %v6538, 0.0
        %vm6675 = vcmp.gt.f32.partialorder %v6539, 0.0
        %vm6676 = vcmp.gt.f32.partialorder %v6540, 0.0
        %vm6677 = vcmp.gt.f32.partialorder %v6541, 0.0
        %vm6678 = vcmp.gt.f32.partialorder %v6542, 0.0
        %vm6679 = vcmp.gt.f32.partialorder %v6543, 0.0
        %vm6680 = vcmp.gt.f32.partialorder %v6544, 0.0
        %vm6681 = vcmp.gt.f32.partialorder %v6545, 0.0
        %vm6682 = vcmp.gt.f32.partialorder %v6546, 0.0
        %vm6683 = vcmp.gt.f32.partialorder %v6547, 0.0
        %vm6684 = vcmp.gt.f32.partialorder %v6548, 0.0
        %vm6685 = vcmp.gt.f32.partialorder %v6549, 0.0
        %vm6686 = vcmp.gt.f32.partialorder %v6550, 0.0
        %vm6687 = vcmp.gt.f32.partialorder %v6551, 0.0
        %vm6688 = vcmp.gt.f32.partialorder %v6552, 0.0
        %vm6689 = vcmp.gt.f32.partialorder %v6553, 0.0
        %vm6690 = vcmp.gt.f32.partialorder %v6554, 0.0
        %vm6691 = vcmp.gt.f32.partialorder %v6555, 0.0
        %vm6692 = vcmp.gt.f32.partialorder %v6556, 0.0
        %vm6693 = vcmp.gt.f32.partialorder %v6557, 0.0
        %vm6694 = vcmp.gt.f32.partialorder %v6558, 0.0
        %vm6695 = vcmp.gt.f32.partialorder %v6559, 0.0
        %vm6696 = vcmp.gt.f32.partialorder %v6560, 0.0
        %vm6697 = vcmp.gt.f32.partialorder %v6561, 0.0
        %vm6698 = vcmp.gt.f32.partialorder %v6562, 0.0
        %vm6699 = vcmp.gt.f32.partialorder %v6563, 0.0
        %vm6700 = vcmp.gt.f32.partialorder %v6564, 0.0
        %vm6701 = vcmp.gt.f32.partialorder %v6565, 0.0
        %vm6702 = vcmp.gt.f32.partialorder %v6566, 0.0
        %vm6703 = vcmp.gt.f32.partialorder %v6567, 0.0
        %vm6704 = vcmp.gt.f32.partialorder %v6568, 0.0
        %vm6705 = vcmp.gt.f32.partialorder %v6569, 0.0
        %vm6706 = vcmp.gt.f32.partialorder %v6570, 0.0
        %vm6707 = vcmp.gt.f32.partialorder %v6571, 0.0
        %vm6708 = vcmp.gt.f32.partialorder %v6572, 0.0
        %vm6709 = vcmp.gt.f32.partialorder %v6573, 0.0
        %vm6710 = vcmp.gt.f32.partialorder %v6574, 0.0
        %vm6711 = vcmp.gt.f32.partialorder %v6575, 0.0
        %vm6712 = vcmp.gt.f32.partialorder %v6576, 0.0
        %vm6713 = vcmp.gt.f32.partialorder %v6577, 0.0
        %vm6714 = vcmp.gt.f32.partialorder %v6578, 0.0
        %vm6715 = vcmp.gt.f32.partialorder %v6579, 0.0
        %vm6716 = vcmp.gt.f32.partialorder %v6580, 0.0
        %vm6717 = vcmp.gt.f32.partialorder %v6581, 0.0
        %vm6718 = vcmp.gt.f32.partialorder %v6582, 0.0
        %vm6719 = vcmp.gt.f32.partialorder %v6583, 0.0
        %vm6720 = vcmp.gt.f32.partialorder %v6584, 0.0
        %vm6721 = vcmp.gt.f32.partialorder %v6585, 0.0
        %vm6722 = vcmp.gt.f32.partialorder %v6586, 0.0
        %vm6723 = vcmp.gt.f32.partialorder %v6587, 0.0
        %vm6724 = vcmp.gt.f32.partialorder %v6588, 0.0
        %vm6725 = vcmp.gt.f32.partialorder %v6589, 0.0
        %vm6726 = vcmp.gt.f32.partialorder %v6590, 0.0
        %vm6727 = vcmp.gt.f32.partialorder %v6591, 0.0
        %vm6728 = vcmp.gt.f32.partialorder %v6592, 0.0
        %vm6729 = vcmp.gt.f32.partialorder %v6593, 0.0
        %vm6730 = vcmp.gt.f32.partialorder %v6594, 0.0
        %vm6731 = vcmp.gt.f32.partialorder %v6595, 0.0
        %vm6732 = vcmp.gt.f32.partialorder %v6596, 0.0
        %vm6733 = vcmp.gt.f32.partialorder %v6597, 0.0
        %vm6734 = vcmp.gt.f32.partialorder %v6598, 0.0
        %vm6735 = vcmp.gt.f32.partialorder %v6599, 0.0
        %vm6736 = vcmp.gt.f32.partialorder %v6600, 0.0
        %vm6737 = vcmp.gt.f32.partialorder %v6601, 0.0
        %vm6738 = vcmp.gt.f32.partialorder %v6602, 0.0
        %vm6739 = vcmp.gt.f32.partialorder %v6603, 0.0
        %vm6740 = vcmp.gt.f32.partialorder %v6604, 0.0
        %vm6741 = vcmp.gt.f32.partialorder %v6605, 0.0
        %vm6742 = vcmp.gt.f32.partialorder %v6606, 0.0
        %vm6743 = vcmp.gt.f32.partialorder %v6607, 0.0
        %vm6744 = vcmp.gt.f32.partialorder %v6608, 0.0
        %vm6745 = vcmp.gt.f32.partialorder %v6609, 0.0
        %vm6746 = vcmp.gt.f32.partialorder %v6610, 0.0
        %vm6747 = vcmp.gt.f32.partialorder %v6611, 0.0
        %vm6748 = vcmp.gt.f32.partialorder %v6612, 0.0
        %vm6749 = vcmp.gt.f32.partialorder %v6613, 0.0
        %vm6750 = vcmp.gt.f32.partialorder %v6614, 0.0
        %vm6751 = vcmp.gt.f32.partialorder %v6615, 0.0
        %vm6752 = vcmp.gt.f32.partialorder %v6616, 0.0
        %vm6753 = vcmp.gt.f32.partialorder %v6617, 0.0
        %vm6754 = vcmp.gt.f32.partialorder %v6618, 0.0
        %vm6755 = vcmp.gt.f32.partialorder %v6619, 0.0
        %vm6756 = vcmp.gt.f32.partialorder %v6620, 0.0
        %vm6757 = vcmp.gt.f32.partialorder %v6621, 0.0
        %vm6758 = vcmp.gt.f32.partialorder %v6622, 0.0
        %vm6759 = vcmp.gt.f32.partialorder %v6623, 0.0
        %vm6760 = vcmp.gt.f32.partialorder %v6624, 0.0
        %vm6761 = vcmp.gt.f32.partialorder %v6625, 0.0
        %vm6762 = vcmp.gt.f32.partialorder %v6626, 0.0
        %vm6763 = vcmp.gt.f32.partialorder %v6627, 0.0
        %vm6764 = vcmp.gt.f32.partialorder %v6628, 0.0
        %v6765 = vmul.f32 %v6493, 0.1
        %v6766 = vmul.f32 %v6494, 0.1
        %v6767 = vmul.f32 %v6495, 0.1
        %v6768 = vmul.f32 %v6496, 0.1
        %v6769 = vmul.f32 %v6497, 0.1
        %v6770 = vmul.f32 %v6498, 0.1
        %v6771 = vmul.f32 %v6499, 0.1
        %v6772 = vmul.f32 %v6500, 0.1
        %v6773 = vmul.f32 %v6501, 0.1
        %v6774 = vmul.f32 %v6502, 0.1
        %v6775 = vmul.f32 %v6503, 0.1
        %v6776 = vmul.f32 %v6504, 0.1
        %v6777 = vmul.f32 %v6505, 0.1
        %v6778 = vmul.f32 %v6506, 0.1
        %v6779 = vmul.f32 %v6507, 0.1
        %v6780 = vmul.f32 %v6508, 0.1
        %v6781 = vmul.f32 %v6509, 0.1
        %v6782 = vmul.f32 %v6510, 0.1
        %v6783 = vmul.f32 %v6511, 0.1
        %v6784 = vmul.f32 %v6512, 0.1
        %v6785 = vmul.f32 %v6513, 0.1
        %v6786 = vmul.f32 %v6514, 0.1
        %v6787 = vmul.f32 %v6515, 0.1
        %v6788 = vmul.f32 %v6516, 0.1
        %v6789 = vmul.f32 %v6517, 0.1
        %v6790 = vmul.f32 %v6518, 0.1
        %v6791 = vmul.f32 %v6519, 0.1
        %v6792 = vmul.f32 %v6520, 0.1
        %v6793 = vmul.f32 %v6521, 0.1
        %v6794 = vmul.f32 %v6522, 0.1
        %v6795 = vmul.f32 %v6523, 0.1
        %v6796 = vmul.f32 %v6524, 0.1
        %v6797 = vmul.f32 %v6525, 0.1
        %v6798 = vmul.f32 %v6526, 0.1
        %v6799 = vmul.f32 %v6527, 0.1
        %v6800 = vmul.f32 %v6528, 0.1
        %v6801 = vmul.f32 %v6529, 0.1
        %v6802 = vmul.f32 %v6530, 0.1
        %v6803 = vmul.f32 %v6531, 0.1
        %v6804 = vmul.f32 %v6532, 0.1
        %v6805 = vmul.f32 %v6533, 0.1
        %v6806 = vmul.f32 %v6534, 0.1
        %v6807 = vmul.f32 %v6535, 0.1
        %v6808 = vmul.f32 %v6536, 0.1
        %v6809 = vmul.f32 %v6537, 0.1
        %v6810 = vmul.f32 %v6538, 0.1
        %v6811 = vmul.f32 %v6539, 0.1
        %v6812 = vmul.f32 %v6540, 0.1
        %v6813 = vmul.f32 %v6541, 0.1
        %v6814 = vmul.f32 %v6542, 0.1
        %v6815 = vmul.f32 %v6543, 0.1
        %v6816 = vmul.f32 %v6544, 0.1
        %v6817 = vmul.f32 %v6545, 0.1
        %v6818 = vmul.f32 %v6546, 0.1
        %v6819 = vmul.f32 %v6547, 0.1
        %v6820 = vmul.f32 %v6548, 0.1
        %v6821 = vmul.f32 %v6549, 0.1
        %v6822 = vmul.f32 %v6550, 0.1
        %v6823 = vmul.f32 %v6551, 0.1
        %v6824 = vmul.f32 %v6552, 0.1
        %v6825 = vmul.f32 %v6553, 0.1
        %v6826 = vmul.f32 %v6554, 0.1
        %v6827 = vmul.f32 %v6555, 0.1
        %v6828 = vmul.f32 %v6556, 0.1
        %v6829 = vmul.f32 %v6557, 0.1
        %v6830 = vmul.f32 %v6558, 0.1
        %v6831 = vmul.f32 %v6559, 0.1
        %v6832 = vmul.f32 %v6560, 0.1
        %v6833 = vmul.f32 %v6561, 0.1
        %v6834 = vmul.f32 %v6562, 0.1
        %v6835 = vmul.f32 %v6563, 0.1
        %v6836 = vmul.f32 %v6564, 0.1
        %v6837 = vmul.f32 %v6565, 0.1
        %v6838 = vmul.f32 %v6566, 0.1
        %v6839 = vmul.f32 %v6567, 0.1
        %v6840 = vmul.f32 %v6568, 0.1
        %v6841 = vmul.f32 %v6569, 0.1
        %v6842 = vmul.f32 %v6570, 0.1
        %v6843 = vmul.f32 %v6571, 0.1
        %v6844 = vmul.f32 %v6572, 0.1
        %v6845 = vmul.f32 %v6573, 0.1
        %v6846 = vmul.f32 %v6574, 0.1
        %v6847 = vmul.f32 %v6575, 0.1
        %v6848 = vmul.f32 %v6576, 0.1
        %v6849 = vmul.f32 %v6577, 0.1
        %v6850 = vmul.f32 %v6578, 0.1
        %v6851 = vmul.f32 %v6579, 0.1
        %v6852 = vmul.f32 %v6580, 0.1
        %v6853 = vmul.f32 %v6581, 0.1
        %v6854 = vmul.f32 %v6582, 0.1
        %v6855 = vmul.f32 %v6583, 0.1
        %v6856 = vmul.f32 %v6584, 0.1
        %v6857 = vmul.f32 %v6585, 0.1
        %v6858 = vmul.f32 %v6586, 0.1
        %v6859 = vmul.f32 %v6587, 0.1
        %v6860 = vmul.f32 %v6588, 0.1
        %v6861 = vmul.f32 %v6589, 0.1
        %v6862 = vmul.f32 %v6590, 0.1
        %v6863 = vmul.f32 %v6591, 0.1
        %v6864 = vmul.f32 %v6592, 0.1
        %v6865 = vmul.f32 %v6593, 0.1
        %v6866 = vmul.f32 %v6594, 0.1
        %v6867 = vmul.f32 %v6595, 0.1
        %v6868 = vmul.f32 %v6596, 0.1
        %v6869 = vmul.f32 %v6597, 0.1
        %v6870 = vmul.f32 %v6598, 0.1
        %v6871 = vmul.f32 %v6599, 0.1
        %v6872 = vmul.f32 %v6600, 0.1
        %v6873 = vmul.f32 %v6601, 0.1
        %v6874 = vmul.f32 %v6602, 0.1
        %v6875 = vmul.f32 %v6603, 0.1
        %v6876 = vmul.f32 %v6604, 0.1
        %v6877 = vmul.f32 %v6605, 0.1
        %v6878 = vmul.f32 %v6606, 0.1
        %v6879 = vmul.f32 %v6607, 0.1
        %v6880 = vmul.f32 %v6608, 0.1
        %v6881 = vmul.f32 %v6609, 0.1
        %v6882 = vmul.f32 %v6610, 0.1
        %v6883 = vmul.f32 %v6611, 0.1
        %v6884 = vmul.f32 %v6612, 0.1
        %v6885 = vmul.f32 %v6613, 0.1
        %v6886 = vmul.f32 %v6614, 0.1
        %v6887 = vmul.f32 %v6615, 0.1
        %v6888 = vmul.f32 %v6616, 0.1
        %v6889 = vmul.f32 %v6617, 0.1
        %v6890 = vmul.f32 %v6618, 0.1
        %v6891 = vmul.f32 %v6619, 0.1
        %v6892 = vmul.f32 %v6620, 0.1
        %v6893 = vmul.f32 %v6621, 0.1
        %v6894 = vmul.f32 %v6622, 0.1
        %v6895 = vmul.f32 %v6623, 0.1
        %v6896 = vmul.f32 %v6624, 0.1
        %v6897 = vmul.f32 %v6625, 0.1
        %v6898 = vmul.f32 %v6626, 0.1
        %v6899 = vmul.f32 %v6627, 0.1
        %v6900 = vmul.f32 %v6628, 0.1
        %v6901 = vsel %vm6629, %v6493, %v6765
        %v6902 = vsel %vm6630, %v6494, %v6766
        %v6903 = vsel %vm6631, %v6495, %v6767
        %v6904 = vsel %vm6632, %v6496, %v6768
        %v6905 = vsel %vm6633, %v6497, %v6769
        %v6906 = vsel %vm6634, %v6498, %v6770
        %v6907 = vsel %vm6635, %v6499, %v6771
        %v6908 = vsel %vm6636, %v6500, %v6772
        %v6909 = vsel %vm6637, %v6501, %v6773
        %v6910 = vsel %vm6638, %v6502, %v6774
        %v6911 = vsel %vm6639, %v6503, %v6775
        %v6912 = vsel %vm6640, %v6504, %v6776
        %v6913 = vsel %vm6641, %v6505, %v6777
        %v6914 = vsel %vm6642, %v6506, %v6778
        %v6915 = vsel %vm6643, %v6507, %v6779
        %v6916 = vsel %vm6644, %v6508, %v6780
        %v6917 = vsel %vm6645, %v6509, %v6781
        %v6918 = vsel %vm6646, %v6510, %v6782
        %v6919 = vsel %vm6647, %v6511, %v6783
        %v6920 = vsel %vm6648, %v6512, %v6784
        %v6921 = vsel %vm6649, %v6513, %v6785
        %v6922 = vsel %vm6650, %v6514, %v6786
        %v6923 = vsel %vm6651, %v6515, %v6787
        %v6924 = vsel %vm6652, %v6516, %v6788
        %v6925 = vsel %vm6653, %v6517, %v6789
        %v6926 = vsel %vm6654, %v6518, %v6790
        %v6927 = vsel %vm6655, %v6519, %v6791
        %v6928 = vsel %vm6656, %v6520, %v6792
        %v6929 = vsel %vm6657, %v6521, %v6793
        %v6930 = vsel %vm6658, %v6522, %v6794
        %v6931 = vsel %vm6659, %v6523, %v6795
        %v6932 = vsel %vm6660, %v6524, %v6796
        %v6933 = vsel %vm6661, %v6525, %v6797
        %v6934 = vsel %vm6662, %v6526, %v6798
        %v6935 = vsel %vm6663, %v6527, %v6799
        %v6936 = vsel %vm6664, %v6528, %v6800
        %v6937 = vsel %vm6665, %v6529, %v6801
        %v6938 = vsel %vm6666, %v6530, %v6802
        %v6939 = vsel %vm6667, %v6531, %v6803
        %v6940 = vsel %vm6668, %v6532, %v6804
        %v6941 = vsel %vm6669, %v6533, %v6805
        %v6942 = vsel %vm6670, %v6534, %v6806
        %v6943 = vsel %vm6671, %v6535, %v6807
        %v6944 = vsel %vm6672, %v6536, %v6808
        %v6945 = vsel %vm6673, %v6537, %v6809
        %v6946 = vsel %vm6674, %v6538, %v6810
        %v6947 = vsel %vm6675, %v6539, %v6811
        %v6948 = vsel %vm6676, %v6540, %v6812
        %v6949 = vsel %vm6677, %v6541, %v6813
        %v6950 = vsel %vm6678, %v6542, %v6814
        %v6951 = vsel %vm6679, %v6543, %v6815
        %v6952 = vsel %vm6680, %v6544, %v6816
        %v6953 = vsel %vm6681, %v6545, %v6817
        %v6954 = vsel %vm6682, %v6546, %v6818
        %v6955 = vsel %vm6683, %v6547, %v6819
        %v6956 = vsel %vm6684, %v6548, %v6820
        %v6957 = vsel %vm6685, %v6549, %v6821
        %v6958 = vsel %vm6686, %v6550, %v6822
        %v6959 = vsel %vm6687, %v6551, %v6823
        %v6960 = vsel %vm6688, %v6552, %v6824
        %v6961 = vsel %vm6689, %v6553, %v6825
        %v6962 = vsel %vm6690, %v6554, %v6826
        %v6963 = vsel %vm6691, %v6555, %v6827
        %v6964 = vsel %vm6692, %v6556, %v6828
        %v6965 = vsel %vm6693, %v6557, %v6829
        %v6966 = vsel %vm6694, %v6558, %v6830
        %v6967 = vsel %vm6695, %v6559, %v6831
        %v6968 = vsel %vm6696, %v6560, %v6832
        %v6969 = vsel %vm6697, %v6561, %v6833
        %v6970 = vsel %vm6698, %v6562, %v6834
        %v6971 = vsel %vm6699, %v6563, %v6835
        %v6972 = vsel %vm6700, %v6564, %v6836
        %v6973 = vsel %vm6701, %v6565, %v6837
        %v6974 = vsel %vm6702, %v6566, %v6838
        %v6975 = vsel %vm6703, %v6567, %v6839
        %v6976 = vsel %vm6704, %v6568, %v6840
        %v6977 = vsel %vm6705, %v6569, %v6841
        %v6978 = vsel %vm6706, %v6570, %v6842
        %v6979 = vsel %vm6707, %v6571, %v6843
        %v6980 = vsel %vm6708, %v6572, %v6844
        %v6981 = vsel %vm6709, %v6573, %v6845
        %v6982 = vsel %vm6710, %v6574, %v6846
        %v6983 = vsel %vm6711, %v6575, %v6847
        %v6984 = vsel %vm6712, %v6576, %v6848
        %v6985 = vsel %vm6713, %v6577, %v6849
        %v6986 = vsel %vm6714, %v6578, %v6850
        %v6987 = vsel %vm6715, %v6579, %v6851
        %v6988 = vsel %vm6716, %v6580, %v6852
        %v6989 = vsel %vm6717, %v6581, %v6853
        %v6990 = vsel %vm6718, %v6582, %v6854
        %v6991 = vsel %vm6719, %v6583, %v6855
        %v6992 = vsel %vm6720, %v6584, %v6856
        %v6993 = vsel %vm6721, %v6585, %v6857
        %v6994 = vsel %vm6722, %v6586, %v6858
        %v6995 = vsel %vm6723, %v6587, %v6859
        %v6996 = vsel %vm6724, %v6588, %v6860
        %v6997 = vsel %vm6725, %v6589, %v6861
        %v6998 = vsel %vm6726, %v6590, %v6862
        %v6999 = vsel %vm6727, %v6591, %v6863
        %v7000 = vsel %vm6728, %v6592, %v6864
        %v7001 = vsel %vm6729, %v6593, %v6865
        %v7002 = vsel %vm6730, %v6594, %v6866
        %v7003 = vsel %vm6731, %v6595, %v6867
        %v7004 = vsel %vm6732, %v6596, %v6868
        %v7005 = vsel %vm6733, %v6597, %v6869
        %v7006 = vsel %vm6734, %v6598, %v6870
        %v7007 = vsel %vm6735, %v6599, %v6871
        %v7008 = vsel %vm6736, %v6600, %v6872
        %v7009 = vsel %vm6737, %v6601, %v6873
        %v7010 = vsel %vm6738, %v6602, %v6874
        %v7011 = vsel %vm6739, %v6603, %v6875
        %v7012 = vsel %vm6740, %v6604, %v6876
        %v7013 = vsel %vm6741, %v6605, %v6877
        %v7014 = vsel %vm6742, %v6606, %v6878
        %v7015 = vsel %vm6743, %v6607, %v6879
        %v7016 = vsel %vm6744, %v6608, %v6880
        %v7017 = vsel %vm6745, %v6609, %v6881
        %v7018 = vsel %vm6746, %v6610, %v6882
        %v7019 = vsel %vm6747, %v6611, %v6883
        %v7020 = vsel %vm6748, %v6612, %v6884
        %v7021 = vsel %vm6749, %v6613, %v6885
        %v7022 = vsel %vm6750, %v6614, %v6886
        %v7023 = vsel %vm6751, %v6615, %v6887
        %v7024 = vsel %vm6752, %v6616, %v6888
        %v7025 = vsel %vm6753, %v6617, %v6889
        %v7026 = vsel %vm6754, %v6618, %v6890
        %v7027 = vsel %vm6755, %v6619, %v6891
        %v7028 = vsel %vm6756, %v6620, %v6892
        %v7029 = vsel %vm6757, %v6621, %v6893
        %v7030 = vsel %vm6758, %v6622, %v6894
        %v7031 = vsel %vm6759, %v6623, %v6895
        %v7032 = vsel %vm6760, %v6624, %v6896
        %v7033 = vsel %vm6761, %v6625, %v6897
        %v7034 = vsel %vm6762, %v6626, %v6898
        %v7035 = vsel %vm6763, %v6627, %v6899
        %v7036 = vsel %vm6764, %v6628, %v6900
        %7037 = vst [vmem:[%s190] sm:$0xff] %v6901
        %7038 = vst [vmem:[%s190 + $0x8] sm:$0xff] %v6902
        %7039 = vst [vmem:[%s190 + $0x10] sm:$0xff] %v6903
        %7040 = vst [vmem:[%s190 + $0x18] sm:$0xff] %v6904
        %7041 = vst [vmem:[%s190 + $0x20] sm:$0xff] %v6905
        %7042 = vst [vmem:[%s190 + $0x28] sm:$0xff] %v6906
        %7043 = vst [vmem:[%s190 + $0x30] sm:$0xff] %v6907
        %7044 = vst [vmem:[%s190 + $0x38] sm:$0xff] %v6908
        %7045 = vst [vmem:[%s190 + $0x40] sm:$0xff] %v6909
        %7046 = vst [vmem:[%s190 + $0x48] sm:$0xff] %v6910
        %7047 = vst [vmem:[%s190 + $0x50] sm:$0xff] %v6911
        %7048 = vst [vmem:[%s190 + $0x58] sm:$0xff] %v6912
        %7049 = vst [vmem:[%s190 + $0x60] sm:$0xff] %v6913
        %7050 = vst [vmem:[%s190 + $0x68] sm:$0xff] %v6914
        %7051 = vst [vmem:[%s190 + $0x70] sm:$0xff] %v6915
        %7052 = vst [vmem:[%s190 + $0x78] sm:$0xff] %v6916
        %7053 = vst [vmem:[%s190 + $0x80] sm:$0xff] %v6917
        %7054 = vst [vmem:[%s190 + $0x88] sm:$0xff] %v6918
        %7055 = vst [vmem:[%s190 + $0x90] sm:$0xff] %v6919
        %7056 = vst [vmem:[%s190 + $0x98] sm:$0xff] %v6920
        %7057 = vst [vmem:[%s190 + $0xa0] sm:$0xff] %v6921
        %7058 = vst [vmem:[%s190 + $0xa8] sm:$0xff] %v6922
        %7059 = vst [vmem:[%s190 + $0xb0] sm:$0xff] %v6923
        %7060 = vst [vmem:[%s190 + $0xb8] sm:$0xff] %v6924
        %7061 = vst [vmem:[%s190 + $0xc0] sm:$0xff] %v6925
        %7062 = vst [vmem:[%s190 + $0xc8] sm:$0xff] %v6926
        %7063 = vst [vmem:[%s190 + $0xd0] sm:$0xff] %v6927
        %7064 = vst [vmem:[%s190 + $0xd8] sm:$0xff] %v6928
        %7065 = vst [vmem:[%s190 + $0xe0] sm:$0xff] %v6929
        %7066 = vst [vmem:[%s190 + $0xe8] sm:$0xff] %v6930
        %7067 = vst [vmem:[%s190 + $0xf0] sm:$0xff] %v6931
        %7068 = vst [vmem:[%s190 + $0xf8] sm:$0xff] %v6932
        %7069 = vst [vmem:[%s190 + $0x100] sm:$0xff] %v6933
        %7070 = vst [vmem:[%s190 + $0x108] sm:$0xff] %v6934
        %7071 = vst [vmem:[%s190 + $0x110] sm:$0xff] %v6935
        %7072 = vst [vmem:[%s190 + $0x118] sm:$0xff] %v6936
        %7073 = vst [vmem:[%s190 + $0x120] sm:$0xff] %v6937
        %7074 = vst [vmem:[%s190 + $0x128] sm:$0xff] %v6938
        %7075 = vst [vmem:[%s190 + $0x130] sm:$0xff] %v6939
        %7076 = vst [vmem:[%s190 + $0x138] sm:$0xff] %v6940
        %7077 = vst [vmem:[%s190 + $0x140] sm:$0xff] %v6941
        %7078 = vst [vmem:[%s190 + $0x148] sm:$0xff] %v6942
        %7079 = vst [vmem:[%s190 + $0x150] sm:$0xff] %v6943
        %7080 = vst [vmem:[%s190 + $0x158] sm:$0xff] %v6944
        %7081 = vst [vmem:[%s190 + $0x160] sm:$0xff] %v6945
        %7082 = vst [vmem:[%s190 + $0x168] sm:$0xff] %v6946
        %7083 = vst [vmem:[%s190 + $0x170] sm:$0xff] %v6947
        %7084 = vst [vmem:[%s190 + $0x178] sm:$0xff] %v6948
        %7085 = vst [vmem:[%s190 + $0x180] sm:$0xff] %v6949
        %7086 = vst [vmem:[%s190 + $0x188] sm:$0xff] %v6950
        %7087 = vst [vmem:[%s190 + $0x190] sm:$0xff] %v6951
        %7088 = vst [vmem:[%s190 + $0x198] sm:$0xff] %v6952
        %7089 = vst [vmem:[%s190 + $0x1a0] sm:$0xff] %v6953
        %7090 = vst [vmem:[%s190 + $0x1a8] sm:$0xff] %v6954
        %7091 = vst [vmem:[%s190 + $0x1b0] sm:$0xff] %v6955
        %7092 = vst [vmem:[%s190 + $0x1b8] sm:$0xff] %v6956
        %7093 = vst [vmem:[%s190 + $0x1c0] sm:$0xff] %v6957
        %7094 = vst [vmem:[%s190 + $0x1c8] sm:$0xff] %v6958
        %7095 = vst [vmem:[%s190 + $0x1d0] sm:$0xff] %v6959
        %7096 = vst [vmem:[%s190 + $0x1d8] sm:$0xff] %v6960
        %7097 = vst [vmem:[%s190 + $0x1e0] sm:$0xff] %v6961
        %7098 = vst [vmem:[%s190 + $0x1e8] sm:$0xff] %v6962
        %7099 = vst [vmem:[%s190 + $0x1f0] sm:$0xff] %v6963
        %7100 = vst [vmem:[%s190 + $0x1f8] sm:$0xff] %v6964
        %7101 = vst [vmem:[%s190 + $0x200] sm:$0xff] %v6965
        %7102 = vst [vmem:[%s190 + $0x208] sm:$0xff] %v6966
        %7103 = vst [vmem:[%s190 + $0x210] sm:$0xff] %v6967
        %7104 = vst [vmem:[%s190 + $0x218] sm:$0xff] %v6968
        %7105 = vst [vmem:[%s190 + $0x220] sm:$0xff] %v6969
        %7106 = vst [vmem:[%s190 + $0x228] sm:$0xff] %v6970
        %7107 = vst [vmem:[%s190 + $0x230] sm:$0xff] %v6971
        %7108 = vst [vmem:[%s190 + $0x238] sm:$0xff] %v6972
        %7109 = vst [vmem:[%s190 + $0x240] sm:$0xff] %v6973
        %7110 = vst [vmem:[%s190 + $0x248] sm:$0xff] %v6974
        %7111 = vst [vmem:[%s190 + $0x250] sm:$0xff] %v6975
        %7112 = vst [vmem:[%s190 + $0x258] sm:$0xff] %v6976
        %7113 = vst [vmem:[%s190 + $0x260] sm:$0xff] %v6977
        %7114 = vst [vmem:[%s190 + $0x268] sm:$0xff] %v6978
        %7115 = vst [vmem:[%s190 + $0x270] sm:$0xff] %v6979
        %7116 = vst [vmem:[%s190 + $0x278] sm:$0xff] %v6980
        %7117 = vst [vmem:[%s190 + $0x280] sm:$0xff] %v6981
        %7118 = vst [vmem:[%s190 + $0x288] sm:$0xff] %v6982
        %7119 = vst [vmem:[%s190 + $0x290] sm:$0xff] %v6983
        %7120 = vst [vmem:[%s190 + $0x298] sm:$0xff] %v6984
        %7121 = vst [vmem:[%s190 + $0x2a0] sm:$0xff] %v6985
        %7122 = vst [vmem:[%s190 + $0x2a8] sm:$0xff] %v6986
        %7123 = vst [vmem:[%s190 + $0x2b0] sm:$0xff] %v6987
        %7124 = vst [vmem:[%s190 + $0x2b8] sm:$0xff] %v6988
        %7125 = vst [vmem:[%s190 + $0x2c0] sm:$0xff] %v6989
        %7126 = vst [vmem:[%s190 + $0x2c8] sm:$0xff] %v6990
        %7127 = vst [vmem:[%s190 + $0x2d0] sm:$0xff] %v6991
        %7128 = vst [vmem:[%s190 + $0x2d8] sm:$0xff] %v6992
        %7129 = vst [vmem:[%s190 + $0x2e0] sm:$0xff] %v6993
        %7130 = vst [vmem:[%s190 + $0x2e8] sm:$0xff] %v6994
        %7131 = vst [vmem:[%s190 + $0x2f0] sm:$0xff] %v6995
        %7132 = vst [vmem:[%s190 + $0x2f8] sm:$0xff] %v6996
        %7133 = vst [vmem:[%s190 + $0x300] sm:$0xff] %v6997
        %7134 = vst [vmem:[%s190 + $0x308] sm:$0xff] %v6998
        %7135 = vst [vmem:[%s190 + $0x310] sm:$0xff] %v6999
        %7136 = vst [vmem:[%s190 + $0x318] sm:$0xff] %v7000
        %7137 = vst [vmem:[%s190 + $0x320] sm:$0xff] %v7001
        %7138 = vst [vmem:[%s190 + $0x328] sm:$0xff] %v7002
        %7139 = vst [vmem:[%s190 + $0x330] sm:$0xff] %v7003
        %7140 = vst [vmem:[%s190 + $0x338] sm:$0xff] %v7004
        %7141 = vst [vmem:[%s190 + $0x340] sm:$0xff] %v7005
        %7142 = vst [vmem:[%s190 + $0x348] sm:$0xff] %v7006
        %7143 = vst [vmem:[%s190 + $0x350] sm:$0xff] %v7007
        %7144 = vst [vmem:[%s190 + $0x358] sm:$0xff] %v7008
        %7145 = vst [vmem:[%s190 + $0x360] sm:$0xff] %v7009
        %7146 = vst [vmem:[%s190 + $0x368] sm:$0xff] %v7010
        %7147 = vst [vmem:[%s190 + $0x370] sm:$0xff] %v7011
        %7148 = vst [vmem:[%s190 + $0x378] sm:$0xff] %v7012
        %7149 = vst [vmem:[%s190 + $0x380] sm:$0xff] %v7013
        %7150 = vst [vmem:[%s190 + $0x388] sm:$0xff] %v7014
        %7151 = vst [vmem:[%s190 + $0x390] sm:$0xff] %v7015
        %7152 = vst [vmem:[%s190 + $0x398] sm:$0xff] %v7016
        %7153 = vst [vmem:[%s190 + $0x3a0] sm:$0xff] %v7017
        %7154 = vst [vmem:[%s190 + $0x3a8] sm:$0xff] %v7018
        %7155 = vst [vmem:[%s190 + $0x3b0] sm:$0xff] %v7019
        %7156 = vst [vmem:[%s190 + $0x3b8] sm:$0xff] %v7020
        %7157 = vst [vmem:[%s190 + $0x3c0] sm:$0xff] %v7021
        %7158 = vst [vmem:[%s190 + $0x3c8] sm:$0xff] %v7022
        %7159 = vst [vmem:[%s190 + $0x3d0] sm:$0xff] %v7023
        %7160 = vst [vmem:[%s190 + $0x3d8] sm:$0xff] %v7024
        %7161 = vst [vmem:[%s190 + $0x3e0] sm:$0xff] %v7025
        %7162 = vst [vmem:[%s190 + $0x3e8] sm:$0xff] %v7026
        %7163 = vst [vmem:[%s190 + $0x3f0] sm:$0xff] %v7027
        %7164 = vst [vmem:[%s190 + $0x3f8] sm:$0xff] %v7028
        %7165 = vst [vmem:[%s190 + $0x400] sm:$0xff] %v7029
        %7166 = vst [vmem:[%s190 + $0x408] sm:$0xff] %v7030
        %7167 = vst [vmem:[%s190 + $0x410] sm:$0xff] %v7031
        %7168 = vst [vmem:[%s190 + $0x418] sm:$0xff] %v7032
        %7169 = vst [vmem:[%s190 + $0x420] sm:$0xff] %v7033
        %7170 = vst [vmem:[%s190 + $0x428] sm:$0xff] %v7034
        %7171 = vst [vmem:[%s190 + $0x430] sm:$0xff] %v7035
        %7172 = vst [vmem:[%s190 + $0x438] sm:$0xff] %v7036
        %s7173 = sand.u32 %s115, 1
        %s7174 = scalar_lea.sflag [#allocation3], %s7173
        %s7175 = sand.u32 %s115, 1
        %s7176 = smul.addr %s7175, 1088
        %s7177 = scalar_lea.vmem [#allocation2], %s7176
        // Predicated region
        $region37: #{tpu_custom_call.1} parent=35 // pred_check
          %p7178 = pneg %p125
        $region38: #{tpu_custom_call.1} parent=35 // pred_check_branch
          %7180 = sbr.rel (%p7178) target = $region40
        $region39: #{tpu_custom_call.1} parent=35 // pred_region
          %7182 = vsyncadd %s7174, 0
          %s7183 = smul.addr %s18, 136
          %s7184 = smul.addr %s7183, 8
          %s7185 = scalar_lea.hbm %s4, %s7184
          %s7186 = sshll.u32 %s7177, 4
          %s7187 = int_to_ptr.vmem [resolvable:$true] %s7186
          %s7188 = sshll.u32 %s7185, 4
          %s7189 = int_to_ptr.hbm [resolvable:$true] %s7188
          %7194 = dma.vmem_to_hbm [thread:$0]  %s7187, 17408, %s7189, %s7174, 128, 128, 8
        $region40: #{tpu_custom_call.1} parent=35 // pred_fallthru
          _
      $region36: #{tpu_custom_call.1} parent=5 // pred_fallthru
        _
      %p7195 = scmp.le.s32.totalorder 2, %s13
      // Predicated region
      $region41: #{tpu_custom_call.1} parent=5 // pred_check
        %p7196 = pneg %p7195
      $region42: #{tpu_custom_call.1} parent=5 // pred_check_branch
        %7198 = sbr.rel (%p7196) target = $region44
      $region43: #{tpu_custom_call.1} parent=5 // pred_region
        %s7199 = ssub.s32 %s13, 2
        // Predicated region
        $region45: #{tpu_custom_call.1} parent=43 // pred_check
          %p7200 = pneg %p131
        $region46: #{tpu_custom_call.1} parent=43 // pred_check_branch
          %7202 = sbr.rel (%p7200) target = $region48
        $region47: #{tpu_custom_call.1} parent=43 // pred_region
          %s7203 = sand.u32 %s116, 1
          %s7204 = scalar_lea.sflag [#allocation3], %s7203
          %s7205 = sand.u32 %s116, 1
          %s7206 = smul.addr %s7205, 1088
          %s7207 = scalar_lea.vmem [#allocation2], %s7206
          %7209 = dma.done %s7204, 17408
        $region48: #{tpu_custom_call.1} parent=43 // pred_fallthru
          _
      $region44: #{tpu_custom_call.1} parent=5 // pred_fallthru
        _
    $region6: #{tpu_custom_call.1} parent=1 // loop_footer
      %s17 = sadd.s32 1, %s13
    $region7: #{tpu_custom_call.1} parent=1 // loop_footer_branch
      %12 = sbr.rel target = $region3
    $region8: #{tpu_custom_call.1} parent=1 // loop_exit
      _
    %7210 = vsyncpa [#allocation3], 1
    %s7211 = scalar_lea.sflag [#allocation3], 1
    %7212 = vsyncpa %s7211, 1

</llo_original>
